<compile_context>
chip_gen: v6e
topology: v6e:2x2x1
jax: 0.10.0
libtpu: 0.0.40
codegen_flags: <defaults>
</compile_context>

<pallas_src>
import jax
import jax.numpy as jnp
from jax.experimental import pallas as pl
from jax.experimental.pallas import tpu as pltpu

HW = 14 * 14            # 196 spatial positions
CIN = 256               # conv input channels
CRED = 100              # conv output channels ("reducer")
K = CRED * HW           # 19600 linear input features (PyTorch flatten order: c*HW + hw)
OUT = HW                # 196 (reg=True -> exit_neur = 14*14)

LANE = 128
KP = ((K + LANE - 1) // LANE) * LANE    # 19712, zero-padded contraction length
NSPLIT = 2                              # K-split: one half per v7x TensorCore
TK = KP // NSPLIT                       # 9856 = 77 * 128
assert KP % NSPLIT == 0 and TK % LANE == 0


# ------------------- kernel 1: 1x1 conv + ReLU (channel-major output, bf16 MXU) ----------
def conv1x1_relu_kernel(x_ref, w_ref, b_ref, o_ref):
    # x_ref: (1, CIN, HW) f32   w_ref: (CRED, CIN) bf16   b_ref: (CRED, 1) f32
    # o_ref: (1, CRED, HW) f32
    x = x_ref[0].astype(jnp.bfloat16)                                       # (CIN, HW)
    h = jnp.dot(w_ref[...], x, preferred_element_type=jnp.float32)          # (CRED, HW)
    o_ref[0] = jnp.maximum(h + b_ref[...], 0.0)


def conv1x1_relu(x_nchw_flat, w1_bf16, b1):
    # x_nchw_flat: (N, CIN, HW) f32  ->  (N, CRED, HW) f32
    N = x_nchw_flat.shape[0]
    cost = pl.CostEstimate(
        flops=2 * N * CRED * CIN * HW,
        transcendentals=0,
        bytes_accessed=N * CIN * HW * 4 + CRED * CIN * 2 + CRED * 4 + N * CRED * HW * 4,
    )
    # NOTE: at large N, block B>1 samples per grid step to amortize the ~0.35us/step
    # overhead; irrelevant at N=2.
    return pl.pallas_call(
        conv1x1_relu_kernel,
        out_shape=jax.ShapeDtypeStruct((N, CRED, HW), jnp.float32),
        grid_spec=pltpu.PrefetchScalarGridSpec(
            num_scalar_prefetch=0,
            grid=(N,),
            in_specs=[
                pl.BlockSpec((1, CIN, HW), lambda i: (i, 0, 0)),
                pl.BlockSpec((CRED, CIN), lambda i: (0, 0)),
                pl.BlockSpec((CRED, 1), lambda i: (0, 0)),
            ],
            out_specs=pl.BlockSpec((1, CRED, HW), lambda i: (i, 0, 0)),
        ),
        compiler_params=pltpu.CompilerParams(
            dimension_semantics=("parallel",)),
        cost_estimate=cost,
    )(x_nchw_flat, w1_bf16, b1)


# ------------------- kernel 2: linear, K-split partial sums over bf16 weight -------------
def linear_kernel(h_ref, w_ref, o_ref):
    # h_ref: (N, TK) f32   w_ref: (TK, OUT) bf16   o_ref: (1, N, OUT) f32 (this split's partial)
    h = h_ref[...]
    # bf16 hi+lo decomposition of the f32 activation: two bf16 MXU passes give
    # f32-activation accuracy without promoting the 3.86 MB weight tile to f32.
    h_hi = h.astype(jnp.bfloat16)
    h_lo = (h - h_hi.astype(jnp.float32)).astype(jnp.bfloat16)
    w = w_ref[...]
    acc = jnp.dot(h_hi, w, preferred_element_type=jnp.float32)
    acc = acc + jnp.dot(h_lo, w, preferred_element_type=jnp.float32)
    o_ref[0] = acc


def linear_partials(hp_f32, w2p_bf16):
    # hp_f32: (N, KP) f32, w2p_bf16: (KP, OUT) bf16  ->  (NSPLIT, N, OUT) f32 partial sums
    N = hp_f32.shape[0]

    # VMEM per core: double-buffered weight half (bf16) + LHS block (f32) + out block.
    vmem_bytes = 2 * (TK * OUT * 2 + N * TK * 4 + N * OUT * 4)
    # TODO(synk): add an N-tile grid axis instead of asserting once batches approach ~250.
    assert vmem_bytes < 28 * 1024 * 1024, "batch too large for un-tiled K-split linear"

    cost = pl.CostEstimate(
        flops=2 * 2 * N * KP * OUT,                    # hi + lo bf16 passes
        transcendentals=0,
        bytes_accessed=KP * OUT * 2 + N * KP * 4 + NSPLIT * N * OUT * 4,
    )
    return pl.pallas_call(
        linear_kernel,
        out_shape=jax.ShapeDtypeStruct((NSPLIT, N, OUT), jnp.float32),
        grid_spec=pltpu.PrefetchScalarGridSpec(
            num_scalar_prefetch=0,
            grid=(NSPLIT,),
            in_specs=[
                pl.BlockSpec((N, TK), lambda s: (0, s)),
                pl.BlockSpec((TK, OUT), lambda s: (s, 0)),
            ],
            out_specs=pl.BlockSpec((1, N, OUT), lambda s: (s, 0, 0)),
        ),
        compiler_params=pltpu.CompilerParams(
            dimension_semantics=("parallel",),          # splits land on both v7x cores
            vmem_limit_bytes=32 * 1024 * 1024),
        cost_estimate=cost,
    )(hp_f32, w2p_bf16)


# ------------------- one-time parameter transform (cache this, do NOT run per call) ------
def prepare_params(w1, b1, w2, b2):
    """w1:(CRED,CIN) conv weight (PyTorch layout, 1x1 squeezed), b1:(CRED,),
       w2:(OUT,K) PyTorch Linear weight, b2:(OUT,)."""
    w1p = w1.astype(jnp.bfloat16)                                  # (CRED, CIN) bf16 MXU path
    b1p = b1.reshape(CRED, 1).astype(jnp.float32)                  # broadcast over HW
    # transpose to (K, OUT), zero-pad contraction dim to KP, cast to bf16 -- done ONCE.
    w2p = jnp.pad(w2.T, ((0, KP - K), (0, 0))).astype(jnp.bfloat16)
    b2p = b2.reshape(1, OUT).astype(jnp.float32)
    return w1p, b1p, w2p, b2p


# ------------------- full forward -------------------
@jax.jit
def ms_block14_forward(x_nchw, prepared):
    w1p, b1p, w2p, b2p = prepared
    N = x_nchw.shape[0]

    # NCHW with spatial flattened: (N, CIN, HW) -- contiguous, free reshape.
    x_r = x_nchw.reshape(N, CIN, HW)

    # reducer: 1x1 conv + ReLU, channel-major f32 output (N, CRED, HW)
    h = conv1x1_relu(x_r, w1p, b1p)

    # Dropout(p=0.2) is identity at inference time.
    # Channel-major flatten matches torch.flatten(x, 1); reshape is free; the explicit
    # zero-pad of the contraction dim is kept (OOB edge blocks could inject NaN/Inf).
    hp = jnp.pad(h.reshape(N, K), ((0, 0), (0, KP - K)))           # (N, KP) f32

    # K-split linear -> two partial sums; trivial epilogue add for partials + bias.
    partials = linear_partials(hp, w2p)                            # (NSPLIT, N, OUT) f32
    return jnp.sum(partials, axis=0) + b2p                         # (N, 196) f32


# pure-JAX f32 reference (mirrors PyTorch semantics: conv1x1 + ReLU, channel-major flatten,
# eval-mode dropout, Linear)
def ref_forward(x_nchw, params):
    w1, b1, w2, b2 = params
    N = x_nchw.shape[0]
    xr = x_nchw.reshape(N, CIN, HW)                                        # (N, CIN, HW)
    h = jnp.maximum(jnp.einsum("oc,nch->noh", w1, xr) + b1[None, :, None], 0.0)
    hflat = h.reshape(N, CRED * HW)                                        # channel-major
    return hflat @ w2.T + b2                                               # (N, 196)


if __name__ == "__main__":
    key = jax.random.PRNGKey(0)
    kx, k1, k2, k3, k4 = jax.random.split(key, 5)

    # deterministic synthetic parameters in PyTorch layouts (MSBlock14.__init__ shapes)
    w1 = jax.random.normal(k1, (CRED, CIN), jnp.float32) * 0.05   # Conv2d weight (Cout, Cin)
    b1 = jax.random.normal(k2, (CRED,), jnp.float32) * 0.05
    w2 = jax.random.normal(k3, (OUT, K), jnp.float32) * 0.01      # Linear weight (out, in)
    b2 = jax.random.normal(k4, (OUT,), jnp.float32) * 0.01
    params = (w1, b1, w2, b2)

    # one-time transform (cached across forward calls)
    prepared = jax.block_until_ready(prepare_params(*params))

    # input consistent with the module: flatten expects 100*14*14 -> x is (N, 256, 14, 14)
    x = jax.random.normal(kx, (2, CIN, 14, 14), jnp.float32)

    out = jax.block_until_ready(ms_block14_forward(x, prepared))
    ref = jax.block_until_ready(ref_forward(x, params))

    assert out.shape == (2, OUT), out.shape
    # bf16 weight stream + bf16 conv inputs; activation kept at f32 precision (hi+lo MXU
    # feed) so observed error is ~3e-3 -- tolerance kept generous for safety margin.
    assert jnp.allclose(out, ref, rtol=2e-2, atol=2e-2), float(jnp.max(jnp.abs(out - ref)))
    print("KERNEL_OK")
</pallas_src>

<mosaic_0001>
module attributes {stable_mosaic.version = 11 : i64} {
  func.func @conv1x1_relu_kernel(%arg0: i32, %arg1: memref<1x256x196xf32, #tpu.memory_space<vmem>>, %arg2: memref<100x256xbf16, #tpu.memory_space<vmem>>, %arg3: memref<100x1xf32, #tpu.memory_space<vmem>>, %arg4: memref<1x100x196xf32, #tpu.memory_space<vmem>>) attributes {dimension_semantics = [#tpu.dimension_semantics<parallel>], iteration_bounds = array<i64: 2>, scalar_prefetch = 0 : i64, scratch_operands = 0 : i64, tpu.core_type = #tpu.core_type<tc>, window_params = [{transform_indices = @transform_0, window_bounds = array<i64: 1, 256, 196>}, {pipeline_mode = #tpu.pipeline_mode<synchronous>, transform_indices = @transform_1, window_bounds = array<i64: 100, 256>}, {pipeline_mode = #tpu.pipeline_mode<synchronous>, transform_indices = @transform_2, window_bounds = array<i64: 100, 1>}, {transform_indices = @transform_3, window_bounds = array<i64: 1, 100, 196>}]} {
    %c0 = arith.constant 0 : index
    %c0_0 = arith.constant 0 : index
    %c0_1 = arith.constant 0 : index
    %0 = vector.load %arg1[%c0, %c0_0, %c0_1] : memref<1x256x196xf32, #tpu.memory_space<vmem>>, vector<1x256x196xf32>
    %1 = vector.shape_cast %0 : vector<1x256x196xf32> to vector<256x196xf32>
    %2 = arith.truncf %1 : vector<256x196xf32> to vector<256x196xbf16>
    %c0_2 = arith.constant 0 : index
    %c0_3 = arith.constant 0 : index
    %3 = vector.load %arg2[%c0_2, %c0_3] : memref<100x256xbf16, #tpu.memory_space<vmem>>, vector<100x256xbf16>
    %cst = arith.constant dense<0.000000e+00> : vector<100x196xf32>
    %4 = tpu.matmul %3, %2, %cst {dimension_numbers = #tpu.dot_dimension_numbers<[1], [0], [0], [1], [0, 0, 1, 1], [], []>} : vector<100x256xbf16>, vector<256x196xbf16>, vector<100x196xf32> -> vector<100x196xf32>
    %c0_4 = arith.constant 0 : index
    %c0_5 = arith.constant 0 : index
    %5 = vector.load %arg3[%c0_4, %c0_5] : memref<100x1xf32, #tpu.memory_space<vmem>>, vector<100x1xf32>
    %6 = vector.broadcast %5 : vector<100x1xf32> to vector<100x196xf32>
    %7 = arith.addf %4, %6 : vector<100x196xf32>
    %cst_6 = arith.constant 0.000000e+00 : f32
    %8 = vector.broadcast %cst_6 : f32 to vector<100x196xf32>
    %9 = arith.maximumf %7, %8 : vector<100x196xf32>
    %c0_7 = arith.constant 0 : index
    %c0_8 = arith.constant 0 : index
    %c0_9 = arith.constant 0 : index
    %10 = vector.load %arg4[%c0_7, %c0_8, %c0_9] : memref<1x100x196xf32, #tpu.memory_space<vmem>>, vector<1x100x196xf32>
    %11 = vector.shape_cast %10 : vector<1x100x196xf32> to vector<100x196xf32>
    %12 = vector.shape_cast %9 : vector<100x196xf32> to vector<1x100x196xf32>
    tpu.vector_store %arg4[%c0_7, %c0_8, %c0_9], %12 {strides = array<i32>} : memref<1x100x196xf32, #tpu.memory_space<vmem>>, vector<1x100x196xf32>,
    return
  }
  func.func @transform_0(%arg0: i32) -> (i32, i32, i32) {
    %c0_i32 = arith.constant 0 : i32
    %c0_i32_0 = arith.constant 0 : i32
    %c0_i32_1 = arith.constant 0 : i32
    return %arg0, %c0_i32, %c0_i32_0 : i32, i32, i32
  }
  func.func @transform_1(%arg0: i32) -> (i32, i32) {
    %c0_i32 = arith.constant 0 : i32
    %c0_i32_0 = arith.constant 0 : i32
    %c0_i32_1 = arith.constant 0 : i32
    return %c0_i32, %c0_i32_0 : i32, i32
  }
  func.func @transform_2(%arg0: i32) -> (i32, i32) {
    %c0_i32 = arith.constant 0 : i32
    %c0_i32_0 = arith.constant 0 : i32
    %c0_i32_1 = arith.constant 0 : i32
    return %c0_i32, %c0_i32_0 : i32, i32
  }
  func.func @transform_3(%arg0: i32) -> (i32, i32, i32) {
    %c0_i32 = arith.constant 0 : i32
    %c0_i32_0 = arith.constant 0 : i32
    %c0_i32_1 = arith.constant 0 : i32
    return %arg0, %c0_i32, %c0_i32_0 : i32, i32, i32
  }
}

module attributes {stable_mosaic.version = 11 : i64} {
  func.func @linear_kernel(%arg0: i32, %arg1: memref<2x9856xf32, #tpu.memory_space<vmem>>, %arg2: memref<9856x196xbf16, #tpu.memory_space<vmem>>, %arg3: memref<1x2x196xf32, #tpu.memory_space<vmem>>) attributes {dimension_semantics = [#tpu.dimension_semantics<parallel>], iteration_bounds = array<i64: 2>, scalar_prefetch = 0 : i64, scratch_operands = 0 : i64, tpu.core_type = #tpu.core_type<tc>, window_params = [{transform_indices = @transform_0, window_bounds = array<i64: 2, 9856>}, {transform_indices = @transform_1, window_bounds = array<i64: 9856, 196>}, {transform_indices = @transform_2, window_bounds = array<i64: 1, 2, 196>}]} {
    %c0 = arith.constant 0 : index
    %c0_0 = arith.constant 0 : index
    %0 = vector.load %arg1[%c0, %c0_0] : memref<2x9856xf32, #tpu.memory_space<vmem>>, vector<2x9856xf32>
    %1 = arith.truncf %0 : vector<2x9856xf32> to vector<2x9856xbf16>
    %2 = arith.extf %1 : vector<2x9856xbf16> to vector<2x9856xf32>
    %3 = arith.subf %0, %2 : vector<2x9856xf32>
    %4 = arith.truncf %3 : vector<2x9856xf32> to vector<2x9856xbf16>
    %c0_1 = arith.constant 0 : index
    %c0_2 = arith.constant 0 : index
    %5 = vector.load %arg2[%c0_1, %c0_2] : memref<9856x196xbf16, #tpu.memory_space<vmem>>, vector<9856x196xbf16>
    %cst = arith.constant dense<0.000000e+00> : vector<2x196xf32>
    %6 = tpu.matmul %1, %5, %cst {dimension_numbers = #tpu.dot_dimension_numbers<[1], [0], [0], [1], [0, 0, 1, 1], [], []>} : vector<2x9856xbf16>, vector<9856x196xbf16>, vector<2x196xf32> -> vector<2x196xf32>
    %cst_3 = arith.constant dense<0.000000e+00> : vector<2x196xf32>
    %7 = tpu.matmul %4, %5, %cst_3 {dimension_numbers = #tpu.dot_dimension_numbers<[1], [0], [0], [1], [0, 0, 1, 1], [], []>} : vector<2x9856xbf16>, vector<9856x196xbf16>, vector<2x196xf32> -> vector<2x196xf32>
    %8 = arith.addf %6, %7 : vector<2x196xf32>
    %c0_4 = arith.constant 0 : index
    %c0_5 = arith.constant 0 : index
    %c0_6 = arith.constant 0 : index
    %9 = vector.load %arg3[%c0_4, %c0_5, %c0_6] : memref<1x2x196xf32, #tpu.memory_space<vmem>>, vector<1x2x196xf32>
    %10 = vector.shape_cast %9 : vector<1x2x196xf32> to vector<2x196xf32>
    %11 = vector.shape_cast %8 : vector<2x196xf32> to vector<1x2x196xf32>
    tpu.vector_store %arg3[%c0_4, %c0_5, %c0_6], %11 {strides = array<i32>} : memref<1x2x196xf32, #tpu.memory_space<vmem>>, vector<1x2x196xf32>,
    return
  }
  func.func @transform_0(%arg0: i32) -> (i32, i32) {
    %c0_i32 = arith.constant 0 : i32
    %c0_i32_0 = arith.constant 0 : i32
    return %c0_i32, %arg0 : i32, i32
  }
  func.func @transform_1(%arg0: i32) -> (i32, i32) {
    %c0_i32 = arith.constant 0 : i32
    %c0_i32_0 = arith.constant 0 : i32
    return %arg0, %c0_i32 : i32, i32
  }
  func.func @transform_2(%arg0: i32) -> (i32, i32, i32) {
    %c0_i32 = arith.constant 0 : i32
    %c0_i32_0 = arith.constant 0 : i32
    %c0_i32_1 = arith.constant 0 : i32
    return %arg0, %c0_i32, %c0_i32_0 : i32, i32, i32
  }
}

</mosaic_0001>

<llo_original>
// kernel: ms_block14_forward.2
$region0: #{ms_block14_forward.2}
  #allocation0 [shape = 'u32[]', space=smem, size = 0x4, offset = 0x4, fixed_abs, tag = 'smem constant byte address 0x4 - core index']
  #allocation1 [shape = 'u32[144,128]{1,0:T(1,128)}', space=vmem, size = 0x12000, scoped, tag = 'internal scratch']
  %s0 = inlined_call_operand.vmem [shape: f32[2,256,196], index: 0, kind: input, shape index: {}]
  %s1 = inlined_call_operand.hbm [shape: bf16[100,256], index: 1, kind: input, shape index: {}]
  %s2 = inlined_call_operand.vmem [shape: f32[100,1], index: 2, kind: input, shape index: {}]
  %s3 = inlined_call_operand.vmem [shape: f32[2,100,196], index: 3, kind: output, shape index: {}]
  %s4 = sld [smem:[#allocation0]]
  $region49: #{ms_block14_forward.2} parent=0
    _
  %s6 = ssub.s32 1, %s4
  %s7 = scalar_select 0, %s6, %s4
  $region1: #{ms_block14_forward.2} parent=0
    #allocation2 [shape = 'u8[53248]{0}', space=vmem, size = 0xd000, scoped, tag = 'input window, operand 1, single buffered']
    #allocation3 [shape = 's32[2]{0}', space=sflag, size = 0x8, scoped, tag = 'scoped memory for ms_block14_forward.2']
    %8 = vsyncpa [#allocation3], 0
    loop: start=0, step=1, limit=4
    $region2: #{ms_block14_forward.2} parent=1 // loop_pre_header
      _
    $region3: #{ms_block14_forward.2} parent=1 // loop_header
      %s10 = sphi 0, %s14
      %p11 = scmp.ge.s32.totalorder %s10, 4
      %s20 = sphi 0, %s22
      %s23 = sphi 0, %s20
      %s24 = sphi 0, %s23
      %s40 = sphi 0, %s24
      %s44 = sphi 0, %s44
      %s46 = sphi 0, %s44
      %s47 = sphi 0, %s46
      %s61 = sphi 0, %s47
      %s65 = sphi 0, %s65
      %s67 = sphi 0, %s65
      %s68 = sphi 0, %s67
      %s82 = sphi 0, %s68
      %s88 = sphi 0, %s90
      %s91 = sphi 0, %s88
      %s92 = sphi 0, %s91
      %s108 = sphi 0, %s92
    $region4: #{ms_block14_forward.2} parent=1 // loop_header_branch
      %13 = sbr.rel (%p11) target = $region8
    $region5: #{ms_block14_forward.2} parent=1 // loop_body
      %s15 = ssub.s32 %s10, 1
      %s16 = ssub.s32 %s10, 2
      %s17 = sadd.s32 %s10, 1
      %s18 = ssub.s32 %s10, %s17
      %p19 = scmp.eq.s32.totalorder %s18, 0
      %s21 = sadd.s32 %s20, 1
      %s22 = scalar_select %p19, %s20, %s21
      %p25 = pneg %p19
      %p26 = scmp.eq.s32.totalorder %s10, 1
      %p27 = por %p25, %p26
      %p28 = scmp.ne.s32.totalorder %s20, %s23
      %p29 = scmp.eq.s32.totalorder %s10, 0
      %p30 = por %p28, %p29
      %p31 = scmp.ne.s32.totalorder %s20, %s23
      %p32 = scmp.eq.s32.totalorder %s15, 1
      %p33 = por %p31, %p32
      %p34 = scmp.ne.s32.totalorder %s23, %s24
      %p35 = scmp.eq.s32.totalorder %s15, 0
      %p36 = por %p34, %p35
      %p37 = scmp.ne.s32.totalorder %s23, %s24
      %p38 = scmp.eq.s32.totalorder %s16, 1
      %p39 = por %p37, %p38
      %p41 = scmp.ne.s32.totalorder %s24, %s40
      %p42 = scmp.eq.s32.totalorder %s16, 0
      %p43 = por %p41, %p42
      %s45 = sadd.s32 %s44, 1
      %p48 = scmp.eq.s32.totalorder %s10, 1
      %p49 = scmp.ne.s32.totalorder %s44, %s46
      %p50 = scmp.eq.s32.totalorder %s10, 0
      %p51 = por %p49, %p50
      %p52 = scmp.ne.s32.totalorder %s44, %s46
      %p53 = scmp.eq.s32.totalorder %s15, 1
      %p54 = por %p52, %p53
      %p55 = scmp.ne.s32.totalorder %s46, %s47
      %p56 = scmp.eq.s32.totalorder %s15, 0
      %p57 = por %p55, %p56
      %p58 = scmp.ne.s32.totalorder %s46, %s47
      %p59 = scmp.eq.s32.totalorder %s16, 1
      %p60 = por %p58, %p59
      %p62 = scmp.ne.s32.totalorder %s47, %s61
      %p63 = scmp.eq.s32.totalorder %s16, 0
      %p64 = por %p62, %p63
      %s66 = sadd.s32 %s65, 1
      %p69 = scmp.eq.s32.totalorder %s10, 1
      %p70 = scmp.ne.s32.totalorder %s65, %s67
      %p71 = scmp.eq.s32.totalorder %s10, 0
      %p72 = por %p70, %p71
      %p73 = scmp.ne.s32.totalorder %s65, %s67
      %p74 = scmp.eq.s32.totalorder %s15, 1
      %p75 = por %p73, %p74
      %p76 = scmp.ne.s32.totalorder %s67, %s68
      %p77 = scmp.eq.s32.totalorder %s15, 0
      %p78 = por %p76, %p77
      %p79 = scmp.ne.s32.totalorder %s67, %s68
      %p80 = scmp.eq.s32.totalorder %s16, 1
      %p81 = por %p79, %p80
      %p83 = scmp.ne.s32.totalorder %s68, %s82
      %p84 = scmp.eq.s32.totalorder %s16, 0
      %p85 = por %p83, %p84
      %s86 = ssub.s32 %s10, %s17
      %p87 = scmp.eq.s32.totalorder %s86, 0
      %s89 = sadd.s32 %s88, 1
      %s90 = scalar_select %p87, %s88, %s89
      %p93 = pneg %p87
      %p94 = scmp.eq.s32.totalorder %s10, 1
      %p95 = por %p93, %p94
      %p96 = scmp.ne.s32.totalorder %s88, %s91
      %p97 = scmp.eq.s32.totalorder %s10, 0
      %p98 = por %p96, %p97
      %p99 = scmp.ne.s32.totalorder %s88, %s91
      %p100 = scmp.eq.s32.totalorder %s15, 1
      %p101 = por %p99, %p100
      %p102 = scmp.ne.s32.totalorder %s91, %s92
      %p103 = scmp.eq.s32.totalorder %s15, 0
      %p104 = por %p102, %p103
      %p105 = scmp.ne.s32.totalorder %s91, %s92
      %p106 = scmp.eq.s32.totalorder %s16, 1
      %p107 = por %p105, %p106
      %p109 = scmp.ne.s32.totalorder %s92, %s108
      %p110 = scmp.eq.s32.totalorder %s16, 0
      %p111 = por %p109, %p110
      %p112 = scmp.le.s32.totalorder 1, %s10
      %p113 = scmp.lt.s32.totalorder %s10, 3
      %p114 = pnand %p112, %p113
      %p115 = pneg %p114
      // Predicated region
      $region9: #{ms_block14_forward.2} parent=5 // pred_check
        _
      $region10: #{ms_block14_forward.2} parent=5 // pred_check_branch
        %117 = sbr.rel (%p114) target = $region12
      $region11: #{ms_block14_forward.2} parent=5 // pred_region
        %s118 = ssub.s32 %s10, 1
        // Predicated region
        $region13: #{ms_block14_forward.2} parent=11 // pred_check
          %p119 = pneg %p57
        $region14: #{ms_block14_forward.2} parent=11 // pred_check_branch
          %121 = sbr.rel (%p119) target = $region16
        $region15: #{ms_block14_forward.2} parent=11 // pred_region
          %s123 = ssub.s32 1664, 1664
          %124 = vsyncadd [#allocation3], %s123
          %s125 = sshll.u32 [#allocation2], 4
          %s126 = int_to_ptr.vmem [resolvable:$true] %s125
          %131 = dma.hbm_to_vmem [thread:$0]  %s1, 1664, %s126, [#allocation3], 128, 128, 8
        $region16: #{ms_block14_forward.2} parent=11 // pred_fallthru
          _
        // Predicated region
        $region17: #{ms_block14_forward.2} parent=11 // pred_check
          %p132 = pneg %p78
        $region18: #{ms_block14_forward.2} parent=11 // pred_check_branch
          %134 = sbr.rel (%p132) target = $region20
        $region19: #{ms_block14_forward.2} parent=11 // pred_region
          _
        $region20: #{ms_block14_forward.2} parent=11 // pred_fallthru
          _
      $region12: #{ms_block14_forward.2} parent=5 // pred_fallthru
        _
      %p135 = scmp.lt.s32.totalorder %s10, 2
      // Predicated region
      $region21: #{ms_block14_forward.2} parent=5 // pred_check
        %p136 = pneg %p135
      $region22: #{ms_block14_forward.2} parent=5 // pred_check_branch
        %138 = sbr.rel (%p136) target = $region24
      $region23: #{ms_block14_forward.2} parent=5 // pred_region
        // Predicated region
        $region25: #{ms_block14_forward.2} parent=23 // pred_check
          %p139 = pneg %p30
        $region26: #{ms_block14_forward.2} parent=23 // pred_check_branch
          %141 = sbr.rel (%p139) target = $region28
        $region27: #{ms_block14_forward.2} parent=23 // pred_region
          %p142 = scmp.lt.s32.totalorder %s10, 1
          %s143 = scalar_select %p142, %s10, 1
          %s144 = smul.addr %s143, 64
          %s145 = smul.addr %s144, 8
          %s146 = scalar_lea.vmem %s0, %s145
        $region28: #{ms_block14_forward.2} parent=23 // pred_fallthru
          _
      $region24: #{ms_block14_forward.2} parent=5 // pred_fallthru
        _
      %p147 = scmp.le.s32.totalorder 1, %s10
      %p148 = scmp.lt.s32.totalorder %s10, 3
      %p149 = pnand %p147, %p148
      %p150 = pneg %p149
      // Predicated region
      $region29: #{ms_block14_forward.2} parent=5 // pred_check
        _
      $region30: #{ms_block14_forward.2} parent=5 // pred_check_branch
        %152 = sbr.rel (%p149) target = $region32
      $region31: #{ms_block14_forward.2} parent=5 // pred_region
        %s153 = ssub.s32 %s10, 1
        // Predicated region
        $region33: #{ms_block14_forward.2} parent=31 // pred_check
          %p154 = pneg %p57
        $region34: #{ms_block14_forward.2} parent=31 // pred_check_branch
          %156 = sbr.rel (%p154) target = $region36
        $region35: #{ms_block14_forward.2} parent=31 // pred_region
          %157 = dma.done [#allocation3], 1664
        $region36: #{ms_block14_forward.2} parent=31 // pred_fallthru
          _
        %p158 = scmp.lt.s32.totalorder %s15, 1
        %s159 = scalar_select %p158, %s15, 1
        %s160 = smul.addr %s159, 64
        %s161 = smul.addr %s160, 8
        %s162 = scalar_lea.vmem %s0, %s161
        %p163 = pneg %p36
        %p164 = pneg %p33
        %p165 = pneg %p57
        %p166 = pneg %p54
        %p167 = pneg %p78
        %p168 = pneg %p75
        %p169 = pneg %p104
        %p170 = pneg %p101
        %p171 = scmp.lt.s32.totalorder %s15, 1
        %s172 = scalar_select %p171, %s15, 1
        %s173 = smul.addr %s172, 26
        %s174 = smul.addr %s173, 8
        %s175 = scalar_lea.vmem %s3, %s174
        %p176 = scmp.lt.s32.totalorder %s15, 1
        %s177 = scalar_select %p176, %s15, 1
        %s178 = smul.addr %s177, 64
        %s179 = smul.addr %s178, 8
        %s180 = scalar_lea.vmem %s0, %s179
        %p181 = scmp.lt.s32.totalorder %s15, 1
        %s182 = scalar_select %p181, %s15, 1
        %s183 = smul.addr %s182, 26
        %s184 = smul.addr %s183, 8
        %s185 = scalar_lea.vmem %s3, %s184
        %v186 = vld [vmem:[%s180] sm:$0xff]
        %v187 = vld [vmem:[%s180 + $0x8] sm:$0xff]
        %v188 = vld [vmem:[%s180 + $0x10] sm:$0xff]
        %v189 = vld [vmem:[%s180 + $0x18] sm:$0xff]
        %v190 = vld [vmem:[%s180 + $0x20] sm:$0xff]
        %v191 = vld [vmem:[%s180 + $0x28] sm:$0xff]
        %v192 = vld [vmem:[%s180 + $0x30] sm:$0xff]
        %v193 = vld [vmem:[%s180 + $0x38] sm:$0xff]
        %v194 = vld [vmem:[%s180 + $0x40] sm:$0xff]
        %v195 = vld [vmem:[%s180 + $0x48] sm:$0xff]
        %v196 = vld [vmem:[%s180 + $0x50] sm:$0xff]
        %v197 = vld [vmem:[%s180 + $0x58] sm:$0xff]
        %v198 = vld [vmem:[%s180 + $0x60] sm:$0xff]
        %v199 = vld [vmem:[%s180 + $0x68] sm:$0xff]
        %v200 = vld [vmem:[%s180 + $0x70] sm:$0xff]
        %v201 = vld [vmem:[%s180 + $0x78] sm:$0xff]
        %v202 = vld [vmem:[%s180 + $0x80] sm:$0xff]
        %v203 = vld [vmem:[%s180 + $0x88] sm:$0xff]
        %v204 = vld [vmem:[%s180 + $0x90] sm:$0xff]
        %v205 = vld [vmem:[%s180 + $0x98] sm:$0xff]
        %v206 = vld [vmem:[%s180 + $0xa0] sm:$0xff]
        %v207 = vld [vmem:[%s180 + $0xa8] sm:$0xff]
        %v208 = vld [vmem:[%s180 + $0xb0] sm:$0xff]
        %v209 = vld [vmem:[%s180 + $0xb8] sm:$0xff]
        %v210 = vld [vmem:[%s180 + $0xc0] sm:$0xff]
        %v211 = vld [vmem:[%s180 + $0xc8] sm:$0xff]
        %v212 = vld [vmem:[%s180 + $0xd0] sm:$0xff]
        %v213 = vld [vmem:[%s180 + $0xd8] sm:$0xff]
        %v214 = vld [vmem:[%s180 + $0xe0] sm:$0xff]
        %v215 = vld [vmem:[%s180 + $0xe8] sm:$0xff]
        %v216 = vld [vmem:[%s180 + $0xf0] sm:$0xff]
        %v217 = vld [vmem:[%s180 + $0xf8] sm:$0xff]
        %v218 = vld [vmem:[%s180 + $0x100] sm:$0xff]
        %v219 = vld [vmem:[%s180 + $0x108] sm:$0xff]
        %v220 = vld [vmem:[%s180 + $0x110] sm:$0xff]
        %v221 = vld [vmem:[%s180 + $0x118] sm:$0xff]
        %v222 = vld [vmem:[%s180 + $0x120] sm:$0xff]
        %v223 = vld [vmem:[%s180 + $0x128] sm:$0xff]
        %v224 = vld [vmem:[%s180 + $0x130] sm:$0xff]
        %v225 = vld [vmem:[%s180 + $0x138] sm:$0xff]
        %v226 = vld [vmem:[%s180 + $0x140] sm:$0xff]
        %v227 = vld [vmem:[%s180 + $0x148] sm:$0xff]
        %v228 = vld [vmem:[%s180 + $0x150] sm:$0xff]
        %v229 = vld [vmem:[%s180 + $0x158] sm:$0xff]
        %v230 = vld [vmem:[%s180 + $0x160] sm:$0xff]
        %v231 = vld [vmem:[%s180 + $0x168] sm:$0xff]
        %v232 = vld [vmem:[%s180 + $0x170] sm:$0xff]
        %v233 = vld [vmem:[%s180 + $0x178] sm:$0xff]
        %v234 = vld [vmem:[%s180 + $0x180] sm:$0xff]
        %v235 = vld [vmem:[%s180 + $0x188] sm:$0xff]
        %v236 = vld [vmem:[%s180 + $0x190] sm:$0xff]
        %v237 = vld [vmem:[%s180 + $0x198] sm:$0xff]
        %v238 = vld [vmem:[%s180 + $0x1a0] sm:$0xff]
        %v239 = vld [vmem:[%s180 + $0x1a8] sm:$0xff]
        %v240 = vld [vmem:[%s180 + $0x1b0] sm:$0xff]
        %v241 = vld [vmem:[%s180 + $0x1b8] sm:$0xff]
        %v242 = vld [vmem:[%s180 + $0x1c0] sm:$0xff]
        %v243 = vld [vmem:[%s180 + $0x1c8] sm:$0xff]
        %v244 = vld [vmem:[%s180 + $0x1d0] sm:$0xff]
        %v245 = vld [vmem:[%s180 + $0x1d8] sm:$0xff]
        %v246 = vld [vmem:[%s180 + $0x1e0] sm:$0xff]
        %v247 = vld [vmem:[%s180 + $0x1e8] sm:$0xff]
        %v248 = vld [vmem:[%s180 + $0x1f0] sm:$0xff]
        %v249 = vld [vmem:[%s180 + $0x1f8] sm:$0xff]
        %v250 = vpack.c.bf16 %v188, %v186
        %v251 = vpack.c.bf16 %v189, %v187
        %v252 = vpack.c.bf16 %v192, %v190
        %v253 = vpack.c.bf16 %v193, %v191
        %v254 = vpack.c.bf16 %v196, %v194
        %v255 = vpack.c.bf16 %v197, %v195
        %v256 = vpack.c.bf16 %v200, %v198
        %v257 = vpack.c.bf16 %v201, %v199
        %v258 = vpack.c.bf16 %v204, %v202
        %v259 = vpack.c.bf16 %v205, %v203
        %v260 = vpack.c.bf16 %v208, %v206
        %v261 = vpack.c.bf16 %v209, %v207
        %v262 = vpack.c.bf16 %v212, %v210
        %v263 = vpack.c.bf16 %v213, %v211
        %v264 = vpack.c.bf16 %v216, %v214
        %v265 = vpack.c.bf16 %v217, %v215
        %v266 = vpack.c.bf16 %v220, %v218
        %v267 = vpack.c.bf16 %v221, %v219
        %v268 = vpack.c.bf16 %v224, %v222
        %v269 = vpack.c.bf16 %v225, %v223
        %v270 = vpack.c.bf16 %v228, %v226
        %v271 = vpack.c.bf16 %v229, %v227
        %v272 = vpack.c.bf16 %v232, %v230
        %v273 = vpack.c.bf16 %v233, %v231
        %v274 = vpack.c.bf16 %v236, %v234
        %v275 = vpack.c.bf16 %v237, %v235
        %v276 = vpack.c.bf16 %v240, %v238
        %v277 = vpack.c.bf16 %v241, %v239
        %v278 = vpack.c.bf16 %v244, %v242
        %v279 = vpack.c.bf16 %v245, %v243
        %v280 = vpack.c.bf16 %v248, %v246
        %v281 = vpack.c.bf16 %v249, %v247
        %v282 = vld [vmem:[#allocation2] sm:$0xff]
        %v283 = vld [vmem:[#allocation2 + $0x8] sm:$0xff]
        %v284 = vld [vmem:[#allocation2 + $0x10] sm:$0xff]
        %v285 = vld [vmem:[#allocation2 + $0x18] sm:$0xff]
        %v286 = vld [vmem:[#allocation2 + $0x20] sm:$0xff]
        %v287 = vld [vmem:[#allocation2 + $0x28] sm:$0xff]
        %v288 = vld [vmem:[#allocation2 + $0x30] sm:$0xff]
        %v289 = vld [vmem:[#allocation2 + $0x38] sm:$0xff]
        %v290 = vld [vmem:[#allocation2 + $0x40] sm:$0xff]
        %v291 = vld [vmem:[#allocation2 + $0x48] sm:$0xff]
        %v292 = vld [vmem:[#allocation2 + $0x50] sm:$0xff]
        %v293 = vld [vmem:[#allocation2 + $0x58] sm:$0xff]
        %v294 = vld [vmem:[#allocation2 + $0x60] sm:$0x33]
        %v295 = vld [vmem:[%s2] sm:$0xff]
        %v296 = vld [vmem:[%s2 + $0x8] sm:$0xff]
        %v297 = vld [vmem:[%s2 + $0x10] sm:$0xff]
        %v298 = vld [vmem:[%s2 + $0x18] sm:$0xff]
        %v299 = vld [vmem:[%s2 + $0x20] sm:$0xff]
        %v300 = vld [vmem:[%s2 + $0x28] sm:$0xff]
        %v301 = vld [vmem:[%s2 + $0x30] sm:$0xff]
        %v302 = vld [vmem:[%s2 + $0x38] sm:$0xff]
        %v303 = vld [vmem:[%s2 + $0x40] sm:$0xff]
        %v304 = vld [vmem:[%s2 + $0x48] sm:$0xff]
        %v305 = vld [vmem:[%s2 + $0x50] sm:$0xff]
        %v306 = vld [vmem:[%s2 + $0x58] sm:$0xff]
        %v307 = vld [vmem:[%s2 + $0x60] sm:$0xf]
        %309 = vset.pattern.permute.xlu0 0
        %310 = vperm.xlu0 %309, %v295
        %v311 = vpop.permute.xlu0 %310
        %314 = vset.pattern.permute.xlu0 0
        %315 = vperm.xlu0 %314, %v296
        %v316 = vpop.permute.xlu0 %315
        %319 = vset.pattern.permute.xlu0 0
        %320 = vperm.xlu0 %319, %v297
        %v321 = vpop.permute.xlu0 %320
        %324 = vset.pattern.permute.xlu0 0
        %325 = vperm.xlu0 %324, %v298
        %v326 = vpop.permute.xlu0 %325
        %329 = vset.pattern.permute.xlu0 0
        %330 = vperm.xlu0 %329, %v299
        %v331 = vpop.permute.xlu0 %330
        %334 = vset.pattern.permute.xlu0 0
        %335 = vperm.xlu0 %334, %v300
        %v336 = vpop.permute.xlu0 %335
        %339 = vset.pattern.permute.xlu0 0
        %340 = vperm.xlu0 %339, %v301
        %v341 = vpop.permute.xlu0 %340
        %344 = vset.pattern.permute.xlu0 0
        %345 = vperm.xlu0 %344, %v302
        %v346 = vpop.permute.xlu0 %345
        %349 = vset.pattern.permute.xlu0 0
        %350 = vperm.xlu0 %349, %v303
        %v351 = vpop.permute.xlu0 %350
        %354 = vset.pattern.permute.xlu0 0
        %355 = vperm.xlu0 %354, %v304
        %v356 = vpop.permute.xlu0 %355
        %359 = vset.pattern.permute.xlu0 0
        %360 = vperm.xlu0 %359, %v305
        %v361 = vpop.permute.xlu0 %360
        %364 = vset.pattern.permute.xlu0 0
        %365 = vperm.xlu0 %364, %v306
        %v366 = vpop.permute.xlu0 %365
        %369 = vset.pattern.permute.xlu0 0
        %370 = vperm.xlu0 %369, %v307
        %v371 = vpop.permute.xlu0 %370
        %v386 = vunpack.c.l.b16 %v282
        %v387 = vunpack.c.h.b16 %v282
        %v388 = vunpack.c.l.b16 %v283
        %v389 = vunpack.c.h.b16 %v283
        %v390 = vunpack.c.l.b16 %v284
        %v391 = vunpack.c.h.b16 %v284
        %v392 = vunpack.c.l.b16 %v285
        %v393 = vunpack.c.h.b16 %v285
        %v394 = vunpack.c.l.b16 %v286
        %v395 = vunpack.c.h.b16 %v286
        %v396 = vunpack.c.l.b16 %v287
        %v397 = vunpack.c.h.b16 %v287
        %v398 = vunpack.c.l.b16 %v288
        %v399 = vunpack.c.h.b16 %v288
        %v400 = vunpack.c.l.b16 %v289
        %v401 = vunpack.c.h.b16 %v289
        %v402 = vunpack.c.l.b16 %v290
        %v403 = vunpack.c.h.b16 %v290
        %v404 = vunpack.c.l.b16 %v291
        %v405 = vunpack.c.h.b16 %v291
        %v406 = vunpack.c.l.b16 %v292
        %v407 = vunpack.c.h.b16 %v292
        %v408 = vunpack.c.l.b16 %v293
        %v409 = vunpack.c.h.b16 %v293
        %v410 = vunpack.c.l.b16 %v294
        %v411 = vunpack.c.h.b16 %v294
        %v412 = vpack.c.b16 %v388, %v386
        %v413 = vpack.c.b16 %v389, %v387
        %v414 = vpack.c.b16 %v392, %v390
        %v415 = vpack.c.b16 %v393, %v391
        %v416 = vpack.c.b16 %v396, %v394
        %v417 = vpack.c.b16 %v397, %v395
        %v418 = vpack.c.b16 %v400, %v398
        %v419 = vpack.c.b16 %v401, %v399
        %v420 = vpack.c.b16 %v404, %v402
        %v421 = vpack.c.b16 %v405, %v403
        %v422 = vpack.c.b16 %v408, %v406
        %v423 = vpack.c.b16 %v409, %v407
        %v424 = vpack.c.b16 %v410, %v410
        %v425 = vpack.c.b16 %v411, %v411
        %440 = vmatprep.subr.bf16.mxu0 %v265
        %441 = vmatpush1.bf16.msra.mxu0 %v264
        %442 = vmatprep.subr.bf16.mxu0 %v263
        %443 = vmatpush1.bf16.msra.mxu0 %v262
        %444 = vmatprep.subr.bf16.mxu0 %v261
        %445 = vmatpush1.bf16.msra.mxu0 %v260
        %446 = vmatprep.subr.bf16.mxu0 %v259
        %447 = vmatpush1.bf16.msra.mxu0 %v258
        %448 = vmatprep.subr.bf16.mxu0 %v257
        %449 = vmatpush1.bf16.msra.mxu0 %v256
        %450 = vmatprep.subr.bf16.mxu0 %v255
        %451 = vmatpush1.bf16.msra.mxu0 %v254
        %452 = vmatprep.subr.bf16.mxu0 %v253
        %453 = vmatpush1.bf16.msra.mxu0 %v252
        %454 = vmatprep.subr.bf16.mxu0 %v251
        %455 = vmatpush1.bf16.msra.mxu0 %v250
        %456 = vmatprep.subr.bf16.mxu0 %v281
        %457 = vmatpush2.bf16.msra.mxu0 %v280
        %458 = vmatprep.subr.bf16.mxu0 %v279
        %459 = vmatpush2.bf16.msra.mxu0 %v278
        %460 = vmatprep.subr.bf16.mxu0 %v277
        %461 = vmatpush2.bf16.msra.mxu0 %v276
        %462 = vmatprep.subr.bf16.mxu0 %v275
        %463 = vmatpush2.bf16.msra.mxu0 %v274
        %464 = vmatprep.subr.bf16.mxu0 %v273
        %465 = vmatpush2.bf16.msra.mxu0 %v272
        %466 = vmatprep.subr.bf16.mxu0 %v271
        %467 = vmatpush2.bf16.msra.mxu0 %v270
        %468 = vmatprep.subr.bf16.mxu0 %v269
        %469 = vmatpush2.bf16.msra.mxu0 %v268
        %470 = vmatprep.subr.bf16.mxu0 %v267
        %471 = vmatpush2.bf16.msra.mxu0 %v266
        %472 = vmatprep.mubr.bf16.mxu0 %v413
        %473 = vmatmul.mubr.bf16.gmra.mxu0 %v412
        %v474 = vpop.f32.mrf.mxu0
        %v475 = vadd.f32 %v311, %v474
        %v476 = vpop.f32.mrf.mxu0
        %v477 = vadd.f32 %v311, %v476
        %v478 = vpop.f32.mrf.mxu0
        %v479 = vadd.f32 %v316, %v478
        %v480 = vpop.f32.mrf.mxu0
        %v481 = vadd.f32 %v316, %v480
        %482 = vmatprep.mubr.bf16.mxu0 %v415
        %483 = vmatmul.mubr.bf16.gmra.mxu0 %v414
        %v484 = vpop.f32.mrf.mxu0
        %v485 = vadd.f32 %v321, %v484
        %v486 = vpop.f32.mrf.mxu0
        %v487 = vadd.f32 %v321, %v486
        %v488 = vpop.f32.mrf.mxu0
        %v489 = vadd.f32 %v326, %v488
        %v490 = vpop.f32.mrf.mxu0
        %v491 = vadd.f32 %v326, %v490
        %492 = vmatprep.mubr.bf16.mxu0 %v417
        %493 = vmatmul.mubr.bf16.gmra.mxu0 %v416
        %v494 = vpop.f32.mrf.mxu0
        %v495 = vadd.f32 %v331, %v494
        %v496 = vpop.f32.mrf.mxu0
        %v497 = vadd.f32 %v331, %v496
        %v498 = vpop.f32.mrf.mxu0
        %v499 = vadd.f32 %v336, %v498
        %v500 = vpop.f32.mrf.mxu0
        %v501 = vadd.f32 %v336, %v500
        %502 = vmatprep.mubr.bf16.mxu0 %v419
        %503 = vmatmul.mubr.bf16.gmra.mxu0 %v418
        %v504 = vpop.f32.mrf.mxu0
        %v505 = vadd.f32 %v341, %v504
        %v506 = vpop.f32.mrf.mxu0
        %v507 = vadd.f32 %v341, %v506
        %v508 = vpop.f32.mrf.mxu0
        %v509 = vadd.f32 %v346, %v508
        %v510 = vpop.f32.mrf.mxu0
        %v511 = vadd.f32 %v346, %v510
        %512 = vmatprep.mubr.bf16.mxu0 %v421
        %513 = vmatmul.mubr.bf16.gmra.mxu0 %v420
        %v514 = vpop.f32.mrf.mxu0
        %v515 = vadd.f32 %v351, %v514
        %v516 = vpop.f32.mrf.mxu0
        %v517 = vadd.f32 %v351, %v516
        %v518 = vpop.f32.mrf.mxu0
        %v519 = vadd.f32 %v356, %v518
        %v520 = vpop.f32.mrf.mxu0
        %v521 = vadd.f32 %v356, %v520
        %522 = vmatprep.mubr.bf16.mxu0 %v423
        %523 = vmatmul.mubr.bf16.gmra.mxu0 %v422
        %v524 = vpop.f32.mrf.mxu0
        %v525 = vadd.f32 %v361, %v524
        %v526 = vpop.f32.mrf.mxu0
        %v527 = vadd.f32 %v361, %v526
        %v528 = vpop.f32.mrf.mxu0
        %v529 = vadd.f32 %v366, %v528
        %v530 = vpop.f32.mrf.mxu0
        %v531 = vadd.f32 %v366, %v530
        %532 = vmatprep.mubr.bf16.mxu0 %v425
        %533 = vmatmul.mubr.bf16.gmra.mxu0 %v424
        %v534 = vpop.f32.mrf.mxu0
        %v535 = vadd.f32 %v371, %v534
        %v536 = vpop.f32.mrf.mxu0
        %v537 = vadd.f32 %v371, %v536
        %v538 = vpop.f32.mrf.mxu0
        %v539 = vpop.f32.mrf.mxu0
        %540 = vdwg.mxu0
        %v541 = vmax.f32 %v475, 0.0
        %v542 = vmax.f32 %v477, 0.0
        %v543 = vmax.f32 %v479, 0.0
        %v544 = vmax.f32 %v481, 0.0
        %v545 = vmax.f32 %v485, 0.0
        %v546 = vmax.f32 %v487, 0.0
        %v547 = vmax.f32 %v489, 0.0
        %v548 = vmax.f32 %v491, 0.0
        %v549 = vmax.f32 %v495, 0.0
        %v550 = vmax.f32 %v497, 0.0
        %v551 = vmax.f32 %v499, 0.0
        %v552 = vmax.f32 %v501, 0.0
        %v553 = vmax.f32 %v505, 0.0
        %v554 = vmax.f32 %v507, 0.0
        %v555 = vmax.f32 %v509, 0.0
        %v556 = vmax.f32 %v511, 0.0
        %v557 = vmax.f32 %v515, 0.0
        %v558 = vmax.f32 %v517, 0.0
        %v559 = vmax.f32 %v519, 0.0
        %v560 = vmax.f32 %v521, 0.0
        %v561 = vmax.f32 %v525, 0.0
        %v562 = vmax.f32 %v527, 0.0
        %v563 = vmax.f32 %v529, 0.0
        %v564 = vmax.f32 %v531, 0.0
        %v565 = vmax.f32 %v535, 0.0
        %v566 = vmax.f32 %v537, 0.0
        %567 = vst [vmem:[%s185] sm:$0xff] %v541
        %vm568 = vcmask 556032
        %569 = vst.msk [vmem:[%s185 + $0x8] sm:$0xff] %vm568, %v542
        %570 = vst [vmem:[%s185 + $0x10] sm:$0xff] %v543
        %571 = vst.msk [vmem:[%s185 + $0x18] sm:$0xff] %vm568, %v544
        %572 = vst [vmem:[%s185 + $0x20] sm:$0xff] %v545
        %573 = vst.msk [vmem:[%s185 + $0x28] sm:$0xff] %vm568, %v546
        %574 = vst [vmem:[%s185 + $0x30] sm:$0xff] %v547
        %575 = vst.msk [vmem:[%s185 + $0x38] sm:$0xff] %vm568, %v548
        %576 = vst [vmem:[%s185 + $0x40] sm:$0xff] %v549
        %577 = vst.msk [vmem:[%s185 + $0x48] sm:$0xff] %vm568, %v550
        %578 = vst [vmem:[%s185 + $0x50] sm:$0xff] %v551
        %579 = vst.msk [vmem:[%s185 + $0x58] sm:$0xff] %vm568, %v552
        %580 = vst [vmem:[%s185 + $0x60] sm:$0xff] %v553
        %581 = vst.msk [vmem:[%s185 + $0x68] sm:$0xff] %vm568, %v554
        %582 = vst [vmem:[%s185 + $0x70] sm:$0xff] %v555
        %583 = vst.msk [vmem:[%s185 + $0x78] sm:$0xff] %vm568, %v556
        %584 = vst [vmem:[%s185 + $0x80] sm:$0xff] %v557
        %585 = vst.msk [vmem:[%s185 + $0x88] sm:$0xff] %vm568, %v558
        %586 = vst [vmem:[%s185 + $0x90] sm:$0xff] %v559
        %587 = vst.msk [vmem:[%s185 + $0x98] sm:$0xff] %vm568, %v560
        %588 = vst [vmem:[%s185 + $0xa0] sm:$0xff] %v561
        %589 = vst.msk [vmem:[%s185 + $0xa8] sm:$0xff] %vm568, %v562
        %590 = vst [vmem:[%s185 + $0xb0] sm:$0xff] %v563
        %591 = vst.msk [vmem:[%s185 + $0xb8] sm:$0xff] %vm568, %v564
        %592 = vst [vmem:[%s185 + $0xc0] sm:$0xf] %v565
        %vm593 = vcmask 551936
        %594 = vst.msk [vmem:[%s185 + $0xc8] sm:$0xf] %vm593, %v566
        %p595 = scmp.lt.s32.totalorder %s15, 1
        %s596 = scalar_select %p595, %s15, 1
        %s597 = smul.addr %s596, 26
        %s598 = smul.addr %s597, 8
        %s599 = scalar_lea.vmem %s3, %s598
        // Predicated region
        $region37: #{ms_block14_forward.2} parent=31 // pred_check
          %p600 = pneg %p101
        $region38: #{ms_block14_forward.2} parent=31 // pred_check_branch
          %602 = sbr.rel (%p600) target = $region40
        $region39: #{ms_block14_forward.2} parent=31 // pred_region
          _
        $region40: #{ms_block14_forward.2} parent=31 // pred_fallthru
          _
      $region32: #{ms_block14_forward.2} parent=5 // pred_fallthru
        _
      %p603 = scmp.le.s32.totalorder 2, %s10
      // Predicated region
      $region41: #{ms_block14_forward.2} parent=5 // pred_check
        %p604 = pneg %p603
      $region42: #{ms_block14_forward.2} parent=5 // pred_check_branch
        %606 = sbr.rel (%p604) target = $region44
      $region43: #{ms_block14_forward.2} parent=5 // pred_region
        %s607 = ssub.s32 %s10, 2
        // Predicated region
        $region45: #{ms_block14_forward.2} parent=43 // pred_check
          %p608 = pneg %p107
        $region46: #{ms_block14_forward.2} parent=43 // pred_check_branch
          %610 = sbr.rel (%p608) target = $region48
        $region47: #{ms_block14_forward.2} parent=43 // pred_region
          %p611 = scmp.lt.s32.totalorder %s16, 1
          %s612 = scalar_select %p611, %s16, 1
          %s613 = smul.addr %s612, 26
          %s614 = smul.addr %s613, 8
          %s615 = scalar_lea.vmem %s3, %s614
        $region48: #{ms_block14_forward.2} parent=43 // pred_fallthru
          _
      $region44: #{ms_block14_forward.2} parent=5 // pred_fallthru
        _
    $region6: #{ms_block14_forward.2} parent=1 // loop_footer
      %s14 = sadd.s32 1, %s10
    $region7: #{ms_block14_forward.2} parent=1 // loop_footer_branch
      %9 = sbr.rel target = $region3
    $region8: #{ms_block14_forward.2} parent=1 // loop_exit
      _
    %616 = vsyncpa [#allocation3], 1
    %s617 = scalar_lea.sflag [#allocation3], 1
    %618 = vsyncpa %s617, 1

// kernel: ms_block14_forward.3
$region0: #{ms_block14_forward.3}
  #allocation0 [shape = 'u32[]', space=smem, size = 0x4, offset = 0x4, fixed_abs, tag = 'smem constant byte address 0x4 - core index']
  #allocation1 [shape = 'u32[144,128]{1,0:T(1,128)}', space=vmem, size = 0x12000, scoped, tag = 'internal scratch']
  %s0 = inlined_call_operand.vmem [shape: f32[2,19712], index: 0, kind: input, shape index: {}]
  %s1 = inlined_call_operand.vmem [shape: bf16[19712,196], index: 1, kind: input, shape index: {}]
  %s2 = inlined_call_operand.vmem [shape: f32[2,2,196], index: 2, kind: output, shape index: {}]
  %s3 = sld [smem:[#allocation0]]
  $region41: #{ms_block14_forward.3} parent=0
    _
  %s5 = ssub.s32 1, %s3
  %s6 = scalar_select 0, %s5, %s3
  loop: start=0, step=1, limit=4
  $region2: #{ms_block14_forward.3} parent=0 // loop_pre_header
    _
  $region3: #{ms_block14_forward.3} parent=0 // loop_header
    %s8 = sphi 0, %s12
    %p9 = scmp.ge.s32.totalorder %s8, 4
    %s18 = sphi 0, %s20
    %s21 = sphi 0, %s18
    %s22 = sphi 0, %s21
    %s38 = sphi 0, %s22
    %s44 = sphi 0, %s46
    %s47 = sphi 0, %s44
    %s48 = sphi 0, %s47
    %s64 = sphi 0, %s48
    %s70 = sphi 0, %s72
    %s73 = sphi 0, %s70
    %s74 = sphi 0, %s73
    %s90 = sphi 0, %s74
  $region4: #{ms_block14_forward.3} parent=0 // loop_header_branch
    %11 = sbr.rel (%p9) target = $region8
  $region5: #{ms_block14_forward.3} parent=0 // loop_body
    %s13 = ssub.s32 %s8, 1
    %s14 = ssub.s32 %s8, 2
    %s15 = sadd.s32 %s8, 1
    %s16 = ssub.s32 %s8, %s15
    %p17 = scmp.eq.s32.totalorder %s16, 0
    %s19 = sadd.s32 %s18, 1
    %s20 = scalar_select %p17, %s18, %s19
    %p23 = pneg %p17
    %p24 = scmp.eq.s32.totalorder %s8, 1
    %p25 = por %p23, %p24
    %p26 = scmp.ne.s32.totalorder %s18, %s21
    %p27 = scmp.eq.s32.totalorder %s8, 0
    %p28 = por %p26, %p27
    %p29 = scmp.ne.s32.totalorder %s18, %s21
    %p30 = scmp.eq.s32.totalorder %s13, 1
    %p31 = por %p29, %p30
    %p32 = scmp.ne.s32.totalorder %s21, %s22
    %p33 = scmp.eq.s32.totalorder %s13, 0
    %p34 = por %p32, %p33
    %p35 = scmp.ne.s32.totalorder %s21, %s22
    %p36 = scmp.eq.s32.totalorder %s14, 1
    %p37 = por %p35, %p36
    %p39 = scmp.ne.s32.totalorder %s22, %s38
    %p40 = scmp.eq.s32.totalorder %s14, 0
    %p41 = por %p39, %p40
    %s42 = ssub.s32 %s8, %s15
    %p43 = scmp.eq.s32.totalorder %s42, 0
    %s45 = sadd.s32 %s44, 1
    %s46 = scalar_select %p43, %s44, %s45
    %p49 = pneg %p43
    %p50 = scmp.eq.s32.totalorder %s8, 1
    %p51 = por %p49, %p50
    %p52 = scmp.ne.s32.totalorder %s44, %s47
    %p53 = scmp.eq.s32.totalorder %s8, 0
    %p54 = por %p52, %p53
    %p55 = scmp.ne.s32.totalorder %s44, %s47
    %p56 = scmp.eq.s32.totalorder %s13, 1
    %p57 = por %p55, %p56
    %p58 = scmp.ne.s32.totalorder %s47, %s48
    %p59 = scmp.eq.s32.totalorder %s13, 0
    %p60 = por %p58, %p59
    %p61 = scmp.ne.s32.totalorder %s47, %s48
    %p62 = scmp.eq.s32.totalorder %s14, 1
    %p63 = por %p61, %p62
    %p65 = scmp.ne.s32.totalorder %s48, %s64
    %p66 = scmp.eq.s32.totalorder %s14, 0
    %p67 = por %p65, %p66
    %s68 = ssub.s32 %s8, %s15
    %p69 = scmp.eq.s32.totalorder %s68, 0
    %s71 = sadd.s32 %s70, 1
    %s72 = scalar_select %p69, %s70, %s71
    %p75 = pneg %p69
    %p76 = scmp.eq.s32.totalorder %s8, 1
    %p77 = por %p75, %p76
    %p78 = scmp.ne.s32.totalorder %s70, %s73
    %p79 = scmp.eq.s32.totalorder %s8, 0
    %p80 = por %p78, %p79
    %p81 = scmp.ne.s32.totalorder %s70, %s73
    %p82 = scmp.eq.s32.totalorder %s13, 1
    %p83 = por %p81, %p82
    %p84 = scmp.ne.s32.totalorder %s73, %s74
    %p85 = scmp.eq.s32.totalorder %s13, 0
    %p86 = por %p84, %p85
    %p87 = scmp.ne.s32.totalorder %s73, %s74
    %p88 = scmp.eq.s32.totalorder %s14, 1
    %p89 = por %p87, %p88
    %p91 = scmp.ne.s32.totalorder %s74, %s90
    %p92 = scmp.eq.s32.totalorder %s14, 0
    %p93 = por %p91, %p92
    %p94 = scmp.le.s32.totalorder 1, %s8
    %p95 = scmp.lt.s32.totalorder %s8, 3
    %p96 = pnand %p94, %p95
    %p97 = pneg %p96
    // Predicated region
    $region9: #{ms_block14_forward.3} parent=5 // pred_check
      _
    $region10: #{ms_block14_forward.3} parent=5 // pred_check_branch
      %99 = sbr.rel (%p96) target = $region12
    $region11: #{ms_block14_forward.3} parent=5 // pred_region
      %s100 = ssub.s32 %s8, 1
    $region12: #{ms_block14_forward.3} parent=5 // pred_fallthru
      _
    %p101 = scmp.lt.s32.totalorder %s8, 2
    // Predicated region
    $region13: #{ms_block14_forward.3} parent=5 // pred_check
      %p102 = pneg %p101
    $region14: #{ms_block14_forward.3} parent=5 // pred_check_branch
      %104 = sbr.rel (%p102) target = $region16
    $region15: #{ms_block14_forward.3} parent=5 // pred_region
      // Predicated region
      $region17: #{ms_block14_forward.3} parent=15 // pred_check
        %p105 = pneg %p28
      $region18: #{ms_block14_forward.3} parent=15 // pred_check_branch
        %107 = sbr.rel (%p105) target = $region20
      $region19: #{ms_block14_forward.3} parent=15 // pred_region
        %s108 = smul.u32 77, %s8
        %p109 = scmp.lt.s32.totalorder %s108, 153
        %s110 = scalar_select %p109, %s108, 153
        %s111 = smul.addr %s110, 2
        %s112 = scalar_lea.vmem %s0, %s111
        %s113 = smul.u32 77, %s8
      $region20: #{ms_block14_forward.3} parent=15 // pred_fallthru
        _
      // Predicated region
      $region21: #{ms_block14_forward.3} parent=15 // pred_check
        %p114 = pneg %p54
      $region22: #{ms_block14_forward.3} parent=15 // pred_check_branch
        %116 = sbr.rel (%p114) target = $region24
      $region23: #{ms_block14_forward.3} parent=15 // pred_region
        %s117 = smul.u32 1232, %s8
        %p118 = scmp.lt.s32.totalorder %s117, 2463
        %s119 = scalar_select %p118, %s117, 2463
        %s120 = smul.addr %s119, 2
        %s121 = smul.addr %s120, 4
        %s122 = scalar_lea.vmem %s1, %s121
        %s123 = smul.u32 1232, %s8
      $region24: #{ms_block14_forward.3} parent=15 // pred_fallthru
        _
    $region16: #{ms_block14_forward.3} parent=5 // pred_fallthru
      _
    %p124 = scmp.le.s32.totalorder 1, %s8
    %p125 = scmp.lt.s32.totalorder %s8, 3
    %p126 = pnand %p124, %p125
    %p127 = pneg %p126
    // Predicated region
    $region25: #{ms_block14_forward.3} parent=5 // pred_check
      _
    $region26: #{ms_block14_forward.3} parent=5 // pred_check_branch
      %129 = sbr.rel (%p126) target = $region28
    $region27: #{ms_block14_forward.3} parent=5 // pred_region
      %s130 = ssub.s32 %s8, 1
      %s131 = smul.u32 77, %s13
      %p132 = scmp.lt.s32.totalorder %s131, 153
      %s133 = scalar_select %p132, %s131, 153
      %s134 = smul.addr %s133, 2
      %s135 = scalar_lea.vmem %s0, %s134
      %p136 = pneg %p34
      %p137 = pneg %p31
      %s138 = smul.u32 1232, %s13
      %p139 = scmp.lt.s32.totalorder %s138, 2463
      %s140 = scalar_select %p139, %s138, 2463
      %s141 = smul.addr %s140, 2
      %s142 = smul.addr %s141, 4
      %s143 = scalar_lea.vmem %s1, %s142
      %p144 = pneg %p60
      %p145 = pneg %p57
      %p146 = pneg %p86
      %p147 = pneg %p83
      %p148 = scmp.lt.s32.totalorder %s13, 1
      %s149 = scalar_select %p148, %s13, 1
      %s150 = smul.addr %s149, 2
      %s151 = smul.addr %s150, 2
      %s152 = scalar_lea.vmem %s2, %s151
      %s153 = smul.u32 77, %s13
      %p154 = scmp.lt.s32.totalorder %s153, 153
      %s155 = scalar_select %p154, %s153, 153
      %s156 = smul.addr %s155, 2
      %s157 = scalar_lea.vmem %s0, %s156
      %s158 = smul.u32 77, %s13
      %s159 = smul.u32 1232, %s13
      %p160 = scmp.lt.s32.totalorder %s159, 2463
      %s161 = scalar_select %p160, %s159, 2463
      %s162 = smul.addr %s161, 2
      %s163 = smul.addr %s162, 4
      %s164 = scalar_lea.vmem %s1, %s163
      %s165 = smul.u32 1232, %s13
      %p166 = scmp.lt.s32.totalorder %s13, 1
      %s167 = scalar_select %p166, %s13, 1
      %s168 = smul.addr %s167, 2
      %s169 = smul.addr %s168, 2
      %s170 = scalar_lea.vmem %s2, %s169
      %v172 = vld [vmem:[%s157] sm:$0xff]
      %v173 = vld [vmem:[%s157 + $0x8] sm:$0xff]
      %v174 = vld [vmem:[%s157 + $0x10] sm:$0xff]
      %v175 = vld [vmem:[%s157 + $0x18] sm:$0xff]
      %v176 = vld [vmem:[%s157 + $0x20] sm:$0xff]
      %v177 = vld [vmem:[%s157 + $0x28] sm:$0xff]
      %v178 = vld [vmem:[%s157 + $0x30] sm:$0xff]
      %v179 = vld [vmem:[%s157 + $0x38] sm:$0xff]
      %v180 = vld [vmem:[%s157 + $0x40] sm:$0xff]
      %v181 = vld [vmem:[%s157 + $0x48] sm:$0xff]
      %v182 = vld [vmem:[%s157 + $0x50] sm:$0xff]
      %v183 = vld [vmem:[%s157 + $0x58] sm:$0xff]
      %v184 = vld [vmem:[%s157 + $0x60] sm:$0xff]
      %v185 = vld [vmem:[%s157 + $0x68] sm:$0xff]
      %v186 = vld [vmem:[%s157 + $0x70] sm:$0xff]
      %v187 = vld [vmem:[%s157 + $0x78] sm:$0xff]
      %v188 = vld [vmem:[%s157 + $0x80] sm:$0xff]
      %v189 = vld [vmem:[%s157 + $0x88] sm:$0xff]
      %v190 = vld [vmem:[%s157 + $0x90] sm:$0xff]
      %v191 = vld [vmem:[%s157 + $0x98] sm:$0x3]
      %v212 = vcombine.high %v172, %v172
      %v214 = vunpack.c.l.s4 1983009808
      %v215 = vunpack.c.0.s8 %v214
      %v216 = vlaneseq
      %v217 = vshrl.u32 %v216, 7
      %v218 = vsub.s32 %v215, %v217
      %v219 = vrot.slane %v172, %v218
      %v221 = vunpack.c.l.s4 1983009808
      %v222 = vunpack.c.0.s8 %v221
      %v223 = vlaneseq
      %v224 = vshrl.u32 %v223, 7
      %v225 = vsub.s32 %v222, %v224
      %v226 = vrot.slane %v212, %v225
      %v227 = vcombine.high %v219, %v219
      %v228 = vcombine.high %v226, %v226
      %v229 = vcombine.high %v173, %v173
      %v231 = vunpack.c.l.s4 1983009808
      %v232 = vunpack.c.0.s8 %v231
      %v233 = vlaneseq
      %v234 = vshrl.u32 %v233, 7
      %v235 = vsub.s32 %v232, %v234
      %v236 = vrot.slane %v173, %v235
      %v238 = vunpack.c.l.s4 1983009808
      %v239 = vunpack.c.0.s8 %v238
      %v240 = vlaneseq
      %v241 = vshrl.u32 %v240, 7
      %v242 = vsub.s32 %v239, %v241
      %v243 = vrot.slane %v229, %v242
      %v244 = vcombine.high %v236, %v236
      %v245 = vcombine.high %v243, %v243
      %v246 = vcombine.high %v174, %v174
      %v248 = vunpack.c.l.s4 1983009808
      %v249 = vunpack.c.0.s8 %v248
      %v250 = vlaneseq
      %v251 = vshrl.u32 %v250, 7
      %v252 = vsub.s32 %v249, %v251
      %v253 = vrot.slane %v174, %v252
      %v255 = vunpack.c.l.s4 1983009808
      %v256 = vunpack.c.0.s8 %v255
      %v257 = vlaneseq
      %v258 = vshrl.u32 %v257, 7
      %v259 = vsub.s32 %v256, %v258
      %v260 = vrot.slane %v246, %v259
      %v261 = vcombine.high %v253, %v253
      %v262 = vcombine.high %v260, %v260
      %v263 = vcombine.high %v175, %v175
      %v265 = vunpack.c.l.s4 1983009808
      %v266 = vunpack.c.0.s8 %v265
      %v267 = vlaneseq
      %v268 = vshrl.u32 %v267, 7
      %v269 = vsub.s32 %v266, %v268
      %v270 = vrot.slane %v175, %v269
      %v272 = vunpack.c.l.s4 1983009808
      %v273 = vunpack.c.0.s8 %v272
      %v274 = vlaneseq
      %v275 = vshrl.u32 %v274, 7
      %v276 = vsub.s32 %v273, %v275
      %v277 = vrot.slane %v263, %v276
      %v278 = vcombine.high %v270, %v270
      %v279 = vcombine.high %v277, %v277
      %v280 = vcombine.high %v176, %v176
      %v282 = vunpack.c.l.s4 1983009808
      %v283 = vunpack.c.0.s8 %v282
      %v284 = vlaneseq
      %v285 = vshrl.u32 %v284, 7
      %v286 = vsub.s32 %v283, %v285
      %v287 = vrot.slane %v176, %v286
      %v289 = vunpack.c.l.s4 1983009808
      %v290 = vunpack.c.0.s8 %v289
      %v291 = vlaneseq
      %v292 = vshrl.u32 %v291, 7
      %v293 = vsub.s32 %v290, %v292
      %v294 = vrot.slane %v280, %v293
      %v295 = vcombine.high %v287, %v287
      %v296 = vcombine.high %v294, %v294
      %v297 = vcombine.high %v177, %v177
      %v299 = vunpack.c.l.s4 1983009808
      %v300 = vunpack.c.0.s8 %v299
      %v301 = vlaneseq
      %v302 = vshrl.u32 %v301, 7
      %v303 = vsub.s32 %v300, %v302
      %v304 = vrot.slane %v177, %v303
      %v306 = vunpack.c.l.s4 1983009808
      %v307 = vunpack.c.0.s8 %v306
      %v308 = vlaneseq
      %v309 = vshrl.u32 %v308, 7
      %v310 = vsub.s32 %v307, %v309
      %v311 = vrot.slane %v297, %v310
      %v312 = vcombine.high %v304, %v304
      %v313 = vcombine.high %v311, %v311
      %v314 = vcombine.high %v178, %v178
      %v316 = vunpack.c.l.s4 1983009808
      %v317 = vunpack.c.0.s8 %v316
      %v318 = vlaneseq
      %v319 = vshrl.u32 %v318, 7
      %v320 = vsub.s32 %v317, %v319
      %v321 = vrot.slane %v178, %v320
      %v323 = vunpack.c.l.s4 1983009808
      %v324 = vunpack.c.0.s8 %v323
      %v325 = vlaneseq
      %v326 = vshrl.u32 %v325, 7
      %v327 = vsub.s32 %v324, %v326
      %v328 = vrot.slane %v314, %v327
      %v329 = vcombine.high %v321, %v321
      %v330 = vcombine.high %v328, %v328
      %v331 = vcombine.high %v179, %v179
      %v333 = vunpack.c.l.s4 1983009808
      %v334 = vunpack.c.0.s8 %v333
      %v335 = vlaneseq
      %v336 = vshrl.u32 %v335, 7
      %v337 = vsub.s32 %v334, %v336
      %v338 = vrot.slane %v179, %v337
      %v340 = vunpack.c.l.s4 1983009808
      %v341 = vunpack.c.0.s8 %v340
      %v342 = vlaneseq
      %v343 = vshrl.u32 %v342, 7
      %v344 = vsub.s32 %v341, %v343
      %v345 = vrot.slane %v331, %v344
      %v346 = vcombine.high %v338, %v338
      %v347 = vcombine.high %v345, %v345
      %v348 = vcombine.high %v180, %v180
      %v350 = vunpack.c.l.s4 1983009808
      %v351 = vunpack.c.0.s8 %v350
      %v352 = vlaneseq
      %v353 = vshrl.u32 %v352, 7
      %v354 = vsub.s32 %v351, %v353
      %v355 = vrot.slane %v180, %v354
      %v357 = vunpack.c.l.s4 1983009808
      %v358 = vunpack.c.0.s8 %v357
      %v359 = vlaneseq
      %v360 = vshrl.u32 %v359, 7
      %v361 = vsub.s32 %v358, %v360
      %v362 = vrot.slane %v348, %v361
      %v363 = vcombine.high %v355, %v355
      %v364 = vcombine.high %v362, %v362
      %v365 = vcombine.high %v181, %v181
      %v367 = vunpack.c.l.s4 1983009808
      %v368 = vunpack.c.0.s8 %v367
      %v369 = vlaneseq
      %v370 = vshrl.u32 %v369, 7
      %v371 = vsub.s32 %v368, %v370
      %v372 = vrot.slane %v181, %v371
      %v374 = vunpack.c.l.s4 1983009808
      %v375 = vunpack.c.0.s8 %v374
      %v376 = vlaneseq
      %v377 = vshrl.u32 %v376, 7
      %v378 = vsub.s32 %v375, %v377
      %v379 = vrot.slane %v365, %v378
      %v380 = vcombine.high %v372, %v372
      %v381 = vcombine.high %v379, %v379
      %v382 = vcombine.high %v182, %v182
      %v384 = vunpack.c.l.s4 1983009808
      %v385 = vunpack.c.0.s8 %v384
      %v386 = vlaneseq
      %v387 = vshrl.u32 %v386, 7
      %v388 = vsub.s32 %v385, %v387
      %v389 = vrot.slane %v182, %v388
      %v391 = vunpack.c.l.s4 1983009808
      %v392 = vunpack.c.0.s8 %v391
      %v393 = vlaneseq
      %v394 = vshrl.u32 %v393, 7
      %v395 = vsub.s32 %v392, %v394
      %v396 = vrot.slane %v382, %v395
      %v397 = vcombine.high %v389, %v389
      %v398 = vcombine.high %v396, %v396
      %v399 = vcombine.high %v183, %v183
      %v401 = vunpack.c.l.s4 1983009808
      %v402 = vunpack.c.0.s8 %v401
      %v403 = vlaneseq
      %v404 = vshrl.u32 %v403, 7
      %v405 = vsub.s32 %v402, %v404
      %v406 = vrot.slane %v183, %v405
      %v408 = vunpack.c.l.s4 1983009808
      %v409 = vunpack.c.0.s8 %v408
      %v410 = vlaneseq
      %v411 = vshrl.u32 %v410, 7
      %v412 = vsub.s32 %v409, %v411
      %v413 = vrot.slane %v399, %v412
      %v414 = vcombine.high %v406, %v406
      %v415 = vcombine.high %v413, %v413
      %v416 = vcombine.high %v184, %v184
      %v418 = vunpack.c.l.s4 1983009808
      %v419 = vunpack.c.0.s8 %v418
      %v420 = vlaneseq
      %v421 = vshrl.u32 %v420, 7
      %v422 = vsub.s32 %v419, %v421
      %v423 = vrot.slane %v184, %v422
      %v425 = vunpack.c.l.s4 1983009808
      %v426 = vunpack.c.0.s8 %v425
      %v427 = vlaneseq
      %v428 = vshrl.u32 %v427, 7
      %v429 = vsub.s32 %v426, %v428
      %v430 = vrot.slane %v416, %v429
      %v431 = vcombine.high %v423, %v423
      %v432 = vcombine.high %v430, %v430
      %v433 = vcombine.high %v185, %v185
      %v435 = vunpack.c.l.s4 1983009808
      %v436 = vunpack.c.0.s8 %v435
      %v437 = vlaneseq
      %v438 = vshrl.u32 %v437, 7
      %v439 = vsub.s32 %v436, %v438
      %v440 = vrot.slane %v185, %v439
      %v442 = vunpack.c.l.s4 1983009808
      %v443 = vunpack.c.0.s8 %v442
      %v444 = vlaneseq
      %v445 = vshrl.u32 %v444, 7
      %v446 = vsub.s32 %v443, %v445
      %v447 = vrot.slane %v433, %v446
      %v448 = vcombine.high %v440, %v440
      %v449 = vcombine.high %v447, %v447
      %v450 = vcombine.high %v186, %v186
      %v452 = vunpack.c.l.s4 1983009808
      %v453 = vunpack.c.0.s8 %v452
      %v454 = vlaneseq
      %v455 = vshrl.u32 %v454, 7
      %v456 = vsub.s32 %v453, %v455
      %v457 = vrot.slane %v186, %v456
      %v459 = vunpack.c.l.s4 1983009808
      %v460 = vunpack.c.0.s8 %v459
      %v461 = vlaneseq
      %v462 = vshrl.u32 %v461, 7
      %v463 = vsub.s32 %v460, %v462
      %v464 = vrot.slane %v450, %v463
      %v465 = vcombine.high %v457, %v457
      %v466 = vcombine.high %v464, %v464
      %v467 = vcombine.high %v187, %v187
      %v469 = vunpack.c.l.s4 1983009808
      %v470 = vunpack.c.0.s8 %v469
      %v471 = vlaneseq
      %v472 = vshrl.u32 %v471, 7
      %v473 = vsub.s32 %v470, %v472
      %v474 = vrot.slane %v187, %v473
      %v476 = vunpack.c.l.s4 1983009808
      %v477 = vunpack.c.0.s8 %v476
      %v478 = vlaneseq
      %v479 = vshrl.u32 %v478, 7
      %v480 = vsub.s32 %v477, %v479
      %v481 = vrot.slane %v467, %v480
      %v482 = vcombine.high %v474, %v474
      %v483 = vcombine.high %v481, %v481
      %v484 = vcombine.high %v188, %v188
      %v486 = vunpack.c.l.s4 1983009808
      %v487 = vunpack.c.0.s8 %v486
      %v488 = vlaneseq
      %v489 = vshrl.u32 %v488, 7
      %v490 = vsub.s32 %v487, %v489
      %v491 = vrot.slane %v188, %v490
      %v493 = vunpack.c.l.s4 1983009808
      %v494 = vunpack.c.0.s8 %v493
      %v495 = vlaneseq
      %v496 = vshrl.u32 %v495, 7
      %v497 = vsub.s32 %v494, %v496
      %v498 = vrot.slane %v484, %v497
      %v499 = vcombine.high %v491, %v491
      %v500 = vcombine.high %v498, %v498
      %v501 = vcombine.high %v189, %v189
      %v503 = vunpack.c.l.s4 1983009808
      %v504 = vunpack.c.0.s8 %v503
      %v505 = vlaneseq
      %v506 = vshrl.u32 %v505, 7
      %v507 = vsub.s32 %v504, %v506
      %v508 = vrot.slane %v189, %v507
      %v510 = vunpack.c.l.s4 1983009808
      %v511 = vunpack.c.0.s8 %v510
      %v512 = vlaneseq
      %v513 = vshrl.u32 %v512, 7
      %v514 = vsub.s32 %v511, %v513
      %v515 = vrot.slane %v501, %v514
      %v516 = vcombine.high %v508, %v508
      %v517 = vcombine.high %v515, %v515
      %v518 = vcombine.high %v190, %v190
      %v520 = vunpack.c.l.s4 1983009808
      %v521 = vunpack.c.0.s8 %v520
      %v522 = vlaneseq
      %v523 = vshrl.u32 %v522, 7
      %v524 = vsub.s32 %v521, %v523
      %v525 = vrot.slane %v190, %v524
      %v527 = vunpack.c.l.s4 1983009808
      %v528 = vunpack.c.0.s8 %v527
      %v529 = vlaneseq
      %v530 = vshrl.u32 %v529, 7
      %v531 = vsub.s32 %v528, %v530
      %v532 = vrot.slane %v518, %v531
      %v533 = vcombine.high %v525, %v525
      %v534 = vcombine.high %v532, %v532
      %v536 = vunpack.c.l.s4 1983009808
      %v537 = vunpack.c.0.s8 %v536
      %v538 = vlaneseq
      %v539 = vshrl.u32 %v538, 7
      %v540 = vsub.s32 %v537, %v539
      %v541 = vrot.slane %v191, %v540
      %v619 = vpack.c.bf16 %v219, %v219
      %v620 = vpack.c.bf16 %v227, %v227
      %v621 = vpack.c.bf16 %v226, %v226
      %v622 = vpack.c.bf16 %v228, %v228
      %v623 = vpack.c.bf16 %v236, %v236
      %v624 = vpack.c.bf16 %v244, %v244
      %v625 = vpack.c.bf16 %v243, %v243
      %v626 = vpack.c.bf16 %v245, %v245
      %v627 = vpack.c.bf16 %v253, %v253
      %v628 = vpack.c.bf16 %v261, %v261
      %v629 = vpack.c.bf16 %v260, %v260
      %v630 = vpack.c.bf16 %v262, %v262
      %v631 = vpack.c.bf16 %v270, %v270
      %v632 = vpack.c.bf16 %v278, %v278
      %v633 = vpack.c.bf16 %v277, %v277
      %v634 = vpack.c.bf16 %v279, %v279
      %v635 = vpack.c.bf16 %v287, %v287
      %v636 = vpack.c.bf16 %v295, %v295
      %v637 = vpack.c.bf16 %v294, %v294
      %v638 = vpack.c.bf16 %v296, %v296
      %v639 = vpack.c.bf16 %v304, %v304
      %v640 = vpack.c.bf16 %v312, %v312
      %v641 = vpack.c.bf16 %v311, %v311
      %v642 = vpack.c.bf16 %v313, %v313
      %v643 = vpack.c.bf16 %v321, %v321
      %v644 = vpack.c.bf16 %v329, %v329
      %v645 = vpack.c.bf16 %v328, %v328
      %v646 = vpack.c.bf16 %v330, %v330
      %v647 = vpack.c.bf16 %v338, %v338
      %v648 = vpack.c.bf16 %v346, %v346
      %v649 = vpack.c.bf16 %v345, %v345
      %v650 = vpack.c.bf16 %v347, %v347
      %v651 = vpack.c.bf16 %v355, %v355
      %v652 = vpack.c.bf16 %v363, %v363
      %v653 = vpack.c.bf16 %v362, %v362
      %v654 = vpack.c.bf16 %v364, %v364
      %v655 = vpack.c.bf16 %v372, %v372
      %v656 = vpack.c.bf16 %v380, %v380
      %v657 = vpack.c.bf16 %v379, %v379
      %v658 = vpack.c.bf16 %v381, %v381
      %v659 = vpack.c.bf16 %v389, %v389
      %v660 = vpack.c.bf16 %v397, %v397
      %v661 = vpack.c.bf16 %v396, %v396
      %v662 = vpack.c.bf16 %v398, %v398
      %v663 = vpack.c.bf16 %v406, %v406
      %v664 = vpack.c.bf16 %v414, %v414
      %v665 = vpack.c.bf16 %v413, %v413
      %v666 = vpack.c.bf16 %v415, %v415
      %v667 = vpack.c.bf16 %v423, %v423
      %v668 = vpack.c.bf16 %v431, %v431
      %v669 = vpack.c.bf16 %v430, %v430
      %v670 = vpack.c.bf16 %v432, %v432
      %v671 = vpack.c.bf16 %v440, %v440
      %v672 = vpack.c.bf16 %v448, %v448
      %v673 = vpack.c.bf16 %v447, %v447
      %v674 = vpack.c.bf16 %v449, %v449
      %v675 = vpack.c.bf16 %v457, %v457
      %v676 = vpack.c.bf16 %v465, %v465
      %v677 = vpack.c.bf16 %v464, %v464
      %v678 = vpack.c.bf16 %v466, %v466
      %v679 = vpack.c.bf16 %v474, %v474
      %v680 = vpack.c.bf16 %v482, %v482
      %v681 = vpack.c.bf16 %v481, %v481
      %v682 = vpack.c.bf16 %v483, %v483
      %v683 = vpack.c.bf16 %v491, %v491
      %v684 = vpack.c.bf16 %v499, %v499
      %v685 = vpack.c.bf16 %v498, %v498
      %v686 = vpack.c.bf16 %v500, %v500
      %v687 = vpack.c.bf16 %v508, %v508
      %v688 = vpack.c.bf16 %v516, %v516
      %v689 = vpack.c.bf16 %v515, %v515
      %v690 = vpack.c.bf16 %v517, %v517
      %v691 = vpack.c.bf16 %v525, %v525
      %v692 = vpack.c.bf16 %v533, %v533
      %v693 = vpack.c.bf16 %v532, %v532
      %v694 = vpack.c.bf16 %v534, %v534
      %v695 = vpack.c.bf16 %v541, %v541
      %v696 = vunpack.c.l.bf16 %v619
      %v697 = vunpack.c.l.bf16 %v620
      %v698 = vunpack.c.l.bf16 %v621
      %v699 = vunpack.c.l.bf16 %v622
      %v700 = vunpack.c.l.bf16 %v623
      %v701 = vunpack.c.l.bf16 %v624
      %v702 = vunpack.c.l.bf16 %v625
      %v703 = vunpack.c.l.bf16 %v626
      %v704 = vunpack.c.l.bf16 %v627
      %v705 = vunpack.c.l.bf16 %v628
      %v706 = vunpack.c.l.bf16 %v629
      %v707 = vunpack.c.l.bf16 %v630
      %v708 = vunpack.c.l.bf16 %v631
      %v709 = vunpack.c.l.bf16 %v632
      %v710 = vunpack.c.l.bf16 %v633
      %v711 = vunpack.c.l.bf16 %v634
      %v712 = vunpack.c.l.bf16 %v635
      %v713 = vunpack.c.l.bf16 %v636
      %v714 = vunpack.c.l.bf16 %v637
      %v715 = vunpack.c.l.bf16 %v638
      %v716 = vunpack.c.l.bf16 %v639
      %v717 = vunpack.c.l.bf16 %v640
      %v718 = vunpack.c.l.bf16 %v641
      %v719 = vunpack.c.l.bf16 %v642
      %v720 = vunpack.c.l.bf16 %v643
      %v721 = vunpack.c.l.bf16 %v644
      %v722 = vunpack.c.l.bf16 %v645
      %v723 = vunpack.c.l.bf16 %v646
      %v724 = vunpack.c.l.bf16 %v647
      %v725 = vunpack.c.l.bf16 %v648
      %v726 = vunpack.c.l.bf16 %v649
      %v727 = vunpack.c.l.bf16 %v650
      %v728 = vunpack.c.l.bf16 %v651
      %v729 = vunpack.c.l.bf16 %v652
      %v730 = vunpack.c.l.bf16 %v653
      %v731 = vunpack.c.l.bf16 %v654
      %v732 = vunpack.c.l.bf16 %v655
      %v733 = vunpack.c.l.bf16 %v656
      %v734 = vunpack.c.l.bf16 %v657
      %v735 = vunpack.c.l.bf16 %v658
      %v736 = vunpack.c.l.bf16 %v659
      %v737 = vunpack.c.l.bf16 %v660
      %v738 = vunpack.c.l.bf16 %v661
      %v739 = vunpack.c.l.bf16 %v662
      %v740 = vunpack.c.l.bf16 %v663
      %v741 = vunpack.c.l.bf16 %v664
      %v742 = vunpack.c.l.bf16 %v665
      %v743 = vunpack.c.l.bf16 %v666
      %v744 = vunpack.c.l.bf16 %v667
      %v745 = vunpack.c.l.bf16 %v668
      %v746 = vunpack.c.l.bf16 %v669
      %v747 = vunpack.c.l.bf16 %v670
      %v748 = vunpack.c.l.bf16 %v671
      %v749 = vunpack.c.l.bf16 %v672
      %v750 = vunpack.c.l.bf16 %v673
      %v751 = vunpack.c.l.bf16 %v674
      %v752 = vunpack.c.l.bf16 %v675
      %v753 = vunpack.c.l.bf16 %v676
      %v754 = vunpack.c.l.bf16 %v677
      %v755 = vunpack.c.l.bf16 %v678
      %v756 = vunpack.c.l.bf16 %v679
      %v757 = vunpack.c.l.bf16 %v680
      %v758 = vunpack.c.l.bf16 %v681
      %v759 = vunpack.c.l.bf16 %v682
      %v760 = vunpack.c.l.bf16 %v683
      %v761 = vunpack.c.l.bf16 %v684
      %v762 = vunpack.c.l.bf16 %v685
      %v763 = vunpack.c.l.bf16 %v686
      %v764 = vunpack.c.l.bf16 %v687
      %v765 = vunpack.c.l.bf16 %v688
      %v766 = vunpack.c.l.bf16 %v689
      %v767 = vunpack.c.l.bf16 %v690
      %v768 = vunpack.c.l.bf16 %v691
      %v769 = vunpack.c.l.bf16 %v692
      %v770 = vunpack.c.l.bf16 %v693
      %v771 = vunpack.c.l.bf16 %v694
      %v772 = vunpack.c.l.bf16 %v695
      %v850 = vcombine.low %v696, %v697
      %v851 = vcombine.low %v698, %v699
      %v853 = vunpack.c.l.s4 1983009808
      %v854 = vunpack.c.0.s8 %v853
      %v855 = vlaneseq
      %v856 = vshrl.u32 %v855, 7
      %v857 = vsub.s32 %v854, %v856
      %v858 = vrot.slane %v850, %v857
      %v860 = vunpack.c.l.s4 1983009808
      %v861 = vunpack.c.0.s8 %v860
      %v862 = vlaneseq
      %v863 = vshrl.u32 %v862, 7
      %v864 = vsub.s32 %v861, %v863
      %v865 = vrot.slane %v851, %v864
      %v866 = vcombine.low %v858, %v865
      %v867 = vcombine.low %v700, %v701
      %v868 = vcombine.low %v702, %v703
      %v870 = vunpack.c.l.s4 1983009808
      %v871 = vunpack.c.0.s8 %v870
      %v872 = vlaneseq
      %v873 = vshrl.u32 %v872, 7
      %v874 = vsub.s32 %v871, %v873
      %v875 = vrot.slane %v867, %v874
      %v877 = vunpack.c.l.s4 1983009808
      %v878 = vunpack.c.0.s8 %v877
      %v879 = vlaneseq
      %v880 = vshrl.u32 %v879, 7
      %v881 = vsub.s32 %v878, %v880
      %v882 = vrot.slane %v868, %v881
      %v883 = vcombine.low %v875, %v882
      %v884 = vcombine.low %v704, %v705
      %v885 = vcombine.low %v706, %v707
      %v887 = vunpack.c.l.s4 1983009808
      %v888 = vunpack.c.0.s8 %v887
      %v889 = vlaneseq
      %v890 = vshrl.u32 %v889, 7
      %v891 = vsub.s32 %v888, %v890
      %v892 = vrot.slane %v884, %v891
      %v894 = vunpack.c.l.s4 1983009808
      %v895 = vunpack.c.0.s8 %v894
      %v896 = vlaneseq
      %v897 = vshrl.u32 %v896, 7
      %v898 = vsub.s32 %v895, %v897
      %v899 = vrot.slane %v885, %v898
      %v900 = vcombine.low %v892, %v899
      %v901 = vcombine.low %v708, %v709
      %v902 = vcombine.low %v710, %v711
      %v904 = vunpack.c.l.s4 1983009808
      %v905 = vunpack.c.0.s8 %v904
      %v906 = vlaneseq
      %v907 = vshrl.u32 %v906, 7
      %v908 = vsub.s32 %v905, %v907
      %v909 = vrot.slane %v901, %v908
      %v911 = vunpack.c.l.s4 1983009808
      %v912 = vunpack.c.0.s8 %v911
      %v913 = vlaneseq
      %v914 = vshrl.u32 %v913, 7
      %v915 = vsub.s32 %v912, %v914
      %v916 = vrot.slane %v902, %v915
      %v917 = vcombine.low %v909, %v916
      %v918 = vcombine.low %v712, %v713
      %v919 = vcombine.low %v714, %v715
      %v921 = vunpack.c.l.s4 1983009808
      %v922 = vunpack.c.0.s8 %v921
      %v923 = vlaneseq
      %v924 = vshrl.u32 %v923, 7
      %v925 = vsub.s32 %v922, %v924
      %v926 = vrot.slane %v918, %v925
      %v928 = vunpack.c.l.s4 1983009808
      %v929 = vunpack.c.0.s8 %v928
      %v930 = vlaneseq
      %v931 = vshrl.u32 %v930, 7
      %v932 = vsub.s32 %v929, %v931
      %v933 = vrot.slane %v919, %v932
      %v934 = vcombine.low %v926, %v933
      %v935 = vcombine.low %v716, %v717
      %v936 = vcombine.low %v718, %v719
      %v938 = vunpack.c.l.s4 1983009808
      %v939 = vunpack.c.0.s8 %v938
      %v940 = vlaneseq
      %v941 = vshrl.u32 %v940, 7
      %v942 = vsub.s32 %v939, %v941
      %v943 = vrot.slane %v935, %v942
      %v945 = vunpack.c.l.s4 1983009808
      %v946 = vunpack.c.0.s8 %v945
      %v947 = vlaneseq
      %v948 = vshrl.u32 %v947, 7
      %v949 = vsub.s32 %v946, %v948
      %v950 = vrot.slane %v936, %v949
      %v951 = vcombine.low %v943, %v950
      %v952 = vcombine.low %v720, %v721
      %v953 = vcombine.low %v722, %v723
      %v955 = vunpack.c.l.s4 1983009808
      %v956 = vunpack.c.0.s8 %v955
      %v957 = vlaneseq
      %v958 = vshrl.u32 %v957, 7
      %v959 = vsub.s32 %v956, %v958
      %v960 = vrot.slane %v952, %v959
      %v962 = vunpack.c.l.s4 1983009808
      %v963 = vunpack.c.0.s8 %v962
      %v964 = vlaneseq
      %v965 = vshrl.u32 %v964, 7
      %v966 = vsub.s32 %v963, %v965
      %v967 = vrot.slane %v953, %v966
      %v968 = vcombine.low %v960, %v967
      %v969 = vcombine.low %v724, %v725
      %v970 = vcombine.low %v726, %v727
      %v972 = vunpack.c.l.s4 1983009808
      %v973 = vunpack.c.0.s8 %v972
      %v974 = vlaneseq
      %v975 = vshrl.u32 %v974, 7
      %v976 = vsub.s32 %v973, %v975
      %v977 = vrot.slane %v969, %v976
      %v979 = vunpack.c.l.s4 1983009808
      %v980 = vunpack.c.0.s8 %v979
      %v981 = vlaneseq
      %v982 = vshrl.u32 %v981, 7
      %v983 = vsub.s32 %v980, %v982
      %v984 = vrot.slane %v970, %v983
      %v985 = vcombine.low %v977, %v984
      %v986 = vcombine.low %v728, %v729
      %v987 = vcombine.low %v730, %v731
      %v989 = vunpack.c.l.s4 1983009808
      %v990 = vunpack.c.0.s8 %v989
      %v991 = vlaneseq
      %v992 = vshrl.u32 %v991, 7
      %v993 = vsub.s32 %v990, %v992
      %v994 = vrot.slane %v986, %v993
      %v996 = vunpack.c.l.s4 1983009808
      %v997 = vunpack.c.0.s8 %v996
      %v998 = vlaneseq
      %v999 = vshrl.u32 %v998, 7
      %v1000 = vsub.s32 %v997, %v999
      %v1001 = vrot.slane %v987, %v1000
      %v1002 = vcombine.low %v994, %v1001
      %v1003 = vcombine.low %v732, %v733
      %v1004 = vcombine.low %v734, %v735
      %v1006 = vunpack.c.l.s4 1983009808
      %v1007 = vunpack.c.0.s8 %v1006
      %v1008 = vlaneseq
      %v1009 = vshrl.u32 %v1008, 7
      %v1010 = vsub.s32 %v1007, %v1009
      %v1011 = vrot.slane %v1003, %v1010
      %v1013 = vunpack.c.l.s4 1983009808
      %v1014 = vunpack.c.0.s8 %v1013
      %v1015 = vlaneseq
      %v1016 = vshrl.u32 %v1015, 7
      %v1017 = vsub.s32 %v1014, %v1016
      %v1018 = vrot.slane %v1004, %v1017
      %v1019 = vcombine.low %v1011, %v1018
      %v1020 = vcombine.low %v736, %v737
      %v1021 = vcombine.low %v738, %v739
      %v1023 = vunpack.c.l.s4 1983009808
      %v1024 = vunpack.c.0.s8 %v1023
      %v1025 = vlaneseq
      %v1026 = vshrl.u32 %v1025, 7
      %v1027 = vsub.s32 %v1024, %v1026
      %v1028 = vrot.slane %v1020, %v1027
      %v1030 = vunpack.c.l.s4 1983009808
      %v1031 = vunpack.c.0.s8 %v1030
      %v1032 = vlaneseq
      %v1033 = vshrl.u32 %v1032, 7
      %v1034 = vsub.s32 %v1031, %v1033
      %v1035 = vrot.slane %v1021, %v1034
      %v1036 = vcombine.low %v1028, %v1035
      %v1037 = vcombine.low %v740, %v741
      %v1038 = vcombine.low %v742, %v743
      %v1040 = vunpack.c.l.s4 1983009808
      %v1041 = vunpack.c.0.s8 %v1040
      %v1042 = vlaneseq
      %v1043 = vshrl.u32 %v1042, 7
      %v1044 = vsub.s32 %v1041, %v1043
      %v1045 = vrot.slane %v1037, %v1044
      %v1047 = vunpack.c.l.s4 1983009808
      %v1048 = vunpack.c.0.s8 %v1047
      %v1049 = vlaneseq
      %v1050 = vshrl.u32 %v1049, 7
      %v1051 = vsub.s32 %v1048, %v1050
      %v1052 = vrot.slane %v1038, %v1051
      %v1053 = vcombine.low %v1045, %v1052
      %v1054 = vcombine.low %v744, %v745
      %v1055 = vcombine.low %v746, %v747
      %v1057 = vunpack.c.l.s4 1983009808
      %v1058 = vunpack.c.0.s8 %v1057
      %v1059 = vlaneseq
      %v1060 = vshrl.u32 %v1059, 7
      %v1061 = vsub.s32 %v1058, %v1060
      %v1062 = vrot.slane %v1054, %v1061
      %v1064 = vunpack.c.l.s4 1983009808
      %v1065 = vunpack.c.0.s8 %v1064
      %v1066 = vlaneseq
      %v1067 = vshrl.u32 %v1066, 7
      %v1068 = vsub.s32 %v1065, %v1067
      %v1069 = vrot.slane %v1055, %v1068
      %v1070 = vcombine.low %v1062, %v1069
      %v1071 = vcombine.low %v748, %v749
      %v1072 = vcombine.low %v750, %v751
      %v1074 = vunpack.c.l.s4 1983009808
      %v1075 = vunpack.c.0.s8 %v1074
      %v1076 = vlaneseq
      %v1077 = vshrl.u32 %v1076, 7
      %v1078 = vsub.s32 %v1075, %v1077
      %v1079 = vrot.slane %v1071, %v1078
      %v1081 = vunpack.c.l.s4 1983009808
      %v1082 = vunpack.c.0.s8 %v1081
      %v1083 = vlaneseq
      %v1084 = vshrl.u32 %v1083, 7
      %v1085 = vsub.s32 %v1082, %v1084
      %v1086 = vrot.slane %v1072, %v1085
      %v1087 = vcombine.low %v1079, %v1086
      %v1088 = vcombine.low %v752, %v753
      %v1089 = vcombine.low %v754, %v755
      %v1091 = vunpack.c.l.s4 1983009808
      %v1092 = vunpack.c.0.s8 %v1091
      %v1093 = vlaneseq
      %v1094 = vshrl.u32 %v1093, 7
      %v1095 = vsub.s32 %v1092, %v1094
      %v1096 = vrot.slane %v1088, %v1095
      %v1098 = vunpack.c.l.s4 1983009808
      %v1099 = vunpack.c.0.s8 %v1098
      %v1100 = vlaneseq
      %v1101 = vshrl.u32 %v1100, 7
      %v1102 = vsub.s32 %v1099, %v1101
      %v1103 = vrot.slane %v1089, %v1102
      %v1104 = vcombine.low %v1096, %v1103
      %v1105 = vcombine.low %v756, %v757
      %v1106 = vcombine.low %v758, %v759
      %v1108 = vunpack.c.l.s4 1983009808
      %v1109 = vunpack.c.0.s8 %v1108
      %v1110 = vlaneseq
      %v1111 = vshrl.u32 %v1110, 7
      %v1112 = vsub.s32 %v1109, %v1111
      %v1113 = vrot.slane %v1105, %v1112
      %v1115 = vunpack.c.l.s4 1983009808
      %v1116 = vunpack.c.0.s8 %v1115
      %v1117 = vlaneseq
      %v1118 = vshrl.u32 %v1117, 7
      %v1119 = vsub.s32 %v1116, %v1118
      %v1120 = vrot.slane %v1106, %v1119
      %v1121 = vcombine.low %v1113, %v1120
      %v1122 = vcombine.low %v760, %v761
      %v1123 = vcombine.low %v762, %v763
      %v1125 = vunpack.c.l.s4 1983009808
      %v1126 = vunpack.c.0.s8 %v1125
      %v1127 = vlaneseq
      %v1128 = vshrl.u32 %v1127, 7
      %v1129 = vsub.s32 %v1126, %v1128
      %v1130 = vrot.slane %v1122, %v1129
      %v1132 = vunpack.c.l.s4 1983009808
      %v1133 = vunpack.c.0.s8 %v1132
      %v1134 = vlaneseq
      %v1135 = vshrl.u32 %v1134, 7
      %v1136 = vsub.s32 %v1133, %v1135
      %v1137 = vrot.slane %v1123, %v1136
      %v1138 = vcombine.low %v1130, %v1137
      %v1139 = vcombine.low %v764, %v765
      %v1140 = vcombine.low %v766, %v767
      %v1142 = vunpack.c.l.s4 1983009808
      %v1143 = vunpack.c.0.s8 %v1142
      %v1144 = vlaneseq
      %v1145 = vshrl.u32 %v1144, 7
      %v1146 = vsub.s32 %v1143, %v1145
      %v1147 = vrot.slane %v1139, %v1146
      %v1149 = vunpack.c.l.s4 1983009808
      %v1150 = vunpack.c.0.s8 %v1149
      %v1151 = vlaneseq
      %v1152 = vshrl.u32 %v1151, 7
      %v1153 = vsub.s32 %v1150, %v1152
      %v1154 = vrot.slane %v1140, %v1153
      %v1155 = vcombine.low %v1147, %v1154
      %v1156 = vcombine.low %v768, %v769
      %v1157 = vcombine.low %v770, %v771
      %v1159 = vunpack.c.l.s4 1983009808
      %v1160 = vunpack.c.0.s8 %v1159
      %v1161 = vlaneseq
      %v1162 = vshrl.u32 %v1161, 7
      %v1163 = vsub.s32 %v1160, %v1162
      %v1164 = vrot.slane %v1156, %v1163
      %v1166 = vunpack.c.l.s4 1983009808
      %v1167 = vunpack.c.0.s8 %v1166
      %v1168 = vlaneseq
      %v1169 = vshrl.u32 %v1168, 7
      %v1170 = vsub.s32 %v1167, %v1169
      %v1171 = vrot.slane %v1157, %v1170
      %v1172 = vcombine.low %v1164, %v1171
      %v1174 = vunpack.c.l.s4 1983009808
      %v1175 = vunpack.c.0.s8 %v1174
      %v1176 = vlaneseq
      %v1177 = vshrl.u32 %v1176, 7
      %v1178 = vsub.s32 %v1175, %v1177
      %v1179 = vrot.slane %v772, %v1178
      %v1200 = vsub.f32 %v172, %v866
      %v1201 = vsub.f32 %v173, %v883
      %v1202 = vsub.f32 %v174, %v900
      %v1203 = vsub.f32 %v175, %v917
      %v1204 = vsub.f32 %v176, %v934
      %v1205 = vsub.f32 %v177, %v951
      %v1206 = vsub.f32 %v178, %v968
      %v1207 = vsub.f32 %v179, %v985
      %v1208 = vsub.f32 %v180, %v1002
      %v1209 = vsub.f32 %v181, %v1019
      %v1210 = vsub.f32 %v182, %v1036
      %v1211 = vsub.f32 %v183, %v1053
      %v1212 = vsub.f32 %v184, %v1070
      %v1213 = vsub.f32 %v185, %v1087
      %v1214 = vsub.f32 %v186, %v1104
      %v1215 = vsub.f32 %v187, %v1121
      %v1216 = vsub.f32 %v188, %v1138
      %v1217 = vsub.f32 %v189, %v1155
      %v1218 = vsub.f32 %v190, %v1172
      %v1219 = vsub.f32 %v191, %v1179
      %v1240 = vcombine.high %v1200, %v1200
      %v1242 = vunpack.c.l.s4 1983009808
      %v1243 = vunpack.c.0.s8 %v1242
      %v1244 = vlaneseq
      %v1245 = vshrl.u32 %v1244, 7
      %v1246 = vsub.s32 %v1243, %v1245
      %v1247 = vrot.slane %v1200, %v1246
      %v1249 = vunpack.c.l.s4 1983009808
      %v1250 = vunpack.c.0.s8 %v1249
      %v1251 = vlaneseq
      %v1252 = vshrl.u32 %v1251, 7
      %v1253 = vsub.s32 %v1250, %v1252
      %v1254 = vrot.slane %v1240, %v1253
      %v1255 = vcombine.high %v1247, %v1247
      %v1256 = vcombine.high %v1254, %v1254
      %v1257 = vcombine.high %v1201, %v1201
      %v1259 = vunpack.c.l.s4 1983009808
      %v1260 = vunpack.c.0.s8 %v1259
      %v1261 = vlaneseq
      %v1262 = vshrl.u32 %v1261, 7
      %v1263 = vsub.s32 %v1260, %v1262
      %v1264 = vrot.slane %v1201, %v1263
      %v1266 = vunpack.c.l.s4 1983009808
      %v1267 = vunpack.c.0.s8 %v1266
      %v1268 = vlaneseq
      %v1269 = vshrl.u32 %v1268, 7
      %v1270 = vsub.s32 %v1267, %v1269
      %v1271 = vrot.slane %v1257, %v1270
      %v1272 = vcombine.high %v1264, %v1264
      %v1273 = vcombine.high %v1271, %v1271
      %v1274 = vcombine.high %v1202, %v1202
      %v1276 = vunpack.c.l.s4 1983009808
      %v1277 = vunpack.c.0.s8 %v1276
      %v1278 = vlaneseq
      %v1279 = vshrl.u32 %v1278, 7
      %v1280 = vsub.s32 %v1277, %v1279
      %v1281 = vrot.slane %v1202, %v1280
      %v1283 = vunpack.c.l.s4 1983009808
      %v1284 = vunpack.c.0.s8 %v1283
      %v1285 = vlaneseq
      %v1286 = vshrl.u32 %v1285, 7
      %v1287 = vsub.s32 %v1284, %v1286
      %v1288 = vrot.slane %v1274, %v1287
      %v1289 = vcombine.high %v1281, %v1281
      %v1290 = vcombine.high %v1288, %v1288
      %v1291 = vcombine.high %v1203, %v1203
      %v1293 = vunpack.c.l.s4 1983009808
      %v1294 = vunpack.c.0.s8 %v1293
      %v1295 = vlaneseq
      %v1296 = vshrl.u32 %v1295, 7
      %v1297 = vsub.s32 %v1294, %v1296
      %v1298 = vrot.slane %v1203, %v1297
      %v1300 = vunpack.c.l.s4 1983009808
      %v1301 = vunpack.c.0.s8 %v1300
      %v1302 = vlaneseq
      %v1303 = vshrl.u32 %v1302, 7
      %v1304 = vsub.s32 %v1301, %v1303
      %v1305 = vrot.slane %v1291, %v1304
      %v1306 = vcombine.high %v1298, %v1298
      %v1307 = vcombine.high %v1305, %v1305
      %v1308 = vcombine.high %v1204, %v1204
      %v1310 = vunpack.c.l.s4 1983009808
      %v1311 = vunpack.c.0.s8 %v1310
      %v1312 = vlaneseq
      %v1313 = vshrl.u32 %v1312, 7
      %v1314 = vsub.s32 %v1311, %v1313
      %v1315 = vrot.slane %v1204, %v1314
      %v1317 = vunpack.c.l.s4 1983009808
      %v1318 = vunpack.c.0.s8 %v1317
      %v1319 = vlaneseq
      %v1320 = vshrl.u32 %v1319, 7
      %v1321 = vsub.s32 %v1318, %v1320
      %v1322 = vrot.slane %v1308, %v1321
      %v1323 = vcombine.high %v1315, %v1315
      %v1324 = vcombine.high %v1322, %v1322
      %v1325 = vcombine.high %v1205, %v1205
      %v1327 = vunpack.c.l.s4 1983009808
      %v1328 = vunpack.c.0.s8 %v1327
      %v1329 = vlaneseq
      %v1330 = vshrl.u32 %v1329, 7
      %v1331 = vsub.s32 %v1328, %v1330
      %v1332 = vrot.slane %v1205, %v1331
      %v1334 = vunpack.c.l.s4 1983009808
      %v1335 = vunpack.c.0.s8 %v1334
      %v1336 = vlaneseq
      %v1337 = vshrl.u32 %v1336, 7
      %v1338 = vsub.s32 %v1335, %v1337
      %v1339 = vrot.slane %v1325, %v1338
      %v1340 = vcombine.high %v1332, %v1332
      %v1341 = vcombine.high %v1339, %v1339
      %v1342 = vcombine.high %v1206, %v1206
      %v1344 = vunpack.c.l.s4 1983009808
      %v1345 = vunpack.c.0.s8 %v1344
      %v1346 = vlaneseq
      %v1347 = vshrl.u32 %v1346, 7
      %v1348 = vsub.s32 %v1345, %v1347
      %v1349 = vrot.slane %v1206, %v1348
      %v1351 = vunpack.c.l.s4 1983009808
      %v1352 = vunpack.c.0.s8 %v1351
      %v1353 = vlaneseq
      %v1354 = vshrl.u32 %v1353, 7
      %v1355 = vsub.s32 %v1352, %v1354
      %v1356 = vrot.slane %v1342, %v1355
      %v1357 = vcombine.high %v1349, %v1349
      %v1358 = vcombine.high %v1356, %v1356
      %v1359 = vcombine.high %v1207, %v1207
      %v1361 = vunpack.c.l.s4 1983009808
      %v1362 = vunpack.c.0.s8 %v1361
      %v1363 = vlaneseq
      %v1364 = vshrl.u32 %v1363, 7
      %v1365 = vsub.s32 %v1362, %v1364
      %v1366 = vrot.slane %v1207, %v1365
      %v1368 = vunpack.c.l.s4 1983009808
      %v1369 = vunpack.c.0.s8 %v1368
      %v1370 = vlaneseq
      %v1371 = vshrl.u32 %v1370, 7
      %v1372 = vsub.s32 %v1369, %v1371
      %v1373 = vrot.slane %v1359, %v1372
      %v1374 = vcombine.high %v1366, %v1366
      %v1375 = vcombine.high %v1373, %v1373
      %v1376 = vcombine.high %v1208, %v1208
      %v1378 = vunpack.c.l.s4 1983009808
      %v1379 = vunpack.c.0.s8 %v1378
      %v1380 = vlaneseq
      %v1381 = vshrl.u32 %v1380, 7
      %v1382 = vsub.s32 %v1379, %v1381
      %v1383 = vrot.slane %v1208, %v1382
      %v1385 = vunpack.c.l.s4 1983009808
      %v1386 = vunpack.c.0.s8 %v1385
      %v1387 = vlaneseq
      %v1388 = vshrl.u32 %v1387, 7
      %v1389 = vsub.s32 %v1386, %v1388
      %v1390 = vrot.slane %v1376, %v1389
      %v1391 = vcombine.high %v1383, %v1383
      %v1392 = vcombine.high %v1390, %v1390
      %v1393 = vcombine.high %v1209, %v1209
      %v1395 = vunpack.c.l.s4 1983009808
      %v1396 = vunpack.c.0.s8 %v1395
      %v1397 = vlaneseq
      %v1398 = vshrl.u32 %v1397, 7
      %v1399 = vsub.s32 %v1396, %v1398
      %v1400 = vrot.slane %v1209, %v1399
      %v1402 = vunpack.c.l.s4 1983009808
      %v1403 = vunpack.c.0.s8 %v1402
      %v1404 = vlaneseq
      %v1405 = vshrl.u32 %v1404, 7
      %v1406 = vsub.s32 %v1403, %v1405
      %v1407 = vrot.slane %v1393, %v1406
      %v1408 = vcombine.high %v1400, %v1400
      %v1409 = vcombine.high %v1407, %v1407
      %v1410 = vcombine.high %v1210, %v1210
      %v1412 = vunpack.c.l.s4 1983009808
      %v1413 = vunpack.c.0.s8 %v1412
      %v1414 = vlaneseq
      %v1415 = vshrl.u32 %v1414, 7
      %v1416 = vsub.s32 %v1413, %v1415
      %v1417 = vrot.slane %v1210, %v1416
      %v1419 = vunpack.c.l.s4 1983009808
      %v1420 = vunpack.c.0.s8 %v1419
      %v1421 = vlaneseq
      %v1422 = vshrl.u32 %v1421, 7
      %v1423 = vsub.s32 %v1420, %v1422
      %v1424 = vrot.slane %v1410, %v1423
      %v1425 = vcombine.high %v1417, %v1417
      %v1426 = vcombine.high %v1424, %v1424
      %v1427 = vcombine.high %v1211, %v1211
      %v1429 = vunpack.c.l.s4 1983009808
      %v1430 = vunpack.c.0.s8 %v1429
      %v1431 = vlaneseq
      %v1432 = vshrl.u32 %v1431, 7
      %v1433 = vsub.s32 %v1430, %v1432
      %v1434 = vrot.slane %v1211, %v1433
      %v1436 = vunpack.c.l.s4 1983009808
      %v1437 = vunpack.c.0.s8 %v1436
      %v1438 = vlaneseq
      %v1439 = vshrl.u32 %v1438, 7
      %v1440 = vsub.s32 %v1437, %v1439
      %v1441 = vrot.slane %v1427, %v1440
      %v1442 = vcombine.high %v1434, %v1434
      %v1443 = vcombine.high %v1441, %v1441
      %v1444 = vcombine.high %v1212, %v1212
      %v1446 = vunpack.c.l.s4 1983009808
      %v1447 = vunpack.c.0.s8 %v1446
      %v1448 = vlaneseq
      %v1449 = vshrl.u32 %v1448, 7
      %v1450 = vsub.s32 %v1447, %v1449
      %v1451 = vrot.slane %v1212, %v1450
      %v1453 = vunpack.c.l.s4 1983009808
      %v1454 = vunpack.c.0.s8 %v1453
      %v1455 = vlaneseq
      %v1456 = vshrl.u32 %v1455, 7
      %v1457 = vsub.s32 %v1454, %v1456
      %v1458 = vrot.slane %v1444, %v1457
      %v1459 = vcombine.high %v1451, %v1451
      %v1460 = vcombine.high %v1458, %v1458
      %v1461 = vcombine.high %v1213, %v1213
      %v1463 = vunpack.c.l.s4 1983009808
      %v1464 = vunpack.c.0.s8 %v1463
      %v1465 = vlaneseq
      %v1466 = vshrl.u32 %v1465, 7
      %v1467 = vsub.s32 %v1464, %v1466
      %v1468 = vrot.slane %v1213, %v1467
      %v1470 = vunpack.c.l.s4 1983009808
      %v1471 = vunpack.c.0.s8 %v1470
      %v1472 = vlaneseq
      %v1473 = vshrl.u32 %v1472, 7
      %v1474 = vsub.s32 %v1471, %v1473
      %v1475 = vrot.slane %v1461, %v1474
      %v1476 = vcombine.high %v1468, %v1468
      %v1477 = vcombine.high %v1475, %v1475
      %v1478 = vcombine.high %v1214, %v1214
      %v1480 = vunpack.c.l.s4 1983009808
      %v1481 = vunpack.c.0.s8 %v1480
      %v1482 = vlaneseq
      %v1483 = vshrl.u32 %v1482, 7
      %v1484 = vsub.s32 %v1481, %v1483
      %v1485 = vrot.slane %v1214, %v1484
      %v1487 = vunpack.c.l.s4 1983009808
      %v1488 = vunpack.c.0.s8 %v1487
      %v1489 = vlaneseq
      %v1490 = vshrl.u32 %v1489, 7
      %v1491 = vsub.s32 %v1488, %v1490
      %v1492 = vrot.slane %v1478, %v1491
      %v1493 = vcombine.high %v1485, %v1485
      %v1494 = vcombine.high %v1492, %v1492
      %v1495 = vcombine.high %v1215, %v1215
      %v1497 = vunpack.c.l.s4 1983009808
      %v1498 = vunpack.c.0.s8 %v1497
      %v1499 = vlaneseq
      %v1500 = vshrl.u32 %v1499, 7
      %v1501 = vsub.s32 %v1498, %v1500
      %v1502 = vrot.slane %v1215, %v1501
      %v1504 = vunpack.c.l.s4 1983009808
      %v1505 = vunpack.c.0.s8 %v1504
      %v1506 = vlaneseq
      %v1507 = vshrl.u32 %v1506, 7
      %v1508 = vsub.s32 %v1505, %v1507
      %v1509 = vrot.slane %v1495, %v1508
      %v1510 = vcombine.high %v1502, %v1502
      %v1511 = vcombine.high %v1509, %v1509
      %v1512 = vcombine.high %v1216, %v1216
      %v1514 = vunpack.c.l.s4 1983009808
      %v1515 = vunpack.c.0.s8 %v1514
      %v1516 = vlaneseq
      %v1517 = vshrl.u32 %v1516, 7
      %v1518 = vsub.s32 %v1515, %v1517
      %v1519 = vrot.slane %v1216, %v1518
      %v1521 = vunpack.c.l.s4 1983009808
      %v1522 = vunpack.c.0.s8 %v1521
      %v1523 = vlaneseq
      %v1524 = vshrl.u32 %v1523, 7
      %v1525 = vsub.s32 %v1522, %v1524
      %v1526 = vrot.slane %v1512, %v1525
      %v1527 = vcombine.high %v1519, %v1519
      %v1528 = vcombine.high %v1526, %v1526
      %v1529 = vcombine.high %v1217, %v1217
      %v1531 = vunpack.c.l.s4 1983009808
      %v1532 = vunpack.c.0.s8 %v1531
      %v1533 = vlaneseq
      %v1534 = vshrl.u32 %v1533, 7
      %v1535 = vsub.s32 %v1532, %v1534
      %v1536 = vrot.slane %v1217, %v1535
      %v1538 = vunpack.c.l.s4 1983009808
      %v1539 = vunpack.c.0.s8 %v1538
      %v1540 = vlaneseq
      %v1541 = vshrl.u32 %v1540, 7
      %v1542 = vsub.s32 %v1539, %v1541
      %v1543 = vrot.slane %v1529, %v1542
      %v1544 = vcombine.high %v1536, %v1536
      %v1545 = vcombine.high %v1543, %v1543
      %v1546 = vcombine.high %v1218, %v1218
      %v1548 = vunpack.c.l.s4 1983009808
      %v1549 = vunpack.c.0.s8 %v1548
      %v1550 = vlaneseq
      %v1551 = vshrl.u32 %v1550, 7
      %v1552 = vsub.s32 %v1549, %v1551
      %v1553 = vrot.slane %v1218, %v1552
      %v1555 = vunpack.c.l.s4 1983009808
      %v1556 = vunpack.c.0.s8 %v1555
      %v1557 = vlaneseq
      %v1558 = vshrl.u32 %v1557, 7
      %v1559 = vsub.s32 %v1556, %v1558
      %v1560 = vrot.slane %v1546, %v1559
      %v1561 = vcombine.high %v1553, %v1553
      %v1562 = vcombine.high %v1560, %v1560
      %v1564 = vunpack.c.l.s4 1983009808
      %v1565 = vunpack.c.0.s8 %v1564
      %v1566 = vlaneseq
      %v1567 = vshrl.u32 %v1566, 7
      %v1568 = vsub.s32 %v1565, %v1567
      %v1569 = vrot.slane %v1219, %v1568
      %v1647 = vpack.c.bf16 %v1247, %v1247
      %v1648 = vpack.c.bf16 %v1255, %v1255
      %v1649 = vpack.c.bf16 %v1254, %v1254
      %v1650 = vpack.c.bf16 %v1256, %v1256
      %v1651 = vpack.c.bf16 %v1264, %v1264
      %v1652 = vpack.c.bf16 %v1272, %v1272
      %v1653 = vpack.c.bf16 %v1271, %v1271
      %v1654 = vpack.c.bf16 %v1273, %v1273
      %v1655 = vpack.c.bf16 %v1281, %v1281
      %v1656 = vpack.c.bf16 %v1289, %v1289
      %v1657 = vpack.c.bf16 %v1288, %v1288
      %v1658 = vpack.c.bf16 %v1290, %v1290
      %v1659 = vpack.c.bf16 %v1298, %v1298
      %v1660 = vpack.c.bf16 %v1306, %v1306
      %v1661 = vpack.c.bf16 %v1305, %v1305
      %v1662 = vpack.c.bf16 %v1307, %v1307
      %v1663 = vpack.c.bf16 %v1315, %v1315
      %v1664 = vpack.c.bf16 %v1323, %v1323
      %v1665 = vpack.c.bf16 %v1322, %v1322
      %v1666 = vpack.c.bf16 %v1324, %v1324
      %v1667 = vpack.c.bf16 %v1332, %v1332
      %v1668 = vpack.c.bf16 %v1340, %v1340
      %v1669 = vpack.c.bf16 %v1339, %v1339
      %v1670 = vpack.c.bf16 %v1341, %v1341
      %v1671 = vpack.c.bf16 %v1349, %v1349
      %v1672 = vpack.c.bf16 %v1357, %v1357
      %v1673 = vpack.c.bf16 %v1356, %v1356
      %v1674 = vpack.c.bf16 %v1358, %v1358
      %v1675 = vpack.c.bf16 %v1366, %v1366
      %v1676 = vpack.c.bf16 %v1374, %v1374
      %v1677 = vpack.c.bf16 %v1373, %v1373
      %v1678 = vpack.c.bf16 %v1375, %v1375
      %v1679 = vpack.c.bf16 %v1383, %v1383
      %v1680 = vpack.c.bf16 %v1391, %v1391
      %v1681 = vpack.c.bf16 %v1390, %v1390
      %v1682 = vpack.c.bf16 %v1392, %v1392
      %v1683 = vpack.c.bf16 %v1400, %v1400
      %v1684 = vpack.c.bf16 %v1408, %v1408
      %v1685 = vpack.c.bf16 %v1407, %v1407
      %v1686 = vpack.c.bf16 %v1409, %v1409
      %v1687 = vpack.c.bf16 %v1417, %v1417
      %v1688 = vpack.c.bf16 %v1425, %v1425
      %v1689 = vpack.c.bf16 %v1424, %v1424
      %v1690 = vpack.c.bf16 %v1426, %v1426
      %v1691 = vpack.c.bf16 %v1434, %v1434
      %v1692 = vpack.c.bf16 %v1442, %v1442
      %v1693 = vpack.c.bf16 %v1441, %v1441
      %v1694 = vpack.c.bf16 %v1443, %v1443
      %v1695 = vpack.c.bf16 %v1451, %v1451
      %v1696 = vpack.c.bf16 %v1459, %v1459
      %v1697 = vpack.c.bf16 %v1458, %v1458
      %v1698 = vpack.c.bf16 %v1460, %v1460
      %v1699 = vpack.c.bf16 %v1468, %v1468
      %v1700 = vpack.c.bf16 %v1476, %v1476
      %v1701 = vpack.c.bf16 %v1475, %v1475
      %v1702 = vpack.c.bf16 %v1477, %v1477
      %v1703 = vpack.c.bf16 %v1485, %v1485
      %v1704 = vpack.c.bf16 %v1493, %v1493
      %v1705 = vpack.c.bf16 %v1492, %v1492
      %v1706 = vpack.c.bf16 %v1494, %v1494
      %v1707 = vpack.c.bf16 %v1502, %v1502
      %v1708 = vpack.c.bf16 %v1510, %v1510
      %v1709 = vpack.c.bf16 %v1509, %v1509
      %v1710 = vpack.c.bf16 %v1511, %v1511
      %v1711 = vpack.c.bf16 %v1519, %v1519
      %v1712 = vpack.c.bf16 %v1527, %v1527
      %v1713 = vpack.c.bf16 %v1526, %v1526
      %v1714 = vpack.c.bf16 %v1528, %v1528
      %v1715 = vpack.c.bf16 %v1536, %v1536
      %v1716 = vpack.c.bf16 %v1544, %v1544
      %v1717 = vpack.c.bf16 %v1543, %v1543
      %v1718 = vpack.c.bf16 %v1545, %v1545
      %v1719 = vpack.c.bf16 %v1553, %v1553
      %v1720 = vpack.c.bf16 %v1561, %v1561
      %v1721 = vpack.c.bf16 %v1560, %v1560
      %v1722 = vpack.c.bf16 %v1562, %v1562
      %v1723 = vpack.c.bf16 %v1569, %v1569
      %v1724 = vld [vmem:[%s164] sm:$0xff]
      %v1725 = vld [vmem:[%s164 + $0x8] sm:$0xff]
      %v1726 = vld [vmem:[%s164 + $0x10] sm:$0xff]
      %v1727 = vld [vmem:[%s164 + $0x18] sm:$0xff]
      %v1728 = vld [vmem:[%s164 + $0x20] sm:$0xff]
      %v1729 = vld [vmem:[%s164 + $0x28] sm:$0xff]
      %v1730 = vld [vmem:[%s164 + $0x30] sm:$0xff]
      %v1731 = vld [vmem:[%s164 + $0x38] sm:$0xff]
      %v1732 = vld [vmem:[%s164 + $0x40] sm:$0xff]
      %v1733 = vld [vmem:[%s164 + $0x48] sm:$0xff]
      %v1734 = vld [vmem:[%s164 + $0x50] sm:$0xff]
      %v1735 = vld [vmem:[%s164 + $0x58] sm:$0xff]
      %v1736 = vld [vmem:[%s164 + $0x60] sm:$0xff]
      %v1737 = vld [vmem:[%s164 + $0x68] sm:$0xff]
      %v1738 = vld [vmem:[%s164 + $0x70] sm:$0xff]
      %v1739 = vld [vmem:[%s164 + $0x78] sm:$0xff]
      %v1740 = vld [vmem:[%s164 + $0x80] sm:$0xff]
      %v1741 = vld [vmem:[%s164 + $0x88] sm:$0xff]
      %v1742 = vld [vmem:[%s164 + $0x90] sm:$0xff]
      %v1743 = vld [vmem:[%s164 + $0x98] sm:$0xff]
      %v1744 = vld [vmem:[%s164 + $0xa0] sm:$0xff]
      %v1745 = vld [vmem:[%s164 + $0xa8] sm:$0xff]
      %v1746 = vld [vmem:[%s164 + $0xb0] sm:$0xff]
      %v1747 = vld [vmem:[%s164 + $0xb8] sm:$0xff]
      %v1748 = vld [vmem:[%s164 + $0xc0] sm:$0xff]
      %v1749 = vld [vmem:[%s164 + $0xc8] sm:$0xff]
      %v1750 = vld [vmem:[%s164 + $0xd0] sm:$0xff]
      %v1751 = vld [vmem:[%s164 + $0xd8] sm:$0xff]
      %v1752 = vld [vmem:[%s164 + $0xe0] sm:$0xff]
      %v1753 = vld [vmem:[%s164 + $0xe8] sm:$0xff]
      %v1754 = vld [vmem:[%s164 + $0xf0] sm:$0xff]
      %v1755 = vld [vmem:[%s164 + $0xf8] sm:$0xff]
      %v1756 = vld [vmem:[%s164 + $0x100] sm:$0xff]
      %v1757 = vld [vmem:[%s164 + $0x108] sm:$0xff]
      %v1758 = vld [vmem:[%s164 + $0x110] sm:$0xff]
      %v1759 = vld [vmem:[%s164 + $0x118] sm:$0xff]
      %v1760 = vld [vmem:[%s164 + $0x120] sm:$0xff]
      %v1761 = vld [vmem:[%s164 + $0x128] sm:$0xff]
      %v1762 = vld [vmem:[%s164 + $0x130] sm:$0xff]
      %v1763 = vld [vmem:[%s164 + $0x138] sm:$0xff]
      %v1764 = vld [vmem:[%s164 + $0x140] sm:$0xff]
      %v1765 = vld [vmem:[%s164 + $0x148] sm:$0xff]
      %v1766 = vld [vmem:[%s164 + $0x150] sm:$0xff]
      %v1767 = vld [vmem:[%s164 + $0x158] sm:$0xff]
      %v1768 = vld [vmem:[%s164 + $0x160] sm:$0xff]
      %v1769 = vld [vmem:[%s164 + $0x168] sm:$0xff]
      %v1770 = vld [vmem:[%s164 + $0x170] sm:$0xff]
      %v1771 = vld [vmem:[%s164 + $0x178] sm:$0xff]
      %v1772 = vld [vmem:[%s164 + $0x180] sm:$0xff]
      %v1773 = vld [vmem:[%s164 + $0x188] sm:$0xff]
      %v1774 = vld [vmem:[%s164 + $0x190] sm:$0xff]
      %v1775 = vld [vmem:[%s164 + $0x198] sm:$0xff]
      %v1776 = vld [vmem:[%s164 + $0x1a0] sm:$0xff]
      %v1777 = vld [vmem:[%s164 + $0x1a8] sm:$0xff]
      %v1778 = vld [vmem:[%s164 + $0x1b0] sm:$0xff]
      %v1779 = vld [vmem:[%s164 + $0x1b8] sm:$0xff]
      %v1780 = vld [vmem:[%s164 + $0x1c0] sm:$0xff]
      %v1781 = vld [vmem:[%s164 + $0x1c8] sm:$0xff]
      %v1782 = vld [vmem:[%s164 + $0x1d0] sm:$0xff]
      %v1783 = vld [vmem:[%s164 + $0x1d8] sm:$0xff]
      %v1784 = vld [vmem:[%s164 + $0x1e0] sm:$0xff]
      %v1785 = vld [vmem:[%s164 + $0x1e8] sm:$0xff]
      %v1786 = vld [vmem:[%s164 + $0x1f0] sm:$0xff]
      %v1787 = vld [vmem:[%s164 + $0x1f8] sm:$0xff]
      %v1788 = vld [vmem:[%s164 + $0x200] sm:$0xff]
      %v1789 = vld [vmem:[%s164 + $0x208] sm:$0xff]
      %v1790 = vld [vmem:[%s164 + $0x210] sm:$0xff]
      %v1791 = vld [vmem:[%s164 + $0x218] sm:$0xff]
      %v1792 = vld [vmem:[%s164 + $0x220] sm:$0xff]
      %v1793 = vld [vmem:[%s164 + $0x228] sm:$0xff]
      %v1794 = vld [vmem:[%s164 + $0x230] sm:$0xff]
      %v1795 = vld [vmem:[%s164 + $0x238] sm:$0xff]
      %v1796 = vld [vmem:[%s164 + $0x240] sm:$0xff]
      %v1797 = vld [vmem:[%s164 + $0x248] sm:$0xff]
      %v1798 = vld [vmem:[%s164 + $0x250] sm:$0xff]
      %v1799 = vld [vmem:[%s164 + $0x258] sm:$0xff]
      %v1800 = vld [vmem:[%s164 + $0x260] sm:$0xff]
      %v1801 = vld [vmem:[%s164 + $0x268] sm:$0xff]
      %v1802 = vld [vmem:[%s164 + $0x270] sm:$0xff]
      %v1803 = vld [vmem:[%s164 + $0x278] sm:$0xff]
      %v1804 = vld [vmem:[%s164 + $0x280] sm:$0xff]
      %v1805 = vld [vmem:[%s164 + $0x288] sm:$0xff]
      %v1806 = vld [vmem:[%s164 + $0x290] sm:$0xff]
      %v1807 = vld [vmem:[%s164 + $0x298] sm:$0xff]
      %v1808 = vld [vmem:[%s164 + $0x2a0] sm:$0xff]
      %v1809 = vld [vmem:[%s164 + $0x2a8] sm:$0xff]
      %v1810 = vld [vmem:[%s164 + $0x2b0] sm:$0xff]
      %v1811 = vld [vmem:[%s164 + $0x2b8] sm:$0xff]
      %v1812 = vld [vmem:[%s164 + $0x2c0] sm:$0xff]
      %v1813 = vld [vmem:[%s164 + $0x2c8] sm:$0xff]
      %v1814 = vld [vmem:[%s164 + $0x2d0] sm:$0xff]
      %v1815 = vld [vmem:[%s164 + $0x2d8] sm:$0xff]
      %v1816 = vld [vmem:[%s164 + $0x2e0] sm:$0xff]
      %v1817 = vld [vmem:[%s164 + $0x2e8] sm:$0xff]
      %v1818 = vld [vmem:[%s164 + $0x2f0] sm:$0xff]
      %v1819 = vld [vmem:[%s164 + $0x2f8] sm:$0xff]
      %v1820 = vld [vmem:[%s164 + $0x300] sm:$0xff]
      %v1821 = vld [vmem:[%s164 + $0x308] sm:$0xff]
      %v1822 = vld [vmem:[%s164 + $0x310] sm:$0xff]
      %v1823 = vld [vmem:[%s164 + $0x318] sm:$0xff]
      %v1824 = vld [vmem:[%s164 + $0x320] sm:$0xff]
      %v1825 = vld [vmem:[%s164 + $0x328] sm:$0xff]
      %v1826 = vld [vmem:[%s164 + $0x330] sm:$0xff]
      %v1827 = vld [vmem:[%s164 + $0x338] sm:$0xff]
      %v1828 = vld [vmem:[%s164 + $0x340] sm:$0xff]
      %v1829 = vld [vmem:[%s164 + $0x348] sm:$0xff]
      %v1830 = vld [vmem:[%s164 + $0x350] sm:$0xff]
      %v1831 = vld [vmem:[%s164 + $0x358] sm:$0xff]
      %v1832 = vld [vmem:[%s164 + $0x360] sm:$0xff]
      %v1833 = vld [vmem:[%s164 + $0x368] sm:$0xff]
      %v1834 = vld [vmem:[%s164 + $0x370] sm:$0xff]
      %v1835 = vld [vmem:[%s164 + $0x378] sm:$0xff]
      %v1836 = vld [vmem:[%s164 + $0x380] sm:$0xff]
      %v1837 = vld [vmem:[%s164 + $0x388] sm:$0xff]
      %v1838 = vld [vmem:[%s164 + $0x390] sm:$0xff]
      %v1839 = vld [vmem:[%s164 + $0x398] sm:$0xff]
      %v1840 = vld [vmem:[%s164 + $0x3a0] sm:$0xff]
      %v1841 = vld [vmem:[%s164 + $0x3a8] sm:$0xff]
      %v1842 = vld [vmem:[%s164 + $0x3b0] sm:$0xff]
      %v1843 = vld [vmem:[%s164 + $0x3b8] sm:$0xff]
      %v1844 = vld [vmem:[%s164 + $0x3c0] sm:$0xff]
      %v1845 = vld [vmem:[%s164 + $0x3c8] sm:$0xff]
      %v1846 = vld [vmem:[%s164 + $0x3d0] sm:$0xff]
      %v1847 = vld [vmem:[%s164 + $0x3d8] sm:$0xff]
      %v1848 = vld [vmem:[%s164 + $0x3e0] sm:$0xff]
      %v1849 = vld [vmem:[%s164 + $0x3e8] sm:$0xff]
      %v1850 = vld [vmem:[%s164 + $0x3f0] sm:$0xff]
      %v1851 = vld [vmem:[%s164 + $0x3f8] sm:$0xff]
      %v1852 = vld [vmem:[%s164 + $0x400] sm:$0xff]
      %v1853 = vld [vmem:[%s164 + $0x408] sm:$0xff]
      %v1854 = vld [vmem:[%s164 + $0x410] sm:$0xff]
      %v1855 = vld [vmem:[%s164 + $0x418] sm:$0xff]
      %v1856 = vld [vmem:[%s164 + $0x420] sm:$0xff]
      %v1857 = vld [vmem:[%s164 + $0x428] sm:$0xff]
      %v1858 = vld [vmem:[%s164 + $0x430] sm:$0xff]
      %v1859 = vld [vmem:[%s164 + $0x438] sm:$0xff]
      %v1860 = vld [vmem:[%s164 + $0x440] sm:$0xff]
      %v1861 = vld [vmem:[%s164 + $0x448] sm:$0xff]
      %v1862 = vld [vmem:[%s164 + $0x450] sm:$0xff]
      %v1863 = vld [vmem:[%s164 + $0x458] sm:$0xff]
      %v1864 = vld [vmem:[%s164 + $0x460] sm:$0xff]
      %v1865 = vld [vmem:[%s164 + $0x468] sm:$0xff]
      %v1866 = vld [vmem:[%s164 + $0x470] sm:$0xff]
      %v1867 = vld [vmem:[%s164 + $0x478] sm:$0xff]
      %v1868 = vld [vmem:[%s164 + $0x480] sm:$0xff]
      %v1869 = vld [vmem:[%s164 + $0x488] sm:$0xff]
      %v1870 = vld [vmem:[%s164 + $0x490] sm:$0xff]
      %v1871 = vld [vmem:[%s164 + $0x498] sm:$0xff]
      %v1872 = vld [vmem:[%s164 + $0x4a0] sm:$0xff]
      %v1873 = vld [vmem:[%s164 + $0x4a8] sm:$0xff]
      %v1874 = vld [vmem:[%s164 + $0x4b0] sm:$0xff]
      %v1875 = vld [vmem:[%s164 + $0x4b8] sm:$0xff]
      %v1876 = vld [vmem:[%s164 + $0x4c0] sm:$0xff]
      %v1877 = vld [vmem:[%s164 + $0x4c8] sm:$0xff]
      %v1878 = vld [vmem:[%s164 + $0x4d0] sm:$0xff]
      %v1879 = vld [vmem:[%s164 + $0x4d8] sm:$0xff]
      %v1880 = vld [vmem:[%s164 + $0x4e0] sm:$0xff]
      %v1881 = vld [vmem:[%s164 + $0x4e8] sm:$0xff]
      %v1882 = vld [vmem:[%s164 + $0x4f0] sm:$0xff]
      %v1883 = vld [vmem:[%s164 + $0x4f8] sm:$0xff]
      %v1884 = vld [vmem:[%s164 + $0x500] sm:$0xff]
      %v1885 = vld [vmem:[%s164 + $0x508] sm:$0xff]
      %v1886 = vld [vmem:[%s164 + $0x510] sm:$0xff]
      %v1887 = vld [vmem:[%s164 + $0x518] sm:$0xff]
      %v1888 = vld [vmem:[%s164 + $0x520] sm:$0xff]
      %v1889 = vld [vmem:[%s164 + $0x528] sm:$0xff]
      %v1890 = vld [vmem:[%s164 + $0x530] sm:$0xff]
      %v1891 = vld [vmem:[%s164 + $0x538] sm:$0xff]
      %v1892 = vld [vmem:[%s164 + $0x540] sm:$0xff]
      %v1893 = vld [vmem:[%s164 + $0x548] sm:$0xff]
      %v1894 = vld [vmem:[%s164 + $0x550] sm:$0xff]
      %v1895 = vld [vmem:[%s164 + $0x558] sm:$0xff]
      %v1896 = vld [vmem:[%s164 + $0x560] sm:$0xff]
      %v1897 = vld [vmem:[%s164 + $0x568] sm:$0xff]
      %v1898 = vld [vmem:[%s164 + $0x570] sm:$0xff]
      %v1899 = vld [vmem:[%s164 + $0x578] sm:$0xff]
      %v1900 = vld [vmem:[%s164 + $0x580] sm:$0xff]
      %v1901 = vld [vmem:[%s164 + $0x588] sm:$0xff]
      %v1902 = vld [vmem:[%s164 + $0x590] sm:$0xff]
      %v1903 = vld [vmem:[%s164 + $0x598] sm:$0xff]
      %v1904 = vld [vmem:[%s164 + $0x5a0] sm:$0xff]
      %v1905 = vld [vmem:[%s164 + $0x5a8] sm:$0xff]
      %v1906 = vld [vmem:[%s164 + $0x5b0] sm:$0xff]
      %v1907 = vld [vmem:[%s164 + $0x5b8] sm:$0xff]
      %v1908 = vld [vmem:[%s164 + $0x5c0] sm:$0xff]
      %v1909 = vld [vmem:[%s164 + $0x5c8] sm:$0xff]
      %v1910 = vld [vmem:[%s164 + $0x5d0] sm:$0xff]
      %v1911 = vld [vmem:[%s164 + $0x5d8] sm:$0xff]
      %v1912 = vld [vmem:[%s164 + $0x5e0] sm:$0xff]
      %v1913 = vld [vmem:[%s164 + $0x5e8] sm:$0xff]
      %v1914 = vld [vmem:[%s164 + $0x5f0] sm:$0xff]
      %v1915 = vld [vmem:[%s164 + $0x5f8] sm:$0xff]
      %v1916 = vld [vmem:[%s164 + $0x600] sm:$0xff]
      %v1917 = vld [vmem:[%s164 + $0x608] sm:$0xff]
      %v1918 = vld [vmem:[%s164 + $0x610] sm:$0xff]
      %v1919 = vld [vmem:[%s164 + $0x618] sm:$0xff]
      %v1920 = vld [vmem:[%s164 + $0x620] sm:$0xff]
      %v1921 = vld [vmem:[%s164 + $0x628] sm:$0xff]
      %v1922 = vld [vmem:[%s164 + $0x630] sm:$0xff]
      %v1923 = vld [vmem:[%s164 + $0x638] sm:$0xff]
      %v1924 = vld [vmem:[%s164 + $0x640] sm:$0xff]
      %v1925 = vld [vmem:[%s164 + $0x648] sm:$0xff]
      %v1926 = vld [vmem:[%s164 + $0x650] sm:$0xff]
      %v1927 = vld [vmem:[%s164 + $0x658] sm:$0xff]
      %v1928 = vld [vmem:[%s164 + $0x660] sm:$0xff]
      %v1929 = vld [vmem:[%s164 + $0x668] sm:$0xff]
      %v1930 = vld [vmem:[%s164 + $0x670] sm:$0xff]
      %v1931 = vld [vmem:[%s164 + $0x678] sm:$0xff]
      %v1932 = vld [vmem:[%s164 + $0x680] sm:$0xff]
      %v1933 = vld [vmem:[%s164 + $0x688] sm:$0xff]
      %v1934 = vld [vmem:[%s164 + $0x690] sm:$0xff]
      %v1935 = vld [vmem:[%s164 + $0x698] sm:$0xff]
      %v1936 = vld [vmem:[%s164 + $0x6a0] sm:$0xff]
      %v1937 = vld [vmem:[%s164 + $0x6a8] sm:$0xff]
      %v1938 = vld [vmem:[%s164 + $0x6b0] sm:$0xff]
      %v1939 = vld [vmem:[%s164 + $0x6b8] sm:$0xff]
      %v1940 = vld [vmem:[%s164 + $0x6c0] sm:$0xff]
      %v1941 = vld [vmem:[%s164 + $0x6c8] sm:$0xff]
      %v1942 = vld [vmem:[%s164 + $0x6d0] sm:$0xff]
      %v1943 = vld [vmem:[%s164 + $0x6d8] sm:$0xff]
      %v1944 = vld [vmem:[%s164 + $0x6e0] sm:$0xff]
      %v1945 = vld [vmem:[%s164 + $0x6e8] sm:$0xff]
      %v1946 = vld [vmem:[%s164 + $0x6f0] sm:$0xff]
      %v1947 = vld [vmem:[%s164 + $0x6f8] sm:$0xff]
      %v1948 = vld [vmem:[%s164 + $0x700] sm:$0xff]
      %v1949 = vld [vmem:[%s164 + $0x708] sm:$0xff]
      %v1950 = vld [vmem:[%s164 + $0x710] sm:$0xff]
      %v1951 = vld [vmem:[%s164 + $0x718] sm:$0xff]
      %v1952 = vld [vmem:[%s164 + $0x720] sm:$0xff]
      %v1953 = vld [vmem:[%s164 + $0x728] sm:$0xff]
      %v1954 = vld [vmem:[%s164 + $0x730] sm:$0xff]
      %v1955 = vld [vmem:[%s164 + $0x738] sm:$0xff]
      %v1956 = vld [vmem:[%s164 + $0x740] sm:$0xff]
      %v1957 = vld [vmem:[%s164 + $0x748] sm:$0xff]
      %v1958 = vld [vmem:[%s164 + $0x750] sm:$0xff]
      %v1959 = vld [vmem:[%s164 + $0x758] sm:$0xff]
      %v1960 = vld [vmem:[%s164 + $0x760] sm:$0xff]
      %v1961 = vld [vmem:[%s164 + $0x768] sm:$0xff]
      %v1962 = vld [vmem:[%s164 + $0x770] sm:$0xff]
      %v1963 = vld [vmem:[%s164 + $0x778] sm:$0xff]
      %v1964 = vld [vmem:[%s164 + $0x780] sm:$0xff]
      %v1965 = vld [vmem:[%s164 + $0x788] sm:$0xff]
      %v1966 = vld [vmem:[%s164 + $0x790] sm:$0xff]
      %v1967 = vld [vmem:[%s164 + $0x798] sm:$0xff]
      %v1968 = vld [vmem:[%s164 + $0x7a0] sm:$0xff]
      %v1969 = vld [vmem:[%s164 + $0x7a8] sm:$0xff]
      %v1970 = vld [vmem:[%s164 + $0x7b0] sm:$0xff]
      %v1971 = vld [vmem:[%s164 + $0x7b8] sm:$0xff]
      %v1972 = vld [vmem:[%s164 + $0x7c0] sm:$0xff]
      %v1973 = vld [vmem:[%s164 + $0x7c8] sm:$0xff]
      %v1974 = vld [vmem:[%s164 + $0x7d0] sm:$0xff]
      %v1975 = vld [vmem:[%s164 + $0x7d8] sm:$0xff]
      %v1976 = vld [vmem:[%s164 + $0x7e0] sm:$0xff]
      %v1977 = vld [vmem:[%s164 + $0x7e8] sm:$0xff]
      %v1978 = vld [vmem:[%s164 + $0x7f0] sm:$0xff]
      %v1979 = vld [vmem:[%s164 + $0x7f8] sm:$0xff]
      %v1980 = vld [vmem:[%s164 + $0x800] sm:$0xff]
      %v1981 = vld [vmem:[%s164 + $0x808] sm:$0xff]
      %v1982 = vld [vmem:[%s164 + $0x810] sm:$0xff]
      %v1983 = vld [vmem:[%s164 + $0x818] sm:$0xff]
      %v1984 = vld [vmem:[%s164 + $0x820] sm:$0xff]
      %v1985 = vld [vmem:[%s164 + $0x828] sm:$0xff]
      %v1986 = vld [vmem:[%s164 + $0x830] sm:$0xff]
      %v1987 = vld [vmem:[%s164 + $0x838] sm:$0xff]
      %v1988 = vld [vmem:[%s164 + $0x840] sm:$0xff]
      %v1989 = vld [vmem:[%s164 + $0x848] sm:$0xff]
      %v1990 = vld [vmem:[%s164 + $0x850] sm:$0xff]
      %v1991 = vld [vmem:[%s164 + $0x858] sm:$0xff]
      %v1992 = vld [vmem:[%s164 + $0x860] sm:$0xff]
      %v1993 = vld [vmem:[%s164 + $0x868] sm:$0xff]
      %v1994 = vld [vmem:[%s164 + $0x870] sm:$0xff]
      %v1995 = vld [vmem:[%s164 + $0x878] sm:$0xff]
      %v1996 = vld [vmem:[%s164 + $0x880] sm:$0xff]
      %v1997 = vld [vmem:[%s164 + $0x888] sm:$0xff]
      %v1998 = vld [vmem:[%s164 + $0x890] sm:$0xff]
      %v1999 = vld [vmem:[%s164 + $0x898] sm:$0xff]
      %v2000 = vld [vmem:[%s164 + $0x8a0] sm:$0xff]
      %v2001 = vld [vmem:[%s164 + $0x8a8] sm:$0xff]
      %v2002 = vld [vmem:[%s164 + $0x8b0] sm:$0xff]
      %v2003 = vld [vmem:[%s164 + $0x8b8] sm:$0xff]
      %v2004 = vld [vmem:[%s164 + $0x8c0] sm:$0xff]
      %v2005 = vld [vmem:[%s164 + $0x8c8] sm:$0xff]
      %v2006 = vld [vmem:[%s164 + $0x8d0] sm:$0xff]
      %v2007 = vld [vmem:[%s164 + $0x8d8] sm:$0xff]
      %v2008 = vld [vmem:[%s164 + $0x8e0] sm:$0xff]
      %v2009 = vld [vmem:[%s164 + $0x8e8] sm:$0xff]
      %v2010 = vld [vmem:[%s164 + $0x8f0] sm:$0xff]
      %v2011 = vld [vmem:[%s164 + $0x8f8] sm:$0xff]
      %v2012 = vld [vmem:[%s164 + $0x900] sm:$0xff]
      %v2013 = vld [vmem:[%s164 + $0x908] sm:$0xff]
      %v2014 = vld [vmem:[%s164 + $0x910] sm:$0xff]
      %v2015 = vld [vmem:[%s164 + $0x918] sm:$0xff]
      %v2016 = vld [vmem:[%s164 + $0x920] sm:$0xff]
      %v2017 = vld [vmem:[%s164 + $0x928] sm:$0xff]
      %v2018 = vld [vmem:[%s164 + $0x930] sm:$0xff]
      %v2019 = vld [vmem:[%s164 + $0x938] sm:$0xff]
      %v2020 = vld [vmem:[%s164 + $0x940] sm:$0xff]
      %v2021 = vld [vmem:[%s164 + $0x948] sm:$0xff]
      %v2022 = vld [vmem:[%s164 + $0x950] sm:$0xff]
      %v2023 = vld [vmem:[%s164 + $0x958] sm:$0xff]
      %v2024 = vld [vmem:[%s164 + $0x960] sm:$0xff]
      %v2025 = vld [vmem:[%s164 + $0x968] sm:$0xff]
      %v2026 = vld [vmem:[%s164 + $0x970] sm:$0xff]
      %v2027 = vld [vmem:[%s164 + $0x978] sm:$0xff]
      %v2028 = vld [vmem:[%s164 + $0x980] sm:$0xff]
      %v2029 = vld [vmem:[%s164 + $0x988] sm:$0xff]
      %v2030 = vld [vmem:[%s164 + $0x990] sm:$0xff]
      %v2031 = vld [vmem:[%s164 + $0x998] sm:$0xff]
      %v2032 = vld [vmem:[%s164 + $0x9a0] sm:$0xff]
      %v2033 = vld [vmem:[%s164 + $0x9a8] sm:$0xff]
      %v2034 = vld [vmem:[%s164 + $0x9b0] sm:$0xff]
      %v2035 = vld [vmem:[%s164 + $0x9b8] sm:$0xff]
      %v2036 = vld [vmem:[%s164 + $0x9c0] sm:$0xff]
      %v2037 = vld [vmem:[%s164 + $0x9c8] sm:$0xff]
      %v2038 = vld [vmem:[%s164 + $0x9d0] sm:$0xff]
      %v2039 = vld [vmem:[%s164 + $0x9d8] sm:$0xff]
      %v2040 = vld [vmem:[%s164 + $0x9e0] sm:$0xff]
      %v2041 = vld [vmem:[%s164 + $0x9e8] sm:$0xff]
      %v2042 = vld [vmem:[%s164 + $0x9f0] sm:$0xff]
      %v2043 = vld [vmem:[%s164 + $0x9f8] sm:$0xff]
      %v2044 = vld [vmem:[%s164 + $0xa00] sm:$0xff]
      %v2045 = vld [vmem:[%s164 + $0xa08] sm:$0xff]
      %v2046 = vld [vmem:[%s164 + $0xa10] sm:$0xff]
      %v2047 = vld [vmem:[%s164 + $0xa18] sm:$0xff]
      %v2048 = vld [vmem:[%s164 + $0xa20] sm:$0xff]
      %v2049 = vld [vmem:[%s164 + $0xa28] sm:$0xff]
      %v2050 = vld [vmem:[%s164 + $0xa30] sm:$0xff]
      %v2051 = vld [vmem:[%s164 + $0xa38] sm:$0xff]
      %v2052 = vld [vmem:[%s164 + $0xa40] sm:$0xff]
      %v2053 = vld [vmem:[%s164 + $0xa48] sm:$0xff]
      %v2054 = vld [vmem:[%s164 + $0xa50] sm:$0xff]
      %v2055 = vld [vmem:[%s164 + $0xa58] sm:$0xff]
      %v2056 = vld [vmem:[%s164 + $0xa60] sm:$0xff]
      %v2057 = vld [vmem:[%s164 + $0xa68] sm:$0xff]
      %v2058 = vld [vmem:[%s164 + $0xa70] sm:$0xff]
      %v2059 = vld [vmem:[%s164 + $0xa78] sm:$0xff]
      %v2060 = vld [vmem:[%s164 + $0xa80] sm:$0xff]
      %v2061 = vld [vmem:[%s164 + $0xa88] sm:$0xff]
      %v2062 = vld [vmem:[%s164 + $0xa90] sm:$0xff]
      %v2063 = vld [vmem:[%s164 + $0xa98] sm:$0xff]
      %v2064 = vld [vmem:[%s164 + $0xaa0] sm:$0xff]
      %v2065 = vld [vmem:[%s164 + $0xaa8] sm:$0xff]
      %v2066 = vld [vmem:[%s164 + $0xab0] sm:$0xff]
      %v2067 = vld [vmem:[%s164 + $0xab8] sm:$0xff]
      %v2068 = vld [vmem:[%s164 + $0xac0] sm:$0xff]
      %v2069 = vld [vmem:[%s164 + $0xac8] sm:$0xff]
      %v2070 = vld [vmem:[%s164 + $0xad0] sm:$0xff]
      %v2071 = vld [vmem:[%s164 + $0xad8] sm:$0xff]
      %v2072 = vld [vmem:[%s164 + $0xae0] sm:$0xff]
      %v2073 = vld [vmem:[%s164 + $0xae8] sm:$0xff]
      %v2074 = vld [vmem:[%s164 + $0xaf0] sm:$0xff]
      %v2075 = vld [vmem:[%s164 + $0xaf8] sm:$0xff]
      %v2076 = vld [vmem:[%s164 + $0xb00] sm:$0xff]
      %v2077 = vld [vmem:[%s164 + $0xb08] sm:$0xff]
      %v2078 = vld [vmem:[%s164 + $0xb10] sm:$0xff]
      %v2079 = vld [vmem:[%s164 + $0xb18] sm:$0xff]
      %v2080 = vld [vmem:[%s164 + $0xb20] sm:$0xff]
      %v2081 = vld [vmem:[%s164 + $0xb28] sm:$0xff]
      %v2082 = vld [vmem:[%s164 + $0xb30] sm:$0xff]
      %v2083 = vld [vmem:[%s164 + $0xb38] sm:$0xff]
      %v2084 = vld [vmem:[%s164 + $0xb40] sm:$0xff]
      %v2085 = vld [vmem:[%s164 + $0xb48] sm:$0xff]
      %v2086 = vld [vmem:[%s164 + $0xb50] sm:$0xff]
      %v2087 = vld [vmem:[%s164 + $0xb58] sm:$0xff]
      %v2088 = vld [vmem:[%s164 + $0xb60] sm:$0xff]
      %v2089 = vld [vmem:[%s164 + $0xb68] sm:$0xff]
      %v2090 = vld [vmem:[%s164 + $0xb70] sm:$0xff]
      %v2091 = vld [vmem:[%s164 + $0xb78] sm:$0xff]
      %v2092 = vld [vmem:[%s164 + $0xb80] sm:$0xff]
      %v2093 = vld [vmem:[%s164 + $0xb88] sm:$0xff]
      %v2094 = vld [vmem:[%s164 + $0xb90] sm:$0xff]
      %v2095 = vld [vmem:[%s164 + $0xb98] sm:$0xff]
      %v2096 = vld [vmem:[%s164 + $0xba0] sm:$0xff]
      %v2097 = vld [vmem:[%s164 + $0xba8] sm:$0xff]
      %v2098 = vld [vmem:[%s164 + $0xbb0] sm:$0xff]
      %v2099 = vld [vmem:[%s164 + $0xbb8] sm:$0xff]
      %v2100 = vld [vmem:[%s164 + $0xbc0] sm:$0xff]
      %v2101 = vld [vmem:[%s164 + $0xbc8] sm:$0xff]
      %v2102 = vld [vmem:[%s164 + $0xbd0] sm:$0xff]
      %v2103 = vld [vmem:[%s164 + $0xbd8] sm:$0xff]
      %v2104 = vld [vmem:[%s164 + $0xbe0] sm:$0xff]
      %v2105 = vld [vmem:[%s164 + $0xbe8] sm:$0xff]
      %v2106 = vld [vmem:[%s164 + $0xbf0] sm:$0xff]
      %v2107 = vld [vmem:[%s164 + $0xbf8] sm:$0xff]
      %v2108 = vld [vmem:[%s164 + $0xc00] sm:$0xff]
      %v2109 = vld [vmem:[%s164 + $0xc08] sm:$0xff]
      %v2110 = vld [vmem:[%s164 + $0xc10] sm:$0xff]
      %v2111 = vld [vmem:[%s164 + $0xc18] sm:$0xff]
      %v2112 = vld [vmem:[%s164 + $0xc20] sm:$0xff]
      %v2113 = vld [vmem:[%s164 + $0xc28] sm:$0xff]
      %v2114 = vld [vmem:[%s164 + $0xc30] sm:$0xff]
      %v2115 = vld [vmem:[%s164 + $0xc38] sm:$0xff]
      %v2116 = vld [vmem:[%s164 + $0xc40] sm:$0xff]
      %v2117 = vld [vmem:[%s164 + $0xc48] sm:$0xff]
      %v2118 = vld [vmem:[%s164 + $0xc50] sm:$0xff]
      %v2119 = vld [vmem:[%s164 + $0xc58] sm:$0xff]
      %v2120 = vld [vmem:[%s164 + $0xc60] sm:$0xff]
      %v2121 = vld [vmem:[%s164 + $0xc68] sm:$0xff]
      %v2122 = vld [vmem:[%s164 + $0xc70] sm:$0xff]
      %v2123 = vld [vmem:[%s164 + $0xc78] sm:$0xff]
      %v2124 = vld [vmem:[%s164 + $0xc80] sm:$0xff]
      %v2125 = vld [vmem:[%s164 + $0xc88] sm:$0xff]
      %v2126 = vld [vmem:[%s164 + $0xc90] sm:$0xff]
      %v2127 = vld [vmem:[%s164 + $0xc98] sm:$0xff]
      %v2128 = vld [vmem:[%s164 + $0xca0] sm:$0xff]
      %v2129 = vld [vmem:[%s164 + $0xca8] sm:$0xff]
      %v2130 = vld [vmem:[%s164 + $0xcb0] sm:$0xff]
      %v2131 = vld [vmem:[%s164 + $0xcb8] sm:$0xff]
      %v2132 = vld [vmem:[%s164 + $0xcc0] sm:$0xff]
      %v2133 = vld [vmem:[%s164 + $0xcc8] sm:$0xff]
      %v2134 = vld [vmem:[%s164 + $0xcd0] sm:$0xff]
      %v2135 = vld [vmem:[%s164 + $0xcd8] sm:$0xff]
      %v2136 = vld [vmem:[%s164 + $0xce0] sm:$0xff]
      %v2137 = vld [vmem:[%s164 + $0xce8] sm:$0xff]
      %v2138 = vld [vmem:[%s164 + $0xcf0] sm:$0xff]
      %v2139 = vld [vmem:[%s164 + $0xcf8] sm:$0xff]
      %v2140 = vld [vmem:[%s164 + $0xd00] sm:$0xff]
      %v2141 = vld [vmem:[%s164 + $0xd08] sm:$0xff]
      %v2142 = vld [vmem:[%s164 + $0xd10] sm:$0xff]
      %v2143 = vld [vmem:[%s164 + $0xd18] sm:$0xff]
      %v2144 = vld [vmem:[%s164 + $0xd20] sm:$0xff]
      %v2145 = vld [vmem:[%s164 + $0xd28] sm:$0xff]
      %v2146 = vld [vmem:[%s164 + $0xd30] sm:$0xff]
      %v2147 = vld [vmem:[%s164 + $0xd38] sm:$0xff]
      %v2148 = vld [vmem:[%s164 + $0xd40] sm:$0xff]
      %v2149 = vld [vmem:[%s164 + $0xd48] sm:$0xff]
      %v2150 = vld [vmem:[%s164 + $0xd50] sm:$0xff]
      %v2151 = vld [vmem:[%s164 + $0xd58] sm:$0xff]
      %v2152 = vld [vmem:[%s164 + $0xd60] sm:$0xff]
      %v2153 = vld [vmem:[%s164 + $0xd68] sm:$0xff]
      %v2154 = vld [vmem:[%s164 + $0xd70] sm:$0xff]
      %v2155 = vld [vmem:[%s164 + $0xd78] sm:$0xff]
      %v2156 = vld [vmem:[%s164 + $0xd80] sm:$0xff]
      %v2157 = vld [vmem:[%s164 + $0xd88] sm:$0xff]
      %v2158 = vld [vmem:[%s164 + $0xd90] sm:$0xff]
      %v2159 = vld [vmem:[%s164 + $0xd98] sm:$0xff]
      %v2160 = vld [vmem:[%s164 + $0xda0] sm:$0xff]
      %v2161 = vld [vmem:[%s164 + $0xda8] sm:$0xff]
      %v2162 = vld [vmem:[%s164 + $0xdb0] sm:$0xff]
      %v2163 = vld [vmem:[%s164 + $0xdb8] sm:$0xff]
      %v2164 = vld [vmem:[%s164 + $0xdc0] sm:$0xff]
      %v2165 = vld [vmem:[%s164 + $0xdc8] sm:$0xff]
      %v2166 = vld [vmem:[%s164 + $0xdd0] sm:$0xff]
      %v2167 = vld [vmem:[%s164 + $0xdd8] sm:$0xff]
      %v2168 = vld [vmem:[%s164 + $0xde0] sm:$0xff]
      %v2169 = vld [vmem:[%s164 + $0xde8] sm:$0xff]
      %v2170 = vld [vmem:[%s164 + $0xdf0] sm:$0xff]
      %v2171 = vld [vmem:[%s164 + $0xdf8] sm:$0xff]
      %v2172 = vld [vmem:[%s164 + $0xe00] sm:$0xff]
      %v2173 = vld [vmem:[%s164 + $0xe08] sm:$0xff]
      %v2174 = vld [vmem:[%s164 + $0xe10] sm:$0xff]
      %v2175 = vld [vmem:[%s164 + $0xe18] sm:$0xff]
      %v2176 = vld [vmem:[%s164 + $0xe20] sm:$0xff]
      %v2177 = vld [vmem:[%s164 + $0xe28] sm:$0xff]
      %v2178 = vld [vmem:[%s164 + $0xe30] sm:$0xff]
      %v2179 = vld [vmem:[%s164 + $0xe38] sm:$0xff]
      %v2180 = vld [vmem:[%s164 + $0xe40] sm:$0xff]
      %v2181 = vld [vmem:[%s164 + $0xe48] sm:$0xff]
      %v2182 = vld [vmem:[%s164 + $0xe50] sm:$0xff]
      %v2183 = vld [vmem:[%s164 + $0xe58] sm:$0xff]
      %v2184 = vld [vmem:[%s164 + $0xe60] sm:$0xff]
      %v2185 = vld [vmem:[%s164 + $0xe68] sm:$0xff]
      %v2186 = vld [vmem:[%s164 + $0xe70] sm:$0xff]
      %v2187 = vld [vmem:[%s164 + $0xe78] sm:$0xff]
      %v2188 = vld [vmem:[%s164 + $0xe80] sm:$0xff]
      %v2189 = vld [vmem:[%s164 + $0xe88] sm:$0xff]
      %v2190 = vld [vmem:[%s164 + $0xe90] sm:$0xff]
      %v2191 = vld [vmem:[%s164 + $0xe98] sm:$0xff]
      %v2192 = vld [vmem:[%s164 + $0xea0] sm:$0xff]
      %v2193 = vld [vmem:[%s164 + $0xea8] sm:$0xff]
      %v2194 = vld [vmem:[%s164 + $0xeb0] sm:$0xff]
      %v2195 = vld [vmem:[%s164 + $0xeb8] sm:$0xff]
      %v2196 = vld [vmem:[%s164 + $0xec0] sm:$0xff]
      %v2197 = vld [vmem:[%s164 + $0xec8] sm:$0xff]
      %v2198 = vld [vmem:[%s164 + $0xed0] sm:$0xff]
      %v2199 = vld [vmem:[%s164 + $0xed8] sm:$0xff]
      %v2200 = vld [vmem:[%s164 + $0xee0] sm:$0xff]
      %v2201 = vld [vmem:[%s164 + $0xee8] sm:$0xff]
      %v2202 = vld [vmem:[%s164 + $0xef0] sm:$0xff]
      %v2203 = vld [vmem:[%s164 + $0xef8] sm:$0xff]
      %v2204 = vld [vmem:[%s164 + $0xf00] sm:$0xff]
      %v2205 = vld [vmem:[%s164 + $0xf08] sm:$0xff]
      %v2206 = vld [vmem:[%s164 + $0xf10] sm:$0xff]
      %v2207 = vld [vmem:[%s164 + $0xf18] sm:$0xff]
      %v2208 = vld [vmem:[%s164 + $0xf20] sm:$0xff]
      %v2209 = vld [vmem:[%s164 + $0xf28] sm:$0xff]
      %v2210 = vld [vmem:[%s164 + $0xf30] sm:$0xff]
      %v2211 = vld [vmem:[%s164 + $0xf38] sm:$0xff]
      %v2212 = vld [vmem:[%s164 + $0xf40] sm:$0xff]
      %v2213 = vld [vmem:[%s164 + $0xf48] sm:$0xff]
      %v2214 = vld [vmem:[%s164 + $0xf50] sm:$0xff]
      %v2215 = vld [vmem:[%s164 + $0xf58] sm:$0xff]
      %v2216 = vld [vmem:[%s164 + $0xf60] sm:$0xff]
      %v2217 = vld [vmem:[%s164 + $0xf68] sm:$0xff]
      %v2218 = vld [vmem:[%s164 + $0xf70] sm:$0xff]
      %v2219 = vld [vmem:[%s164 + $0xf78] sm:$0xff]
      %v2220 = vld [vmem:[%s164 + $0xf80] sm:$0xff]
      %v2221 = vld [vmem:[%s164 + $0xf88] sm:$0xff]
      %v2222 = vld [vmem:[%s164 + $0xf90] sm:$0xff]
      %v2223 = vld [vmem:[%s164 + $0xf98] sm:$0xff]
      %v2224 = vld [vmem:[%s164 + $0xfa0] sm:$0xff]
      %v2225 = vld [vmem:[%s164 + $0xfa8] sm:$0xff]
      %v2226 = vld [vmem:[%s164 + $0xfb0] sm:$0xff]
      %v2227 = vld [vmem:[%s164 + $0xfb8] sm:$0xff]
      %v2228 = vld [vmem:[%s164 + $0xfc0] sm:$0xff]
      %v2229 = vld [vmem:[%s164 + $0xfc8] sm:$0xff]
      %v2230 = vld [vmem:[%s164 + $0xfd0] sm:$0xff]
      %v2231 = vld [vmem:[%s164 + $0xfd8] sm:$0xff]
      %v2232 = vld [vmem:[%s164 + $0xfe0] sm:$0xff]
      %v2233 = vld [vmem:[%s164 + $0xfe8] sm:$0xff]
      %v2234 = vld [vmem:[%s164 + $0xff0] sm:$0xff]
      %v2235 = vld [vmem:[%s164 + $0xff8] sm:$0xff]
      %v2236 = vld [vmem:[%s164 + $0x1000] sm:$0xff]
      %v2237 = vld [vmem:[%s164 + $0x1008] sm:$0xff]
      %v2238 = vld [vmem:[%s164 + $0x1010] sm:$0xff]
      %v2239 = vld [vmem:[%s164 + $0x1018] sm:$0xff]
      %v2240 = vld [vmem:[%s164 + $0x1020] sm:$0xff]
      %v2241 = vld [vmem:[%s164 + $0x1028] sm:$0xff]
      %v2242 = vld [vmem:[%s164 + $0x1030] sm:$0xff]
      %v2243 = vld [vmem:[%s164 + $0x1038] sm:$0xff]
      %v2244 = vld [vmem:[%s164 + $0x1040] sm:$0xff]
      %v2245 = vld [vmem:[%s164 + $0x1048] sm:$0xff]
      %v2246 = vld [vmem:[%s164 + $0x1050] sm:$0xff]
      %v2247 = vld [vmem:[%s164 + $0x1058] sm:$0xff]
      %v2248 = vld [vmem:[%s164 + $0x1060] sm:$0xff]
      %v2249 = vld [vmem:[%s164 + $0x1068] sm:$0xff]
      %v2250 = vld [vmem:[%s164 + $0x1070] sm:$0xff]
      %v2251 = vld [vmem:[%s164 + $0x1078] sm:$0xff]
      %v2252 = vld [vmem:[%s164 + $0x1080] sm:$0xff]
      %v2253 = vld [vmem:[%s164 + $0x1088] sm:$0xff]
      %v2254 = vld [vmem:[%s164 + $0x1090] sm:$0xff]
      %v2255 = vld [vmem:[%s164 + $0x1098] sm:$0xff]
      %v2256 = vld [vmem:[%s164 + $0x10a0] sm:$0xff]
      %v2257 = vld [vmem:[%s164 + $0x10a8] sm:$0xff]
      %v2258 = vld [vmem:[%s164 + $0x10b0] sm:$0xff]
      %v2259 = vld [vmem:[%s164 + $0x10b8] sm:$0xff]
      %v2260 = vld [vmem:[%s164 + $0x10c0] sm:$0xff]
      %v2261 = vld [vmem:[%s164 + $0x10c8] sm:$0xff]
      %v2262 = vld [vmem:[%s164 + $0x10d0] sm:$0xff]
      %v2263 = vld [vmem:[%s164 + $0x10d8] sm:$0xff]
      %v2264 = vld [vmem:[%s164 + $0x10e0] sm:$0xff]
      %v2265 = vld [vmem:[%s164 + $0x10e8] sm:$0xff]
      %v2266 = vld [vmem:[%s164 + $0x10f0] sm:$0xff]
      %v2267 = vld [vmem:[%s164 + $0x10f8] sm:$0xff]
      %v2268 = vld [vmem:[%s164 + $0x1100] sm:$0xff]
      %v2269 = vld [vmem:[%s164 + $0x1108] sm:$0xff]
      %v2270 = vld [vmem:[%s164 + $0x1110] sm:$0xff]
      %v2271 = vld [vmem:[%s164 + $0x1118] sm:$0xff]
      %v2272 = vld [vmem:[%s164 + $0x1120] sm:$0xff]
      %v2273 = vld [vmem:[%s164 + $0x1128] sm:$0xff]
      %v2274 = vld [vmem:[%s164 + $0x1130] sm:$0xff]
      %v2275 = vld [vmem:[%s164 + $0x1138] sm:$0xff]
      %v2276 = vld [vmem:[%s164 + $0x1140] sm:$0xff]
      %v2277 = vld [vmem:[%s164 + $0x1148] sm:$0xff]
      %v2278 = vld [vmem:[%s164 + $0x1150] sm:$0xff]
      %v2279 = vld [vmem:[%s164 + $0x1158] sm:$0xff]
      %v2280 = vld [vmem:[%s164 + $0x1160] sm:$0xff]
      %v2281 = vld [vmem:[%s164 + $0x1168] sm:$0xff]
      %v2282 = vld [vmem:[%s164 + $0x1170] sm:$0xff]
      %v2283 = vld [vmem:[%s164 + $0x1178] sm:$0xff]
      %v2284 = vld [vmem:[%s164 + $0x1180] sm:$0xff]
      %v2285 = vld [vmem:[%s164 + $0x1188] sm:$0xff]
      %v2286 = vld [vmem:[%s164 + $0x1190] sm:$0xff]
      %v2287 = vld [vmem:[%s164 + $0x1198] sm:$0xff]
      %v2288 = vld [vmem:[%s164 + $0x11a0] sm:$0xff]
      %v2289 = vld [vmem:[%s164 + $0x11a8] sm:$0xff]
      %v2290 = vld [vmem:[%s164 + $0x11b0] sm:$0xff]
      %v2291 = vld [vmem:[%s164 + $0x11b8] sm:$0xff]
      %v2292 = vld [vmem:[%s164 + $0x11c0] sm:$0xff]
      %v2293 = vld [vmem:[%s164 + $0x11c8] sm:$0xff]
      %v2294 = vld [vmem:[%s164 + $0x11d0] sm:$0xff]
      %v2295 = vld [vmem:[%s164 + $0x11d8] sm:$0xff]
      %v2296 = vld [vmem:[%s164 + $0x11e0] sm:$0xff]
      %v2297 = vld [vmem:[%s164 + $0x11e8] sm:$0xff]
      %v2298 = vld [vmem:[%s164 + $0x11f0] sm:$0xff]
      %v2299 = vld [vmem:[%s164 + $0x11f8] sm:$0xff]
      %v2300 = vld [vmem:[%s164 + $0x1200] sm:$0xff]
      %v2301 = vld [vmem:[%s164 + $0x1208] sm:$0xff]
      %v2302 = vld [vmem:[%s164 + $0x1210] sm:$0xff]
      %v2303 = vld [vmem:[%s164 + $0x1218] sm:$0xff]
      %v2304 = vld [vmem:[%s164 + $0x1220] sm:$0xff]
      %v2305 = vld [vmem:[%s164 + $0x1228] sm:$0xff]
      %v2306 = vld [vmem:[%s164 + $0x1230] sm:$0xff]
      %v2307 = vld [vmem:[%s164 + $0x1238] sm:$0xff]
      %v2308 = vld [vmem:[%s164 + $0x1240] sm:$0xff]
      %v2309 = vld [vmem:[%s164 + $0x1248] sm:$0xff]
      %v2310 = vld [vmem:[%s164 + $0x1250] sm:$0xff]
      %v2311 = vld [vmem:[%s164 + $0x1258] sm:$0xff]
      %v2312 = vld [vmem:[%s164 + $0x1260] sm:$0xff]
      %v2313 = vld [vmem:[%s164 + $0x1268] sm:$0xff]
      %v2314 = vld [vmem:[%s164 + $0x1270] sm:$0xff]
      %v2315 = vld [vmem:[%s164 + $0x1278] sm:$0xff]
      %v2316 = vld [vmem:[%s164 + $0x1280] sm:$0xff]
      %v2317 = vld [vmem:[%s164 + $0x1288] sm:$0xff]
      %v2318 = vld [vmem:[%s164 + $0x1290] sm:$0xff]
      %v2319 = vld [vmem:[%s164 + $0x1298] sm:$0xff]
      %v2320 = vld [vmem:[%s164 + $0x12a0] sm:$0xff]
      %v2321 = vld [vmem:[%s164 + $0x12a8] sm:$0xff]
      %v2322 = vld [vmem:[%s164 + $0x12b0] sm:$0xff]
      %v2323 = vld [vmem:[%s164 + $0x12b8] sm:$0xff]
      %v2324 = vld [vmem:[%s164 + $0x12c0] sm:$0xff]
      %v2325 = vld [vmem:[%s164 + $0x12c8] sm:$0xff]
      %v2326 = vld [vmem:[%s164 + $0x12d0] sm:$0xff]
      %v2327 = vld [vmem:[%s164 + $0x12d8] sm:$0xff]
      %v2328 = vld [vmem:[%s164 + $0x12e0] sm:$0xff]
      %v2329 = vld [vmem:[%s164 + $0x12e8] sm:$0xff]
      %v2330 = vld [vmem:[%s164 + $0x12f0] sm:$0xff]
      %v2331 = vld [vmem:[%s164 + $0x12f8] sm:$0xff]
      %v2332 = vld [vmem:[%s164 + $0x1300] sm:$0xff]
      %v2333 = vld [vmem:[%s164 + $0x1308] sm:$0xff]
      %v2334 = vld [vmem:[%s164 + $0x1310] sm:$0xff]
      %v2335 = vld [vmem:[%s164 + $0x1318] sm:$0xff]
      %v2336 = vld [vmem:[%s164 + $0x1320] sm:$0xff]
      %v2337 = vld [vmem:[%s164 + $0x1328] sm:$0xff]
      %v2338 = vld [vmem:[%s164 + $0x1330] sm:$0xff]
      %v2339 = vld [vmem:[%s164 + $0x1338] sm:$0xff]
      %v2340 = vld [vmem:[%s164 + $0x1340] sm:$0xff]
      %v2341 = vld [vmem:[%s164 + $0x1348] sm:$0xff]
      %v2342 = vld [vmem:[%s164 + $0x1350] sm:$0xff]
      %v2343 = vld [vmem:[%s164 + $0x1358] sm:$0xff]
      %v2344 = vld [vmem:[%s164 + $0x1360] sm:$0xff]
      %v2345 = vld [vmem:[%s164 + $0x1368] sm:$0xff]
      %v2346 = vld [vmem:[%s164 + $0x1370] sm:$0xff]
      %v2347 = vld [vmem:[%s164 + $0x1378] sm:$0xff]
      %v2348 = vld [vmem:[%s164 + $0x1380] sm:$0xff]
      %v2349 = vld [vmem:[%s164 + $0x1388] sm:$0xff]
      %v2350 = vld [vmem:[%s164 + $0x1390] sm:$0xff]
      %v2351 = vld [vmem:[%s164 + $0x1398] sm:$0xff]
      %v2352 = vld [vmem:[%s164 + $0x13a0] sm:$0xff]
      %v2353 = vld [vmem:[%s164 + $0x13a8] sm:$0xff]
      %v2354 = vld [vmem:[%s164 + $0x13b0] sm:$0xff]
      %v2355 = vld [vmem:[%s164 + $0x13b8] sm:$0xff]
      %v2356 = vld [vmem:[%s164 + $0x13c0] sm:$0xff]
      %v2357 = vld [vmem:[%s164 + $0x13c8] sm:$0xff]
      %v2358 = vld [vmem:[%s164 + $0x13d0] sm:$0xff]
      %v2359 = vld [vmem:[%s164 + $0x13d8] sm:$0xff]
      %v2360 = vld [vmem:[%s164 + $0x13e0] sm:$0xff]
      %v2361 = vld [vmem:[%s164 + $0x13e8] sm:$0xff]
      %v2362 = vld [vmem:[%s164 + $0x13f0] sm:$0xff]
      %v2363 = vld [vmem:[%s164 + $0x13f8] sm:$0xff]
      %v2364 = vld [vmem:[%s164 + $0x1400] sm:$0xff]
      %v2365 = vld [vmem:[%s164 + $0x1408] sm:$0xff]
      %v2366 = vld [vmem:[%s164 + $0x1410] sm:$0xff]
      %v2367 = vld [vmem:[%s164 + $0x1418] sm:$0xff]
      %v2368 = vld [vmem:[%s164 + $0x1420] sm:$0xff]
      %v2369 = vld [vmem:[%s164 + $0x1428] sm:$0xff]
      %v2370 = vld [vmem:[%s164 + $0x1430] sm:$0xff]
      %v2371 = vld [vmem:[%s164 + $0x1438] sm:$0xff]
      %v2372 = vld [vmem:[%s164 + $0x1440] sm:$0xff]
      %v2373 = vld [vmem:[%s164 + $0x1448] sm:$0xff]
      %v2374 = vld [vmem:[%s164 + $0x1450] sm:$0xff]
      %v2375 = vld [vmem:[%s164 + $0x1458] sm:$0xff]
      %v2376 = vld [vmem:[%s164 + $0x1460] sm:$0xff]
      %v2377 = vld [vmem:[%s164 + $0x1468] sm:$0xff]
      %v2378 = vld [vmem:[%s164 + $0x1470] sm:$0xff]
      %v2379 = vld [vmem:[%s164 + $0x1478] sm:$0xff]
      %v2380 = vld [vmem:[%s164 + $0x1480] sm:$0xff]
      %v2381 = vld [vmem:[%s164 + $0x1488] sm:$0xff]
      %v2382 = vld [vmem:[%s164 + $0x1490] sm:$0xff]
      %v2383 = vld [vmem:[%s164 + $0x1498] sm:$0xff]
      %v2384 = vld [vmem:[%s164 + $0x14a0] sm:$0xff]
      %v2385 = vld [vmem:[%s164 + $0x14a8] sm:$0xff]
      %v2386 = vld [vmem:[%s164 + $0x14b0] sm:$0xff]
      %v2387 = vld [vmem:[%s164 + $0x14b8] sm:$0xff]
      %v2388 = vld [vmem:[%s164 + $0x14c0] sm:$0xff]
      %v2389 = vld [vmem:[%s164 + $0x14c8] sm:$0xff]
      %v2390 = vld [vmem:[%s164 + $0x14d0] sm:$0xff]
      %v2391 = vld [vmem:[%s164 + $0x14d8] sm:$0xff]
      %v2392 = vld [vmem:[%s164 + $0x14e0] sm:$0xff]
      %v2393 = vld [vmem:[%s164 + $0x14e8] sm:$0xff]
      %v2394 = vld [vmem:[%s164 + $0x14f0] sm:$0xff]
      %v2395 = vld [vmem:[%s164 + $0x14f8] sm:$0xff]
      %v2396 = vld [vmem:[%s164 + $0x1500] sm:$0xff]
      %v2397 = vld [vmem:[%s164 + $0x1508] sm:$0xff]
      %v2398 = vld [vmem:[%s164 + $0x1510] sm:$0xff]
      %v2399 = vld [vmem:[%s164 + $0x1518] sm:$0xff]
      %v2400 = vld [vmem:[%s164 + $0x1520] sm:$0xff]
      %v2401 = vld [vmem:[%s164 + $0x1528] sm:$0xff]
      %v2402 = vld [vmem:[%s164 + $0x1530] sm:$0xff]
      %v2403 = vld [vmem:[%s164 + $0x1538] sm:$0xff]
      %v2404 = vld [vmem:[%s164 + $0x1540] sm:$0xff]
      %v2405 = vld [vmem:[%s164 + $0x1548] sm:$0xff]
      %v2406 = vld [vmem:[%s164 + $0x1550] sm:$0xff]
      %v2407 = vld [vmem:[%s164 + $0x1558] sm:$0xff]
      %v2408 = vld [vmem:[%s164 + $0x1560] sm:$0xff]
      %v2409 = vld [vmem:[%s164 + $0x1568] sm:$0xff]
      %v2410 = vld [vmem:[%s164 + $0x1570] sm:$0xff]
      %v2411 = vld [vmem:[%s164 + $0x1578] sm:$0xff]
      %v2412 = vld [vmem:[%s164 + $0x1580] sm:$0xff]
      %v2413 = vld [vmem:[%s164 + $0x1588] sm:$0xff]
      %v2414 = vld [vmem:[%s164 + $0x1590] sm:$0xff]
      %v2415 = vld [vmem:[%s164 + $0x1598] sm:$0xff]
      %v2416 = vld [vmem:[%s164 + $0x15a0] sm:$0xff]
      %v2417 = vld [vmem:[%s164 + $0x15a8] sm:$0xff]
      %v2418 = vld [vmem:[%s164 + $0x15b0] sm:$0xff]
      %v2419 = vld [vmem:[%s164 + $0x15b8] sm:$0xff]
      %v2420 = vld [vmem:[%s164 + $0x15c0] sm:$0xff]
      %v2421 = vld [vmem:[%s164 + $0x15c8] sm:$0xff]
      %v2422 = vld [vmem:[%s164 + $0x15d0] sm:$0xff]
      %v2423 = vld [vmem:[%s164 + $0x15d8] sm:$0xff]
      %v2424 = vld [vmem:[%s164 + $0x15e0] sm:$0xff]
      %v2425 = vld [vmem:[%s164 + $0x15e8] sm:$0xff]
      %v2426 = vld [vmem:[%s164 + $0x15f0] sm:$0xff]
      %v2427 = vld [vmem:[%s164 + $0x15f8] sm:$0xff]
      %v2428 = vld [vmem:[%s164 + $0x1600] sm:$0xff]
      %v2429 = vld [vmem:[%s164 + $0x1608] sm:$0xff]
      %v2430 = vld [vmem:[%s164 + $0x1610] sm:$0xff]
      %v2431 = vld [vmem:[%s164 + $0x1618] sm:$0xff]
      %v2432 = vld [vmem:[%s164 + $0x1620] sm:$0xff]
      %v2433 = vld [vmem:[%s164 + $0x1628] sm:$0xff]
      %v2434 = vld [vmem:[%s164 + $0x1630] sm:$0xff]
      %v2435 = vld [vmem:[%s164 + $0x1638] sm:$0xff]
      %v2436 = vld [vmem:[%s164 + $0x1640] sm:$0xff]
      %v2437 = vld [vmem:[%s164 + $0x1648] sm:$0xff]
      %v2438 = vld [vmem:[%s164 + $0x1650] sm:$0xff]
      %v2439 = vld [vmem:[%s164 + $0x1658] sm:$0xff]
      %v2440 = vld [vmem:[%s164 + $0x1660] sm:$0xff]
      %v2441 = vld [vmem:[%s164 + $0x1668] sm:$0xff]
      %v2442 = vld [vmem:[%s164 + $0x1670] sm:$0xff]
      %v2443 = vld [vmem:[%s164 + $0x1678] sm:$0xff]
      %v2444 = vld [vmem:[%s164 + $0x1680] sm:$0xff]
      %v2445 = vld [vmem:[%s164 + $0x1688] sm:$0xff]
      %v2446 = vld [vmem:[%s164 + $0x1690] sm:$0xff]
      %v2447 = vld [vmem:[%s164 + $0x1698] sm:$0xff]
      %v2448 = vld [vmem:[%s164 + $0x16a0] sm:$0xff]
      %v2449 = vld [vmem:[%s164 + $0x16a8] sm:$0xff]
      %v2450 = vld [vmem:[%s164 + $0x16b0] sm:$0xff]
      %v2451 = vld [vmem:[%s164 + $0x16b8] sm:$0xff]
      %v2452 = vld [vmem:[%s164 + $0x16c0] sm:$0xff]
      %v2453 = vld [vmem:[%s164 + $0x16c8] sm:$0xff]
      %v2454 = vld [vmem:[%s164 + $0x16d0] sm:$0xff]
      %v2455 = vld [vmem:[%s164 + $0x16d8] sm:$0xff]
      %v2456 = vld [vmem:[%s164 + $0x16e0] sm:$0xff]
      %v2457 = vld [vmem:[%s164 + $0x16e8] sm:$0xff]
      %v2458 = vld [vmem:[%s164 + $0x16f0] sm:$0xff]
      %v2459 = vld [vmem:[%s164 + $0x16f8] sm:$0xff]
      %v2460 = vld [vmem:[%s164 + $0x1700] sm:$0xff]
      %v2461 = vld [vmem:[%s164 + $0x1708] sm:$0xff]
      %v2462 = vld [vmem:[%s164 + $0x1710] sm:$0xff]
      %v2463 = vld [vmem:[%s164 + $0x1718] sm:$0xff]
      %v2464 = vld [vmem:[%s164 + $0x1720] sm:$0xff]
      %v2465 = vld [vmem:[%s164 + $0x1728] sm:$0xff]
      %v2466 = vld [vmem:[%s164 + $0x1730] sm:$0xff]
      %v2467 = vld [vmem:[%s164 + $0x1738] sm:$0xff]
      %v2468 = vld [vmem:[%s164 + $0x1740] sm:$0xff]
      %v2469 = vld [vmem:[%s164 + $0x1748] sm:$0xff]
      %v2470 = vld [vmem:[%s164 + $0x1750] sm:$0xff]
      %v2471 = vld [vmem:[%s164 + $0x1758] sm:$0xff]
      %v2472 = vld [vmem:[%s164 + $0x1760] sm:$0xff]
      %v2473 = vld [vmem:[%s164 + $0x1768] sm:$0xff]
      %v2474 = vld [vmem:[%s164 + $0x1770] sm:$0xff]
      %v2475 = vld [vmem:[%s164 + $0x1778] sm:$0xff]
      %v2476 = vld [vmem:[%s164 + $0x1780] sm:$0xff]
      %v2477 = vld [vmem:[%s164 + $0x1788] sm:$0xff]
      %v2478 = vld [vmem:[%s164 + $0x1790] sm:$0xff]
      %v2479 = vld [vmem:[%s164 + $0x1798] sm:$0xff]
      %v2480 = vld [vmem:[%s164 + $0x17a0] sm:$0xff]
      %v2481 = vld [vmem:[%s164 + $0x17a8] sm:$0xff]
      %v2482 = vld [vmem:[%s164 + $0x17b0] sm:$0xff]
      %v2483 = vld [vmem:[%s164 + $0x17b8] sm:$0xff]
      %v2484 = vld [vmem:[%s164 + $0x17c0] sm:$0xff]
      %v2485 = vld [vmem:[%s164 + $0x17c8] sm:$0xff]
      %v2486 = vld [vmem:[%s164 + $0x17d0] sm:$0xff]
      %v2487 = vld [vmem:[%s164 + $0x17d8] sm:$0xff]
      %v2488 = vld [vmem:[%s164 + $0x17e0] sm:$0xff]
      %v2489 = vld [vmem:[%s164 + $0x17e8] sm:$0xff]
      %v2490 = vld [vmem:[%s164 + $0x17f0] sm:$0xff]
      %v2491 = vld [vmem:[%s164 + $0x17f8] sm:$0xff]
      %v2492 = vld [vmem:[%s164 + $0x1800] sm:$0xff]
      %v2493 = vld [vmem:[%s164 + $0x1808] sm:$0xff]
      %v2494 = vld [vmem:[%s164 + $0x1810] sm:$0xff]
      %v2495 = vld [vmem:[%s164 + $0x1818] sm:$0xff]
      %v2496 = vld [vmem:[%s164 + $0x1820] sm:$0xff]
      %v2497 = vld [vmem:[%s164 + $0x1828] sm:$0xff]
      %v2498 = vld [vmem:[%s164 + $0x1830] sm:$0xff]
      %v2499 = vld [vmem:[%s164 + $0x1838] sm:$0xff]
      %v2500 = vld [vmem:[%s164 + $0x1840] sm:$0xff]
      %v2501 = vld [vmem:[%s164 + $0x1848] sm:$0xff]
      %v2502 = vld [vmem:[%s164 + $0x1850] sm:$0xff]
      %v2503 = vld [vmem:[%s164 + $0x1858] sm:$0xff]
      %v2504 = vld [vmem:[%s164 + $0x1860] sm:$0xff]
      %v2505 = vld [vmem:[%s164 + $0x1868] sm:$0xff]
      %v2506 = vld [vmem:[%s164 + $0x1870] sm:$0xff]
      %v2507 = vld [vmem:[%s164 + $0x1878] sm:$0xff]
      %v2508 = vld [vmem:[%s164 + $0x1880] sm:$0xff]
      %v2509 = vld [vmem:[%s164 + $0x1888] sm:$0xff]
      %v2510 = vld [vmem:[%s164 + $0x1890] sm:$0xff]
      %v2511 = vld [vmem:[%s164 + $0x1898] sm:$0xff]
      %v2512 = vld [vmem:[%s164 + $0x18a0] sm:$0xff]
      %v2513 = vld [vmem:[%s164 + $0x18a8] sm:$0xff]
      %v2514 = vld [vmem:[%s164 + $0x18b0] sm:$0xff]
      %v2515 = vld [vmem:[%s164 + $0x18b8] sm:$0xff]
      %v2516 = vld [vmem:[%s164 + $0x18c0] sm:$0xff]
      %v2517 = vld [vmem:[%s164 + $0x18c8] sm:$0xff]
      %v2518 = vld [vmem:[%s164 + $0x18d0] sm:$0xff]
      %v2519 = vld [vmem:[%s164 + $0x18d8] sm:$0xff]
      %v2520 = vld [vmem:[%s164 + $0x18e0] sm:$0xff]
      %v2521 = vld [vmem:[%s164 + $0x18e8] sm:$0xff]
      %v2522 = vld [vmem:[%s164 + $0x18f0] sm:$0xff]
      %v2523 = vld [vmem:[%s164 + $0x18f8] sm:$0xff]
      %v2524 = vld [vmem:[%s164 + $0x1900] sm:$0xff]
      %v2525 = vld [vmem:[%s164 + $0x1908] sm:$0xff]
      %v2526 = vld [vmem:[%s164 + $0x1910] sm:$0xff]
      %v2527 = vld [vmem:[%s164 + $0x1918] sm:$0xff]
      %v2528 = vld [vmem:[%s164 + $0x1920] sm:$0xff]
      %v2529 = vld [vmem:[%s164 + $0x1928] sm:$0xff]
      %v2530 = vld [vmem:[%s164 + $0x1930] sm:$0xff]
      %v2531 = vld [vmem:[%s164 + $0x1938] sm:$0xff]
      %v2532 = vld [vmem:[%s164 + $0x1940] sm:$0xff]
      %v2533 = vld [vmem:[%s164 + $0x1948] sm:$0xff]
      %v2534 = vld [vmem:[%s164 + $0x1950] sm:$0xff]
      %v2535 = vld [vmem:[%s164 + $0x1958] sm:$0xff]
      %v2536 = vld [vmem:[%s164 + $0x1960] sm:$0xff]
      %v2537 = vld [vmem:[%s164 + $0x1968] sm:$0xff]
      %v2538 = vld [vmem:[%s164 + $0x1970] sm:$0xff]
      %v2539 = vld [vmem:[%s164 + $0x1978] sm:$0xff]
      %v2540 = vld [vmem:[%s164 + $0x1980] sm:$0xff]
      %v2541 = vld [vmem:[%s164 + $0x1988] sm:$0xff]
      %v2542 = vld [vmem:[%s164 + $0x1990] sm:$0xff]
      %v2543 = vld [vmem:[%s164 + $0x1998] sm:$0xff]
      %v2544 = vld [vmem:[%s164 + $0x19a0] sm:$0xff]
      %v2545 = vld [vmem:[%s164 + $0x19a8] sm:$0xff]
      %v2546 = vld [vmem:[%s164 + $0x19b0] sm:$0xff]
      %v2547 = vld [vmem:[%s164 + $0x19b8] sm:$0xff]
      %v2548 = vld [vmem:[%s164 + $0x19c0] sm:$0xff]
      %v2549 = vld [vmem:[%s164 + $0x19c8] sm:$0xff]
      %v2550 = vld [vmem:[%s164 + $0x19d0] sm:$0xff]
      %v2551 = vld [vmem:[%s164 + $0x19d8] sm:$0xff]
      %v2552 = vld [vmem:[%s164 + $0x19e0] sm:$0xff]
      %v2553 = vld [vmem:[%s164 + $0x19e8] sm:$0xff]
      %v2554 = vld [vmem:[%s164 + $0x19f0] sm:$0xff]
      %v2555 = vld [vmem:[%s164 + $0x19f8] sm:$0xff]
      %v2556 = vld [vmem:[%s164 + $0x1a00] sm:$0xff]
      %v2557 = vld [vmem:[%s164 + $0x1a08] sm:$0xff]
      %v2558 = vld [vmem:[%s164 + $0x1a10] sm:$0xff]
      %v2559 = vld [vmem:[%s164 + $0x1a18] sm:$0xff]
      %v2560 = vld [vmem:[%s164 + $0x1a20] sm:$0xff]
      %v2561 = vld [vmem:[%s164 + $0x1a28] sm:$0xff]
      %v2562 = vld [vmem:[%s164 + $0x1a30] sm:$0xff]
      %v2563 = vld [vmem:[%s164 + $0x1a38] sm:$0xff]
      %v2564 = vld [vmem:[%s164 + $0x1a40] sm:$0xff]
      %v2565 = vld [vmem:[%s164 + $0x1a48] sm:$0xff]
      %v2566 = vld [vmem:[%s164 + $0x1a50] sm:$0xff]
      %v2567 = vld [vmem:[%s164 + $0x1a58] sm:$0xff]
      %v2568 = vld [vmem:[%s164 + $0x1a60] sm:$0xff]
      %v2569 = vld [vmem:[%s164 + $0x1a68] sm:$0xff]
      %v2570 = vld [vmem:[%s164 + $0x1a70] sm:$0xff]
      %v2571 = vld [vmem:[%s164 + $0x1a78] sm:$0xff]
      %v2572 = vld [vmem:[%s164 + $0x1a80] sm:$0xff]
      %v2573 = vld [vmem:[%s164 + $0x1a88] sm:$0xff]
      %v2574 = vld [vmem:[%s164 + $0x1a90] sm:$0xff]
      %v2575 = vld [vmem:[%s164 + $0x1a98] sm:$0xff]
      %v2576 = vld [vmem:[%s164 + $0x1aa0] sm:$0xff]
      %v2577 = vld [vmem:[%s164 + $0x1aa8] sm:$0xff]
      %v2578 = vld [vmem:[%s164 + $0x1ab0] sm:$0xff]
      %v2579 = vld [vmem:[%s164 + $0x1ab8] sm:$0xff]
      %v2580 = vld [vmem:[%s164 + $0x1ac0] sm:$0xff]
      %v2581 = vld [vmem:[%s164 + $0x1ac8] sm:$0xff]
      %v2582 = vld [vmem:[%s164 + $0x1ad0] sm:$0xff]
      %v2583 = vld [vmem:[%s164 + $0x1ad8] sm:$0xff]
      %v2584 = vld [vmem:[%s164 + $0x1ae0] sm:$0xff]
      %v2585 = vld [vmem:[%s164 + $0x1ae8] sm:$0xff]
      %v2586 = vld [vmem:[%s164 + $0x1af0] sm:$0xff]
      %v2587 = vld [vmem:[%s164 + $0x1af8] sm:$0xff]
      %v2588 = vld [vmem:[%s164 + $0x1b00] sm:$0xff]
      %v2589 = vld [vmem:[%s164 + $0x1b08] sm:$0xff]
      %v2590 = vld [vmem:[%s164 + $0x1b10] sm:$0xff]
      %v2591 = vld [vmem:[%s164 + $0x1b18] sm:$0xff]
      %v2592 = vld [vmem:[%s164 + $0x1b20] sm:$0xff]
      %v2593 = vld [vmem:[%s164 + $0x1b28] sm:$0xff]
      %v2594 = vld [vmem:[%s164 + $0x1b30] sm:$0xff]
      %v2595 = vld [vmem:[%s164 + $0x1b38] sm:$0xff]
      %v2596 = vld [vmem:[%s164 + $0x1b40] sm:$0xff]
      %v2597 = vld [vmem:[%s164 + $0x1b48] sm:$0xff]
      %v2598 = vld [vmem:[%s164 + $0x1b50] sm:$0xff]
      %v2599 = vld [vmem:[%s164 + $0x1b58] sm:$0xff]
      %v2600 = vld [vmem:[%s164 + $0x1b60] sm:$0xff]
      %v2601 = vld [vmem:[%s164 + $0x1b68] sm:$0xff]
      %v2602 = vld [vmem:[%s164 + $0x1b70] sm:$0xff]
      %v2603 = vld [vmem:[%s164 + $0x1b78] sm:$0xff]
      %v2604 = vld [vmem:[%s164 + $0x1b80] sm:$0xff]
      %v2605 = vld [vmem:[%s164 + $0x1b88] sm:$0xff]
      %v2606 = vld [vmem:[%s164 + $0x1b90] sm:$0xff]
      %v2607 = vld [vmem:[%s164 + $0x1b98] sm:$0xff]
      %v2608 = vld [vmem:[%s164 + $0x1ba0] sm:$0xff]
      %v2609 = vld [vmem:[%s164 + $0x1ba8] sm:$0xff]
      %v2610 = vld [vmem:[%s164 + $0x1bb0] sm:$0xff]
      %v2611 = vld [vmem:[%s164 + $0x1bb8] sm:$0xff]
      %v2612 = vld [vmem:[%s164 + $0x1bc0] sm:$0xff]
      %v2613 = vld [vmem:[%s164 + $0x1bc8] sm:$0xff]
      %v2614 = vld [vmem:[%s164 + $0x1bd0] sm:$0xff]
      %v2615 = vld [vmem:[%s164 + $0x1bd8] sm:$0xff]
      %v2616 = vld [vmem:[%s164 + $0x1be0] sm:$0xff]
      %v2617 = vld [vmem:[%s164 + $0x1be8] sm:$0xff]
      %v2618 = vld [vmem:[%s164 + $0x1bf0] sm:$0xff]
      %v2619 = vld [vmem:[%s164 + $0x1bf8] sm:$0xff]
      %v2620 = vld [vmem:[%s164 + $0x1c00] sm:$0xff]
      %v2621 = vld [vmem:[%s164 + $0x1c08] sm:$0xff]
      %v2622 = vld [vmem:[%s164 + $0x1c10] sm:$0xff]
      %v2623 = vld [vmem:[%s164 + $0x1c18] sm:$0xff]
      %v2624 = vld [vmem:[%s164 + $0x1c20] sm:$0xff]
      %v2625 = vld [vmem:[%s164 + $0x1c28] sm:$0xff]
      %v2626 = vld [vmem:[%s164 + $0x1c30] sm:$0xff]
      %v2627 = vld [vmem:[%s164 + $0x1c38] sm:$0xff]
      %v2628 = vld [vmem:[%s164 + $0x1c40] sm:$0xff]
      %v2629 = vld [vmem:[%s164 + $0x1c48] sm:$0xff]
      %v2630 = vld [vmem:[%s164 + $0x1c50] sm:$0xff]
      %v2631 = vld [vmem:[%s164 + $0x1c58] sm:$0xff]
      %v2632 = vld [vmem:[%s164 + $0x1c60] sm:$0xff]
      %v2633 = vld [vmem:[%s164 + $0x1c68] sm:$0xff]
      %v2634 = vld [vmem:[%s164 + $0x1c70] sm:$0xff]
      %v2635 = vld [vmem:[%s164 + $0x1c78] sm:$0xff]
      %v2636 = vld [vmem:[%s164 + $0x1c80] sm:$0xff]
      %v2637 = vld [vmem:[%s164 + $0x1c88] sm:$0xff]
      %v2638 = vld [vmem:[%s164 + $0x1c90] sm:$0xff]
      %v2639 = vld [vmem:[%s164 + $0x1c98] sm:$0xff]
      %v2640 = vld [vmem:[%s164 + $0x1ca0] sm:$0xff]
      %v2641 = vld [vmem:[%s164 + $0x1ca8] sm:$0xff]
      %v2642 = vld [vmem:[%s164 + $0x1cb0] sm:$0xff]
      %v2643 = vld [vmem:[%s164 + $0x1cb8] sm:$0xff]
      %v2644 = vld [vmem:[%s164 + $0x1cc0] sm:$0xff]
      %v2645 = vld [vmem:[%s164 + $0x1cc8] sm:$0xff]
      %v2646 = vld [vmem:[%s164 + $0x1cd0] sm:$0xff]
      %v2647 = vld [vmem:[%s164 + $0x1cd8] sm:$0xff]
      %v2648 = vld [vmem:[%s164 + $0x1ce0] sm:$0xff]
      %v2649 = vld [vmem:[%s164 + $0x1ce8] sm:$0xff]
      %v2650 = vld [vmem:[%s164 + $0x1cf0] sm:$0xff]
      %v2651 = vld [vmem:[%s164 + $0x1cf8] sm:$0xff]
      %v2652 = vld [vmem:[%s164 + $0x1d00] sm:$0xff]
      %v2653 = vld [vmem:[%s164 + $0x1d08] sm:$0xff]
      %v2654 = vld [vmem:[%s164 + $0x1d10] sm:$0xff]
      %v2655 = vld [vmem:[%s164 + $0x1d18] sm:$0xff]
      %v2656 = vld [vmem:[%s164 + $0x1d20] sm:$0xff]
      %v2657 = vld [vmem:[%s164 + $0x1d28] sm:$0xff]
      %v2658 = vld [vmem:[%s164 + $0x1d30] sm:$0xff]
      %v2659 = vld [vmem:[%s164 + $0x1d38] sm:$0xff]
      %v2660 = vld [vmem:[%s164 + $0x1d40] sm:$0xff]
      %v2661 = vld [vmem:[%s164 + $0x1d48] sm:$0xff]
      %v2662 = vld [vmem:[%s164 + $0x1d50] sm:$0xff]
      %v2663 = vld [vmem:[%s164 + $0x1d58] sm:$0xff]
      %v2664 = vld [vmem:[%s164 + $0x1d60] sm:$0xff]
      %v2665 = vld [vmem:[%s164 + $0x1d68] sm:$0xff]
      %v2666 = vld [vmem:[%s164 + $0x1d70] sm:$0xff]
      %v2667 = vld [vmem:[%s164 + $0x1d78] sm:$0xff]
      %v2668 = vld [vmem:[%s164 + $0x1d80] sm:$0xff]
      %v2669 = vld [vmem:[%s164 + $0x1d88] sm:$0xff]
      %v2670 = vld [vmem:[%s164 + $0x1d90] sm:$0xff]
      %v2671 = vld [vmem:[%s164 + $0x1d98] sm:$0xff]
      %v2672 = vld [vmem:[%s164 + $0x1da0] sm:$0xff]
      %v2673 = vld [vmem:[%s164 + $0x1da8] sm:$0xff]
      %v2674 = vld [vmem:[%s164 + $0x1db0] sm:$0xff]
      %v2675 = vld [vmem:[%s164 + $0x1db8] sm:$0xff]
      %v2676 = vld [vmem:[%s164 + $0x1dc0] sm:$0xff]
      %v2677 = vld [vmem:[%s164 + $0x1dc8] sm:$0xff]
      %v2678 = vld [vmem:[%s164 + $0x1dd0] sm:$0xff]
      %v2679 = vld [vmem:[%s164 + $0x1dd8] sm:$0xff]
      %v2680 = vld [vmem:[%s164 + $0x1de0] sm:$0xff]
      %v2681 = vld [vmem:[%s164 + $0x1de8] sm:$0xff]
      %v2682 = vld [vmem:[%s164 + $0x1df0] sm:$0xff]
      %v2683 = vld [vmem:[%s164 + $0x1df8] sm:$0xff]
      %v2684 = vld [vmem:[%s164 + $0x1e00] sm:$0xff]
      %v2685 = vld [vmem:[%s164 + $0x1e08] sm:$0xff]
      %v2686 = vld [vmem:[%s164 + $0x1e10] sm:$0xff]
      %v2687 = vld [vmem:[%s164 + $0x1e18] sm:$0xff]
      %v2688 = vld [vmem:[%s164 + $0x1e20] sm:$0xff]
      %v2689 = vld [vmem:[%s164 + $0x1e28] sm:$0xff]
      %v2690 = vld [vmem:[%s164 + $0x1e30] sm:$0xff]
      %v2691 = vld [vmem:[%s164 + $0x1e38] sm:$0xff]
      %v2692 = vld [vmem:[%s164 + $0x1e40] sm:$0xff]
      %v2693 = vld [vmem:[%s164 + $0x1e48] sm:$0xff]
      %v2694 = vld [vmem:[%s164 + $0x1e50] sm:$0xff]
      %v2695 = vld [vmem:[%s164 + $0x1e58] sm:$0xff]
      %v2696 = vld [vmem:[%s164 + $0x1e60] sm:$0xff]
      %v2697 = vld [vmem:[%s164 + $0x1e68] sm:$0xff]
      %v2698 = vld [vmem:[%s164 + $0x1e70] sm:$0xff]
      %v2699 = vld [vmem:[%s164 + $0x1e78] sm:$0xff]
      %v2700 = vld [vmem:[%s164 + $0x1e80] sm:$0xff]
      %v2701 = vld [vmem:[%s164 + $0x1e88] sm:$0xff]
      %v2702 = vld [vmem:[%s164 + $0x1e90] sm:$0xff]
      %v2703 = vld [vmem:[%s164 + $0x1e98] sm:$0xff]
      %v2704 = vld [vmem:[%s164 + $0x1ea0] sm:$0xff]
      %v2705 = vld [vmem:[%s164 + $0x1ea8] sm:$0xff]
      %v2706 = vld [vmem:[%s164 + $0x1eb0] sm:$0xff]
      %v2707 = vld [vmem:[%s164 + $0x1eb8] sm:$0xff]
      %v2708 = vld [vmem:[%s164 + $0x1ec0] sm:$0xff]
      %v2709 = vld [vmem:[%s164 + $0x1ec8] sm:$0xff]
      %v2710 = vld [vmem:[%s164 + $0x1ed0] sm:$0xff]
      %v2711 = vld [vmem:[%s164 + $0x1ed8] sm:$0xff]
      %v2712 = vld [vmem:[%s164 + $0x1ee0] sm:$0xff]
      %v2713 = vld [vmem:[%s164 + $0x1ee8] sm:$0xff]
      %v2714 = vld [vmem:[%s164 + $0x1ef0] sm:$0xff]
      %v2715 = vld [vmem:[%s164 + $0x1ef8] sm:$0xff]
      %v2716 = vld [vmem:[%s164 + $0x1f00] sm:$0xff]
      %v2717 = vld [vmem:[%s164 + $0x1f08] sm:$0xff]
      %v2718 = vld [vmem:[%s164 + $0x1f10] sm:$0xff]
      %v2719 = vld [vmem:[%s164 + $0x1f18] sm:$0xff]
      %v2720 = vld [vmem:[%s164 + $0x1f20] sm:$0xff]
      %v2721 = vld [vmem:[%s164 + $0x1f28] sm:$0xff]
      %v2722 = vld [vmem:[%s164 + $0x1f30] sm:$0xff]
      %v2723 = vld [vmem:[%s164 + $0x1f38] sm:$0xff]
      %v2724 = vld [vmem:[%s164 + $0x1f40] sm:$0xff]
      %v2725 = vld [vmem:[%s164 + $0x1f48] sm:$0xff]
      %v2726 = vld [vmem:[%s164 + $0x1f50] sm:$0xff]
      %v2727 = vld [vmem:[%s164 + $0x1f58] sm:$0xff]
      %v2728 = vld [vmem:[%s164 + $0x1f60] sm:$0xff]
      %v2729 = vld [vmem:[%s164 + $0x1f68] sm:$0xff]
      %v2730 = vld [vmem:[%s164 + $0x1f70] sm:$0xff]
      %v2731 = vld [vmem:[%s164 + $0x1f78] sm:$0xff]
      %v2732 = vld [vmem:[%s164 + $0x1f80] sm:$0xff]
      %v2733 = vld [vmem:[%s164 + $0x1f88] sm:$0xff]
      %v2734 = vld [vmem:[%s164 + $0x1f90] sm:$0xff]
      %v2735 = vld [vmem:[%s164 + $0x1f98] sm:$0xff]
      %v2736 = vld [vmem:[%s164 + $0x1fa0] sm:$0xff]
      %v2737 = vld [vmem:[%s164 + $0x1fa8] sm:$0xff]
      %v2738 = vld [vmem:[%s164 + $0x1fb0] sm:$0xff]
      %v2739 = vld [vmem:[%s164 + $0x1fb8] sm:$0xff]
      %v2740 = vld [vmem:[%s164 + $0x1fc0] sm:$0xff]
      %v2741 = vld [vmem:[%s164 + $0x1fc8] sm:$0xff]
      %v2742 = vld [vmem:[%s164 + $0x1fd0] sm:$0xff]
      %v2743 = vld [vmem:[%s164 + $0x1fd8] sm:$0xff]
      %v2744 = vld [vmem:[%s164 + $0x1fe0] sm:$0xff]
      %v2745 = vld [vmem:[%s164 + $0x1fe8] sm:$0xff]
      %v2746 = vld [vmem:[%s164 + $0x1ff0] sm:$0xff]
      %v2747 = vld [vmem:[%s164 + $0x1ff8] sm:$0xff]
      %v2748 = vld [vmem:[%s164 + $0x2000] sm:$0xff]
      %v2749 = vld [vmem:[%s164 + $0x2008] sm:$0xff]
      %v2750 = vld [vmem:[%s164 + $0x2010] sm:$0xff]
      %v2751 = vld [vmem:[%s164 + $0x2018] sm:$0xff]
      %v2752 = vld [vmem:[%s164 + $0x2020] sm:$0xff]
      %v2753 = vld [vmem:[%s164 + $0x2028] sm:$0xff]
      %v2754 = vld [vmem:[%s164 + $0x2030] sm:$0xff]
      %v2755 = vld [vmem:[%s164 + $0x2038] sm:$0xff]
      %v2756 = vld [vmem:[%s164 + $0x2040] sm:$0xff]
      %v2757 = vld [vmem:[%s164 + $0x2048] sm:$0xff]
      %v2758 = vld [vmem:[%s164 + $0x2050] sm:$0xff]
      %v2759 = vld [vmem:[%s164 + $0x2058] sm:$0xff]
      %v2760 = vld [vmem:[%s164 + $0x2060] sm:$0xff]
      %v2761 = vld [vmem:[%s164 + $0x2068] sm:$0xff]
      %v2762 = vld [vmem:[%s164 + $0x2070] sm:$0xff]
      %v2763 = vld [vmem:[%s164 + $0x2078] sm:$0xff]
      %v2764 = vld [vmem:[%s164 + $0x2080] sm:$0xff]
      %v2765 = vld [vmem:[%s164 + $0x2088] sm:$0xff]
      %v2766 = vld [vmem:[%s164 + $0x2090] sm:$0xff]
      %v2767 = vld [vmem:[%s164 + $0x2098] sm:$0xff]
      %v2768 = vld [vmem:[%s164 + $0x20a0] sm:$0xff]
      %v2769 = vld [vmem:[%s164 + $0x20a8] sm:$0xff]
      %v2770 = vld [vmem:[%s164 + $0x20b0] sm:$0xff]
      %v2771 = vld [vmem:[%s164 + $0x20b8] sm:$0xff]
      %v2772 = vld [vmem:[%s164 + $0x20c0] sm:$0xff]
      %v2773 = vld [vmem:[%s164 + $0x20c8] sm:$0xff]
      %v2774 = vld [vmem:[%s164 + $0x20d0] sm:$0xff]
      %v2775 = vld [vmem:[%s164 + $0x20d8] sm:$0xff]
      %v2776 = vld [vmem:[%s164 + $0x20e0] sm:$0xff]
      %v2777 = vld [vmem:[%s164 + $0x20e8] sm:$0xff]
      %v2778 = vld [vmem:[%s164 + $0x20f0] sm:$0xff]
      %v2779 = vld [vmem:[%s164 + $0x20f8] sm:$0xff]
      %v2780 = vld [vmem:[%s164 + $0x2100] sm:$0xff]
      %v2781 = vld [vmem:[%s164 + $0x2108] sm:$0xff]
      %v2782 = vld [vmem:[%s164 + $0x2110] sm:$0xff]
      %v2783 = vld [vmem:[%s164 + $0x2118] sm:$0xff]
      %v2784 = vld [vmem:[%s164 + $0x2120] sm:$0xff]
      %v2785 = vld [vmem:[%s164 + $0x2128] sm:$0xff]
      %v2786 = vld [vmem:[%s164 + $0x2130] sm:$0xff]
      %v2787 = vld [vmem:[%s164 + $0x2138] sm:$0xff]
      %v2788 = vld [vmem:[%s164 + $0x2140] sm:$0xff]
      %v2789 = vld [vmem:[%s164 + $0x2148] sm:$0xff]
      %v2790 = vld [vmem:[%s164 + $0x2150] sm:$0xff]
      %v2791 = vld [vmem:[%s164 + $0x2158] sm:$0xff]
      %v2792 = vld [vmem:[%s164 + $0x2160] sm:$0xff]
      %v2793 = vld [vmem:[%s164 + $0x2168] sm:$0xff]
      %v2794 = vld [vmem:[%s164 + $0x2170] sm:$0xff]
      %v2795 = vld [vmem:[%s164 + $0x2178] sm:$0xff]
      %v2796 = vld [vmem:[%s164 + $0x2180] sm:$0xff]
      %v2797 = vld [vmem:[%s164 + $0x2188] sm:$0xff]
      %v2798 = vld [vmem:[%s164 + $0x2190] sm:$0xff]
      %v2799 = vld [vmem:[%s164 + $0x2198] sm:$0xff]
      %v2800 = vld [vmem:[%s164 + $0x21a0] sm:$0xff]
      %v2801 = vld [vmem:[%s164 + $0x21a8] sm:$0xff]
      %v2802 = vld [vmem:[%s164 + $0x21b0] sm:$0xff]
      %v2803 = vld [vmem:[%s164 + $0x21b8] sm:$0xff]
      %v2804 = vld [vmem:[%s164 + $0x21c0] sm:$0xff]
      %v2805 = vld [vmem:[%s164 + $0x21c8] sm:$0xff]
      %v2806 = vld [vmem:[%s164 + $0x21d0] sm:$0xff]
      %v2807 = vld [vmem:[%s164 + $0x21d8] sm:$0xff]
      %v2808 = vld [vmem:[%s164 + $0x21e0] sm:$0xff]
      %v2809 = vld [vmem:[%s164 + $0x21e8] sm:$0xff]
      %v2810 = vld [vmem:[%s164 + $0x21f0] sm:$0xff]
      %v2811 = vld [vmem:[%s164 + $0x21f8] sm:$0xff]
      %v2812 = vld [vmem:[%s164 + $0x2200] sm:$0xff]
      %v2813 = vld [vmem:[%s164 + $0x2208] sm:$0xff]
      %v2814 = vld [vmem:[%s164 + $0x2210] sm:$0xff]
      %v2815 = vld [vmem:[%s164 + $0x2218] sm:$0xff]
      %v2816 = vld [vmem:[%s164 + $0x2220] sm:$0xff]
      %v2817 = vld [vmem:[%s164 + $0x2228] sm:$0xff]
      %v2818 = vld [vmem:[%s164 + $0x2230] sm:$0xff]
      %v2819 = vld [vmem:[%s164 + $0x2238] sm:$0xff]
      %v2820 = vld [vmem:[%s164 + $0x2240] sm:$0xff]
      %v2821 = vld [vmem:[%s164 + $0x2248] sm:$0xff]
      %v2822 = vld [vmem:[%s164 + $0x2250] sm:$0xff]
      %v2823 = vld [vmem:[%s164 + $0x2258] sm:$0xff]
      %v2824 = vld [vmem:[%s164 + $0x2260] sm:$0xff]
      %v2825 = vld [vmem:[%s164 + $0x2268] sm:$0xff]
      %v2826 = vld [vmem:[%s164 + $0x2270] sm:$0xff]
      %v2827 = vld [vmem:[%s164 + $0x2278] sm:$0xff]
      %v2828 = vld [vmem:[%s164 + $0x2280] sm:$0xff]
      %v2829 = vld [vmem:[%s164 + $0x2288] sm:$0xff]
      %v2830 = vld [vmem:[%s164 + $0x2290] sm:$0xff]
      %v2831 = vld [vmem:[%s164 + $0x2298] sm:$0xff]
      %v2832 = vld [vmem:[%s164 + $0x22a0] sm:$0xff]
      %v2833 = vld [vmem:[%s164 + $0x22a8] sm:$0xff]
      %v2834 = vld [vmem:[%s164 + $0x22b0] sm:$0xff]
      %v2835 = vld [vmem:[%s164 + $0x22b8] sm:$0xff]
      %v2836 = vld [vmem:[%s164 + $0x22c0] sm:$0xff]
      %v2837 = vld [vmem:[%s164 + $0x22c8] sm:$0xff]
      %v2838 = vld [vmem:[%s164 + $0x22d0] sm:$0xff]
      %v2839 = vld [vmem:[%s164 + $0x22d8] sm:$0xff]
      %v2840 = vld [vmem:[%s164 + $0x22e0] sm:$0xff]
      %v2841 = vld [vmem:[%s164 + $0x22e8] sm:$0xff]
      %v2842 = vld [vmem:[%s164 + $0x22f0] sm:$0xff]
      %v2843 = vld [vmem:[%s164 + $0x22f8] sm:$0xff]
      %v2844 = vld [vmem:[%s164 + $0x2300] sm:$0xff]
      %v2845 = vld [vmem:[%s164 + $0x2308] sm:$0xff]
      %v2846 = vld [vmem:[%s164 + $0x2310] sm:$0xff]
      %v2847 = vld [vmem:[%s164 + $0x2318] sm:$0xff]
      %v2848 = vld [vmem:[%s164 + $0x2320] sm:$0xff]
      %v2849 = vld [vmem:[%s164 + $0x2328] sm:$0xff]
      %v2850 = vld [vmem:[%s164 + $0x2330] sm:$0xff]
      %v2851 = vld [vmem:[%s164 + $0x2338] sm:$0xff]
      %v2852 = vld [vmem:[%s164 + $0x2340] sm:$0xff]
      %v2853 = vld [vmem:[%s164 + $0x2348] sm:$0xff]
      %v2854 = vld [vmem:[%s164 + $0x2350] sm:$0xff]
      %v2855 = vld [vmem:[%s164 + $0x2358] sm:$0xff]
      %v2856 = vld [vmem:[%s164 + $0x2360] sm:$0xff]
      %v2857 = vld [vmem:[%s164 + $0x2368] sm:$0xff]
      %v2858 = vld [vmem:[%s164 + $0x2370] sm:$0xff]
      %v2859 = vld [vmem:[%s164 + $0x2378] sm:$0xff]
      %v2860 = vld [vmem:[%s164 + $0x2380] sm:$0xff]
      %v2861 = vld [vmem:[%s164 + $0x2388] sm:$0xff]
      %v2862 = vld [vmem:[%s164 + $0x2390] sm:$0xff]
      %v2863 = vld [vmem:[%s164 + $0x2398] sm:$0xff]
      %v2864 = vld [vmem:[%s164 + $0x23a0] sm:$0xff]
      %v2865 = vld [vmem:[%s164 + $0x23a8] sm:$0xff]
      %v2866 = vld [vmem:[%s164 + $0x23b0] sm:$0xff]
      %v2867 = vld [vmem:[%s164 + $0x23b8] sm:$0xff]
      %v2868 = vld [vmem:[%s164 + $0x23c0] sm:$0xff]
      %v2869 = vld [vmem:[%s164 + $0x23c8] sm:$0xff]
      %v2870 = vld [vmem:[%s164 + $0x23d0] sm:$0xff]
      %v2871 = vld [vmem:[%s164 + $0x23d8] sm:$0xff]
      %v2872 = vld [vmem:[%s164 + $0x23e0] sm:$0xff]
      %v2873 = vld [vmem:[%s164 + $0x23e8] sm:$0xff]
      %v2874 = vld [vmem:[%s164 + $0x23f0] sm:$0xff]
      %v2875 = vld [vmem:[%s164 + $0x23f8] sm:$0xff]
      %v2876 = vld [vmem:[%s164 + $0x2400] sm:$0xff]
      %v2877 = vld [vmem:[%s164 + $0x2408] sm:$0xff]
      %v2878 = vld [vmem:[%s164 + $0x2410] sm:$0xff]
      %v2879 = vld [vmem:[%s164 + $0x2418] sm:$0xff]
      %v2880 = vld [vmem:[%s164 + $0x2420] sm:$0xff]
      %v2881 = vld [vmem:[%s164 + $0x2428] sm:$0xff]
      %v2882 = vld [vmem:[%s164 + $0x2430] sm:$0xff]
      %v2883 = vld [vmem:[%s164 + $0x2438] sm:$0xff]
      %v2884 = vld [vmem:[%s164 + $0x2440] sm:$0xff]
      %v2885 = vld [vmem:[%s164 + $0x2448] sm:$0xff]
      %v2886 = vld [vmem:[%s164 + $0x2450] sm:$0xff]
      %v2887 = vld [vmem:[%s164 + $0x2458] sm:$0xff]
      %v2888 = vld [vmem:[%s164 + $0x2460] sm:$0xff]
      %v2889 = vld [vmem:[%s164 + $0x2468] sm:$0xff]
      %v2890 = vld [vmem:[%s164 + $0x2470] sm:$0xff]
      %v2891 = vld [vmem:[%s164 + $0x2478] sm:$0xff]
      %v2892 = vld [vmem:[%s164 + $0x2480] sm:$0xff]
      %v2893 = vld [vmem:[%s164 + $0x2488] sm:$0xff]
      %v2894 = vld [vmem:[%s164 + $0x2490] sm:$0xff]
      %v2895 = vld [vmem:[%s164 + $0x2498] sm:$0xff]
      %v2896 = vld [vmem:[%s164 + $0x24a0] sm:$0xff]
      %v2897 = vld [vmem:[%s164 + $0x24a8] sm:$0xff]
      %v2898 = vld [vmem:[%s164 + $0x24b0] sm:$0xff]
      %v2899 = vld [vmem:[%s164 + $0x24b8] sm:$0xff]
      %v2900 = vld [vmem:[%s164 + $0x24c0] sm:$0xff]
      %v2901 = vld [vmem:[%s164 + $0x24c8] sm:$0xff]
      %v2902 = vld [vmem:[%s164 + $0x24d0] sm:$0xff]
      %v2903 = vld [vmem:[%s164 + $0x24d8] sm:$0xff]
      %v2904 = vld [vmem:[%s164 + $0x24e0] sm:$0xff]
      %v2905 = vld [vmem:[%s164 + $0x24e8] sm:$0xff]
      %v2906 = vld [vmem:[%s164 + $0x24f0] sm:$0xff]
      %v2907 = vld [vmem:[%s164 + $0x24f8] sm:$0xff]
      %v2908 = vld [vmem:[%s164 + $0x2500] sm:$0xff]
      %v2909 = vld [vmem:[%s164 + $0x2508] sm:$0xff]
      %v2910 = vld [vmem:[%s164 + $0x2510] sm:$0xff]
      %v2911 = vld [vmem:[%s164 + $0x2518] sm:$0xff]
      %v2912 = vld [vmem:[%s164 + $0x2520] sm:$0xff]
      %v2913 = vld [vmem:[%s164 + $0x2528] sm:$0xff]
      %v2914 = vld [vmem:[%s164 + $0x2530] sm:$0xff]
      %v2915 = vld [vmem:[%s164 + $0x2538] sm:$0xff]
      %v2916 = vld [vmem:[%s164 + $0x2540] sm:$0xff]
      %v2917 = vld [vmem:[%s164 + $0x2548] sm:$0xff]
      %v2918 = vld [vmem:[%s164 + $0x2550] sm:$0xff]
      %v2919 = vld [vmem:[%s164 + $0x2558] sm:$0xff]
      %v2920 = vld [vmem:[%s164 + $0x2560] sm:$0xff]
      %v2921 = vld [vmem:[%s164 + $0x2568] sm:$0xff]
      %v2922 = vld [vmem:[%s164 + $0x2570] sm:$0xff]
      %v2923 = vld [vmem:[%s164 + $0x2578] sm:$0xff]
      %v2924 = vld [vmem:[%s164 + $0x2580] sm:$0xff]
      %v2925 = vld [vmem:[%s164 + $0x2588] sm:$0xff]
      %v2926 = vld [vmem:[%s164 + $0x2590] sm:$0xff]
      %v2927 = vld [vmem:[%s164 + $0x2598] sm:$0xff]
      %v2928 = vld [vmem:[%s164 + $0x25a0] sm:$0xff]
      %v2929 = vld [vmem:[%s164 + $0x25a8] sm:$0xff]
      %v2930 = vld [vmem:[%s164 + $0x25b0] sm:$0xff]
      %v2931 = vld [vmem:[%s164 + $0x25b8] sm:$0xff]
      %v2932 = vld [vmem:[%s164 + $0x25c0] sm:$0xff]
      %v2933 = vld [vmem:[%s164 + $0x25c8] sm:$0xff]
      %v2934 = vld [vmem:[%s164 + $0x25d0] sm:$0xff]
      %v2935 = vld [vmem:[%s164 + $0x25d8] sm:$0xff]
      %v2936 = vld [vmem:[%s164 + $0x25e0] sm:$0xff]
      %v2937 = vld [vmem:[%s164 + $0x25e8] sm:$0xff]
      %v2938 = vld [vmem:[%s164 + $0x25f0] sm:$0xff]
      %v2939 = vld [vmem:[%s164 + $0x25f8] sm:$0xff]
      %v2940 = vld [vmem:[%s164 + $0x2600] sm:$0xff]
      %v2941 = vld [vmem:[%s164 + $0x2608] sm:$0xff]
      %v2942 = vld [vmem:[%s164 + $0x2610] sm:$0xff]
      %v2943 = vld [vmem:[%s164 + $0x2618] sm:$0xff]
      %v2944 = vld [vmem:[%s164 + $0x2620] sm:$0xff]
      %v2945 = vld [vmem:[%s164 + $0x2628] sm:$0xff]
      %v2946 = vld [vmem:[%s164 + $0x2630] sm:$0xff]
      %v2947 = vld [vmem:[%s164 + $0x2638] sm:$0xff]
      %v2948 = vld [vmem:[%s164 + $0x2640] sm:$0xff]
      %v2949 = vld [vmem:[%s164 + $0x2648] sm:$0xff]
      %v2950 = vld [vmem:[%s164 + $0x2650] sm:$0xff]
      %v2951 = vld [vmem:[%s164 + $0x2658] sm:$0xff]
      %v2952 = vld [vmem:[%s164 + $0x2660] sm:$0xff]
      %v2953 = vld [vmem:[%s164 + $0x2668] sm:$0xff]
      %v2954 = vld [vmem:[%s164 + $0x2670] sm:$0xff]
      %v2955 = vld [vmem:[%s164 + $0x2678] sm:$0xff]
      %v4188 = vunpack.c.l.b16 %v1724
      %v4189 = vunpack.c.h.b16 %v1724
      %v4190 = vunpack.c.l.b16 %v1725
      %v4191 = vunpack.c.h.b16 %v1725
      %v4192 = vunpack.c.l.b16 %v1726
      %v4193 = vunpack.c.h.b16 %v1726
      %v4194 = vunpack.c.l.b16 %v1727
      %v4195 = vunpack.c.h.b16 %v1727
      %v4196 = vunpack.c.l.b16 %v1728
      %v4197 = vunpack.c.h.b16 %v1728
      %v4198 = vunpack.c.l.b16 %v1729
      %v4199 = vunpack.c.h.b16 %v1729
      %v4200 = vunpack.c.l.b16 %v1730
      %v4201 = vunpack.c.h.b16 %v1730
      %v4202 = vunpack.c.l.b16 %v1731
      %v4203 = vunpack.c.h.b16 %v1731
      %v4204 = vunpack.c.l.b16 %v1732
      %v4205 = vunpack.c.h.b16 %v1732
      %v4206 = vunpack.c.l.b16 %v1733
      %v4207 = vunpack.c.h.b16 %v1733
      %v4208 = vunpack.c.l.b16 %v1734
      %v4209 = vunpack.c.h.b16 %v1734
      %v4210 = vunpack.c.l.b16 %v1735
      %v4211 = vunpack.c.h.b16 %v1735
      %v4212 = vunpack.c.l.b16 %v1736
      %v4213 = vunpack.c.h.b16 %v1736
      %v4214 = vunpack.c.l.b16 %v1737
      %v4215 = vunpack.c.h.b16 %v1737
      %v4216 = vunpack.c.l.b16 %v1738
      %v4217 = vunpack.c.h.b16 %v1738
      %v4218 = vunpack.c.l.b16 %v1739
      %v4219 = vunpack.c.h.b16 %v1739
      %v4220 = vunpack.c.l.b16 %v1740
      %v4221 = vunpack.c.h.b16 %v1740
      %v4222 = vunpack.c.l.b16 %v1741
      %v4223 = vunpack.c.h.b16 %v1741
      %v4224 = vunpack.c.l.b16 %v1742
      %v4225 = vunpack.c.h.b16 %v1742
      %v4226 = vunpack.c.l.b16 %v1743
      %v4227 = vunpack.c.h.b16 %v1743
      %v4228 = vunpack.c.l.b16 %v1744
      %v4229 = vunpack.c.h.b16 %v1744
      %v4230 = vunpack.c.l.b16 %v1745
      %v4231 = vunpack.c.h.b16 %v1745
      %v4232 = vunpack.c.l.b16 %v1746
      %v4233 = vunpack.c.h.b16 %v1746
      %v4234 = vunpack.c.l.b16 %v1747
      %v4235 = vunpack.c.h.b16 %v1747
      %v4236 = vunpack.c.l.b16 %v1748
      %v4237 = vunpack.c.h.b16 %v1748
      %v4238 = vunpack.c.l.b16 %v1749
      %v4239 = vunpack.c.h.b16 %v1749
      %v4240 = vunpack.c.l.b16 %v1750
      %v4241 = vunpack.c.h.b16 %v1750
      %v4242 = vunpack.c.l.b16 %v1751
      %v4243 = vunpack.c.h.b16 %v1751
      %v4244 = vunpack.c.l.b16 %v1752
      %v4245 = vunpack.c.h.b16 %v1752
      %v4246 = vunpack.c.l.b16 %v1753
      %v4247 = vunpack.c.h.b16 %v1753
      %v4248 = vunpack.c.l.b16 %v1754
      %v4249 = vunpack.c.h.b16 %v1754
      %v4250 = vunpack.c.l.b16 %v1755
      %v4251 = vunpack.c.h.b16 %v1755
      %v4252 = vunpack.c.l.b16 %v1756
      %v4253 = vunpack.c.h.b16 %v1756
      %v4254 = vunpack.c.l.b16 %v1757
      %v4255 = vunpack.c.h.b16 %v1757
      %v4256 = vunpack.c.l.b16 %v1758
      %v4257 = vunpack.c.h.b16 %v1758
      %v4258 = vunpack.c.l.b16 %v1759
      %v4259 = vunpack.c.h.b16 %v1759
      %v4260 = vunpack.c.l.b16 %v1760
      %v4261 = vunpack.c.h.b16 %v1760
      %v4262 = vunpack.c.l.b16 %v1761
      %v4263 = vunpack.c.h.b16 %v1761
      %v4264 = vunpack.c.l.b16 %v1762
      %v4265 = vunpack.c.h.b16 %v1762
      %v4266 = vunpack.c.l.b16 %v1763
      %v4267 = vunpack.c.h.b16 %v1763
      %v4268 = vunpack.c.l.b16 %v1764
      %v4269 = vunpack.c.h.b16 %v1764
      %v4270 = vunpack.c.l.b16 %v1765
      %v4271 = vunpack.c.h.b16 %v1765
      %v4272 = vunpack.c.l.b16 %v1766
      %v4273 = vunpack.c.h.b16 %v1766
      %v4274 = vunpack.c.l.b16 %v1767
      %v4275 = vunpack.c.h.b16 %v1767
      %v4276 = vunpack.c.l.b16 %v1768
      %v4277 = vunpack.c.h.b16 %v1768
      %v4278 = vunpack.c.l.b16 %v1769
      %v4279 = vunpack.c.h.b16 %v1769
      %v4280 = vunpack.c.l.b16 %v1770
      %v4281 = vunpack.c.h.b16 %v1770
      %v4282 = vunpack.c.l.b16 %v1771
      %v4283 = vunpack.c.h.b16 %v1771
      %v4284 = vunpack.c.l.b16 %v1772
      %v4285 = vunpack.c.h.b16 %v1772
      %v4286 = vunpack.c.l.b16 %v1773
      %v4287 = vunpack.c.h.b16 %v1773
      %v4288 = vunpack.c.l.b16 %v1774
      %v4289 = vunpack.c.h.b16 %v1774
      %v4290 = vunpack.c.l.b16 %v1775
      %v4291 = vunpack.c.h.b16 %v1775
      %v4292 = vunpack.c.l.b16 %v1776
      %v4293 = vunpack.c.h.b16 %v1776
      %v4294 = vunpack.c.l.b16 %v1777
      %v4295 = vunpack.c.h.b16 %v1777
      %v4296 = vunpack.c.l.b16 %v1778
      %v4297 = vunpack.c.h.b16 %v1778
      %v4298 = vunpack.c.l.b16 %v1779
      %v4299 = vunpack.c.h.b16 %v1779
      %v4300 = vunpack.c.l.b16 %v1780
      %v4301 = vunpack.c.h.b16 %v1780
      %v4302 = vunpack.c.l.b16 %v1781
      %v4303 = vunpack.c.h.b16 %v1781
      %v4304 = vunpack.c.l.b16 %v1782
      %v4305 = vunpack.c.h.b16 %v1782
      %v4306 = vunpack.c.l.b16 %v1783
      %v4307 = vunpack.c.h.b16 %v1783
      %v4308 = vunpack.c.l.b16 %v1784
      %v4309 = vunpack.c.h.b16 %v1784
      %v4310 = vunpack.c.l.b16 %v1785
      %v4311 = vunpack.c.h.b16 %v1785
      %v4312 = vunpack.c.l.b16 %v1786
      %v4313 = vunpack.c.h.b16 %v1786
      %v4314 = vunpack.c.l.b16 %v1787
      %v4315 = vunpack.c.h.b16 %v1787
      %v4316 = vunpack.c.l.b16 %v1788
      %v4317 = vunpack.c.h.b16 %v1788
      %v4318 = vunpack.c.l.b16 %v1789
      %v4319 = vunpack.c.h.b16 %v1789
      %v4320 = vunpack.c.l.b16 %v1790
      %v4321 = vunpack.c.h.b16 %v1790
      %v4322 = vunpack.c.l.b16 %v1791
      %v4323 = vunpack.c.h.b16 %v1791
      %v4324 = vunpack.c.l.b16 %v1792
      %v4325 = vunpack.c.h.b16 %v1792
      %v4326 = vunpack.c.l.b16 %v1793
      %v4327 = vunpack.c.h.b16 %v1793
      %v4328 = vunpack.c.l.b16 %v1794
      %v4329 = vunpack.c.h.b16 %v1794
      %v4330 = vunpack.c.l.b16 %v1795
      %v4331 = vunpack.c.h.b16 %v1795
      %v4332 = vunpack.c.l.b16 %v1796
      %v4333 = vunpack.c.h.b16 %v1796
      %v4334 = vunpack.c.l.b16 %v1797
      %v4335 = vunpack.c.h.b16 %v1797
      %v4336 = vunpack.c.l.b16 %v1798
      %v4337 = vunpack.c.h.b16 %v1798
      %v4338 = vunpack.c.l.b16 %v1799
      %v4339 = vunpack.c.h.b16 %v1799
      %v4340 = vunpack.c.l.b16 %v1800
      %v4341 = vunpack.c.h.b16 %v1800
      %v4342 = vunpack.c.l.b16 %v1801
      %v4343 = vunpack.c.h.b16 %v1801
      %v4344 = vunpack.c.l.b16 %v1802
      %v4345 = vunpack.c.h.b16 %v1802
      %v4346 = vunpack.c.l.b16 %v1803
      %v4347 = vunpack.c.h.b16 %v1803
      %v4348 = vunpack.c.l.b16 %v1804
      %v4349 = vunpack.c.h.b16 %v1804
      %v4350 = vunpack.c.l.b16 %v1805
      %v4351 = vunpack.c.h.b16 %v1805
      %v4352 = vunpack.c.l.b16 %v1806
      %v4353 = vunpack.c.h.b16 %v1806
      %v4354 = vunpack.c.l.b16 %v1807
      %v4355 = vunpack.c.h.b16 %v1807
      %v4356 = vunpack.c.l.b16 %v1808
      %v4357 = vunpack.c.h.b16 %v1808
      %v4358 = vunpack.c.l.b16 %v1809
      %v4359 = vunpack.c.h.b16 %v1809
      %v4360 = vunpack.c.l.b16 %v1810
      %v4361 = vunpack.c.h.b16 %v1810
      %v4362 = vunpack.c.l.b16 %v1811
      %v4363 = vunpack.c.h.b16 %v1811
      %v4364 = vunpack.c.l.b16 %v1812
      %v4365 = vunpack.c.h.b16 %v1812
      %v4366 = vunpack.c.l.b16 %v1813
      %v4367 = vunpack.c.h.b16 %v1813
      %v4368 = vunpack.c.l.b16 %v1814
      %v4369 = vunpack.c.h.b16 %v1814
      %v4370 = vunpack.c.l.b16 %v1815
      %v4371 = vunpack.c.h.b16 %v1815
      %v4372 = vunpack.c.l.b16 %v1816
      %v4373 = vunpack.c.h.b16 %v1816
      %v4374 = vunpack.c.l.b16 %v1817
      %v4375 = vunpack.c.h.b16 %v1817
      %v4376 = vunpack.c.l.b16 %v1818
      %v4377 = vunpack.c.h.b16 %v1818
      %v4378 = vunpack.c.l.b16 %v1819
      %v4379 = vunpack.c.h.b16 %v1819
      %v4380 = vunpack.c.l.b16 %v1820
      %v4381 = vunpack.c.h.b16 %v1820
      %v4382 = vunpack.c.l.b16 %v1821
      %v4383 = vunpack.c.h.b16 %v1821
      %v4384 = vunpack.c.l.b16 %v1822
      %v4385 = vunpack.c.h.b16 %v1822
      %v4386 = vunpack.c.l.b16 %v1823
      %v4387 = vunpack.c.h.b16 %v1823
      %v4388 = vunpack.c.l.b16 %v1824
      %v4389 = vunpack.c.h.b16 %v1824
      %v4390 = vunpack.c.l.b16 %v1825
      %v4391 = vunpack.c.h.b16 %v1825
      %v4392 = vunpack.c.l.b16 %v1826
      %v4393 = vunpack.c.h.b16 %v1826
      %v4394 = vunpack.c.l.b16 %v1827
      %v4395 = vunpack.c.h.b16 %v1827
      %v4396 = vunpack.c.l.b16 %v1828
      %v4397 = vunpack.c.h.b16 %v1828
      %v4398 = vunpack.c.l.b16 %v1829
      %v4399 = vunpack.c.h.b16 %v1829
      %v4400 = vunpack.c.l.b16 %v1830
      %v4401 = vunpack.c.h.b16 %v1830
      %v4402 = vunpack.c.l.b16 %v1831
      %v4403 = vunpack.c.h.b16 %v1831
      %v4404 = vunpack.c.l.b16 %v1832
      %v4405 = vunpack.c.h.b16 %v1832
      %v4406 = vunpack.c.l.b16 %v1833
      %v4407 = vunpack.c.h.b16 %v1833
      %v4408 = vunpack.c.l.b16 %v1834
      %v4409 = vunpack.c.h.b16 %v1834
      %v4410 = vunpack.c.l.b16 %v1835
      %v4411 = vunpack.c.h.b16 %v1835
      %v4412 = vunpack.c.l.b16 %v1836
      %v4413 = vunpack.c.h.b16 %v1836
      %v4414 = vunpack.c.l.b16 %v1837
      %v4415 = vunpack.c.h.b16 %v1837
      %v4416 = vunpack.c.l.b16 %v1838
      %v4417 = vunpack.c.h.b16 %v1838
      %v4418 = vunpack.c.l.b16 %v1839
      %v4419 = vunpack.c.h.b16 %v1839
      %v4420 = vunpack.c.l.b16 %v1840
      %v4421 = vunpack.c.h.b16 %v1840
      %v4422 = vunpack.c.l.b16 %v1841
      %v4423 = vunpack.c.h.b16 %v1841
      %v4424 = vunpack.c.l.b16 %v1842
      %v4425 = vunpack.c.h.b16 %v1842
      %v4426 = vunpack.c.l.b16 %v1843
      %v4427 = vunpack.c.h.b16 %v1843
      %v4428 = vunpack.c.l.b16 %v1844
      %v4429 = vunpack.c.h.b16 %v1844
      %v4430 = vunpack.c.l.b16 %v1845
      %v4431 = vunpack.c.h.b16 %v1845
      %v4432 = vunpack.c.l.b16 %v1846
      %v4433 = vunpack.c.h.b16 %v1846
      %v4434 = vunpack.c.l.b16 %v1847
      %v4435 = vunpack.c.h.b16 %v1847
      %v4436 = vunpack.c.l.b16 %v1848
      %v4437 = vunpack.c.h.b16 %v1848
      %v4438 = vunpack.c.l.b16 %v1849
      %v4439 = vunpack.c.h.b16 %v1849
      %v4440 = vunpack.c.l.b16 %v1850
      %v4441 = vunpack.c.h.b16 %v1850
      %v4442 = vunpack.c.l.b16 %v1851
      %v4443 = vunpack.c.h.b16 %v1851
      %v4444 = vunpack.c.l.b16 %v1852
      %v4445 = vunpack.c.h.b16 %v1852
      %v4446 = vunpack.c.l.b16 %v1853
      %v4447 = vunpack.c.h.b16 %v1853
      %v4448 = vunpack.c.l.b16 %v1854
      %v4449 = vunpack.c.h.b16 %v1854
      %v4450 = vunpack.c.l.b16 %v1855
      %v4451 = vunpack.c.h.b16 %v1855
      %v4452 = vunpack.c.l.b16 %v1856
      %v4453 = vunpack.c.h.b16 %v1856
      %v4454 = vunpack.c.l.b16 %v1857
      %v4455 = vunpack.c.h.b16 %v1857
      %v4456 = vunpack.c.l.b16 %v1858
      %v4457 = vunpack.c.h.b16 %v1858
      %v4458 = vunpack.c.l.b16 %v1859
      %v4459 = vunpack.c.h.b16 %v1859
      %v4460 = vunpack.c.l.b16 %v1860
      %v4461 = vunpack.c.h.b16 %v1860
      %v4462 = vunpack.c.l.b16 %v1861
      %v4463 = vunpack.c.h.b16 %v1861
      %v4464 = vunpack.c.l.b16 %v1862
      %v4465 = vunpack.c.h.b16 %v1862
      %v4466 = vunpack.c.l.b16 %v1863
      %v4467 = vunpack.c.h.b16 %v1863
      %v4468 = vunpack.c.l.b16 %v1864
      %v4469 = vunpack.c.h.b16 %v1864
      %v4470 = vunpack.c.l.b16 %v1865
      %v4471 = vunpack.c.h.b16 %v1865
      %v4472 = vunpack.c.l.b16 %v1866
      %v4473 = vunpack.c.h.b16 %v1866
      %v4474 = vunpack.c.l.b16 %v1867
      %v4475 = vunpack.c.h.b16 %v1867
      %v4476 = vunpack.c.l.b16 %v1868
      %v4477 = vunpack.c.h.b16 %v1868
      %v4478 = vunpack.c.l.b16 %v1869
      %v4479 = vunpack.c.h.b16 %v1869
      %v4480 = vunpack.c.l.b16 %v1870
      %v4481 = vunpack.c.h.b16 %v1870
      %v4482 = vunpack.c.l.b16 %v1871
      %v4483 = vunpack.c.h.b16 %v1871
      %v4484 = vunpack.c.l.b16 %v1872
      %v4485 = vunpack.c.h.b16 %v1872
      %v4486 = vunpack.c.l.b16 %v1873
      %v4487 = vunpack.c.h.b16 %v1873
      %v4488 = vunpack.c.l.b16 %v1874
      %v4489 = vunpack.c.h.b16 %v1874
      %v4490 = vunpack.c.l.b16 %v1875
      %v4491 = vunpack.c.h.b16 %v1875
      %v4492 = vunpack.c.l.b16 %v1876
      %v4493 = vunpack.c.h.b16 %v1876
      %v4494 = vunpack.c.l.b16 %v1877
      %v4495 = vunpack.c.h.b16 %v1877
      %v4496 = vunpack.c.l.b16 %v1878
      %v4497 = vunpack.c.h.b16 %v1878
      %v4498 = vunpack.c.l.b16 %v1879
      %v4499 = vunpack.c.h.b16 %v1879
      %v4500 = vunpack.c.l.b16 %v1880
      %v4501 = vunpack.c.h.b16 %v1880
      %v4502 = vunpack.c.l.b16 %v1881
      %v4503 = vunpack.c.h.b16 %v1881
      %v4504 = vunpack.c.l.b16 %v1882
      %v4505 = vunpack.c.h.b16 %v1882
      %v4506 = vunpack.c.l.b16 %v1883
      %v4507 = vunpack.c.h.b16 %v1883
      %v4508 = vunpack.c.l.b16 %v1884
      %v4509 = vunpack.c.h.b16 %v1884
      %v4510 = vunpack.c.l.b16 %v1885
      %v4511 = vunpack.c.h.b16 %v1885
      %v4512 = vunpack.c.l.b16 %v1886
      %v4513 = vunpack.c.h.b16 %v1886
      %v4514 = vunpack.c.l.b16 %v1887
      %v4515 = vunpack.c.h.b16 %v1887
      %v4516 = vunpack.c.l.b16 %v1888
      %v4517 = vunpack.c.h.b16 %v1888
      %v4518 = vunpack.c.l.b16 %v1889
      %v4519 = vunpack.c.h.b16 %v1889
      %v4520 = vunpack.c.l.b16 %v1890
      %v4521 = vunpack.c.h.b16 %v1890
      %v4522 = vunpack.c.l.b16 %v1891
      %v4523 = vunpack.c.h.b16 %v1891
      %v4524 = vunpack.c.l.b16 %v1892
      %v4525 = vunpack.c.h.b16 %v1892
      %v4526 = vunpack.c.l.b16 %v1893
      %v4527 = vunpack.c.h.b16 %v1893
      %v4528 = vunpack.c.l.b16 %v1894
      %v4529 = vunpack.c.h.b16 %v1894
      %v4530 = vunpack.c.l.b16 %v1895
      %v4531 = vunpack.c.h.b16 %v1895
      %v4532 = vunpack.c.l.b16 %v1896
      %v4533 = vunpack.c.h.b16 %v1896
      %v4534 = vunpack.c.l.b16 %v1897
      %v4535 = vunpack.c.h.b16 %v1897
      %v4536 = vunpack.c.l.b16 %v1898
      %v4537 = vunpack.c.h.b16 %v1898
      %v4538 = vunpack.c.l.b16 %v1899
      %v4539 = vunpack.c.h.b16 %v1899
      %v4540 = vunpack.c.l.b16 %v1900
      %v4541 = vunpack.c.h.b16 %v1900
      %v4542 = vunpack.c.l.b16 %v1901
      %v4543 = vunpack.c.h.b16 %v1901
      %v4544 = vunpack.c.l.b16 %v1902
      %v4545 = vunpack.c.h.b16 %v1902
      %v4546 = vunpack.c.l.b16 %v1903
      %v4547 = vunpack.c.h.b16 %v1903
      %v4548 = vunpack.c.l.b16 %v1904
      %v4549 = vunpack.c.h.b16 %v1904
      %v4550 = vunpack.c.l.b16 %v1905
      %v4551 = vunpack.c.h.b16 %v1905
      %v4552 = vunpack.c.l.b16 %v1906
      %v4553 = vunpack.c.h.b16 %v1906
      %v4554 = vunpack.c.l.b16 %v1907
      %v4555 = vunpack.c.h.b16 %v1907
      %v4556 = vunpack.c.l.b16 %v1908
      %v4557 = vunpack.c.h.b16 %v1908
      %v4558 = vunpack.c.l.b16 %v1909
      %v4559 = vunpack.c.h.b16 %v1909
      %v4560 = vunpack.c.l.b16 %v1910
      %v4561 = vunpack.c.h.b16 %v1910
      %v4562 = vunpack.c.l.b16 %v1911
      %v4563 = vunpack.c.h.b16 %v1911
      %v4564 = vunpack.c.l.b16 %v1912
      %v4565 = vunpack.c.h.b16 %v1912
      %v4566 = vunpack.c.l.b16 %v1913
      %v4567 = vunpack.c.h.b16 %v1913
      %v4568 = vunpack.c.l.b16 %v1914
      %v4569 = vunpack.c.h.b16 %v1914
      %v4570 = vunpack.c.l.b16 %v1915
      %v4571 = vunpack.c.h.b16 %v1915
      %v4572 = vunpack.c.l.b16 %v1916
      %v4573 = vunpack.c.h.b16 %v1916
      %v4574 = vunpack.c.l.b16 %v1917
      %v4575 = vunpack.c.h.b16 %v1917
      %v4576 = vunpack.c.l.b16 %v1918
      %v4577 = vunpack.c.h.b16 %v1918
      %v4578 = vunpack.c.l.b16 %v1919
      %v4579 = vunpack.c.h.b16 %v1919
      %v4580 = vunpack.c.l.b16 %v1920
      %v4581 = vunpack.c.h.b16 %v1920
      %v4582 = vunpack.c.l.b16 %v1921
      %v4583 = vunpack.c.h.b16 %v1921
      %v4584 = vunpack.c.l.b16 %v1922
      %v4585 = vunpack.c.h.b16 %v1922
      %v4586 = vunpack.c.l.b16 %v1923
      %v4587 = vunpack.c.h.b16 %v1923
      %v4588 = vunpack.c.l.b16 %v1924
      %v4589 = vunpack.c.h.b16 %v1924
      %v4590 = vunpack.c.l.b16 %v1925
      %v4591 = vunpack.c.h.b16 %v1925
      %v4592 = vunpack.c.l.b16 %v1926
      %v4593 = vunpack.c.h.b16 %v1926
      %v4594 = vunpack.c.l.b16 %v1927
      %v4595 = vunpack.c.h.b16 %v1927
      %v4596 = vunpack.c.l.b16 %v1928
      %v4597 = vunpack.c.h.b16 %v1928
      %v4598 = vunpack.c.l.b16 %v1929
      %v4599 = vunpack.c.h.b16 %v1929
      %v4600 = vunpack.c.l.b16 %v1930
      %v4601 = vunpack.c.h.b16 %v1930
      %v4602 = vunpack.c.l.b16 %v1931
      %v4603 = vunpack.c.h.b16 %v1931
      %v4604 = vunpack.c.l.b16 %v1932
      %v4605 = vunpack.c.h.b16 %v1932
      %v4606 = vunpack.c.l.b16 %v1933
      %v4607 = vunpack.c.h.b16 %v1933
      %v4608 = vunpack.c.l.b16 %v1934
      %v4609 = vunpack.c.h.b16 %v1934
      %v4610 = vunpack.c.l.b16 %v1935
      %v4611 = vunpack.c.h.b16 %v1935
      %v4612 = vunpack.c.l.b16 %v1936
      %v4613 = vunpack.c.h.b16 %v1936
      %v4614 = vunpack.c.l.b16 %v1937
      %v4615 = vunpack.c.h.b16 %v1937
      %v4616 = vunpack.c.l.b16 %v1938
      %v4617 = vunpack.c.h.b16 %v1938
      %v4618 = vunpack.c.l.b16 %v1939
      %v4619 = vunpack.c.h.b16 %v1939
      %v4620 = vunpack.c.l.b16 %v1940
      %v4621 = vunpack.c.h.b16 %v1940
      %v4622 = vunpack.c.l.b16 %v1941
      %v4623 = vunpack.c.h.b16 %v1941
      %v4624 = vunpack.c.l.b16 %v1942
      %v4625 = vunpack.c.h.b16 %v1942
      %v4626 = vunpack.c.l.b16 %v1943
      %v4627 = vunpack.c.h.b16 %v1943
      %v4628 = vunpack.c.l.b16 %v1944
      %v4629 = vunpack.c.h.b16 %v1944
      %v4630 = vunpack.c.l.b16 %v1945
      %v4631 = vunpack.c.h.b16 %v1945
      %v4632 = vunpack.c.l.b16 %v1946
      %v4633 = vunpack.c.h.b16 %v1946
      %v4634 = vunpack.c.l.b16 %v1947
      %v4635 = vunpack.c.h.b16 %v1947
      %v4636 = vunpack.c.l.b16 %v1948
      %v4637 = vunpack.c.h.b16 %v1948
      %v4638 = vunpack.c.l.b16 %v1949
      %v4639 = vunpack.c.h.b16 %v1949
      %v4640 = vunpack.c.l.b16 %v1950
      %v4641 = vunpack.c.h.b16 %v1950
      %v4642 = vunpack.c.l.b16 %v1951
      %v4643 = vunpack.c.h.b16 %v1951
      %v4644 = vunpack.c.l.b16 %v1952
      %v4645 = vunpack.c.h.b16 %v1952
      %v4646 = vunpack.c.l.b16 %v1953
      %v4647 = vunpack.c.h.b16 %v1953
      %v4648 = vunpack.c.l.b16 %v1954
      %v4649 = vunpack.c.h.b16 %v1954
      %v4650 = vunpack.c.l.b16 %v1955
      %v4651 = vunpack.c.h.b16 %v1955
      %v4652 = vunpack.c.l.b16 %v1956
      %v4653 = vunpack.c.h.b16 %v1956
      %v4654 = vunpack.c.l.b16 %v1957
      %v4655 = vunpack.c.h.b16 %v1957
      %v4656 = vunpack.c.l.b16 %v1958
      %v4657 = vunpack.c.h.b16 %v1958
      %v4658 = vunpack.c.l.b16 %v1959
      %v4659 = vunpack.c.h.b16 %v1959
      %v4660 = vunpack.c.l.b16 %v1960
      %v4661 = vunpack.c.h.b16 %v1960
      %v4662 = vunpack.c.l.b16 %v1961
      %v4663 = vunpack.c.h.b16 %v1961
      %v4664 = vunpack.c.l.b16 %v1962
      %v4665 = vunpack.c.h.b16 %v1962
      %v4666 = vunpack.c.l.b16 %v1963
      %v4667 = vunpack.c.h.b16 %v1963
      %v4668 = vunpack.c.l.b16 %v1964
      %v4669 = vunpack.c.h.b16 %v1964
      %v4670 = vunpack.c.l.b16 %v1965
      %v4671 = vunpack.c.h.b16 %v1965
      %v4672 = vunpack.c.l.b16 %v1966
      %v4673 = vunpack.c.h.b16 %v1966
      %v4674 = vunpack.c.l.b16 %v1967
      %v4675 = vunpack.c.h.b16 %v1967
      %v4676 = vunpack.c.l.b16 %v1968
      %v4677 = vunpack.c.h.b16 %v1968
      %v4678 = vunpack.c.l.b16 %v1969
      %v4679 = vunpack.c.h.b16 %v1969
      %v4680 = vunpack.c.l.b16 %v1970
      %v4681 = vunpack.c.h.b16 %v1970
      %v4682 = vunpack.c.l.b16 %v1971
      %v4683 = vunpack.c.h.b16 %v1971
      %v4684 = vunpack.c.l.b16 %v1972
      %v4685 = vunpack.c.h.b16 %v1972
      %v4686 = vunpack.c.l.b16 %v1973
      %v4687 = vunpack.c.h.b16 %v1973
      %v4688 = vunpack.c.l.b16 %v1974
      %v4689 = vunpack.c.h.b16 %v1974
      %v4690 = vunpack.c.l.b16 %v1975
      %v4691 = vunpack.c.h.b16 %v1975
      %v4692 = vunpack.c.l.b16 %v1976
      %v4693 = vunpack.c.h.b16 %v1976
      %v4694 = vunpack.c.l.b16 %v1977
      %v4695 = vunpack.c.h.b16 %v1977
      %v4696 = vunpack.c.l.b16 %v1978
      %v4697 = vunpack.c.h.b16 %v1978
      %v4698 = vunpack.c.l.b16 %v1979
      %v4699 = vunpack.c.h.b16 %v1979
      %v4700 = vunpack.c.l.b16 %v1980
      %v4701 = vunpack.c.h.b16 %v1980
      %v4702 = vunpack.c.l.b16 %v1981
      %v4703 = vunpack.c.h.b16 %v1981
      %v4704 = vunpack.c.l.b16 %v1982
      %v4705 = vunpack.c.h.b16 %v1982
      %v4706 = vunpack.c.l.b16 %v1983
      %v4707 = vunpack.c.h.b16 %v1983
      %v4708 = vunpack.c.l.b16 %v1984
      %v4709 = vunpack.c.h.b16 %v1984
      %v4710 = vunpack.c.l.b16 %v1985
      %v4711 = vunpack.c.h.b16 %v1985
      %v4712 = vunpack.c.l.b16 %v1986
      %v4713 = vunpack.c.h.b16 %v1986
      %v4714 = vunpack.c.l.b16 %v1987
      %v4715 = vunpack.c.h.b16 %v1987
      %v4716 = vunpack.c.l.b16 %v1988
      %v4717 = vunpack.c.h.b16 %v1988
      %v4718 = vunpack.c.l.b16 %v1989
      %v4719 = vunpack.c.h.b16 %v1989
      %v4720 = vunpack.c.l.b16 %v1990
      %v4721 = vunpack.c.h.b16 %v1990
      %v4722 = vunpack.c.l.b16 %v1991
      %v4723 = vunpack.c.h.b16 %v1991
      %v4724 = vunpack.c.l.b16 %v1992
      %v4725 = vunpack.c.h.b16 %v1992
      %v4726 = vunpack.c.l.b16 %v1993
      %v4727 = vunpack.c.h.b16 %v1993
      %v4728 = vunpack.c.l.b16 %v1994
      %v4729 = vunpack.c.h.b16 %v1994
      %v4730 = vunpack.c.l.b16 %v1995
      %v4731 = vunpack.c.h.b16 %v1995
      %v4732 = vunpack.c.l.b16 %v1996
      %v4733 = vunpack.c.h.b16 %v1996
      %v4734 = vunpack.c.l.b16 %v1997
      %v4735 = vunpack.c.h.b16 %v1997
      %v4736 = vunpack.c.l.b16 %v1998
      %v4737 = vunpack.c.h.b16 %v1998
      %v4738 = vunpack.c.l.b16 %v1999
      %v4739 = vunpack.c.h.b16 %v1999
      %v4740 = vunpack.c.l.b16 %v2000
      %v4741 = vunpack.c.h.b16 %v2000
      %v4742 = vunpack.c.l.b16 %v2001
      %v4743 = vunpack.c.h.b16 %v2001
      %v4744 = vunpack.c.l.b16 %v2002
      %v4745 = vunpack.c.h.b16 %v2002
      %v4746 = vunpack.c.l.b16 %v2003
      %v4747 = vunpack.c.h.b16 %v2003
      %v4748 = vunpack.c.l.b16 %v2004
      %v4749 = vunpack.c.h.b16 %v2004
      %v4750 = vunpack.c.l.b16 %v2005
      %v4751 = vunpack.c.h.b16 %v2005
      %v4752 = vunpack.c.l.b16 %v2006
      %v4753 = vunpack.c.h.b16 %v2006
      %v4754 = vunpack.c.l.b16 %v2007
      %v4755 = vunpack.c.h.b16 %v2007
      %v4756 = vunpack.c.l.b16 %v2008
      %v4757 = vunpack.c.h.b16 %v2008
      %v4758 = vunpack.c.l.b16 %v2009
      %v4759 = vunpack.c.h.b16 %v2009
      %v4760 = vunpack.c.l.b16 %v2010
      %v4761 = vunpack.c.h.b16 %v2010
      %v4762 = vunpack.c.l.b16 %v2011
      %v4763 = vunpack.c.h.b16 %v2011
      %v4764 = vunpack.c.l.b16 %v2012
      %v4765 = vunpack.c.h.b16 %v2012
      %v4766 = vunpack.c.l.b16 %v2013
      %v4767 = vunpack.c.h.b16 %v2013
      %v4768 = vunpack.c.l.b16 %v2014
      %v4769 = vunpack.c.h.b16 %v2014
      %v4770 = vunpack.c.l.b16 %v2015
      %v4771 = vunpack.c.h.b16 %v2015
      %v4772 = vunpack.c.l.b16 %v2016
      %v4773 = vunpack.c.h.b16 %v2016
      %v4774 = vunpack.c.l.b16 %v2017
      %v4775 = vunpack.c.h.b16 %v2017
      %v4776 = vunpack.c.l.b16 %v2018
      %v4777 = vunpack.c.h.b16 %v2018
      %v4778 = vunpack.c.l.b16 %v2019
      %v4779 = vunpack.c.h.b16 %v2019
      %v4780 = vunpack.c.l.b16 %v2020
      %v4781 = vunpack.c.h.b16 %v2020
      %v4782 = vunpack.c.l.b16 %v2021
      %v4783 = vunpack.c.h.b16 %v2021
      %v4784 = vunpack.c.l.b16 %v2022
      %v4785 = vunpack.c.h.b16 %v2022
      %v4786 = vunpack.c.l.b16 %v2023
      %v4787 = vunpack.c.h.b16 %v2023
      %v4788 = vunpack.c.l.b16 %v2024
      %v4789 = vunpack.c.h.b16 %v2024
      %v4790 = vunpack.c.l.b16 %v2025
      %v4791 = vunpack.c.h.b16 %v2025
      %v4792 = vunpack.c.l.b16 %v2026
      %v4793 = vunpack.c.h.b16 %v2026
      %v4794 = vunpack.c.l.b16 %v2027
      %v4795 = vunpack.c.h.b16 %v2027
      %v4796 = vunpack.c.l.b16 %v2028
      %v4797 = vunpack.c.h.b16 %v2028
      %v4798 = vunpack.c.l.b16 %v2029
      %v4799 = vunpack.c.h.b16 %v2029
      %v4800 = vunpack.c.l.b16 %v2030
      %v4801 = vunpack.c.h.b16 %v2030
      %v4802 = vunpack.c.l.b16 %v2031
      %v4803 = vunpack.c.h.b16 %v2031
      %v4804 = vunpack.c.l.b16 %v2032
      %v4805 = vunpack.c.h.b16 %v2032
      %v4806 = vunpack.c.l.b16 %v2033
      %v4807 = vunpack.c.h.b16 %v2033
      %v4808 = vunpack.c.l.b16 %v2034
      %v4809 = vunpack.c.h.b16 %v2034
      %v4810 = vunpack.c.l.b16 %v2035
      %v4811 = vunpack.c.h.b16 %v2035
      %v4812 = vunpack.c.l.b16 %v2036
      %v4813 = vunpack.c.h.b16 %v2036
      %v4814 = vunpack.c.l.b16 %v2037
      %v4815 = vunpack.c.h.b16 %v2037
      %v4816 = vunpack.c.l.b16 %v2038
      %v4817 = vunpack.c.h.b16 %v2038
      %v4818 = vunpack.c.l.b16 %v2039
      %v4819 = vunpack.c.h.b16 %v2039
      %v4820 = vunpack.c.l.b16 %v2040
      %v4821 = vunpack.c.h.b16 %v2040
      %v4822 = vunpack.c.l.b16 %v2041
      %v4823 = vunpack.c.h.b16 %v2041
      %v4824 = vunpack.c.l.b16 %v2042
      %v4825 = vunpack.c.h.b16 %v2042
      %v4826 = vunpack.c.l.b16 %v2043
      %v4827 = vunpack.c.h.b16 %v2043
      %v4828 = vunpack.c.l.b16 %v2044
      %v4829 = vunpack.c.h.b16 %v2044
      %v4830 = vunpack.c.l.b16 %v2045
      %v4831 = vunpack.c.h.b16 %v2045
      %v4832 = vunpack.c.l.b16 %v2046
      %v4833 = vunpack.c.h.b16 %v2046
      %v4834 = vunpack.c.l.b16 %v2047
      %v4835 = vunpack.c.h.b16 %v2047
      %v4836 = vunpack.c.l.b16 %v2048
      %v4837 = vunpack.c.h.b16 %v2048
      %v4838 = vunpack.c.l.b16 %v2049
      %v4839 = vunpack.c.h.b16 %v2049
      %v4840 = vunpack.c.l.b16 %v2050
      %v4841 = vunpack.c.h.b16 %v2050
      %v4842 = vunpack.c.l.b16 %v2051
      %v4843 = vunpack.c.h.b16 %v2051
      %v4844 = vunpack.c.l.b16 %v2052
      %v4845 = vunpack.c.h.b16 %v2052
      %v4846 = vunpack.c.l.b16 %v2053
      %v4847 = vunpack.c.h.b16 %v2053
      %v4848 = vunpack.c.l.b16 %v2054
      %v4849 = vunpack.c.h.b16 %v2054
      %v4850 = vunpack.c.l.b16 %v2055
      %v4851 = vunpack.c.h.b16 %v2055
      %v4852 = vunpack.c.l.b16 %v2056
      %v4853 = vunpack.c.h.b16 %v2056
      %v4854 = vunpack.c.l.b16 %v2057
      %v4855 = vunpack.c.h.b16 %v2057
      %v4856 = vunpack.c.l.b16 %v2058
      %v4857 = vunpack.c.h.b16 %v2058
      %v4858 = vunpack.c.l.b16 %v2059
      %v4859 = vunpack.c.h.b16 %v2059
      %v4860 = vunpack.c.l.b16 %v2060
      %v4861 = vunpack.c.h.b16 %v2060
      %v4862 = vunpack.c.l.b16 %v2061
      %v4863 = vunpack.c.h.b16 %v2061
      %v4864 = vunpack.c.l.b16 %v2062
      %v4865 = vunpack.c.h.b16 %v2062
      %v4866 = vunpack.c.l.b16 %v2063
      %v4867 = vunpack.c.h.b16 %v2063
      %v4868 = vunpack.c.l.b16 %v2064
      %v4869 = vunpack.c.h.b16 %v2064
      %v4870 = vunpack.c.l.b16 %v2065
      %v4871 = vunpack.c.h.b16 %v2065
      %v4872 = vunpack.c.l.b16 %v2066
      %v4873 = vunpack.c.h.b16 %v2066
      %v4874 = vunpack.c.l.b16 %v2067
      %v4875 = vunpack.c.h.b16 %v2067
      %v4876 = vunpack.c.l.b16 %v2068
      %v4877 = vunpack.c.h.b16 %v2068
      %v4878 = vunpack.c.l.b16 %v2069
      %v4879 = vunpack.c.h.b16 %v2069
      %v4880 = vunpack.c.l.b16 %v2070
      %v4881 = vunpack.c.h.b16 %v2070
      %v4882 = vunpack.c.l.b16 %v2071
      %v4883 = vunpack.c.h.b16 %v2071
      %v4884 = vunpack.c.l.b16 %v2072
      %v4885 = vunpack.c.h.b16 %v2072
      %v4886 = vunpack.c.l.b16 %v2073
      %v4887 = vunpack.c.h.b16 %v2073
      %v4888 = vunpack.c.l.b16 %v2074
      %v4889 = vunpack.c.h.b16 %v2074
      %v4890 = vunpack.c.l.b16 %v2075
      %v4891 = vunpack.c.h.b16 %v2075
      %v4892 = vunpack.c.l.b16 %v2076
      %v4893 = vunpack.c.h.b16 %v2076
      %v4894 = vunpack.c.l.b16 %v2077
      %v4895 = vunpack.c.h.b16 %v2077
      %v4896 = vunpack.c.l.b16 %v2078
      %v4897 = vunpack.c.h.b16 %v2078
      %v4898 = vunpack.c.l.b16 %v2079
      %v4899 = vunpack.c.h.b16 %v2079
      %v4900 = vunpack.c.l.b16 %v2080
      %v4901 = vunpack.c.h.b16 %v2080
      %v4902 = vunpack.c.l.b16 %v2081
      %v4903 = vunpack.c.h.b16 %v2081
      %v4904 = vunpack.c.l.b16 %v2082
      %v4905 = vunpack.c.h.b16 %v2082
      %v4906 = vunpack.c.l.b16 %v2083
      %v4907 = vunpack.c.h.b16 %v2083
      %v4908 = vunpack.c.l.b16 %v2084
      %v4909 = vunpack.c.h.b16 %v2084
      %v4910 = vunpack.c.l.b16 %v2085
      %v4911 = vunpack.c.h.b16 %v2085
      %v4912 = vunpack.c.l.b16 %v2086
      %v4913 = vunpack.c.h.b16 %v2086
      %v4914 = vunpack.c.l.b16 %v2087
      %v4915 = vunpack.c.h.b16 %v2087
      %v4916 = vunpack.c.l.b16 %v2088
      %v4917 = vunpack.c.h.b16 %v2088
      %v4918 = vunpack.c.l.b16 %v2089
      %v4919 = vunpack.c.h.b16 %v2089
      %v4920 = vunpack.c.l.b16 %v2090
      %v4921 = vunpack.c.h.b16 %v2090
      %v4922 = vunpack.c.l.b16 %v2091
      %v4923 = vunpack.c.h.b16 %v2091
      %v4924 = vunpack.c.l.b16 %v2092
      %v4925 = vunpack.c.h.b16 %v2092
      %v4926 = vunpack.c.l.b16 %v2093
      %v4927 = vunpack.c.h.b16 %v2093
      %v4928 = vunpack.c.l.b16 %v2094
      %v4929 = vunpack.c.h.b16 %v2094
      %v4930 = vunpack.c.l.b16 %v2095
      %v4931 = vunpack.c.h.b16 %v2095
      %v4932 = vunpack.c.l.b16 %v2096
      %v4933 = vunpack.c.h.b16 %v2096
      %v4934 = vunpack.c.l.b16 %v2097
      %v4935 = vunpack.c.h.b16 %v2097
      %v4936 = vunpack.c.l.b16 %v2098
      %v4937 = vunpack.c.h.b16 %v2098
      %v4938 = vunpack.c.l.b16 %v2099
      %v4939 = vunpack.c.h.b16 %v2099
      %v4940 = vunpack.c.l.b16 %v2100
      %v4941 = vunpack.c.h.b16 %v2100
      %v4942 = vunpack.c.l.b16 %v2101
      %v4943 = vunpack.c.h.b16 %v2101
      %v4944 = vunpack.c.l.b16 %v2102
      %v4945 = vunpack.c.h.b16 %v2102
      %v4946 = vunpack.c.l.b16 %v2103
      %v4947 = vunpack.c.h.b16 %v2103
      %v4948 = vunpack.c.l.b16 %v2104
      %v4949 = vunpack.c.h.b16 %v2104
      %v4950 = vunpack.c.l.b16 %v2105
      %v4951 = vunpack.c.h.b16 %v2105
      %v4952 = vunpack.c.l.b16 %v2106
      %v4953 = vunpack.c.h.b16 %v2106
      %v4954 = vunpack.c.l.b16 %v2107
      %v4955 = vunpack.c.h.b16 %v2107
      %v4956 = vunpack.c.l.b16 %v2108
      %v4957 = vunpack.c.h.b16 %v2108
      %v4958 = vunpack.c.l.b16 %v2109
      %v4959 = vunpack.c.h.b16 %v2109
      %v4960 = vunpack.c.l.b16 %v2110
      %v4961 = vunpack.c.h.b16 %v2110
      %v4962 = vunpack.c.l.b16 %v2111
      %v4963 = vunpack.c.h.b16 %v2111
      %v4964 = vunpack.c.l.b16 %v2112
      %v4965 = vunpack.c.h.b16 %v2112
      %v4966 = vunpack.c.l.b16 %v2113
      %v4967 = vunpack.c.h.b16 %v2113
      %v4968 = vunpack.c.l.b16 %v2114
      %v4969 = vunpack.c.h.b16 %v2114
      %v4970 = vunpack.c.l.b16 %v2115
      %v4971 = vunpack.c.h.b16 %v2115
      %v4972 = vunpack.c.l.b16 %v2116
      %v4973 = vunpack.c.h.b16 %v2116
      %v4974 = vunpack.c.l.b16 %v2117
      %v4975 = vunpack.c.h.b16 %v2117
      %v4976 = vunpack.c.l.b16 %v2118
      %v4977 = vunpack.c.h.b16 %v2118
      %v4978 = vunpack.c.l.b16 %v2119
      %v4979 = vunpack.c.h.b16 %v2119
      %v4980 = vunpack.c.l.b16 %v2120
      %v4981 = vunpack.c.h.b16 %v2120
      %v4982 = vunpack.c.l.b16 %v2121
      %v4983 = vunpack.c.h.b16 %v2121
      %v4984 = vunpack.c.l.b16 %v2122
      %v4985 = vunpack.c.h.b16 %v2122
      %v4986 = vunpack.c.l.b16 %v2123
      %v4987 = vunpack.c.h.b16 %v2123
      %v4988 = vunpack.c.l.b16 %v2124
      %v4989 = vunpack.c.h.b16 %v2124
      %v4990 = vunpack.c.l.b16 %v2125
      %v4991 = vunpack.c.h.b16 %v2125
      %v4992 = vunpack.c.l.b16 %v2126
      %v4993 = vunpack.c.h.b16 %v2126
      %v4994 = vunpack.c.l.b16 %v2127
      %v4995 = vunpack.c.h.b16 %v2127
      %v4996 = vunpack.c.l.b16 %v2128
      %v4997 = vunpack.c.h.b16 %v2128
      %v4998 = vunpack.c.l.b16 %v2129
      %v4999 = vunpack.c.h.b16 %v2129
      %v5000 = vunpack.c.l.b16 %v2130
      %v5001 = vunpack.c.h.b16 %v2130
      %v5002 = vunpack.c.l.b16 %v2131
      %v5003 = vunpack.c.h.b16 %v2131
      %v5004 = vunpack.c.l.b16 %v2132
      %v5005 = vunpack.c.h.b16 %v2132
      %v5006 = vunpack.c.l.b16 %v2133
      %v5007 = vunpack.c.h.b16 %v2133
      %v5008 = vunpack.c.l.b16 %v2134
      %v5009 = vunpack.c.h.b16 %v2134
      %v5010 = vunpack.c.l.b16 %v2135
      %v5011 = vunpack.c.h.b16 %v2135
      %v5012 = vunpack.c.l.b16 %v2136
      %v5013 = vunpack.c.h.b16 %v2136
      %v5014 = vunpack.c.l.b16 %v2137
      %v5015 = vunpack.c.h.b16 %v2137
      %v5016 = vunpack.c.l.b16 %v2138
      %v5017 = vunpack.c.h.b16 %v2138
      %v5018 = vunpack.c.l.b16 %v2139
      %v5019 = vunpack.c.h.b16 %v2139
      %v5020 = vunpack.c.l.b16 %v2140
      %v5021 = vunpack.c.h.b16 %v2140
      %v5022 = vunpack.c.l.b16 %v2141
      %v5023 = vunpack.c.h.b16 %v2141
      %v5024 = vunpack.c.l.b16 %v2142
      %v5025 = vunpack.c.h.b16 %v2142
      %v5026 = vunpack.c.l.b16 %v2143
      %v5027 = vunpack.c.h.b16 %v2143
      %v5028 = vunpack.c.l.b16 %v2144
      %v5029 = vunpack.c.h.b16 %v2144
      %v5030 = vunpack.c.l.b16 %v2145
      %v5031 = vunpack.c.h.b16 %v2145
      %v5032 = vunpack.c.l.b16 %v2146
      %v5033 = vunpack.c.h.b16 %v2146
      %v5034 = vunpack.c.l.b16 %v2147
      %v5035 = vunpack.c.h.b16 %v2147
      %v5036 = vunpack.c.l.b16 %v2148
      %v5037 = vunpack.c.h.b16 %v2148
      %v5038 = vunpack.c.l.b16 %v2149
      %v5039 = vunpack.c.h.b16 %v2149
      %v5040 = vunpack.c.l.b16 %v2150
      %v5041 = vunpack.c.h.b16 %v2150
      %v5042 = vunpack.c.l.b16 %v2151
      %v5043 = vunpack.c.h.b16 %v2151
      %v5044 = vunpack.c.l.b16 %v2152
      %v5045 = vunpack.c.h.b16 %v2152
      %v5046 = vunpack.c.l.b16 %v2153
      %v5047 = vunpack.c.h.b16 %v2153
      %v5048 = vunpack.c.l.b16 %v2154
      %v5049 = vunpack.c.h.b16 %v2154
      %v5050 = vunpack.c.l.b16 %v2155
      %v5051 = vunpack.c.h.b16 %v2155
      %v5052 = vunpack.c.l.b16 %v2156
      %v5053 = vunpack.c.h.b16 %v2156
      %v5054 = vunpack.c.l.b16 %v2157
      %v5055 = vunpack.c.h.b16 %v2157
      %v5056 = vunpack.c.l.b16 %v2158
      %v5057 = vunpack.c.h.b16 %v2158
      %v5058 = vunpack.c.l.b16 %v2159
      %v5059 = vunpack.c.h.b16 %v2159
      %v5060 = vunpack.c.l.b16 %v2160
      %v5061 = vunpack.c.h.b16 %v2160
      %v5062 = vunpack.c.l.b16 %v2161
      %v5063 = vunpack.c.h.b16 %v2161
      %v5064 = vunpack.c.l.b16 %v2162
      %v5065 = vunpack.c.h.b16 %v2162
      %v5066 = vunpack.c.l.b16 %v2163
      %v5067 = vunpack.c.h.b16 %v2163
      %v5068 = vunpack.c.l.b16 %v2164
      %v5069 = vunpack.c.h.b16 %v2164
      %v5070 = vunpack.c.l.b16 %v2165
      %v5071 = vunpack.c.h.b16 %v2165
      %v5072 = vunpack.c.l.b16 %v2166
      %v5073 = vunpack.c.h.b16 %v2166
      %v5074 = vunpack.c.l.b16 %v2167
      %v5075 = vunpack.c.h.b16 %v2167
      %v5076 = vunpack.c.l.b16 %v2168
      %v5077 = vunpack.c.h.b16 %v2168
      %v5078 = vunpack.c.l.b16 %v2169
      %v5079 = vunpack.c.h.b16 %v2169
      %v5080 = vunpack.c.l.b16 %v2170
      %v5081 = vunpack.c.h.b16 %v2170
      %v5082 = vunpack.c.l.b16 %v2171
      %v5083 = vunpack.c.h.b16 %v2171
      %v5084 = vunpack.c.l.b16 %v2172
      %v5085 = vunpack.c.h.b16 %v2172
      %v5086 = vunpack.c.l.b16 %v2173
      %v5087 = vunpack.c.h.b16 %v2173
      %v5088 = vunpack.c.l.b16 %v2174
      %v5089 = vunpack.c.h.b16 %v2174
      %v5090 = vunpack.c.l.b16 %v2175
      %v5091 = vunpack.c.h.b16 %v2175
      %v5092 = vunpack.c.l.b16 %v2176
      %v5093 = vunpack.c.h.b16 %v2176
      %v5094 = vunpack.c.l.b16 %v2177
      %v5095 = vunpack.c.h.b16 %v2177
      %v5096 = vunpack.c.l.b16 %v2178
      %v5097 = vunpack.c.h.b16 %v2178
      %v5098 = vunpack.c.l.b16 %v2179
      %v5099 = vunpack.c.h.b16 %v2179
      %v5100 = vunpack.c.l.b16 %v2180
      %v5101 = vunpack.c.h.b16 %v2180
      %v5102 = vunpack.c.l.b16 %v2181
      %v5103 = vunpack.c.h.b16 %v2181
      %v5104 = vunpack.c.l.b16 %v2182
      %v5105 = vunpack.c.h.b16 %v2182
      %v5106 = vunpack.c.l.b16 %v2183
      %v5107 = vunpack.c.h.b16 %v2183
      %v5108 = vunpack.c.l.b16 %v2184
      %v5109 = vunpack.c.h.b16 %v2184
      %v5110 = vunpack.c.l.b16 %v2185
      %v5111 = vunpack.c.h.b16 %v2185
      %v5112 = vunpack.c.l.b16 %v2186
      %v5113 = vunpack.c.h.b16 %v2186
      %v5114 = vunpack.c.l.b16 %v2187
      %v5115 = vunpack.c.h.b16 %v2187
      %v5116 = vunpack.c.l.b16 %v2188
      %v5117 = vunpack.c.h.b16 %v2188
      %v5118 = vunpack.c.l.b16 %v2189
      %v5119 = vunpack.c.h.b16 %v2189
      %v5120 = vunpack.c.l.b16 %v2190
      %v5121 = vunpack.c.h.b16 %v2190
      %v5122 = vunpack.c.l.b16 %v2191
      %v5123 = vunpack.c.h.b16 %v2191
      %v5124 = vunpack.c.l.b16 %v2192
      %v5125 = vunpack.c.h.b16 %v2192
      %v5126 = vunpack.c.l.b16 %v2193
      %v5127 = vunpack.c.h.b16 %v2193
      %v5128 = vunpack.c.l.b16 %v2194
      %v5129 = vunpack.c.h.b16 %v2194
      %v5130 = vunpack.c.l.b16 %v2195
      %v5131 = vunpack.c.h.b16 %v2195
      %v5132 = vunpack.c.l.b16 %v2196
      %v5133 = vunpack.c.h.b16 %v2196
      %v5134 = vunpack.c.l.b16 %v2197
      %v5135 = vunpack.c.h.b16 %v2197
      %v5136 = vunpack.c.l.b16 %v2198
      %v5137 = vunpack.c.h.b16 %v2198
      %v5138 = vunpack.c.l.b16 %v2199
      %v5139 = vunpack.c.h.b16 %v2199
      %v5140 = vunpack.c.l.b16 %v2200
      %v5141 = vunpack.c.h.b16 %v2200
      %v5142 = vunpack.c.l.b16 %v2201
      %v5143 = vunpack.c.h.b16 %v2201
      %v5144 = vunpack.c.l.b16 %v2202
      %v5145 = vunpack.c.h.b16 %v2202
      %v5146 = vunpack.c.l.b16 %v2203
      %v5147 = vunpack.c.h.b16 %v2203
      %v5148 = vunpack.c.l.b16 %v2204
      %v5149 = vunpack.c.h.b16 %v2204
      %v5150 = vunpack.c.l.b16 %v2205
      %v5151 = vunpack.c.h.b16 %v2205
      %v5152 = vunpack.c.l.b16 %v2206
      %v5153 = vunpack.c.h.b16 %v2206
      %v5154 = vunpack.c.l.b16 %v2207
      %v5155 = vunpack.c.h.b16 %v2207
      %v5156 = vunpack.c.l.b16 %v2208
      %v5157 = vunpack.c.h.b16 %v2208
      %v5158 = vunpack.c.l.b16 %v2209
      %v5159 = vunpack.c.h.b16 %v2209
      %v5160 = vunpack.c.l.b16 %v2210
      %v5161 = vunpack.c.h.b16 %v2210
      %v5162 = vunpack.c.l.b16 %v2211
      %v5163 = vunpack.c.h.b16 %v2211
      %v5164 = vunpack.c.l.b16 %v2212
      %v5165 = vunpack.c.h.b16 %v2212
      %v5166 = vunpack.c.l.b16 %v2213
      %v5167 = vunpack.c.h.b16 %v2213
      %v5168 = vunpack.c.l.b16 %v2214
      %v5169 = vunpack.c.h.b16 %v2214
      %v5170 = vunpack.c.l.b16 %v2215
      %v5171 = vunpack.c.h.b16 %v2215
      %v5172 = vunpack.c.l.b16 %v2216
      %v5173 = vunpack.c.h.b16 %v2216
      %v5174 = vunpack.c.l.b16 %v2217
      %v5175 = vunpack.c.h.b16 %v2217
      %v5176 = vunpack.c.l.b16 %v2218
      %v5177 = vunpack.c.h.b16 %v2218
      %v5178 = vunpack.c.l.b16 %v2219
      %v5179 = vunpack.c.h.b16 %v2219
      %v5180 = vunpack.c.l.b16 %v2220
      %v5181 = vunpack.c.h.b16 %v2220
      %v5182 = vunpack.c.l.b16 %v2221
      %v5183 = vunpack.c.h.b16 %v2221
      %v5184 = vunpack.c.l.b16 %v2222
      %v5185 = vunpack.c.h.b16 %v2222
      %v5186 = vunpack.c.l.b16 %v2223
      %v5187 = vunpack.c.h.b16 %v2223
      %v5188 = vunpack.c.l.b16 %v2224
      %v5189 = vunpack.c.h.b16 %v2224
      %v5190 = vunpack.c.l.b16 %v2225
      %v5191 = vunpack.c.h.b16 %v2225
      %v5192 = vunpack.c.l.b16 %v2226
      %v5193 = vunpack.c.h.b16 %v2226
      %v5194 = vunpack.c.l.b16 %v2227
      %v5195 = vunpack.c.h.b16 %v2227
      %v5196 = vunpack.c.l.b16 %v2228
      %v5197 = vunpack.c.h.b16 %v2228
      %v5198 = vunpack.c.l.b16 %v2229
      %v5199 = vunpack.c.h.b16 %v2229
      %v5200 = vunpack.c.l.b16 %v2230
      %v5201 = vunpack.c.h.b16 %v2230
      %v5202 = vunpack.c.l.b16 %v2231
      %v5203 = vunpack.c.h.b16 %v2231
      %v5204 = vunpack.c.l.b16 %v2232
      %v5205 = vunpack.c.h.b16 %v2232
      %v5206 = vunpack.c.l.b16 %v2233
      %v5207 = vunpack.c.h.b16 %v2233
      %v5208 = vunpack.c.l.b16 %v2234
      %v5209 = vunpack.c.h.b16 %v2234
      %v5210 = vunpack.c.l.b16 %v2235
      %v5211 = vunpack.c.h.b16 %v2235
      %v5212 = vunpack.c.l.b16 %v2236
      %v5213 = vunpack.c.h.b16 %v2236
      %v5214 = vunpack.c.l.b16 %v2237
      %v5215 = vunpack.c.h.b16 %v2237
      %v5216 = vunpack.c.l.b16 %v2238
      %v5217 = vunpack.c.h.b16 %v2238
      %v5218 = vunpack.c.l.b16 %v2239
      %v5219 = vunpack.c.h.b16 %v2239
      %v5220 = vunpack.c.l.b16 %v2240
      %v5221 = vunpack.c.h.b16 %v2240
      %v5222 = vunpack.c.l.b16 %v2241
      %v5223 = vunpack.c.h.b16 %v2241
      %v5224 = vunpack.c.l.b16 %v2242
      %v5225 = vunpack.c.h.b16 %v2242
      %v5226 = vunpack.c.l.b16 %v2243
      %v5227 = vunpack.c.h.b16 %v2243
      %v5228 = vunpack.c.l.b16 %v2244
      %v5229 = vunpack.c.h.b16 %v2244
      %v5230 = vunpack.c.l.b16 %v2245
      %v5231 = vunpack.c.h.b16 %v2245
      %v5232 = vunpack.c.l.b16 %v2246
      %v5233 = vunpack.c.h.b16 %v2246
      %v5234 = vunpack.c.l.b16 %v2247
      %v5235 = vunpack.c.h.b16 %v2247
      %v5236 = vunpack.c.l.b16 %v2248
      %v5237 = vunpack.c.h.b16 %v2248
      %v5238 = vunpack.c.l.b16 %v2249
      %v5239 = vunpack.c.h.b16 %v2249
      %v5240 = vunpack.c.l.b16 %v2250
      %v5241 = vunpack.c.h.b16 %v2250
      %v5242 = vunpack.c.l.b16 %v2251
      %v5243 = vunpack.c.h.b16 %v2251
      %v5244 = vunpack.c.l.b16 %v2252
      %v5245 = vunpack.c.h.b16 %v2252
      %v5246 = vunpack.c.l.b16 %v2253
      %v5247 = vunpack.c.h.b16 %v2253
      %v5248 = vunpack.c.l.b16 %v2254
      %v5249 = vunpack.c.h.b16 %v2254
      %v5250 = vunpack.c.l.b16 %v2255
      %v5251 = vunpack.c.h.b16 %v2255
      %v5252 = vunpack.c.l.b16 %v2256
      %v5253 = vunpack.c.h.b16 %v2256
      %v5254 = vunpack.c.l.b16 %v2257
      %v5255 = vunpack.c.h.b16 %v2257
      %v5256 = vunpack.c.l.b16 %v2258
      %v5257 = vunpack.c.h.b16 %v2258
      %v5258 = vunpack.c.l.b16 %v2259
      %v5259 = vunpack.c.h.b16 %v2259
      %v5260 = vunpack.c.l.b16 %v2260
      %v5261 = vunpack.c.h.b16 %v2260
      %v5262 = vunpack.c.l.b16 %v2261
      %v5263 = vunpack.c.h.b16 %v2261
      %v5264 = vunpack.c.l.b16 %v2262
      %v5265 = vunpack.c.h.b16 %v2262
      %v5266 = vunpack.c.l.b16 %v2263
      %v5267 = vunpack.c.h.b16 %v2263
      %v5268 = vunpack.c.l.b16 %v2264
      %v5269 = vunpack.c.h.b16 %v2264
      %v5270 = vunpack.c.l.b16 %v2265
      %v5271 = vunpack.c.h.b16 %v2265
      %v5272 = vunpack.c.l.b16 %v2266
      %v5273 = vunpack.c.h.b16 %v2266
      %v5274 = vunpack.c.l.b16 %v2267
      %v5275 = vunpack.c.h.b16 %v2267
      %v5276 = vunpack.c.l.b16 %v2268
      %v5277 = vunpack.c.h.b16 %v2268
      %v5278 = vunpack.c.l.b16 %v2269
      %v5279 = vunpack.c.h.b16 %v2269
      %v5280 = vunpack.c.l.b16 %v2270
      %v5281 = vunpack.c.h.b16 %v2270
      %v5282 = vunpack.c.l.b16 %v2271
      %v5283 = vunpack.c.h.b16 %v2271
      %v5284 = vunpack.c.l.b16 %v2272
      %v5285 = vunpack.c.h.b16 %v2272
      %v5286 = vunpack.c.l.b16 %v2273
      %v5287 = vunpack.c.h.b16 %v2273
      %v5288 = vunpack.c.l.b16 %v2274
      %v5289 = vunpack.c.h.b16 %v2274
      %v5290 = vunpack.c.l.b16 %v2275
      %v5291 = vunpack.c.h.b16 %v2275
      %v5292 = vunpack.c.l.b16 %v2276
      %v5293 = vunpack.c.h.b16 %v2276
      %v5294 = vunpack.c.l.b16 %v2277
      %v5295 = vunpack.c.h.b16 %v2277
      %v5296 = vunpack.c.l.b16 %v2278
      %v5297 = vunpack.c.h.b16 %v2278
      %v5298 = vunpack.c.l.b16 %v2279
      %v5299 = vunpack.c.h.b16 %v2279
      %v5300 = vunpack.c.l.b16 %v2280
      %v5301 = vunpack.c.h.b16 %v2280
      %v5302 = vunpack.c.l.b16 %v2281
      %v5303 = vunpack.c.h.b16 %v2281
      %v5304 = vunpack.c.l.b16 %v2282
      %v5305 = vunpack.c.h.b16 %v2282
      %v5306 = vunpack.c.l.b16 %v2283
      %v5307 = vunpack.c.h.b16 %v2283
      %v5308 = vunpack.c.l.b16 %v2284
      %v5309 = vunpack.c.h.b16 %v2284
      %v5310 = vunpack.c.l.b16 %v2285
      %v5311 = vunpack.c.h.b16 %v2285
      %v5312 = vunpack.c.l.b16 %v2286
      %v5313 = vunpack.c.h.b16 %v2286
      %v5314 = vunpack.c.l.b16 %v2287
      %v5315 = vunpack.c.h.b16 %v2287
      %v5316 = vunpack.c.l.b16 %v2288
      %v5317 = vunpack.c.h.b16 %v2288
      %v5318 = vunpack.c.l.b16 %v2289
      %v5319 = vunpack.c.h.b16 %v2289
      %v5320 = vunpack.c.l.b16 %v2290
      %v5321 = vunpack.c.h.b16 %v2290
      %v5322 = vunpack.c.l.b16 %v2291
      %v5323 = vunpack.c.h.b16 %v2291
      %v5324 = vunpack.c.l.b16 %v2292
      %v5325 = vunpack.c.h.b16 %v2292
      %v5326 = vunpack.c.l.b16 %v2293
      %v5327 = vunpack.c.h.b16 %v2293
      %v5328 = vunpack.c.l.b16 %v2294
      %v5329 = vunpack.c.h.b16 %v2294
      %v5330 = vunpack.c.l.b16 %v2295
      %v5331 = vunpack.c.h.b16 %v2295
      %v5332 = vunpack.c.l.b16 %v2296
      %v5333 = vunpack.c.h.b16 %v2296
      %v5334 = vunpack.c.l.b16 %v2297
      %v5335 = vunpack.c.h.b16 %v2297
      %v5336 = vunpack.c.l.b16 %v2298
      %v5337 = vunpack.c.h.b16 %v2298
      %v5338 = vunpack.c.l.b16 %v2299
      %v5339 = vunpack.c.h.b16 %v2299
      %v5340 = vunpack.c.l.b16 %v2300
      %v5341 = vunpack.c.h.b16 %v2300
      %v5342 = vunpack.c.l.b16 %v2301
      %v5343 = vunpack.c.h.b16 %v2301
      %v5344 = vunpack.c.l.b16 %v2302
      %v5345 = vunpack.c.h.b16 %v2302
      %v5346 = vunpack.c.l.b16 %v2303
      %v5347 = vunpack.c.h.b16 %v2303
      %v5348 = vunpack.c.l.b16 %v2304
      %v5349 = vunpack.c.h.b16 %v2304
      %v5350 = vunpack.c.l.b16 %v2305
      %v5351 = vunpack.c.h.b16 %v2305
      %v5352 = vunpack.c.l.b16 %v2306
      %v5353 = vunpack.c.h.b16 %v2306
      %v5354 = vunpack.c.l.b16 %v2307
      %v5355 = vunpack.c.h.b16 %v2307
      %v5356 = vunpack.c.l.b16 %v2308
      %v5357 = vunpack.c.h.b16 %v2308
      %v5358 = vunpack.c.l.b16 %v2309
      %v5359 = vunpack.c.h.b16 %v2309
      %v5360 = vunpack.c.l.b16 %v2310
      %v5361 = vunpack.c.h.b16 %v2310
      %v5362 = vunpack.c.l.b16 %v2311
      %v5363 = vunpack.c.h.b16 %v2311
      %v5364 = vunpack.c.l.b16 %v2312
      %v5365 = vunpack.c.h.b16 %v2312
      %v5366 = vunpack.c.l.b16 %v2313
      %v5367 = vunpack.c.h.b16 %v2313
      %v5368 = vunpack.c.l.b16 %v2314
      %v5369 = vunpack.c.h.b16 %v2314
      %v5370 = vunpack.c.l.b16 %v2315
      %v5371 = vunpack.c.h.b16 %v2315
      %v5372 = vunpack.c.l.b16 %v2316
      %v5373 = vunpack.c.h.b16 %v2316
      %v5374 = vunpack.c.l.b16 %v2317
      %v5375 = vunpack.c.h.b16 %v2317
      %v5376 = vunpack.c.l.b16 %v2318
      %v5377 = vunpack.c.h.b16 %v2318
      %v5378 = vunpack.c.l.b16 %v2319
      %v5379 = vunpack.c.h.b16 %v2319
      %v5380 = vunpack.c.l.b16 %v2320
      %v5381 = vunpack.c.h.b16 %v2320
      %v5382 = vunpack.c.l.b16 %v2321
      %v5383 = vunpack.c.h.b16 %v2321
      %v5384 = vunpack.c.l.b16 %v2322
      %v5385 = vunpack.c.h.b16 %v2322
      %v5386 = vunpack.c.l.b16 %v2323
      %v5387 = vunpack.c.h.b16 %v2323
      %v5388 = vunpack.c.l.b16 %v2324
      %v5389 = vunpack.c.h.b16 %v2324
      %v5390 = vunpack.c.l.b16 %v2325
      %v5391 = vunpack.c.h.b16 %v2325
      %v5392 = vunpack.c.l.b16 %v2326
      %v5393 = vunpack.c.h.b16 %v2326
      %v5394 = vunpack.c.l.b16 %v2327
      %v5395 = vunpack.c.h.b16 %v2327
      %v5396 = vunpack.c.l.b16 %v2328
      %v5397 = vunpack.c.h.b16 %v2328
      %v5398 = vunpack.c.l.b16 %v2329
      %v5399 = vunpack.c.h.b16 %v2329
      %v5400 = vunpack.c.l.b16 %v2330
      %v5401 = vunpack.c.h.b16 %v2330
      %v5402 = vunpack.c.l.b16 %v2331
      %v5403 = vunpack.c.h.b16 %v2331
      %v5404 = vunpack.c.l.b16 %v2332
      %v5405 = vunpack.c.h.b16 %v2332
      %v5406 = vunpack.c.l.b16 %v2333
      %v5407 = vunpack.c.h.b16 %v2333
      %v5408 = vunpack.c.l.b16 %v2334
      %v5409 = vunpack.c.h.b16 %v2334
      %v5410 = vunpack.c.l.b16 %v2335
      %v5411 = vunpack.c.h.b16 %v2335
      %v5412 = vunpack.c.l.b16 %v2336
      %v5413 = vunpack.c.h.b16 %v2336
      %v5414 = vunpack.c.l.b16 %v2337
      %v5415 = vunpack.c.h.b16 %v2337
      %v5416 = vunpack.c.l.b16 %v2338
      %v5417 = vunpack.c.h.b16 %v2338
      %v5418 = vunpack.c.l.b16 %v2339
      %v5419 = vunpack.c.h.b16 %v2339
      %v5420 = vunpack.c.l.b16 %v2340
      %v5421 = vunpack.c.h.b16 %v2340
      %v5422 = vunpack.c.l.b16 %v2341
      %v5423 = vunpack.c.h.b16 %v2341
      %v5424 = vunpack.c.l.b16 %v2342
      %v5425 = vunpack.c.h.b16 %v2342
      %v5426 = vunpack.c.l.b16 %v2343
      %v5427 = vunpack.c.h.b16 %v2343
      %v5428 = vunpack.c.l.b16 %v2344
      %v5429 = vunpack.c.h.b16 %v2344
      %v5430 = vunpack.c.l.b16 %v2345
      %v5431 = vunpack.c.h.b16 %v2345
      %v5432 = vunpack.c.l.b16 %v2346
      %v5433 = vunpack.c.h.b16 %v2346
      %v5434 = vunpack.c.l.b16 %v2347
      %v5435 = vunpack.c.h.b16 %v2347
      %v5436 = vunpack.c.l.b16 %v2348
      %v5437 = vunpack.c.h.b16 %v2348
      %v5438 = vunpack.c.l.b16 %v2349
      %v5439 = vunpack.c.h.b16 %v2349
      %v5440 = vunpack.c.l.b16 %v2350
      %v5441 = vunpack.c.h.b16 %v2350
      %v5442 = vunpack.c.l.b16 %v2351
      %v5443 = vunpack.c.h.b16 %v2351
      %v5444 = vunpack.c.l.b16 %v2352
      %v5445 = vunpack.c.h.b16 %v2352
      %v5446 = vunpack.c.l.b16 %v2353
      %v5447 = vunpack.c.h.b16 %v2353
      %v5448 = vunpack.c.l.b16 %v2354
      %v5449 = vunpack.c.h.b16 %v2354
      %v5450 = vunpack.c.l.b16 %v2355
      %v5451 = vunpack.c.h.b16 %v2355
      %v5452 = vunpack.c.l.b16 %v2356
      %v5453 = vunpack.c.h.b16 %v2356
      %v5454 = vunpack.c.l.b16 %v2357
      %v5455 = vunpack.c.h.b16 %v2357
      %v5456 = vunpack.c.l.b16 %v2358
      %v5457 = vunpack.c.h.b16 %v2358
      %v5458 = vunpack.c.l.b16 %v2359
      %v5459 = vunpack.c.h.b16 %v2359
      %v5460 = vunpack.c.l.b16 %v2360
      %v5461 = vunpack.c.h.b16 %v2360
      %v5462 = vunpack.c.l.b16 %v2361
      %v5463 = vunpack.c.h.b16 %v2361
      %v5464 = vunpack.c.l.b16 %v2362
      %v5465 = vunpack.c.h.b16 %v2362
      %v5466 = vunpack.c.l.b16 %v2363
      %v5467 = vunpack.c.h.b16 %v2363
      %v5468 = vunpack.c.l.b16 %v2364
      %v5469 = vunpack.c.h.b16 %v2364
      %v5470 = vunpack.c.l.b16 %v2365
      %v5471 = vunpack.c.h.b16 %v2365
      %v5472 = vunpack.c.l.b16 %v2366
      %v5473 = vunpack.c.h.b16 %v2366
      %v5474 = vunpack.c.l.b16 %v2367
      %v5475 = vunpack.c.h.b16 %v2367
      %v5476 = vunpack.c.l.b16 %v2368
      %v5477 = vunpack.c.h.b16 %v2368
      %v5478 = vunpack.c.l.b16 %v2369
      %v5479 = vunpack.c.h.b16 %v2369
      %v5480 = vunpack.c.l.b16 %v2370
      %v5481 = vunpack.c.h.b16 %v2370
      %v5482 = vunpack.c.l.b16 %v2371
      %v5483 = vunpack.c.h.b16 %v2371
      %v5484 = vunpack.c.l.b16 %v2372
      %v5485 = vunpack.c.h.b16 %v2372
      %v5486 = vunpack.c.l.b16 %v2373
      %v5487 = vunpack.c.h.b16 %v2373
      %v5488 = vunpack.c.l.b16 %v2374
      %v5489 = vunpack.c.h.b16 %v2374
      %v5490 = vunpack.c.l.b16 %v2375
      %v5491 = vunpack.c.h.b16 %v2375
      %v5492 = vunpack.c.l.b16 %v2376
      %v5493 = vunpack.c.h.b16 %v2376
      %v5494 = vunpack.c.l.b16 %v2377
      %v5495 = vunpack.c.h.b16 %v2377
      %v5496 = vunpack.c.l.b16 %v2378
      %v5497 = vunpack.c.h.b16 %v2378
      %v5498 = vunpack.c.l.b16 %v2379
      %v5499 = vunpack.c.h.b16 %v2379
      %v5500 = vunpack.c.l.b16 %v2380
      %v5501 = vunpack.c.h.b16 %v2380
      %v5502 = vunpack.c.l.b16 %v2381
      %v5503 = vunpack.c.h.b16 %v2381
      %v5504 = vunpack.c.l.b16 %v2382
      %v5505 = vunpack.c.h.b16 %v2382
      %v5506 = vunpack.c.l.b16 %v2383
      %v5507 = vunpack.c.h.b16 %v2383
      %v5508 = vunpack.c.l.b16 %v2384
      %v5509 = vunpack.c.h.b16 %v2384
      %v5510 = vunpack.c.l.b16 %v2385
      %v5511 = vunpack.c.h.b16 %v2385
      %v5512 = vunpack.c.l.b16 %v2386
      %v5513 = vunpack.c.h.b16 %v2386
      %v5514 = vunpack.c.l.b16 %v2387
      %v5515 = vunpack.c.h.b16 %v2387
      %v5516 = vunpack.c.l.b16 %v2388
      %v5517 = vunpack.c.h.b16 %v2388
      %v5518 = vunpack.c.l.b16 %v2389
      %v5519 = vunpack.c.h.b16 %v2389
      %v5520 = vunpack.c.l.b16 %v2390
      %v5521 = vunpack.c.h.b16 %v2390
      %v5522 = vunpack.c.l.b16 %v2391
      %v5523 = vunpack.c.h.b16 %v2391
      %v5524 = vunpack.c.l.b16 %v2392
      %v5525 = vunpack.c.h.b16 %v2392
      %v5526 = vunpack.c.l.b16 %v2393
      %v5527 = vunpack.c.h.b16 %v2393
      %v5528 = vunpack.c.l.b16 %v2394
      %v5529 = vunpack.c.h.b16 %v2394
      %v5530 = vunpack.c.l.b16 %v2395
      %v5531 = vunpack.c.h.b16 %v2395
      %v5532 = vunpack.c.l.b16 %v2396
      %v5533 = vunpack.c.h.b16 %v2396
      %v5534 = vunpack.c.l.b16 %v2397
      %v5535 = vunpack.c.h.b16 %v2397
      %v5536 = vunpack.c.l.b16 %v2398
      %v5537 = vunpack.c.h.b16 %v2398
      %v5538 = vunpack.c.l.b16 %v2399
      %v5539 = vunpack.c.h.b16 %v2399
      %v5540 = vunpack.c.l.b16 %v2400
      %v5541 = vunpack.c.h.b16 %v2400
      %v5542 = vunpack.c.l.b16 %v2401
      %v5543 = vunpack.c.h.b16 %v2401
      %v5544 = vunpack.c.l.b16 %v2402
      %v5545 = vunpack.c.h.b16 %v2402
      %v5546 = vunpack.c.l.b16 %v2403
      %v5547 = vunpack.c.h.b16 %v2403
      %v5548 = vunpack.c.l.b16 %v2404
      %v5549 = vunpack.c.h.b16 %v2404
      %v5550 = vunpack.c.l.b16 %v2405
      %v5551 = vunpack.c.h.b16 %v2405
      %v5552 = vunpack.c.l.b16 %v2406
      %v5553 = vunpack.c.h.b16 %v2406
      %v5554 = vunpack.c.l.b16 %v2407
      %v5555 = vunpack.c.h.b16 %v2407
      %v5556 = vunpack.c.l.b16 %v2408
      %v5557 = vunpack.c.h.b16 %v2408
      %v5558 = vunpack.c.l.b16 %v2409
      %v5559 = vunpack.c.h.b16 %v2409
      %v5560 = vunpack.c.l.b16 %v2410
      %v5561 = vunpack.c.h.b16 %v2410
      %v5562 = vunpack.c.l.b16 %v2411
      %v5563 = vunpack.c.h.b16 %v2411
      %v5564 = vunpack.c.l.b16 %v2412
      %v5565 = vunpack.c.h.b16 %v2412
      %v5566 = vunpack.c.l.b16 %v2413
      %v5567 = vunpack.c.h.b16 %v2413
      %v5568 = vunpack.c.l.b16 %v2414
      %v5569 = vunpack.c.h.b16 %v2414
      %v5570 = vunpack.c.l.b16 %v2415
      %v5571 = vunpack.c.h.b16 %v2415
      %v5572 = vunpack.c.l.b16 %v2416
      %v5573 = vunpack.c.h.b16 %v2416
      %v5574 = vunpack.c.l.b16 %v2417
      %v5575 = vunpack.c.h.b16 %v2417
      %v5576 = vunpack.c.l.b16 %v2418
      %v5577 = vunpack.c.h.b16 %v2418
      %v5578 = vunpack.c.l.b16 %v2419
      %v5579 = vunpack.c.h.b16 %v2419
      %v5580 = vunpack.c.l.b16 %v2420
      %v5581 = vunpack.c.h.b16 %v2420
      %v5582 = vunpack.c.l.b16 %v2421
      %v5583 = vunpack.c.h.b16 %v2421
      %v5584 = vunpack.c.l.b16 %v2422
      %v5585 = vunpack.c.h.b16 %v2422
      %v5586 = vunpack.c.l.b16 %v2423
      %v5587 = vunpack.c.h.b16 %v2423
      %v5588 = vunpack.c.l.b16 %v2424
      %v5589 = vunpack.c.h.b16 %v2424
      %v5590 = vunpack.c.l.b16 %v2425
      %v5591 = vunpack.c.h.b16 %v2425
      %v5592 = vunpack.c.l.b16 %v2426
      %v5593 = vunpack.c.h.b16 %v2426
      %v5594 = vunpack.c.l.b16 %v2427
      %v5595 = vunpack.c.h.b16 %v2427
      %v5596 = vunpack.c.l.b16 %v2428
      %v5597 = vunpack.c.h.b16 %v2428
      %v5598 = vunpack.c.l.b16 %v2429
      %v5599 = vunpack.c.h.b16 %v2429
      %v5600 = vunpack.c.l.b16 %v2430
      %v5601 = vunpack.c.h.b16 %v2430
      %v5602 = vunpack.c.l.b16 %v2431
      %v5603 = vunpack.c.h.b16 %v2431
      %v5604 = vunpack.c.l.b16 %v2432
      %v5605 = vunpack.c.h.b16 %v2432
      %v5606 = vunpack.c.l.b16 %v2433
      %v5607 = vunpack.c.h.b16 %v2433
      %v5608 = vunpack.c.l.b16 %v2434
      %v5609 = vunpack.c.h.b16 %v2434
      %v5610 = vunpack.c.l.b16 %v2435
      %v5611 = vunpack.c.h.b16 %v2435
      %v5612 = vunpack.c.l.b16 %v2436
      %v5613 = vunpack.c.h.b16 %v2436
      %v5614 = vunpack.c.l.b16 %v2437
      %v5615 = vunpack.c.h.b16 %v2437
      %v5616 = vunpack.c.l.b16 %v2438
      %v5617 = vunpack.c.h.b16 %v2438
      %v5618 = vunpack.c.l.b16 %v2439
      %v5619 = vunpack.c.h.b16 %v2439
      %v5620 = vunpack.c.l.b16 %v2440
      %v5621 = vunpack.c.h.b16 %v2440
      %v5622 = vunpack.c.l.b16 %v2441
      %v5623 = vunpack.c.h.b16 %v2441
      %v5624 = vunpack.c.l.b16 %v2442
      %v5625 = vunpack.c.h.b16 %v2442
      %v5626 = vunpack.c.l.b16 %v2443
      %v5627 = vunpack.c.h.b16 %v2443
      %v5628 = vunpack.c.l.b16 %v2444
      %v5629 = vunpack.c.h.b16 %v2444
      %v5630 = vunpack.c.l.b16 %v2445
      %v5631 = vunpack.c.h.b16 %v2445
      %v5632 = vunpack.c.l.b16 %v2446
      %v5633 = vunpack.c.h.b16 %v2446
      %v5634 = vunpack.c.l.b16 %v2447
      %v5635 = vunpack.c.h.b16 %v2447
      %v5636 = vunpack.c.l.b16 %v2448
      %v5637 = vunpack.c.h.b16 %v2448
      %v5638 = vunpack.c.l.b16 %v2449
      %v5639 = vunpack.c.h.b16 %v2449
      %v5640 = vunpack.c.l.b16 %v2450
      %v5641 = vunpack.c.h.b16 %v2450
      %v5642 = vunpack.c.l.b16 %v2451
      %v5643 = vunpack.c.h.b16 %v2451
      %v5644 = vunpack.c.l.b16 %v2452
      %v5645 = vunpack.c.h.b16 %v2452
      %v5646 = vunpack.c.l.b16 %v2453
      %v5647 = vunpack.c.h.b16 %v2453
      %v5648 = vunpack.c.l.b16 %v2454
      %v5649 = vunpack.c.h.b16 %v2454
      %v5650 = vunpack.c.l.b16 %v2455
      %v5651 = vunpack.c.h.b16 %v2455
      %v5652 = vunpack.c.l.b16 %v2456
      %v5653 = vunpack.c.h.b16 %v2456
      %v5654 = vunpack.c.l.b16 %v2457
      %v5655 = vunpack.c.h.b16 %v2457
      %v5656 = vunpack.c.l.b16 %v2458
      %v5657 = vunpack.c.h.b16 %v2458
      %v5658 = vunpack.c.l.b16 %v2459
      %v5659 = vunpack.c.h.b16 %v2459
      %v5660 = vunpack.c.l.b16 %v2460
      %v5661 = vunpack.c.h.b16 %v2460
      %v5662 = vunpack.c.l.b16 %v2461
      %v5663 = vunpack.c.h.b16 %v2461
      %v5664 = vunpack.c.l.b16 %v2462
      %v5665 = vunpack.c.h.b16 %v2462
      %v5666 = vunpack.c.l.b16 %v2463
      %v5667 = vunpack.c.h.b16 %v2463
      %v5668 = vunpack.c.l.b16 %v2464
      %v5669 = vunpack.c.h.b16 %v2464
      %v5670 = vunpack.c.l.b16 %v2465
      %v5671 = vunpack.c.h.b16 %v2465
      %v5672 = vunpack.c.l.b16 %v2466
      %v5673 = vunpack.c.h.b16 %v2466
      %v5674 = vunpack.c.l.b16 %v2467
      %v5675 = vunpack.c.h.b16 %v2467
      %v5676 = vunpack.c.l.b16 %v2468
      %v5677 = vunpack.c.h.b16 %v2468
      %v5678 = vunpack.c.l.b16 %v2469
      %v5679 = vunpack.c.h.b16 %v2469
      %v5680 = vunpack.c.l.b16 %v2470
      %v5681 = vunpack.c.h.b16 %v2470
      %v5682 = vunpack.c.l.b16 %v2471
      %v5683 = vunpack.c.h.b16 %v2471
      %v5684 = vunpack.c.l.b16 %v2472
      %v5685 = vunpack.c.h.b16 %v2472
      %v5686 = vunpack.c.l.b16 %v2473
      %v5687 = vunpack.c.h.b16 %v2473
      %v5688 = vunpack.c.l.b16 %v2474
      %v5689 = vunpack.c.h.b16 %v2474
      %v5690 = vunpack.c.l.b16 %v2475
      %v5691 = vunpack.c.h.b16 %v2475
      %v5692 = vunpack.c.l.b16 %v2476
      %v5693 = vunpack.c.h.b16 %v2476
      %v5694 = vunpack.c.l.b16 %v2477
      %v5695 = vunpack.c.h.b16 %v2477
      %v5696 = vunpack.c.l.b16 %v2478
      %v5697 = vunpack.c.h.b16 %v2478
      %v5698 = vunpack.c.l.b16 %v2479
      %v5699 = vunpack.c.h.b16 %v2479
      %v5700 = vunpack.c.l.b16 %v2480
      %v5701 = vunpack.c.h.b16 %v2480
      %v5702 = vunpack.c.l.b16 %v2481
      %v5703 = vunpack.c.h.b16 %v2481
      %v5704 = vunpack.c.l.b16 %v2482
      %v5705 = vunpack.c.h.b16 %v2482
      %v5706 = vunpack.c.l.b16 %v2483
      %v5707 = vunpack.c.h.b16 %v2483
      %v5708 = vunpack.c.l.b16 %v2484
      %v5709 = vunpack.c.h.b16 %v2484
      %v5710 = vunpack.c.l.b16 %v2485
      %v5711 = vunpack.c.h.b16 %v2485
      %v5712 = vunpack.c.l.b16 %v2486
      %v5713 = vunpack.c.h.b16 %v2486
      %v5714 = vunpack.c.l.b16 %v2487
      %v5715 = vunpack.c.h.b16 %v2487
      %v5716 = vunpack.c.l.b16 %v2488
      %v5717 = vunpack.c.h.b16 %v2488
      %v5718 = vunpack.c.l.b16 %v2489
      %v5719 = vunpack.c.h.b16 %v2489
      %v5720 = vunpack.c.l.b16 %v2490
      %v5721 = vunpack.c.h.b16 %v2490
      %v5722 = vunpack.c.l.b16 %v2491
      %v5723 = vunpack.c.h.b16 %v2491
      %v5724 = vunpack.c.l.b16 %v2492
      %v5725 = vunpack.c.h.b16 %v2492
      %v5726 = vunpack.c.l.b16 %v2493
      %v5727 = vunpack.c.h.b16 %v2493
      %v5728 = vunpack.c.l.b16 %v2494
      %v5729 = vunpack.c.h.b16 %v2494
      %v5730 = vunpack.c.l.b16 %v2495
      %v5731 = vunpack.c.h.b16 %v2495
      %v5732 = vunpack.c.l.b16 %v2496
      %v5733 = vunpack.c.h.b16 %v2496
      %v5734 = vunpack.c.l.b16 %v2497
      %v5735 = vunpack.c.h.b16 %v2497
      %v5736 = vunpack.c.l.b16 %v2498
      %v5737 = vunpack.c.h.b16 %v2498
      %v5738 = vunpack.c.l.b16 %v2499
      %v5739 = vunpack.c.h.b16 %v2499
      %v5740 = vunpack.c.l.b16 %v2500
      %v5741 = vunpack.c.h.b16 %v2500
      %v5742 = vunpack.c.l.b16 %v2501
      %v5743 = vunpack.c.h.b16 %v2501
      %v5744 = vunpack.c.l.b16 %v2502
      %v5745 = vunpack.c.h.b16 %v2502
      %v5746 = vunpack.c.l.b16 %v2503
      %v5747 = vunpack.c.h.b16 %v2503
      %v5748 = vunpack.c.l.b16 %v2504
      %v5749 = vunpack.c.h.b16 %v2504
      %v5750 = vunpack.c.l.b16 %v2505
      %v5751 = vunpack.c.h.b16 %v2505
      %v5752 = vunpack.c.l.b16 %v2506
      %v5753 = vunpack.c.h.b16 %v2506
      %v5754 = vunpack.c.l.b16 %v2507
      %v5755 = vunpack.c.h.b16 %v2507
      %v5756 = vunpack.c.l.b16 %v2508
      %v5757 = vunpack.c.h.b16 %v2508
      %v5758 = vunpack.c.l.b16 %v2509
      %v5759 = vunpack.c.h.b16 %v2509
      %v5760 = vunpack.c.l.b16 %v2510
      %v5761 = vunpack.c.h.b16 %v2510
      %v5762 = vunpack.c.l.b16 %v2511
      %v5763 = vunpack.c.h.b16 %v2511
      %v5764 = vunpack.c.l.b16 %v2512
      %v5765 = vunpack.c.h.b16 %v2512
      %v5766 = vunpack.c.l.b16 %v2513
      %v5767 = vunpack.c.h.b16 %v2513
      %v5768 = vunpack.c.l.b16 %v2514
      %v5769 = vunpack.c.h.b16 %v2514
      %v5770 = vunpack.c.l.b16 %v2515
      %v5771 = vunpack.c.h.b16 %v2515
      %v5772 = vunpack.c.l.b16 %v2516
      %v5773 = vunpack.c.h.b16 %v2516
      %v5774 = vunpack.c.l.b16 %v2517
      %v5775 = vunpack.c.h.b16 %v2517
      %v5776 = vunpack.c.l.b16 %v2518
      %v5777 = vunpack.c.h.b16 %v2518
      %v5778 = vunpack.c.l.b16 %v2519
      %v5779 = vunpack.c.h.b16 %v2519
      %v5780 = vunpack.c.l.b16 %v2520
      %v5781 = vunpack.c.h.b16 %v2520
      %v5782 = vunpack.c.l.b16 %v2521
      %v5783 = vunpack.c.h.b16 %v2521
      %v5784 = vunpack.c.l.b16 %v2522
      %v5785 = vunpack.c.h.b16 %v2522
      %v5786 = vunpack.c.l.b16 %v2523
      %v5787 = vunpack.c.h.b16 %v2523
      %v5788 = vunpack.c.l.b16 %v2524
      %v5789 = vunpack.c.h.b16 %v2524
      %v5790 = vunpack.c.l.b16 %v2525
      %v5791 = vunpack.c.h.b16 %v2525
      %v5792 = vunpack.c.l.b16 %v2526
      %v5793 = vunpack.c.h.b16 %v2526
      %v5794 = vunpack.c.l.b16 %v2527
      %v5795 = vunpack.c.h.b16 %v2527
      %v5796 = vunpack.c.l.b16 %v2528
      %v5797 = vunpack.c.h.b16 %v2528
      %v5798 = vunpack.c.l.b16 %v2529
      %v5799 = vunpack.c.h.b16 %v2529
      %v5800 = vunpack.c.l.b16 %v2530
      %v5801 = vunpack.c.h.b16 %v2530
      %v5802 = vunpack.c.l.b16 %v2531
      %v5803 = vunpack.c.h.b16 %v2531
      %v5804 = vunpack.c.l.b16 %v2532
      %v5805 = vunpack.c.h.b16 %v2532
      %v5806 = vunpack.c.l.b16 %v2533
      %v5807 = vunpack.c.h.b16 %v2533
      %v5808 = vunpack.c.l.b16 %v2534
      %v5809 = vunpack.c.h.b16 %v2534
      %v5810 = vunpack.c.l.b16 %v2535
      %v5811 = vunpack.c.h.b16 %v2535
      %v5812 = vunpack.c.l.b16 %v2536
      %v5813 = vunpack.c.h.b16 %v2536
      %v5814 = vunpack.c.l.b16 %v2537
      %v5815 = vunpack.c.h.b16 %v2537
      %v5816 = vunpack.c.l.b16 %v2538
      %v5817 = vunpack.c.h.b16 %v2538
      %v5818 = vunpack.c.l.b16 %v2539
      %v5819 = vunpack.c.h.b16 %v2539
      %v5820 = vunpack.c.l.b16 %v2540
      %v5821 = vunpack.c.h.b16 %v2540
      %v5822 = vunpack.c.l.b16 %v2541
      %v5823 = vunpack.c.h.b16 %v2541
      %v5824 = vunpack.c.l.b16 %v2542
      %v5825 = vunpack.c.h.b16 %v2542
      %v5826 = vunpack.c.l.b16 %v2543
      %v5827 = vunpack.c.h.b16 %v2543
      %v5828 = vunpack.c.l.b16 %v2544
      %v5829 = vunpack.c.h.b16 %v2544
      %v5830 = vunpack.c.l.b16 %v2545
      %v5831 = vunpack.c.h.b16 %v2545
      %v5832 = vunpack.c.l.b16 %v2546
      %v5833 = vunpack.c.h.b16 %v2546
      %v5834 = vunpack.c.l.b16 %v2547
      %v5835 = vunpack.c.h.b16 %v2547
      %v5836 = vunpack.c.l.b16 %v2548
      %v5837 = vunpack.c.h.b16 %v2548
      %v5838 = vunpack.c.l.b16 %v2549
      %v5839 = vunpack.c.h.b16 %v2549
      %v5840 = vunpack.c.l.b16 %v2550
      %v5841 = vunpack.c.h.b16 %v2550
      %v5842 = vunpack.c.l.b16 %v2551
      %v5843 = vunpack.c.h.b16 %v2551
      %v5844 = vunpack.c.l.b16 %v2552
      %v5845 = vunpack.c.h.b16 %v2552
      %v5846 = vunpack.c.l.b16 %v2553
      %v5847 = vunpack.c.h.b16 %v2553
      %v5848 = vunpack.c.l.b16 %v2554
      %v5849 = vunpack.c.h.b16 %v2554
      %v5850 = vunpack.c.l.b16 %v2555
      %v5851 = vunpack.c.h.b16 %v2555
      %v5852 = vunpack.c.l.b16 %v2556
      %v5853 = vunpack.c.h.b16 %v2556
      %v5854 = vunpack.c.l.b16 %v2557
      %v5855 = vunpack.c.h.b16 %v2557
      %v5856 = vunpack.c.l.b16 %v2558
      %v5857 = vunpack.c.h.b16 %v2558
      %v5858 = vunpack.c.l.b16 %v2559
      %v5859 = vunpack.c.h.b16 %v2559
      %v5860 = vunpack.c.l.b16 %v2560
      %v5861 = vunpack.c.h.b16 %v2560
      %v5862 = vunpack.c.l.b16 %v2561
      %v5863 = vunpack.c.h.b16 %v2561
      %v5864 = vunpack.c.l.b16 %v2562
      %v5865 = vunpack.c.h.b16 %v2562
      %v5866 = vunpack.c.l.b16 %v2563
      %v5867 = vunpack.c.h.b16 %v2563
      %v5868 = vunpack.c.l.b16 %v2564
      %v5869 = vunpack.c.h.b16 %v2564
      %v5870 = vunpack.c.l.b16 %v2565
      %v5871 = vunpack.c.h.b16 %v2565
      %v5872 = vunpack.c.l.b16 %v2566
      %v5873 = vunpack.c.h.b16 %v2566
      %v5874 = vunpack.c.l.b16 %v2567
      %v5875 = vunpack.c.h.b16 %v2567
      %v5876 = vunpack.c.l.b16 %v2568
      %v5877 = vunpack.c.h.b16 %v2568
      %v5878 = vunpack.c.l.b16 %v2569
      %v5879 = vunpack.c.h.b16 %v2569
      %v5880 = vunpack.c.l.b16 %v2570
      %v5881 = vunpack.c.h.b16 %v2570
      %v5882 = vunpack.c.l.b16 %v2571
      %v5883 = vunpack.c.h.b16 %v2571
      %v5884 = vunpack.c.l.b16 %v2572
      %v5885 = vunpack.c.h.b16 %v2572
      %v5886 = vunpack.c.l.b16 %v2573
      %v5887 = vunpack.c.h.b16 %v2573
      %v5888 = vunpack.c.l.b16 %v2574
      %v5889 = vunpack.c.h.b16 %v2574
      %v5890 = vunpack.c.l.b16 %v2575
      %v5891 = vunpack.c.h.b16 %v2575
      %v5892 = vunpack.c.l.b16 %v2576
      %v5893 = vunpack.c.h.b16 %v2576
      %v5894 = vunpack.c.l.b16 %v2577
      %v5895 = vunpack.c.h.b16 %v2577
      %v5896 = vunpack.c.l.b16 %v2578
      %v5897 = vunpack.c.h.b16 %v2578
      %v5898 = vunpack.c.l.b16 %v2579
      %v5899 = vunpack.c.h.b16 %v2579
      %v5900 = vunpack.c.l.b16 %v2580
      %v5901 = vunpack.c.h.b16 %v2580
      %v5902 = vunpack.c.l.b16 %v2581
      %v5903 = vunpack.c.h.b16 %v2581
      %v5904 = vunpack.c.l.b16 %v2582
      %v5905 = vunpack.c.h.b16 %v2582
      %v5906 = vunpack.c.l.b16 %v2583
      %v5907 = vunpack.c.h.b16 %v2583
      %v5908 = vunpack.c.l.b16 %v2584
      %v5909 = vunpack.c.h.b16 %v2584
      %v5910 = vunpack.c.l.b16 %v2585
      %v5911 = vunpack.c.h.b16 %v2585
      %v5912 = vunpack.c.l.b16 %v2586
      %v5913 = vunpack.c.h.b16 %v2586
      %v5914 = vunpack.c.l.b16 %v2587
      %v5915 = vunpack.c.h.b16 %v2587
      %v5916 = vunpack.c.l.b16 %v2588
      %v5917 = vunpack.c.h.b16 %v2588
      %v5918 = vunpack.c.l.b16 %v2589
      %v5919 = vunpack.c.h.b16 %v2589
      %v5920 = vunpack.c.l.b16 %v2590
      %v5921 = vunpack.c.h.b16 %v2590
      %v5922 = vunpack.c.l.b16 %v2591
      %v5923 = vunpack.c.h.b16 %v2591
      %v5924 = vunpack.c.l.b16 %v2592
      %v5925 = vunpack.c.h.b16 %v2592
      %v5926 = vunpack.c.l.b16 %v2593
      %v5927 = vunpack.c.h.b16 %v2593
      %v5928 = vunpack.c.l.b16 %v2594
      %v5929 = vunpack.c.h.b16 %v2594
      %v5930 = vunpack.c.l.b16 %v2595
      %v5931 = vunpack.c.h.b16 %v2595
      %v5932 = vunpack.c.l.b16 %v2596
      %v5933 = vunpack.c.h.b16 %v2596
      %v5934 = vunpack.c.l.b16 %v2597
      %v5935 = vunpack.c.h.b16 %v2597
      %v5936 = vunpack.c.l.b16 %v2598
      %v5937 = vunpack.c.h.b16 %v2598
      %v5938 = vunpack.c.l.b16 %v2599
      %v5939 = vunpack.c.h.b16 %v2599
      %v5940 = vunpack.c.l.b16 %v2600
      %v5941 = vunpack.c.h.b16 %v2600
      %v5942 = vunpack.c.l.b16 %v2601
      %v5943 = vunpack.c.h.b16 %v2601
      %v5944 = vunpack.c.l.b16 %v2602
      %v5945 = vunpack.c.h.b16 %v2602
      %v5946 = vunpack.c.l.b16 %v2603
      %v5947 = vunpack.c.h.b16 %v2603
      %v5948 = vunpack.c.l.b16 %v2604
      %v5949 = vunpack.c.h.b16 %v2604
      %v5950 = vunpack.c.l.b16 %v2605
      %v5951 = vunpack.c.h.b16 %v2605
      %v5952 = vunpack.c.l.b16 %v2606
      %v5953 = vunpack.c.h.b16 %v2606
      %v5954 = vunpack.c.l.b16 %v2607
      %v5955 = vunpack.c.h.b16 %v2607
      %v5956 = vunpack.c.l.b16 %v2608
      %v5957 = vunpack.c.h.b16 %v2608
      %v5958 = vunpack.c.l.b16 %v2609
      %v5959 = vunpack.c.h.b16 %v2609
      %v5960 = vunpack.c.l.b16 %v2610
      %v5961 = vunpack.c.h.b16 %v2610
      %v5962 = vunpack.c.l.b16 %v2611
      %v5963 = vunpack.c.h.b16 %v2611
      %v5964 = vunpack.c.l.b16 %v2612
      %v5965 = vunpack.c.h.b16 %v2612
      %v5966 = vunpack.c.l.b16 %v2613
      %v5967 = vunpack.c.h.b16 %v2613
      %v5968 = vunpack.c.l.b16 %v2614
      %v5969 = vunpack.c.h.b16 %v2614
      %v5970 = vunpack.c.l.b16 %v2615
      %v5971 = vunpack.c.h.b16 %v2615
      %v5972 = vunpack.c.l.b16 %v2616
      %v5973 = vunpack.c.h.b16 %v2616
      %v5974 = vunpack.c.l.b16 %v2617
      %v5975 = vunpack.c.h.b16 %v2617
      %v5976 = vunpack.c.l.b16 %v2618
      %v5977 = vunpack.c.h.b16 %v2618
      %v5978 = vunpack.c.l.b16 %v2619
      %v5979 = vunpack.c.h.b16 %v2619
      %v5980 = vunpack.c.l.b16 %v2620
      %v5981 = vunpack.c.h.b16 %v2620
      %v5982 = vunpack.c.l.b16 %v2621
      %v5983 = vunpack.c.h.b16 %v2621
      %v5984 = vunpack.c.l.b16 %v2622
      %v5985 = vunpack.c.h.b16 %v2622
      %v5986 = vunpack.c.l.b16 %v2623
      %v5987 = vunpack.c.h.b16 %v2623
      %v5988 = vunpack.c.l.b16 %v2624
      %v5989 = vunpack.c.h.b16 %v2624
      %v5990 = vunpack.c.l.b16 %v2625
      %v5991 = vunpack.c.h.b16 %v2625
      %v5992 = vunpack.c.l.b16 %v2626
      %v5993 = vunpack.c.h.b16 %v2626
      %v5994 = vunpack.c.l.b16 %v2627
      %v5995 = vunpack.c.h.b16 %v2627
      %v5996 = vunpack.c.l.b16 %v2628
      %v5997 = vunpack.c.h.b16 %v2628
      %v5998 = vunpack.c.l.b16 %v2629
      %v5999 = vunpack.c.h.b16 %v2629
      %v6000 = vunpack.c.l.b16 %v2630
      %v6001 = vunpack.c.h.b16 %v2630
      %v6002 = vunpack.c.l.b16 %v2631
      %v6003 = vunpack.c.h.b16 %v2631
      %v6004 = vunpack.c.l.b16 %v2632
      %v6005 = vunpack.c.h.b16 %v2632
      %v6006 = vunpack.c.l.b16 %v2633
      %v6007 = vunpack.c.h.b16 %v2633
      %v6008 = vunpack.c.l.b16 %v2634
      %v6009 = vunpack.c.h.b16 %v2634
      %v6010 = vunpack.c.l.b16 %v2635
      %v6011 = vunpack.c.h.b16 %v2635
      %v6012 = vunpack.c.l.b16 %v2636
      %v6013 = vunpack.c.h.b16 %v2636
      %v6014 = vunpack.c.l.b16 %v2637
      %v6015 = vunpack.c.h.b16 %v2637
      %v6016 = vunpack.c.l.b16 %v2638
      %v6017 = vunpack.c.h.b16 %v2638
      %v6018 = vunpack.c.l.b16 %v2639
      %v6019 = vunpack.c.h.b16 %v2639
      %v6020 = vunpack.c.l.b16 %v2640
      %v6021 = vunpack.c.h.b16 %v2640
      %v6022 = vunpack.c.l.b16 %v2641
      %v6023 = vunpack.c.h.b16 %v2641
      %v6024 = vunpack.c.l.b16 %v2642
      %v6025 = vunpack.c.h.b16 %v2642
      %v6026 = vunpack.c.l.b16 %v2643
      %v6027 = vunpack.c.h.b16 %v2643
      %v6028 = vunpack.c.l.b16 %v2644
      %v6029 = vunpack.c.h.b16 %v2644
      %v6030 = vunpack.c.l.b16 %v2645
      %v6031 = vunpack.c.h.b16 %v2645
      %v6032 = vunpack.c.l.b16 %v2646
      %v6033 = vunpack.c.h.b16 %v2646
      %v6034 = vunpack.c.l.b16 %v2647
      %v6035 = vunpack.c.h.b16 %v2647
      %v6036 = vunpack.c.l.b16 %v2648
      %v6037 = vunpack.c.h.b16 %v2648
      %v6038 = vunpack.c.l.b16 %v2649
      %v6039 = vunpack.c.h.b16 %v2649
      %v6040 = vunpack.c.l.b16 %v2650
      %v6041 = vunpack.c.h.b16 %v2650
      %v6042 = vunpack.c.l.b16 %v2651
      %v6043 = vunpack.c.h.b16 %v2651
      %v6044 = vunpack.c.l.b16 %v2652
      %v6045 = vunpack.c.h.b16 %v2652
      %v6046 = vunpack.c.l.b16 %v2653
      %v6047 = vunpack.c.h.b16 %v2653
      %v6048 = vunpack.c.l.b16 %v2654
      %v6049 = vunpack.c.h.b16 %v2654
      %v6050 = vunpack.c.l.b16 %v2655
      %v6051 = vunpack.c.h.b16 %v2655
      %v6052 = vunpack.c.l.b16 %v2656
      %v6053 = vunpack.c.h.b16 %v2656
      %v6054 = vunpack.c.l.b16 %v2657
      %v6055 = vunpack.c.h.b16 %v2657
      %v6056 = vunpack.c.l.b16 %v2658
      %v6057 = vunpack.c.h.b16 %v2658
      %v6058 = vunpack.c.l.b16 %v2659
      %v6059 = vunpack.c.h.b16 %v2659
      %v6060 = vunpack.c.l.b16 %v2660
      %v6061 = vunpack.c.h.b16 %v2660
      %v6062 = vunpack.c.l.b16 %v2661
      %v6063 = vunpack.c.h.b16 %v2661
      %v6064 = vunpack.c.l.b16 %v2662
      %v6065 = vunpack.c.h.b16 %v2662
      %v6066 = vunpack.c.l.b16 %v2663
      %v6067 = vunpack.c.h.b16 %v2663
      %v6068 = vunpack.c.l.b16 %v2664
      %v6069 = vunpack.c.h.b16 %v2664
      %v6070 = vunpack.c.l.b16 %v2665
      %v6071 = vunpack.c.h.b16 %v2665
      %v6072 = vunpack.c.l.b16 %v2666
      %v6073 = vunpack.c.h.b16 %v2666
      %v6074 = vunpack.c.l.b16 %v2667
      %v6075 = vunpack.c.h.b16 %v2667
      %v6076 = vunpack.c.l.b16 %v2668
      %v6077 = vunpack.c.h.b16 %v2668
      %v6078 = vunpack.c.l.b16 %v2669
      %v6079 = vunpack.c.h.b16 %v2669
      %v6080 = vunpack.c.l.b16 %v2670
      %v6081 = vunpack.c.h.b16 %v2670
      %v6082 = vunpack.c.l.b16 %v2671
      %v6083 = vunpack.c.h.b16 %v2671
      %v6084 = vunpack.c.l.b16 %v2672
      %v6085 = vunpack.c.h.b16 %v2672
      %v6086 = vunpack.c.l.b16 %v2673
      %v6087 = vunpack.c.h.b16 %v2673
      %v6088 = vunpack.c.l.b16 %v2674
      %v6089 = vunpack.c.h.b16 %v2674
      %v6090 = vunpack.c.l.b16 %v2675
      %v6091 = vunpack.c.h.b16 %v2675
      %v6092 = vunpack.c.l.b16 %v2676
      %v6093 = vunpack.c.h.b16 %v2676
      %v6094 = vunpack.c.l.b16 %v2677
      %v6095 = vunpack.c.h.b16 %v2677
      %v6096 = vunpack.c.l.b16 %v2678
      %v6097 = vunpack.c.h.b16 %v2678
      %v6098 = vunpack.c.l.b16 %v2679
      %v6099 = vunpack.c.h.b16 %v2679
      %v6100 = vunpack.c.l.b16 %v2680
      %v6101 = vunpack.c.h.b16 %v2680
      %v6102 = vunpack.c.l.b16 %v2681
      %v6103 = vunpack.c.h.b16 %v2681
      %v6104 = vunpack.c.l.b16 %v2682
      %v6105 = vunpack.c.h.b16 %v2682
      %v6106 = vunpack.c.l.b16 %v2683
      %v6107 = vunpack.c.h.b16 %v2683
      %v6108 = vunpack.c.l.b16 %v2684
      %v6109 = vunpack.c.h.b16 %v2684
      %v6110 = vunpack.c.l.b16 %v2685
      %v6111 = vunpack.c.h.b16 %v2685
      %v6112 = vunpack.c.l.b16 %v2686
      %v6113 = vunpack.c.h.b16 %v2686
      %v6114 = vunpack.c.l.b16 %v2687
      %v6115 = vunpack.c.h.b16 %v2687
      %v6116 = vunpack.c.l.b16 %v2688
      %v6117 = vunpack.c.h.b16 %v2688
      %v6118 = vunpack.c.l.b16 %v2689
      %v6119 = vunpack.c.h.b16 %v2689
      %v6120 = vunpack.c.l.b16 %v2690
      %v6121 = vunpack.c.h.b16 %v2690
      %v6122 = vunpack.c.l.b16 %v2691
      %v6123 = vunpack.c.h.b16 %v2691
      %v6124 = vunpack.c.l.b16 %v2692
      %v6125 = vunpack.c.h.b16 %v2692
      %v6126 = vunpack.c.l.b16 %v2693
      %v6127 = vunpack.c.h.b16 %v2693
      %v6128 = vunpack.c.l.b16 %v2694
      %v6129 = vunpack.c.h.b16 %v2694
      %v6130 = vunpack.c.l.b16 %v2695
      %v6131 = vunpack.c.h.b16 %v2695
      %v6132 = vunpack.c.l.b16 %v2696
      %v6133 = vunpack.c.h.b16 %v2696
      %v6134 = vunpack.c.l.b16 %v2697
      %v6135 = vunpack.c.h.b16 %v2697
      %v6136 = vunpack.c.l.b16 %v2698
      %v6137 = vunpack.c.h.b16 %v2698
      %v6138 = vunpack.c.l.b16 %v2699
      %v6139 = vunpack.c.h.b16 %v2699
      %v6140 = vunpack.c.l.b16 %v2700
      %v6141 = vunpack.c.h.b16 %v2700
      %v6142 = vunpack.c.l.b16 %v2701
      %v6143 = vunpack.c.h.b16 %v2701
      %v6144 = vunpack.c.l.b16 %v2702
      %v6145 = vunpack.c.h.b16 %v2702
      %v6146 = vunpack.c.l.b16 %v2703
      %v6147 = vunpack.c.h.b16 %v2703
      %v6148 = vunpack.c.l.b16 %v2704
      %v6149 = vunpack.c.h.b16 %v2704
      %v6150 = vunpack.c.l.b16 %v2705
      %v6151 = vunpack.c.h.b16 %v2705
      %v6152 = vunpack.c.l.b16 %v2706
      %v6153 = vunpack.c.h.b16 %v2706
      %v6154 = vunpack.c.l.b16 %v2707
      %v6155 = vunpack.c.h.b16 %v2707
      %v6156 = vunpack.c.l.b16 %v2708
      %v6157 = vunpack.c.h.b16 %v2708
      %v6158 = vunpack.c.l.b16 %v2709
      %v6159 = vunpack.c.h.b16 %v2709
      %v6160 = vunpack.c.l.b16 %v2710
      %v6161 = vunpack.c.h.b16 %v2710
      %v6162 = vunpack.c.l.b16 %v2711
      %v6163 = vunpack.c.h.b16 %v2711
      %v6164 = vunpack.c.l.b16 %v2712
      %v6165 = vunpack.c.h.b16 %v2712
      %v6166 = vunpack.c.l.b16 %v2713
      %v6167 = vunpack.c.h.b16 %v2713
      %v6168 = vunpack.c.l.b16 %v2714
      %v6169 = vunpack.c.h.b16 %v2714
      %v6170 = vunpack.c.l.b16 %v2715
      %v6171 = vunpack.c.h.b16 %v2715
      %v6172 = vunpack.c.l.b16 %v2716
      %v6173 = vunpack.c.h.b16 %v2716
      %v6174 = vunpack.c.l.b16 %v2717
      %v6175 = vunpack.c.h.b16 %v2717
      %v6176 = vunpack.c.l.b16 %v2718
      %v6177 = vunpack.c.h.b16 %v2718
      %v6178 = vunpack.c.l.b16 %v2719
      %v6179 = vunpack.c.h.b16 %v2719
      %v6180 = vunpack.c.l.b16 %v2720
      %v6181 = vunpack.c.h.b16 %v2720
      %v6182 = vunpack.c.l.b16 %v2721
      %v6183 = vunpack.c.h.b16 %v2721
      %v6184 = vunpack.c.l.b16 %v2722
      %v6185 = vunpack.c.h.b16 %v2722
      %v6186 = vunpack.c.l.b16 %v2723
      %v6187 = vunpack.c.h.b16 %v2723
      %v6188 = vunpack.c.l.b16 %v2724
      %v6189 = vunpack.c.h.b16 %v2724
      %v6190 = vunpack.c.l.b16 %v2725
      %v6191 = vunpack.c.h.b16 %v2725
      %v6192 = vunpack.c.l.b16 %v2726
      %v6193 = vunpack.c.h.b16 %v2726
      %v6194 = vunpack.c.l.b16 %v2727
      %v6195 = vunpack.c.h.b16 %v2727
      %v6196 = vunpack.c.l.b16 %v2728
      %v6197 = vunpack.c.h.b16 %v2728
      %v6198 = vunpack.c.l.b16 %v2729
      %v6199 = vunpack.c.h.b16 %v2729
      %v6200 = vunpack.c.l.b16 %v2730
      %v6201 = vunpack.c.h.b16 %v2730
      %v6202 = vunpack.c.l.b16 %v2731
      %v6203 = vunpack.c.h.b16 %v2731
      %v6204 = vunpack.c.l.b16 %v2732
      %v6205 = vunpack.c.h.b16 %v2732
      %v6206 = vunpack.c.l.b16 %v2733
      %v6207 = vunpack.c.h.b16 %v2733
      %v6208 = vunpack.c.l.b16 %v2734
      %v6209 = vunpack.c.h.b16 %v2734
      %v6210 = vunpack.c.l.b16 %v2735
      %v6211 = vunpack.c.h.b16 %v2735
      %v6212 = vunpack.c.l.b16 %v2736
      %v6213 = vunpack.c.h.b16 %v2736
      %v6214 = vunpack.c.l.b16 %v2737
      %v6215 = vunpack.c.h.b16 %v2737
      %v6216 = vunpack.c.l.b16 %v2738
      %v6217 = vunpack.c.h.b16 %v2738
      %v6218 = vunpack.c.l.b16 %v2739
      %v6219 = vunpack.c.h.b16 %v2739
      %v6220 = vunpack.c.l.b16 %v2740
      %v6221 = vunpack.c.h.b16 %v2740
      %v6222 = vunpack.c.l.b16 %v2741
      %v6223 = vunpack.c.h.b16 %v2741
      %v6224 = vunpack.c.l.b16 %v2742
      %v6225 = vunpack.c.h.b16 %v2742
      %v6226 = vunpack.c.l.b16 %v2743
      %v6227 = vunpack.c.h.b16 %v2743
      %v6228 = vunpack.c.l.b16 %v2744
      %v6229 = vunpack.c.h.b16 %v2744
      %v6230 = vunpack.c.l.b16 %v2745
      %v6231 = vunpack.c.h.b16 %v2745
      %v6232 = vunpack.c.l.b16 %v2746
      %v6233 = vunpack.c.h.b16 %v2746
      %v6234 = vunpack.c.l.b16 %v2747
      %v6235 = vunpack.c.h.b16 %v2747
      %v6236 = vunpack.c.l.b16 %v2748
      %v6237 = vunpack.c.h.b16 %v2748
      %v6238 = vunpack.c.l.b16 %v2749
      %v6239 = vunpack.c.h.b16 %v2749
      %v6240 = vunpack.c.l.b16 %v2750
      %v6241 = vunpack.c.h.b16 %v2750
      %v6242 = vunpack.c.l.b16 %v2751
      %v6243 = vunpack.c.h.b16 %v2751
      %v6244 = vunpack.c.l.b16 %v2752
      %v6245 = vunpack.c.h.b16 %v2752
      %v6246 = vunpack.c.l.b16 %v2753
      %v6247 = vunpack.c.h.b16 %v2753
      %v6248 = vunpack.c.l.b16 %v2754
      %v6249 = vunpack.c.h.b16 %v2754
      %v6250 = vunpack.c.l.b16 %v2755
      %v6251 = vunpack.c.h.b16 %v2755
      %v6252 = vunpack.c.l.b16 %v2756
      %v6253 = vunpack.c.h.b16 %v2756
      %v6254 = vunpack.c.l.b16 %v2757
      %v6255 = vunpack.c.h.b16 %v2757
      %v6256 = vunpack.c.l.b16 %v2758
      %v6257 = vunpack.c.h.b16 %v2758
      %v6258 = vunpack.c.l.b16 %v2759
      %v6259 = vunpack.c.h.b16 %v2759
      %v6260 = vunpack.c.l.b16 %v2760
      %v6261 = vunpack.c.h.b16 %v2760
      %v6262 = vunpack.c.l.b16 %v2761
      %v6263 = vunpack.c.h.b16 %v2761
      %v6264 = vunpack.c.l.b16 %v2762
      %v6265 = vunpack.c.h.b16 %v2762
      %v6266 = vunpack.c.l.b16 %v2763
      %v6267 = vunpack.c.h.b16 %v2763
      %v6268 = vunpack.c.l.b16 %v2764
      %v6269 = vunpack.c.h.b16 %v2764
      %v6270 = vunpack.c.l.b16 %v2765
      %v6271 = vunpack.c.h.b16 %v2765
      %v6272 = vunpack.c.l.b16 %v2766
      %v6273 = vunpack.c.h.b16 %v2766
      %v6274 = vunpack.c.l.b16 %v2767
      %v6275 = vunpack.c.h.b16 %v2767
      %v6276 = vunpack.c.l.b16 %v2768
      %v6277 = vunpack.c.h.b16 %v2768
      %v6278 = vunpack.c.l.b16 %v2769
      %v6279 = vunpack.c.h.b16 %v2769
      %v6280 = vunpack.c.l.b16 %v2770
      %v6281 = vunpack.c.h.b16 %v2770
      %v6282 = vunpack.c.l.b16 %v2771
      %v6283 = vunpack.c.h.b16 %v2771
      %v6284 = vunpack.c.l.b16 %v2772
      %v6285 = vunpack.c.h.b16 %v2772
      %v6286 = vunpack.c.l.b16 %v2773
      %v6287 = vunpack.c.h.b16 %v2773
      %v6288 = vunpack.c.l.b16 %v2774
      %v6289 = vunpack.c.h.b16 %v2774
      %v6290 = vunpack.c.l.b16 %v2775
      %v6291 = vunpack.c.h.b16 %v2775
      %v6292 = vunpack.c.l.b16 %v2776
      %v6293 = vunpack.c.h.b16 %v2776
      %v6294 = vunpack.c.l.b16 %v2777
      %v6295 = vunpack.c.h.b16 %v2777
      %v6296 = vunpack.c.l.b16 %v2778
      %v6297 = vunpack.c.h.b16 %v2778
      %v6298 = vunpack.c.l.b16 %v2779
      %v6299 = vunpack.c.h.b16 %v2779
      %v6300 = vunpack.c.l.b16 %v2780
      %v6301 = vunpack.c.h.b16 %v2780
      %v6302 = vunpack.c.l.b16 %v2781
      %v6303 = vunpack.c.h.b16 %v2781
      %v6304 = vunpack.c.l.b16 %v2782
      %v6305 = vunpack.c.h.b16 %v2782
      %v6306 = vunpack.c.l.b16 %v2783
      %v6307 = vunpack.c.h.b16 %v2783
      %v6308 = vunpack.c.l.b16 %v2784
      %v6309 = vunpack.c.h.b16 %v2784
      %v6310 = vunpack.c.l.b16 %v2785
      %v6311 = vunpack.c.h.b16 %v2785
      %v6312 = vunpack.c.l.b16 %v2786
      %v6313 = vunpack.c.h.b16 %v2786
      %v6314 = vunpack.c.l.b16 %v2787
      %v6315 = vunpack.c.h.b16 %v2787
      %v6316 = vunpack.c.l.b16 %v2788
      %v6317 = vunpack.c.h.b16 %v2788
      %v6318 = vunpack.c.l.b16 %v2789
      %v6319 = vunpack.c.h.b16 %v2789
      %v6320 = vunpack.c.l.b16 %v2790
      %v6321 = vunpack.c.h.b16 %v2790
      %v6322 = vunpack.c.l.b16 %v2791
      %v6323 = vunpack.c.h.b16 %v2791
      %v6324 = vunpack.c.l.b16 %v2792
      %v6325 = vunpack.c.h.b16 %v2792
      %v6326 = vunpack.c.l.b16 %v2793
      %v6327 = vunpack.c.h.b16 %v2793
      %v6328 = vunpack.c.l.b16 %v2794
      %v6329 = vunpack.c.h.b16 %v2794
      %v6330 = vunpack.c.l.b16 %v2795
      %v6331 = vunpack.c.h.b16 %v2795
      %v6332 = vunpack.c.l.b16 %v2796
      %v6333 = vunpack.c.h.b16 %v2796
      %v6334 = vunpack.c.l.b16 %v2797
      %v6335 = vunpack.c.h.b16 %v2797
      %v6336 = vunpack.c.l.b16 %v2798
      %v6337 = vunpack.c.h.b16 %v2798
      %v6338 = vunpack.c.l.b16 %v2799
      %v6339 = vunpack.c.h.b16 %v2799
      %v6340 = vunpack.c.l.b16 %v2800
      %v6341 = vunpack.c.h.b16 %v2800
      %v6342 = vunpack.c.l.b16 %v2801
      %v6343 = vunpack.c.h.b16 %v2801
      %v6344 = vunpack.c.l.b16 %v2802
      %v6345 = vunpack.c.h.b16 %v2802
      %v6346 = vunpack.c.l.b16 %v2803
      %v6347 = vunpack.c.h.b16 %v2803
      %v6348 = vunpack.c.l.b16 %v2804
      %v6349 = vunpack.c.h.b16 %v2804
      %v6350 = vunpack.c.l.b16 %v2805
      %v6351 = vunpack.c.h.b16 %v2805
      %v6352 = vunpack.c.l.b16 %v2806
      %v6353 = vunpack.c.h.b16 %v2806
      %v6354 = vunpack.c.l.b16 %v2807
      %v6355 = vunpack.c.h.b16 %v2807
      %v6356 = vunpack.c.l.b16 %v2808
      %v6357 = vunpack.c.h.b16 %v2808
      %v6358 = vunpack.c.l.b16 %v2809
      %v6359 = vunpack.c.h.b16 %v2809
      %v6360 = vunpack.c.l.b16 %v2810
      %v6361 = vunpack.c.h.b16 %v2810
      %v6362 = vunpack.c.l.b16 %v2811
      %v6363 = vunpack.c.h.b16 %v2811
      %v6364 = vunpack.c.l.b16 %v2812
      %v6365 = vunpack.c.h.b16 %v2812
      %v6366 = vunpack.c.l.b16 %v2813
      %v6367 = vunpack.c.h.b16 %v2813
      %v6368 = vunpack.c.l.b16 %v2814
      %v6369 = vunpack.c.h.b16 %v2814
      %v6370 = vunpack.c.l.b16 %v2815
      %v6371 = vunpack.c.h.b16 %v2815
      %v6372 = vunpack.c.l.b16 %v2816
      %v6373 = vunpack.c.h.b16 %v2816
      %v6374 = vunpack.c.l.b16 %v2817
      %v6375 = vunpack.c.h.b16 %v2817
      %v6376 = vunpack.c.l.b16 %v2818
      %v6377 = vunpack.c.h.b16 %v2818
      %v6378 = vunpack.c.l.b16 %v2819
      %v6379 = vunpack.c.h.b16 %v2819
      %v6380 = vunpack.c.l.b16 %v2820
      %v6381 = vunpack.c.h.b16 %v2820
      %v6382 = vunpack.c.l.b16 %v2821
      %v6383 = vunpack.c.h.b16 %v2821
      %v6384 = vunpack.c.l.b16 %v2822
      %v6385 = vunpack.c.h.b16 %v2822
      %v6386 = vunpack.c.l.b16 %v2823
      %v6387 = vunpack.c.h.b16 %v2823
      %v6388 = vunpack.c.l.b16 %v2824
      %v6389 = vunpack.c.h.b16 %v2824
      %v6390 = vunpack.c.l.b16 %v2825
      %v6391 = vunpack.c.h.b16 %v2825
      %v6392 = vunpack.c.l.b16 %v2826
      %v6393 = vunpack.c.h.b16 %v2826
      %v6394 = vunpack.c.l.b16 %v2827
      %v6395 = vunpack.c.h.b16 %v2827
      %v6396 = vunpack.c.l.b16 %v2828
      %v6397 = vunpack.c.h.b16 %v2828
      %v6398 = vunpack.c.l.b16 %v2829
      %v6399 = vunpack.c.h.b16 %v2829
      %v6400 = vunpack.c.l.b16 %v2830
      %v6401 = vunpack.c.h.b16 %v2830
      %v6402 = vunpack.c.l.b16 %v2831
      %v6403 = vunpack.c.h.b16 %v2831
      %v6404 = vunpack.c.l.b16 %v2832
      %v6405 = vunpack.c.h.b16 %v2832
      %v6406 = vunpack.c.l.b16 %v2833
      %v6407 = vunpack.c.h.b16 %v2833
      %v6408 = vunpack.c.l.b16 %v2834
      %v6409 = vunpack.c.h.b16 %v2834
      %v6410 = vunpack.c.l.b16 %v2835
      %v6411 = vunpack.c.h.b16 %v2835
      %v6412 = vunpack.c.l.b16 %v2836
      %v6413 = vunpack.c.h.b16 %v2836
      %v6414 = vunpack.c.l.b16 %v2837
      %v6415 = vunpack.c.h.b16 %v2837
      %v6416 = vunpack.c.l.b16 %v2838
      %v6417 = vunpack.c.h.b16 %v2838
      %v6418 = vunpack.c.l.b16 %v2839
      %v6419 = vunpack.c.h.b16 %v2839
      %v6420 = vunpack.c.l.b16 %v2840
      %v6421 = vunpack.c.h.b16 %v2840
      %v6422 = vunpack.c.l.b16 %v2841
      %v6423 = vunpack.c.h.b16 %v2841
      %v6424 = vunpack.c.l.b16 %v2842
      %v6425 = vunpack.c.h.b16 %v2842
      %v6426 = vunpack.c.l.b16 %v2843
      %v6427 = vunpack.c.h.b16 %v2843
      %v6428 = vunpack.c.l.b16 %v2844
      %v6429 = vunpack.c.h.b16 %v2844
      %v6430 = vunpack.c.l.b16 %v2845
      %v6431 = vunpack.c.h.b16 %v2845
      %v6432 = vunpack.c.l.b16 %v2846
      %v6433 = vunpack.c.h.b16 %v2846
      %v6434 = vunpack.c.l.b16 %v2847
      %v6435 = vunpack.c.h.b16 %v2847
      %v6436 = vunpack.c.l.b16 %v2848
      %v6437 = vunpack.c.h.b16 %v2848
      %v6438 = vunpack.c.l.b16 %v2849
      %v6439 = vunpack.c.h.b16 %v2849
      %v6440 = vunpack.c.l.b16 %v2850
      %v6441 = vunpack.c.h.b16 %v2850
      %v6442 = vunpack.c.l.b16 %v2851
      %v6443 = vunpack.c.h.b16 %v2851
      %v6444 = vunpack.c.l.b16 %v2852
      %v6445 = vunpack.c.h.b16 %v2852
      %v6446 = vunpack.c.l.b16 %v2853
      %v6447 = vunpack.c.h.b16 %v2853
      %v6448 = vunpack.c.l.b16 %v2854
      %v6449 = vunpack.c.h.b16 %v2854
      %v6450 = vunpack.c.l.b16 %v2855
      %v6451 = vunpack.c.h.b16 %v2855
      %v6452 = vunpack.c.l.b16 %v2856
      %v6453 = vunpack.c.h.b16 %v2856
      %v6454 = vunpack.c.l.b16 %v2857
      %v6455 = vunpack.c.h.b16 %v2857
      %v6456 = vunpack.c.l.b16 %v2858
      %v6457 = vunpack.c.h.b16 %v2858
      %v6458 = vunpack.c.l.b16 %v2859
      %v6459 = vunpack.c.h.b16 %v2859
      %v6460 = vunpack.c.l.b16 %v2860
      %v6461 = vunpack.c.h.b16 %v2860
      %v6462 = vunpack.c.l.b16 %v2861
      %v6463 = vunpack.c.h.b16 %v2861
      %v6464 = vunpack.c.l.b16 %v2862
      %v6465 = vunpack.c.h.b16 %v2862
      %v6466 = vunpack.c.l.b16 %v2863
      %v6467 = vunpack.c.h.b16 %v2863
      %v6468 = vunpack.c.l.b16 %v2864
      %v6469 = vunpack.c.h.b16 %v2864
      %v6470 = vunpack.c.l.b16 %v2865
      %v6471 = vunpack.c.h.b16 %v2865
      %v6472 = vunpack.c.l.b16 %v2866
      %v6473 = vunpack.c.h.b16 %v2866
      %v6474 = vunpack.c.l.b16 %v2867
      %v6475 = vunpack.c.h.b16 %v2867
      %v6476 = vunpack.c.l.b16 %v2868
      %v6477 = vunpack.c.h.b16 %v2868
      %v6478 = vunpack.c.l.b16 %v2869
      %v6479 = vunpack.c.h.b16 %v2869
      %v6480 = vunpack.c.l.b16 %v2870
      %v6481 = vunpack.c.h.b16 %v2870
      %v6482 = vunpack.c.l.b16 %v2871
      %v6483 = vunpack.c.h.b16 %v2871
      %v6484 = vunpack.c.l.b16 %v2872
      %v6485 = vunpack.c.h.b16 %v2872
      %v6486 = vunpack.c.l.b16 %v2873
      %v6487 = vunpack.c.h.b16 %v2873
      %v6488 = vunpack.c.l.b16 %v2874
      %v6489 = vunpack.c.h.b16 %v2874
      %v6490 = vunpack.c.l.b16 %v2875
      %v6491 = vunpack.c.h.b16 %v2875
      %v6492 = vunpack.c.l.b16 %v2876
      %v6493 = vunpack.c.h.b16 %v2876
      %v6494 = vunpack.c.l.b16 %v2877
      %v6495 = vunpack.c.h.b16 %v2877
      %v6496 = vunpack.c.l.b16 %v2878
      %v6497 = vunpack.c.h.b16 %v2878
      %v6498 = vunpack.c.l.b16 %v2879
      %v6499 = vunpack.c.h.b16 %v2879
      %v6500 = vunpack.c.l.b16 %v2880
      %v6501 = vunpack.c.h.b16 %v2880
      %v6502 = vunpack.c.l.b16 %v2881
      %v6503 = vunpack.c.h.b16 %v2881
      %v6504 = vunpack.c.l.b16 %v2882
      %v6505 = vunpack.c.h.b16 %v2882
      %v6506 = vunpack.c.l.b16 %v2883
      %v6507 = vunpack.c.h.b16 %v2883
      %v6508 = vunpack.c.l.b16 %v2884
      %v6509 = vunpack.c.h.b16 %v2884
      %v6510 = vunpack.c.l.b16 %v2885
      %v6511 = vunpack.c.h.b16 %v2885
      %v6512 = vunpack.c.l.b16 %v2886
      %v6513 = vunpack.c.h.b16 %v2886
      %v6514 = vunpack.c.l.b16 %v2887
      %v6515 = vunpack.c.h.b16 %v2887
      %v6516 = vunpack.c.l.b16 %v2888
      %v6517 = vunpack.c.h.b16 %v2888
      %v6518 = vunpack.c.l.b16 %v2889
      %v6519 = vunpack.c.h.b16 %v2889
      %v6520 = vunpack.c.l.b16 %v2890
      %v6521 = vunpack.c.h.b16 %v2890
      %v6522 = vunpack.c.l.b16 %v2891
      %v6523 = vunpack.c.h.b16 %v2891
      %v6524 = vunpack.c.l.b16 %v2892
      %v6525 = vunpack.c.h.b16 %v2892
      %v6526 = vunpack.c.l.b16 %v2893
      %v6527 = vunpack.c.h.b16 %v2893
      %v6528 = vunpack.c.l.b16 %v2894
      %v6529 = vunpack.c.h.b16 %v2894
      %v6530 = vunpack.c.l.b16 %v2895
      %v6531 = vunpack.c.h.b16 %v2895
      %v6532 = vunpack.c.l.b16 %v2896
      %v6533 = vunpack.c.h.b16 %v2896
      %v6534 = vunpack.c.l.b16 %v2897
      %v6535 = vunpack.c.h.b16 %v2897
      %v6536 = vunpack.c.l.b16 %v2898
      %v6537 = vunpack.c.h.b16 %v2898
      %v6538 = vunpack.c.l.b16 %v2899
      %v6539 = vunpack.c.h.b16 %v2899
      %v6540 = vunpack.c.l.b16 %v2900
      %v6541 = vunpack.c.h.b16 %v2900
      %v6542 = vunpack.c.l.b16 %v2901
      %v6543 = vunpack.c.h.b16 %v2901
      %v6544 = vunpack.c.l.b16 %v2902
      %v6545 = vunpack.c.h.b16 %v2902
      %v6546 = vunpack.c.l.b16 %v2903
      %v6547 = vunpack.c.h.b16 %v2903
      %v6548 = vunpack.c.l.b16 %v2904
      %v6549 = vunpack.c.h.b16 %v2904
      %v6550 = vunpack.c.l.b16 %v2905
      %v6551 = vunpack.c.h.b16 %v2905
      %v6552 = vunpack.c.l.b16 %v2906
      %v6553 = vunpack.c.h.b16 %v2906
      %v6554 = vunpack.c.l.b16 %v2907
      %v6555 = vunpack.c.h.b16 %v2907
      %v6556 = vunpack.c.l.b16 %v2908
      %v6557 = vunpack.c.h.b16 %v2908
      %v6558 = vunpack.c.l.b16 %v2909
      %v6559 = vunpack.c.h.b16 %v2909
      %v6560 = vunpack.c.l.b16 %v2910
      %v6561 = vunpack.c.h.b16 %v2910
      %v6562 = vunpack.c.l.b16 %v2911
      %v6563 = vunpack.c.h.b16 %v2911
      %v6564 = vunpack.c.l.b16 %v2912
      %v6565 = vunpack.c.h.b16 %v2912
      %v6566 = vunpack.c.l.b16 %v2913
      %v6567 = vunpack.c.h.b16 %v2913
      %v6568 = vunpack.c.l.b16 %v2914
      %v6569 = vunpack.c.h.b16 %v2914
      %v6570 = vunpack.c.l.b16 %v2915
      %v6571 = vunpack.c.h.b16 %v2915
      %v6572 = vunpack.c.l.b16 %v2916
      %v6573 = vunpack.c.h.b16 %v2916
      %v6574 = vunpack.c.l.b16 %v2917
      %v6575 = vunpack.c.h.b16 %v2917
      %v6576 = vunpack.c.l.b16 %v2918
      %v6577 = vunpack.c.h.b16 %v2918
      %v6578 = vunpack.c.l.b16 %v2919
      %v6579 = vunpack.c.h.b16 %v2919
      %v6580 = vunpack.c.l.b16 %v2920
      %v6581 = vunpack.c.h.b16 %v2920
      %v6582 = vunpack.c.l.b16 %v2921
      %v6583 = vunpack.c.h.b16 %v2921
      %v6584 = vunpack.c.l.b16 %v2922
      %v6585 = vunpack.c.h.b16 %v2922
      %v6586 = vunpack.c.l.b16 %v2923
      %v6587 = vunpack.c.h.b16 %v2923
      %v6588 = vunpack.c.l.b16 %v2924
      %v6589 = vunpack.c.h.b16 %v2924
      %v6590 = vunpack.c.l.b16 %v2925
      %v6591 = vunpack.c.h.b16 %v2925
      %v6592 = vunpack.c.l.b16 %v2926
      %v6593 = vunpack.c.h.b16 %v2926
      %v6594 = vunpack.c.l.b16 %v2927
      %v6595 = vunpack.c.h.b16 %v2927
      %v6596 = vunpack.c.l.b16 %v2928
      %v6597 = vunpack.c.h.b16 %v2928
      %v6598 = vunpack.c.l.b16 %v2929
      %v6599 = vunpack.c.h.b16 %v2929
      %v6600 = vunpack.c.l.b16 %v2930
      %v6601 = vunpack.c.h.b16 %v2930
      %v6602 = vunpack.c.l.b16 %v2931
      %v6603 = vunpack.c.h.b16 %v2931
      %v6604 = vunpack.c.l.b16 %v2932
      %v6605 = vunpack.c.h.b16 %v2932
      %v6606 = vunpack.c.l.b16 %v2933
      %v6607 = vunpack.c.h.b16 %v2933
      %v6608 = vunpack.c.l.b16 %v2934
      %v6609 = vunpack.c.h.b16 %v2934
      %v6610 = vunpack.c.l.b16 %v2935
      %v6611 = vunpack.c.h.b16 %v2935
      %v6612 = vunpack.c.l.b16 %v2936
      %v6613 = vunpack.c.h.b16 %v2936
      %v6614 = vunpack.c.l.b16 %v2937
      %v6615 = vunpack.c.h.b16 %v2937
      %v6616 = vunpack.c.l.b16 %v2938
      %v6617 = vunpack.c.h.b16 %v2938
      %v6618 = vunpack.c.l.b16 %v2939
      %v6619 = vunpack.c.h.b16 %v2939
      %v6620 = vunpack.c.l.b16 %v2940
      %v6621 = vunpack.c.h.b16 %v2940
      %v6622 = vunpack.c.l.b16 %v2941
      %v6623 = vunpack.c.h.b16 %v2941
      %v6624 = vunpack.c.l.b16 %v2942
      %v6625 = vunpack.c.h.b16 %v2942
      %v6626 = vunpack.c.l.b16 %v2943
      %v6627 = vunpack.c.h.b16 %v2943
      %v6628 = vunpack.c.l.b16 %v2944
      %v6629 = vunpack.c.h.b16 %v2944
      %v6630 = vunpack.c.l.b16 %v2945
      %v6631 = vunpack.c.h.b16 %v2945
      %v6632 = vunpack.c.l.b16 %v2946
      %v6633 = vunpack.c.h.b16 %v2946
      %v6634 = vunpack.c.l.b16 %v2947
      %v6635 = vunpack.c.h.b16 %v2947
      %v6636 = vunpack.c.l.b16 %v2948
      %v6637 = vunpack.c.h.b16 %v2948
      %v6638 = vunpack.c.l.b16 %v2949
      %v6639 = vunpack.c.h.b16 %v2949
      %v6640 = vunpack.c.l.b16 %v2950
      %v6641 = vunpack.c.h.b16 %v2950
      %v6642 = vunpack.c.l.b16 %v2951
      %v6643 = vunpack.c.h.b16 %v2951
      %v6644 = vunpack.c.l.b16 %v2952
      %v6645 = vunpack.c.h.b16 %v2952
      %v6646 = vunpack.c.l.b16 %v2953
      %v6647 = vunpack.c.h.b16 %v2953
      %v6648 = vunpack.c.l.b16 %v2954
      %v6649 = vunpack.c.h.b16 %v2954
      %v6650 = vunpack.c.l.b16 %v2955
      %v6651 = vunpack.c.h.b16 %v2955
      %v6652 = vpack.c.b16 %v4190, %v4188
      %v6653 = vpack.c.b16 %v4191, %v4189
      %v6654 = vpack.c.b16 %v4194, %v4192
      %v6655 = vpack.c.b16 %v4195, %v4193
      %v6656 = vpack.c.b16 %v4198, %v4196
      %v6657 = vpack.c.b16 %v4199, %v4197
      %v6658 = vpack.c.b16 %v4202, %v4200
      %v6659 = vpack.c.b16 %v4203, %v4201
      %v6660 = vpack.c.b16 %v4206, %v4204
      %v6661 = vpack.c.b16 %v4207, %v4205
      %v6662 = vpack.c.b16 %v4210, %v4208
      %v6663 = vpack.c.b16 %v4211, %v4209
      %v6664 = vpack.c.b16 %v4214, %v4212
      %v6665 = vpack.c.b16 %v4215, %v4213
      %v6666 = vpack.c.b16 %v4218, %v4216
      %v6667 = vpack.c.b16 %v4219, %v4217
      %v6668 = vpack.c.b16 %v4222, %v4220
      %v6669 = vpack.c.b16 %v4223, %v4221
      %v6670 = vpack.c.b16 %v4226, %v4224
      %v6671 = vpack.c.b16 %v4227, %v4225
      %v6672 = vpack.c.b16 %v4230, %v4228
      %v6673 = vpack.c.b16 %v4231, %v4229
      %v6674 = vpack.c.b16 %v4234, %v4232
      %v6675 = vpack.c.b16 %v4235, %v4233
      %v6676 = vpack.c.b16 %v4238, %v4236
      %v6677 = vpack.c.b16 %v4239, %v4237
      %v6678 = vpack.c.b16 %v4242, %v4240
      %v6679 = vpack.c.b16 %v4243, %v4241
      %v6680 = vpack.c.b16 %v4246, %v4244
      %v6681 = vpack.c.b16 %v4247, %v4245
      %v6682 = vpack.c.b16 %v4250, %v4248
      %v6683 = vpack.c.b16 %v4251, %v4249
      %v6684 = vpack.c.b16 %v4254, %v4252
      %v6685 = vpack.c.b16 %v4255, %v4253
      %v6686 = vpack.c.b16 %v4258, %v4256
      %v6687 = vpack.c.b16 %v4259, %v4257
      %v6688 = vpack.c.b16 %v4262, %v4260
      %v6689 = vpack.c.b16 %v4263, %v4261
      %v6690 = vpack.c.b16 %v4266, %v4264
      %v6691 = vpack.c.b16 %v4267, %v4265
      %v6692 = vpack.c.b16 %v4270, %v4268
      %v6693 = vpack.c.b16 %v4271, %v4269
      %v6694 = vpack.c.b16 %v4274, %v4272
      %v6695 = vpack.c.b16 %v4275, %v4273
      %v6696 = vpack.c.b16 %v4278, %v4276
      %v6697 = vpack.c.b16 %v4279, %v4277
      %v6698 = vpack.c.b16 %v4282, %v4280
      %v6699 = vpack.c.b16 %v4283, %v4281
      %v6700 = vpack.c.b16 %v4286, %v4284
      %v6701 = vpack.c.b16 %v4287, %v4285
      %v6702 = vpack.c.b16 %v4290, %v4288
      %v6703 = vpack.c.b16 %v4291, %v4289
      %v6704 = vpack.c.b16 %v4294, %v4292
      %v6705 = vpack.c.b16 %v4295, %v4293
      %v6706 = vpack.c.b16 %v4298, %v4296
      %v6707 = vpack.c.b16 %v4299, %v4297
      %v6708 = vpack.c.b16 %v4302, %v4300
      %v6709 = vpack.c.b16 %v4303, %v4301
      %v6710 = vpack.c.b16 %v4306, %v4304
      %v6711 = vpack.c.b16 %v4307, %v4305
      %v6712 = vpack.c.b16 %v4310, %v4308
      %v6713 = vpack.c.b16 %v4311, %v4309
      %v6714 = vpack.c.b16 %v4314, %v4312
      %v6715 = vpack.c.b16 %v4315, %v4313
      %v6716 = vpack.c.b16 %v4318, %v4316
      %v6717 = vpack.c.b16 %v4319, %v4317
      %v6718 = vpack.c.b16 %v4322, %v4320
      %v6719 = vpack.c.b16 %v4323, %v4321
      %v6720 = vpack.c.b16 %v4326, %v4324
      %v6721 = vpack.c.b16 %v4327, %v4325
      %v6722 = vpack.c.b16 %v4330, %v4328
      %v6723 = vpack.c.b16 %v4331, %v4329
      %v6724 = vpack.c.b16 %v4334, %v4332
      %v6725 = vpack.c.b16 %v4335, %v4333
      %v6726 = vpack.c.b16 %v4338, %v4336
      %v6727 = vpack.c.b16 %v4339, %v4337
      %v6728 = vpack.c.b16 %v4342, %v4340
      %v6729 = vpack.c.b16 %v4343, %v4341
      %v6730 = vpack.c.b16 %v4346, %v4344
      %v6731 = vpack.c.b16 %v4347, %v4345
      %v6732 = vpack.c.b16 %v4350, %v4348
      %v6733 = vpack.c.b16 %v4351, %v4349
      %v6734 = vpack.c.b16 %v4354, %v4352
      %v6735 = vpack.c.b16 %v4355, %v4353
      %v6736 = vpack.c.b16 %v4358, %v4356
      %v6737 = vpack.c.b16 %v4359, %v4357
      %v6738 = vpack.c.b16 %v4362, %v4360
      %v6739 = vpack.c.b16 %v4363, %v4361
      %v6740 = vpack.c.b16 %v4366, %v4364
      %v6741 = vpack.c.b16 %v4367, %v4365
      %v6742 = vpack.c.b16 %v4370, %v4368
      %v6743 = vpack.c.b16 %v4371, %v4369
      %v6744 = vpack.c.b16 %v4374, %v4372
      %v6745 = vpack.c.b16 %v4375, %v4373
      %v6746 = vpack.c.b16 %v4378, %v4376
      %v6747 = vpack.c.b16 %v4379, %v4377
      %v6748 = vpack.c.b16 %v4382, %v4380
      %v6749 = vpack.c.b16 %v4383, %v4381
      %v6750 = vpack.c.b16 %v4386, %v4384
      %v6751 = vpack.c.b16 %v4387, %v4385
      %v6752 = vpack.c.b16 %v4390, %v4388
      %v6753 = vpack.c.b16 %v4391, %v4389
      %v6754 = vpack.c.b16 %v4394, %v4392
      %v6755 = vpack.c.b16 %v4395, %v4393
      %v6756 = vpack.c.b16 %v4398, %v4396
      %v6757 = vpack.c.b16 %v4399, %v4397
      %v6758 = vpack.c.b16 %v4402, %v4400
      %v6759 = vpack.c.b16 %v4403, %v4401
      %v6760 = vpack.c.b16 %v4406, %v4404
      %v6761 = vpack.c.b16 %v4407, %v4405
      %v6762 = vpack.c.b16 %v4410, %v4408
      %v6763 = vpack.c.b16 %v4411, %v4409
      %v6764 = vpack.c.b16 %v4414, %v4412
      %v6765 = vpack.c.b16 %v4415, %v4413
      %v6766 = vpack.c.b16 %v4418, %v4416
      %v6767 = vpack.c.b16 %v4419, %v4417
      %v6768 = vpack.c.b16 %v4422, %v4420
      %v6769 = vpack.c.b16 %v4423, %v4421
      %v6770 = vpack.c.b16 %v4426, %v4424
      %v6771 = vpack.c.b16 %v4427, %v4425
      %v6772 = vpack.c.b16 %v4430, %v4428
      %v6773 = vpack.c.b16 %v4431, %v4429
      %v6774 = vpack.c.b16 %v4434, %v4432
      %v6775 = vpack.c.b16 %v4435, %v4433
      %v6776 = vpack.c.b16 %v4438, %v4436
      %v6777 = vpack.c.b16 %v4439, %v4437
      %v6778 = vpack.c.b16 %v4442, %v4440
      %v6779 = vpack.c.b16 %v4443, %v4441
      %v6780 = vpack.c.b16 %v4446, %v4444
      %v6781 = vpack.c.b16 %v4447, %v4445
      %v6782 = vpack.c.b16 %v4450, %v4448
      %v6783 = vpack.c.b16 %v4451, %v4449
      %v6784 = vpack.c.b16 %v4454, %v4452
      %v6785 = vpack.c.b16 %v4455, %v4453
      %v6786 = vpack.c.b16 %v4458, %v4456
      %v6787 = vpack.c.b16 %v4459, %v4457
      %v6788 = vpack.c.b16 %v4462, %v4460
      %v6789 = vpack.c.b16 %v4463, %v4461
      %v6790 = vpack.c.b16 %v4466, %v4464
      %v6791 = vpack.c.b16 %v4467, %v4465
      %v6792 = vpack.c.b16 %v4470, %v4468
      %v6793 = vpack.c.b16 %v4471, %v4469
      %v6794 = vpack.c.b16 %v4474, %v4472
      %v6795 = vpack.c.b16 %v4475, %v4473
      %v6796 = vpack.c.b16 %v4478, %v4476
      %v6797 = vpack.c.b16 %v4479, %v4477
      %v6798 = vpack.c.b16 %v4482, %v4480
      %v6799 = vpack.c.b16 %v4483, %v4481
      %v6800 = vpack.c.b16 %v4486, %v4484
      %v6801 = vpack.c.b16 %v4487, %v4485
      %v6802 = vpack.c.b16 %v4490, %v4488
      %v6803 = vpack.c.b16 %v4491, %v4489
      %v6804 = vpack.c.b16 %v4494, %v4492
      %v6805 = vpack.c.b16 %v4495, %v4493
      %v6806 = vpack.c.b16 %v4498, %v4496
      %v6807 = vpack.c.b16 %v4499, %v4497
      %v6808 = vpack.c.b16 %v4502, %v4500
      %v6809 = vpack.c.b16 %v4503, %v4501
      %v6810 = vpack.c.b16 %v4506, %v4504
      %v6811 = vpack.c.b16 %v4507, %v4505
      %v6812 = vpack.c.b16 %v4510, %v4508
      %v6813 = vpack.c.b16 %v4511, %v4509
      %v6814 = vpack.c.b16 %v4514, %v4512
      %v6815 = vpack.c.b16 %v4515, %v4513
      %v6816 = vpack.c.b16 %v4518, %v4516
      %v6817 = vpack.c.b16 %v4519, %v4517
      %v6818 = vpack.c.b16 %v4522, %v4520
      %v6819 = vpack.c.b16 %v4523, %v4521
      %v6820 = vpack.c.b16 %v4526, %v4524
      %v6821 = vpack.c.b16 %v4527, %v4525
      %v6822 = vpack.c.b16 %v4530, %v4528
      %v6823 = vpack.c.b16 %v4531, %v4529
      %v6824 = vpack.c.b16 %v4534, %v4532
      %v6825 = vpack.c.b16 %v4535, %v4533
      %v6826 = vpack.c.b16 %v4538, %v4536
      %v6827 = vpack.c.b16 %v4539, %v4537
      %v6828 = vpack.c.b16 %v4542, %v4540
      %v6829 = vpack.c.b16 %v4543, %v4541
      %v6830 = vpack.c.b16 %v4546, %v4544
      %v6831 = vpack.c.b16 %v4547, %v4545
      %v6832 = vpack.c.b16 %v4550, %v4548
      %v6833 = vpack.c.b16 %v4551, %v4549
      %v6834 = vpack.c.b16 %v4554, %v4552
      %v6835 = vpack.c.b16 %v4555, %v4553
      %v6836 = vpack.c.b16 %v4558, %v4556
      %v6837 = vpack.c.b16 %v4559, %v4557
      %v6838 = vpack.c.b16 %v4562, %v4560
      %v6839 = vpack.c.b16 %v4563, %v4561
      %v6840 = vpack.c.b16 %v4566, %v4564
      %v6841 = vpack.c.b16 %v4567, %v4565
      %v6842 = vpack.c.b16 %v4570, %v4568
      %v6843 = vpack.c.b16 %v4571, %v4569
      %v6844 = vpack.c.b16 %v4574, %v4572
      %v6845 = vpack.c.b16 %v4575, %v4573
      %v6846 = vpack.c.b16 %v4578, %v4576
      %v6847 = vpack.c.b16 %v4579, %v4577
      %v6848 = vpack.c.b16 %v4582, %v4580
      %v6849 = vpack.c.b16 %v4583, %v4581
      %v6850 = vpack.c.b16 %v4586, %v4584
      %v6851 = vpack.c.b16 %v4587, %v4585
      %v6852 = vpack.c.b16 %v4590, %v4588
      %v6853 = vpack.c.b16 %v4591, %v4589
      %v6854 = vpack.c.b16 %v4594, %v4592
      %v6855 = vpack.c.b16 %v4595, %v4593
      %v6856 = vpack.c.b16 %v4598, %v4596
      %v6857 = vpack.c.b16 %v4599, %v4597
      %v6858 = vpack.c.b16 %v4602, %v4600
      %v6859 = vpack.c.b16 %v4603, %v4601
      %v6860 = vpack.c.b16 %v4606, %v4604
      %v6861 = vpack.c.b16 %v4607, %v4605
      %v6862 = vpack.c.b16 %v4610, %v4608
      %v6863 = vpack.c.b16 %v4611, %v4609
      %v6864 = vpack.c.b16 %v4614, %v4612
      %v6865 = vpack.c.b16 %v4615, %v4613
      %v6866 = vpack.c.b16 %v4618, %v4616
      %v6867 = vpack.c.b16 %v4619, %v4617
      %v6868 = vpack.c.b16 %v4622, %v4620
      %v6869 = vpack.c.b16 %v4623, %v4621
      %v6870 = vpack.c.b16 %v4626, %v4624
      %v6871 = vpack.c.b16 %v4627, %v4625
      %v6872 = vpack.c.b16 %v4630, %v4628
      %v6873 = vpack.c.b16 %v4631, %v4629
      %v6874 = vpack.c.b16 %v4634, %v4632
      %v6875 = vpack.c.b16 %v4635, %v4633
      %v6876 = vpack.c.b16 %v4638, %v4636
      %v6877 = vpack.c.b16 %v4639, %v4637
      %v6878 = vpack.c.b16 %v4642, %v4640
      %v6879 = vpack.c.b16 %v4643, %v4641
      %v6880 = vpack.c.b16 %v4646, %v4644
      %v6881 = vpack.c.b16 %v4647, %v4645
      %v6882 = vpack.c.b16 %v4650, %v4648
      %v6883 = vpack.c.b16 %v4651, %v4649
      %v6884 = vpack.c.b16 %v4654, %v4652
      %v6885 = vpack.c.b16 %v4655, %v4653
      %v6886 = vpack.c.b16 %v4658, %v4656
      %v6887 = vpack.c.b16 %v4659, %v4657
      %v6888 = vpack.c.b16 %v4662, %v4660
      %v6889 = vpack.c.b16 %v4663, %v4661
      %v6890 = vpack.c.b16 %v4666, %v4664
      %v6891 = vpack.c.b16 %v4667, %v4665
      %v6892 = vpack.c.b16 %v4670, %v4668
      %v6893 = vpack.c.b16 %v4671, %v4669
      %v6894 = vpack.c.b16 %v4674, %v4672
      %v6895 = vpack.c.b16 %v4675, %v4673
      %v6896 = vpack.c.b16 %v4678, %v4676
      %v6897 = vpack.c.b16 %v4679, %v4677
      %v6898 = vpack.c.b16 %v4682, %v4680
      %v6899 = vpack.c.b16 %v4683, %v4681
      %v6900 = vpack.c.b16 %v4686, %v4684
      %v6901 = vpack.c.b16 %v4687, %v4685
      %v6902 = vpack.c.b16 %v4690, %v4688
      %v6903 = vpack.c.b16 %v4691, %v4689
      %v6904 = vpack.c.b16 %v4694, %v4692
      %v6905 = vpack.c.b16 %v4695, %v4693
      %v6906 = vpack.c.b16 %v4698, %v4696
      %v6907 = vpack.c.b16 %v4699, %v4697
      %v6908 = vpack.c.b16 %v4702, %v4700
      %v6909 = vpack.c.b16 %v4703, %v4701
      %v6910 = vpack.c.b16 %v4706, %v4704
      %v6911 = vpack.c.b16 %v4707, %v4705
      %v6912 = vpack.c.b16 %v4710, %v4708
      %v6913 = vpack.c.b16 %v4711, %v4709
      %v6914 = vpack.c.b16 %v4714, %v4712
      %v6915 = vpack.c.b16 %v4715, %v4713
      %v6916 = vpack.c.b16 %v4718, %v4716
      %v6917 = vpack.c.b16 %v4719, %v4717
      %v6918 = vpack.c.b16 %v4722, %v4720
      %v6919 = vpack.c.b16 %v4723, %v4721
      %v6920 = vpack.c.b16 %v4726, %v4724
      %v6921 = vpack.c.b16 %v4727, %v4725
      %v6922 = vpack.c.b16 %v4730, %v4728
      %v6923 = vpack.c.b16 %v4731, %v4729
      %v6924 = vpack.c.b16 %v4734, %v4732
      %v6925 = vpack.c.b16 %v4735, %v4733
      %v6926 = vpack.c.b16 %v4738, %v4736
      %v6927 = vpack.c.b16 %v4739, %v4737
      %v6928 = vpack.c.b16 %v4742, %v4740
      %v6929 = vpack.c.b16 %v4743, %v4741
      %v6930 = vpack.c.b16 %v4746, %v4744
      %v6931 = vpack.c.b16 %v4747, %v4745
      %v6932 = vpack.c.b16 %v4750, %v4748
      %v6933 = vpack.c.b16 %v4751, %v4749
      %v6934 = vpack.c.b16 %v4754, %v4752
      %v6935 = vpack.c.b16 %v4755, %v4753
      %v6936 = vpack.c.b16 %v4758, %v4756
      %v6937 = vpack.c.b16 %v4759, %v4757
      %v6938 = vpack.c.b16 %v4762, %v4760
      %v6939 = vpack.c.b16 %v4763, %v4761
      %v6940 = vpack.c.b16 %v4766, %v4764
      %v6941 = vpack.c.b16 %v4767, %v4765
      %v6942 = vpack.c.b16 %v4770, %v4768
      %v6943 = vpack.c.b16 %v4771, %v4769
      %v6944 = vpack.c.b16 %v4774, %v4772
      %v6945 = vpack.c.b16 %v4775, %v4773
      %v6946 = vpack.c.b16 %v4778, %v4776
      %v6947 = vpack.c.b16 %v4779, %v4777
      %v6948 = vpack.c.b16 %v4782, %v4780
      %v6949 = vpack.c.b16 %v4783, %v4781
      %v6950 = vpack.c.b16 %v4786, %v4784
      %v6951 = vpack.c.b16 %v4787, %v4785
      %v6952 = vpack.c.b16 %v4790, %v4788
      %v6953 = vpack.c.b16 %v4791, %v4789
      %v6954 = vpack.c.b16 %v4794, %v4792
      %v6955 = vpack.c.b16 %v4795, %v4793
      %v6956 = vpack.c.b16 %v4798, %v4796
      %v6957 = vpack.c.b16 %v4799, %v4797
      %v6958 = vpack.c.b16 %v4802, %v4800
      %v6959 = vpack.c.b16 %v4803, %v4801
      %v6960 = vpack.c.b16 %v4806, %v4804
      %v6961 = vpack.c.b16 %v4807, %v4805
      %v6962 = vpack.c.b16 %v4810, %v4808
      %v6963 = vpack.c.b16 %v4811, %v4809
      %v6964 = vpack.c.b16 %v4814, %v4812
      %v6965 = vpack.c.b16 %v4815, %v4813
      %v6966 = vpack.c.b16 %v4818, %v4816
      %v6967 = vpack.c.b16 %v4819, %v4817
      %v6968 = vpack.c.b16 %v4822, %v4820
      %v6969 = vpack.c.b16 %v4823, %v4821
      %v6970 = vpack.c.b16 %v4826, %v4824
      %v6971 = vpack.c.b16 %v4827, %v4825
      %v6972 = vpack.c.b16 %v4830, %v4828
      %v6973 = vpack.c.b16 %v4831, %v4829
      %v6974 = vpack.c.b16 %v4834, %v4832
      %v6975 = vpack.c.b16 %v4835, %v4833
      %v6976 = vpack.c.b16 %v4838, %v4836
      %v6977 = vpack.c.b16 %v4839, %v4837
      %v6978 = vpack.c.b16 %v4842, %v4840
      %v6979 = vpack.c.b16 %v4843, %v4841
      %v6980 = vpack.c.b16 %v4846, %v4844
      %v6981 = vpack.c.b16 %v4847, %v4845
      %v6982 = vpack.c.b16 %v4850, %v4848
      %v6983 = vpack.c.b16 %v4851, %v4849
      %v6984 = vpack.c.b16 %v4854, %v4852
      %v6985 = vpack.c.b16 %v4855, %v4853
      %v6986 = vpack.c.b16 %v4858, %v4856
      %v6987 = vpack.c.b16 %v4859, %v4857
      %v6988 = vpack.c.b16 %v4862, %v4860
      %v6989 = vpack.c.b16 %v4863, %v4861
      %v6990 = vpack.c.b16 %v4866, %v4864
      %v6991 = vpack.c.b16 %v4867, %v4865
      %v6992 = vpack.c.b16 %v4870, %v4868
      %v6993 = vpack.c.b16 %v4871, %v4869
      %v6994 = vpack.c.b16 %v4874, %v4872
      %v6995 = vpack.c.b16 %v4875, %v4873
      %v6996 = vpack.c.b16 %v4878, %v4876
      %v6997 = vpack.c.b16 %v4879, %v4877
      %v6998 = vpack.c.b16 %v4882, %v4880
      %v6999 = vpack.c.b16 %v4883, %v4881
      %v7000 = vpack.c.b16 %v4886, %v4884
      %v7001 = vpack.c.b16 %v4887, %v4885
      %v7002 = vpack.c.b16 %v4890, %v4888
      %v7003 = vpack.c.b16 %v4891, %v4889
      %v7004 = vpack.c.b16 %v4894, %v4892
      %v7005 = vpack.c.b16 %v4895, %v4893
      %v7006 = vpack.c.b16 %v4898, %v4896
      %v7007 = vpack.c.b16 %v4899, %v4897
      %v7008 = vpack.c.b16 %v4902, %v4900
      %v7009 = vpack.c.b16 %v4903, %v4901
      %v7010 = vpack.c.b16 %v4906, %v4904
      %v7011 = vpack.c.b16 %v4907, %v4905
      %v7012 = vpack.c.b16 %v4910, %v4908
      %v7013 = vpack.c.b16 %v4911, %v4909
      %v7014 = vpack.c.b16 %v4914, %v4912
      %v7015 = vpack.c.b16 %v4915, %v4913
      %v7016 = vpack.c.b16 %v4918, %v4916
      %v7017 = vpack.c.b16 %v4919, %v4917
      %v7018 = vpack.c.b16 %v4922, %v4920
      %v7019 = vpack.c.b16 %v4923, %v4921
      %v7020 = vpack.c.b16 %v4926, %v4924
      %v7021 = vpack.c.b16 %v4927, %v4925
      %v7022 = vpack.c.b16 %v4930, %v4928
      %v7023 = vpack.c.b16 %v4931, %v4929
      %v7024 = vpack.c.b16 %v4934, %v4932
      %v7025 = vpack.c.b16 %v4935, %v4933
      %v7026 = vpack.c.b16 %v4938, %v4936
      %v7027 = vpack.c.b16 %v4939, %v4937
      %v7028 = vpack.c.b16 %v4942, %v4940
      %v7029 = vpack.c.b16 %v4943, %v4941
      %v7030 = vpack.c.b16 %v4946, %v4944
      %v7031 = vpack.c.b16 %v4947, %v4945
      %v7032 = vpack.c.b16 %v4950, %v4948
      %v7033 = vpack.c.b16 %v4951, %v4949
      %v7034 = vpack.c.b16 %v4954, %v4952
      %v7035 = vpack.c.b16 %v4955, %v4953
      %v7036 = vpack.c.b16 %v4958, %v4956
      %v7037 = vpack.c.b16 %v4959, %v4957
      %v7038 = vpack.c.b16 %v4962, %v4960
      %v7039 = vpack.c.b16 %v4963, %v4961
      %v7040 = vpack.c.b16 %v4966, %v4964
      %v7041 = vpack.c.b16 %v4967, %v4965
      %v7042 = vpack.c.b16 %v4970, %v4968
      %v7043 = vpack.c.b16 %v4971, %v4969
      %v7044 = vpack.c.b16 %v4974, %v4972
      %v7045 = vpack.c.b16 %v4975, %v4973
      %v7046 = vpack.c.b16 %v4978, %v4976
      %v7047 = vpack.c.b16 %v4979, %v4977
      %v7048 = vpack.c.b16 %v4982, %v4980
      %v7049 = vpack.c.b16 %v4983, %v4981
      %v7050 = vpack.c.b16 %v4986, %v4984
      %v7051 = vpack.c.b16 %v4987, %v4985
      %v7052 = vpack.c.b16 %v4990, %v4988
      %v7053 = vpack.c.b16 %v4991, %v4989
      %v7054 = vpack.c.b16 %v4994, %v4992
      %v7055 = vpack.c.b16 %v4995, %v4993
      %v7056 = vpack.c.b16 %v4998, %v4996
      %v7057 = vpack.c.b16 %v4999, %v4997
      %v7058 = vpack.c.b16 %v5002, %v5000
      %v7059 = vpack.c.b16 %v5003, %v5001
      %v7060 = vpack.c.b16 %v5006, %v5004
      %v7061 = vpack.c.b16 %v5007, %v5005
      %v7062 = vpack.c.b16 %v5010, %v5008
      %v7063 = vpack.c.b16 %v5011, %v5009
      %v7064 = vpack.c.b16 %v5014, %v5012
      %v7065 = vpack.c.b16 %v5015, %v5013
      %v7066 = vpack.c.b16 %v5018, %v5016
      %v7067 = vpack.c.b16 %v5019, %v5017
      %v7068 = vpack.c.b16 %v5022, %v5020
      %v7069 = vpack.c.b16 %v5023, %v5021
      %v7070 = vpack.c.b16 %v5026, %v5024
      %v7071 = vpack.c.b16 %v5027, %v5025
      %v7072 = vpack.c.b16 %v5030, %v5028
      %v7073 = vpack.c.b16 %v5031, %v5029
      %v7074 = vpack.c.b16 %v5034, %v5032
      %v7075 = vpack.c.b16 %v5035, %v5033
      %v7076 = vpack.c.b16 %v5038, %v5036
      %v7077 = vpack.c.b16 %v5039, %v5037
      %v7078 = vpack.c.b16 %v5042, %v5040
      %v7079 = vpack.c.b16 %v5043, %v5041
      %v7080 = vpack.c.b16 %v5046, %v5044
      %v7081 = vpack.c.b16 %v5047, %v5045
      %v7082 = vpack.c.b16 %v5050, %v5048
      %v7083 = vpack.c.b16 %v5051, %v5049
      %v7084 = vpack.c.b16 %v5054, %v5052
      %v7085 = vpack.c.b16 %v5055, %v5053
      %v7086 = vpack.c.b16 %v5058, %v5056
      %v7087 = vpack.c.b16 %v5059, %v5057
      %v7088 = vpack.c.b16 %v5062, %v5060
      %v7089 = vpack.c.b16 %v5063, %v5061
      %v7090 = vpack.c.b16 %v5066, %v5064
      %v7091 = vpack.c.b16 %v5067, %v5065
      %v7092 = vpack.c.b16 %v5070, %v5068
      %v7093 = vpack.c.b16 %v5071, %v5069
      %v7094 = vpack.c.b16 %v5074, %v5072
      %v7095 = vpack.c.b16 %v5075, %v5073
      %v7096 = vpack.c.b16 %v5078, %v5076
      %v7097 = vpack.c.b16 %v5079, %v5077
      %v7098 = vpack.c.b16 %v5082, %v5080
      %v7099 = vpack.c.b16 %v5083, %v5081
      %v7100 = vpack.c.b16 %v5086, %v5084
      %v7101 = vpack.c.b16 %v5087, %v5085
      %v7102 = vpack.c.b16 %v5090, %v5088
      %v7103 = vpack.c.b16 %v5091, %v5089
      %v7104 = vpack.c.b16 %v5094, %v5092
      %v7105 = vpack.c.b16 %v5095, %v5093
      %v7106 = vpack.c.b16 %v5098, %v5096
      %v7107 = vpack.c.b16 %v5099, %v5097
      %v7108 = vpack.c.b16 %v5102, %v5100
      %v7109 = vpack.c.b16 %v5103, %v5101
      %v7110 = vpack.c.b16 %v5106, %v5104
      %v7111 = vpack.c.b16 %v5107, %v5105
      %v7112 = vpack.c.b16 %v5110, %v5108
      %v7113 = vpack.c.b16 %v5111, %v5109
      %v7114 = vpack.c.b16 %v5114, %v5112
      %v7115 = vpack.c.b16 %v5115, %v5113
      %v7116 = vpack.c.b16 %v5118, %v5116
      %v7117 = vpack.c.b16 %v5119, %v5117
      %v7118 = vpack.c.b16 %v5122, %v5120
      %v7119 = vpack.c.b16 %v5123, %v5121
      %v7120 = vpack.c.b16 %v5126, %v5124
      %v7121 = vpack.c.b16 %v5127, %v5125
      %v7122 = vpack.c.b16 %v5130, %v5128
      %v7123 = vpack.c.b16 %v5131, %v5129
      %v7124 = vpack.c.b16 %v5134, %v5132
      %v7125 = vpack.c.b16 %v5135, %v5133
      %v7126 = vpack.c.b16 %v5138, %v5136
      %v7127 = vpack.c.b16 %v5139, %v5137
      %v7128 = vpack.c.b16 %v5142, %v5140
      %v7129 = vpack.c.b16 %v5143, %v5141
      %v7130 = vpack.c.b16 %v5146, %v5144
      %v7131 = vpack.c.b16 %v5147, %v5145
      %v7132 = vpack.c.b16 %v5150, %v5148
      %v7133 = vpack.c.b16 %v5151, %v5149
      %v7134 = vpack.c.b16 %v5154, %v5152
      %v7135 = vpack.c.b16 %v5155, %v5153
      %v7136 = vpack.c.b16 %v5158, %v5156
      %v7137 = vpack.c.b16 %v5159, %v5157
      %v7138 = vpack.c.b16 %v5162, %v5160
      %v7139 = vpack.c.b16 %v5163, %v5161
      %v7140 = vpack.c.b16 %v5166, %v5164
      %v7141 = vpack.c.b16 %v5167, %v5165
      %v7142 = vpack.c.b16 %v5170, %v5168
      %v7143 = vpack.c.b16 %v5171, %v5169
      %v7144 = vpack.c.b16 %v5174, %v5172
      %v7145 = vpack.c.b16 %v5175, %v5173
      %v7146 = vpack.c.b16 %v5178, %v5176
      %v7147 = vpack.c.b16 %v5179, %v5177
      %v7148 = vpack.c.b16 %v5182, %v5180
      %v7149 = vpack.c.b16 %v5183, %v5181
      %v7150 = vpack.c.b16 %v5186, %v5184
      %v7151 = vpack.c.b16 %v5187, %v5185
      %v7152 = vpack.c.b16 %v5190, %v5188
      %v7153 = vpack.c.b16 %v5191, %v5189
      %v7154 = vpack.c.b16 %v5194, %v5192
      %v7155 = vpack.c.b16 %v5195, %v5193
      %v7156 = vpack.c.b16 %v5198, %v5196
      %v7157 = vpack.c.b16 %v5199, %v5197
      %v7158 = vpack.c.b16 %v5202, %v5200
      %v7159 = vpack.c.b16 %v5203, %v5201
      %v7160 = vpack.c.b16 %v5206, %v5204
      %v7161 = vpack.c.b16 %v5207, %v5205
      %v7162 = vpack.c.b16 %v5210, %v5208
      %v7163 = vpack.c.b16 %v5211, %v5209
      %v7164 = vpack.c.b16 %v5214, %v5212
      %v7165 = vpack.c.b16 %v5215, %v5213
      %v7166 = vpack.c.b16 %v5218, %v5216
      %v7167 = vpack.c.b16 %v5219, %v5217
      %v7168 = vpack.c.b16 %v5222, %v5220
      %v7169 = vpack.c.b16 %v5223, %v5221
      %v7170 = vpack.c.b16 %v5226, %v5224
      %v7171 = vpack.c.b16 %v5227, %v5225
      %v7172 = vpack.c.b16 %v5230, %v5228
      %v7173 = vpack.c.b16 %v5231, %v5229
      %v7174 = vpack.c.b16 %v5234, %v5232
      %v7175 = vpack.c.b16 %v5235, %v5233
      %v7176 = vpack.c.b16 %v5238, %v5236
      %v7177 = vpack.c.b16 %v5239, %v5237
      %v7178 = vpack.c.b16 %v5242, %v5240
      %v7179 = vpack.c.b16 %v5243, %v5241
      %v7180 = vpack.c.b16 %v5246, %v5244
      %v7181 = vpack.c.b16 %v5247, %v5245
      %v7182 = vpack.c.b16 %v5250, %v5248
      %v7183 = vpack.c.b16 %v5251, %v5249
      %v7184 = vpack.c.b16 %v5254, %v5252
      %v7185 = vpack.c.b16 %v5255, %v5253
      %v7186 = vpack.c.b16 %v5258, %v5256
      %v7187 = vpack.c.b16 %v5259, %v5257
      %v7188 = vpack.c.b16 %v5262, %v5260
      %v7189 = vpack.c.b16 %v5263, %v5261
      %v7190 = vpack.c.b16 %v5266, %v5264
      %v7191 = vpack.c.b16 %v5267, %v5265
      %v7192 = vpack.c.b16 %v5270, %v5268
      %v7193 = vpack.c.b16 %v5271, %v5269
      %v7194 = vpack.c.b16 %v5274, %v5272
      %v7195 = vpack.c.b16 %v5275, %v5273
      %v7196 = vpack.c.b16 %v5278, %v5276
      %v7197 = vpack.c.b16 %v5279, %v5277
      %v7198 = vpack.c.b16 %v5282, %v5280
      %v7199 = vpack.c.b16 %v5283, %v5281
      %v7200 = vpack.c.b16 %v5286, %v5284
      %v7201 = vpack.c.b16 %v5287, %v5285
      %v7202 = vpack.c.b16 %v5290, %v5288
      %v7203 = vpack.c.b16 %v5291, %v5289
      %v7204 = vpack.c.b16 %v5294, %v5292
      %v7205 = vpack.c.b16 %v5295, %v5293
      %v7206 = vpack.c.b16 %v5298, %v5296
      %v7207 = vpack.c.b16 %v5299, %v5297
      %v7208 = vpack.c.b16 %v5302, %v5300
      %v7209 = vpack.c.b16 %v5303, %v5301
      %v7210 = vpack.c.b16 %v5306, %v5304
      %v7211 = vpack.c.b16 %v5307, %v5305
      %v7212 = vpack.c.b16 %v5310, %v5308
      %v7213 = vpack.c.b16 %v5311, %v5309
      %v7214 = vpack.c.b16 %v5314, %v5312
      %v7215 = vpack.c.b16 %v5315, %v5313
      %v7216 = vpack.c.b16 %v5318, %v5316
      %v7217 = vpack.c.b16 %v5319, %v5317
      %v7218 = vpack.c.b16 %v5322, %v5320
      %v7219 = vpack.c.b16 %v5323, %v5321
      %v7220 = vpack.c.b16 %v5326, %v5324
      %v7221 = vpack.c.b16 %v5327, %v5325
      %v7222 = vpack.c.b16 %v5330, %v5328
      %v7223 = vpack.c.b16 %v5331, %v5329
      %v7224 = vpack.c.b16 %v5334, %v5332
      %v7225 = vpack.c.b16 %v5335, %v5333
      %v7226 = vpack.c.b16 %v5338, %v5336
      %v7227 = vpack.c.b16 %v5339, %v5337
      %v7228 = vpack.c.b16 %v5342, %v5340
      %v7229 = vpack.c.b16 %v5343, %v5341
      %v7230 = vpack.c.b16 %v5346, %v5344
      %v7231 = vpack.c.b16 %v5347, %v5345
      %v7232 = vpack.c.b16 %v5350, %v5348
      %v7233 = vpack.c.b16 %v5351, %v5349
      %v7234 = vpack.c.b16 %v5354, %v5352
      %v7235 = vpack.c.b16 %v5355, %v5353
      %v7236 = vpack.c.b16 %v5358, %v5356
      %v7237 = vpack.c.b16 %v5359, %v5357
      %v7238 = vpack.c.b16 %v5362, %v5360
      %v7239 = vpack.c.b16 %v5363, %v5361
      %v7240 = vpack.c.b16 %v5366, %v5364
      %v7241 = vpack.c.b16 %v5367, %v5365
      %v7242 = vpack.c.b16 %v5370, %v5368
      %v7243 = vpack.c.b16 %v5371, %v5369
      %v7244 = vpack.c.b16 %v5374, %v5372
      %v7245 = vpack.c.b16 %v5375, %v5373
      %v7246 = vpack.c.b16 %v5378, %v5376
      %v7247 = vpack.c.b16 %v5379, %v5377
      %v7248 = vpack.c.b16 %v5382, %v5380
      %v7249 = vpack.c.b16 %v5383, %v5381
      %v7250 = vpack.c.b16 %v5386, %v5384
      %v7251 = vpack.c.b16 %v5387, %v5385
      %v7252 = vpack.c.b16 %v5390, %v5388
      %v7253 = vpack.c.b16 %v5391, %v5389
      %v7254 = vpack.c.b16 %v5394, %v5392
      %v7255 = vpack.c.b16 %v5395, %v5393
      %v7256 = vpack.c.b16 %v5398, %v5396
      %v7257 = vpack.c.b16 %v5399, %v5397
      %v7258 = vpack.c.b16 %v5402, %v5400
      %v7259 = vpack.c.b16 %v5403, %v5401
      %v7260 = vpack.c.b16 %v5406, %v5404
      %v7261 = vpack.c.b16 %v5407, %v5405
      %v7262 = vpack.c.b16 %v5410, %v5408
      %v7263 = vpack.c.b16 %v5411, %v5409
      %v7264 = vpack.c.b16 %v5414, %v5412
      %v7265 = vpack.c.b16 %v5415, %v5413
      %v7266 = vpack.c.b16 %v5418, %v5416
      %v7267 = vpack.c.b16 %v5419, %v5417
      %v7268 = vpack.c.b16 %v5422, %v5420
      %v7269 = vpack.c.b16 %v5423, %v5421
      %v7270 = vpack.c.b16 %v5426, %v5424
      %v7271 = vpack.c.b16 %v5427, %v5425
      %v7272 = vpack.c.b16 %v5430, %v5428
      %v7273 = vpack.c.b16 %v5431, %v5429
      %v7274 = vpack.c.b16 %v5434, %v5432
      %v7275 = vpack.c.b16 %v5435, %v5433
      %v7276 = vpack.c.b16 %v5438, %v5436
      %v7277 = vpack.c.b16 %v5439, %v5437
      %v7278 = vpack.c.b16 %v5442, %v5440
      %v7279 = vpack.c.b16 %v5443, %v5441
      %v7280 = vpack.c.b16 %v5446, %v5444
      %v7281 = vpack.c.b16 %v5447, %v5445
      %v7282 = vpack.c.b16 %v5450, %v5448
      %v7283 = vpack.c.b16 %v5451, %v5449
      %v7284 = vpack.c.b16 %v5454, %v5452
      %v7285 = vpack.c.b16 %v5455, %v5453
      %v7286 = vpack.c.b16 %v5458, %v5456
      %v7287 = vpack.c.b16 %v5459, %v5457
      %v7288 = vpack.c.b16 %v5462, %v5460
      %v7289 = vpack.c.b16 %v5463, %v5461
      %v7290 = vpack.c.b16 %v5466, %v5464
      %v7291 = vpack.c.b16 %v5467, %v5465
      %v7292 = vpack.c.b16 %v5470, %v5468
      %v7293 = vpack.c.b16 %v5471, %v5469
      %v7294 = vpack.c.b16 %v5474, %v5472
      %v7295 = vpack.c.b16 %v5475, %v5473
      %v7296 = vpack.c.b16 %v5478, %v5476
      %v7297 = vpack.c.b16 %v5479, %v5477
      %v7298 = vpack.c.b16 %v5482, %v5480
      %v7299 = vpack.c.b16 %v5483, %v5481
      %v7300 = vpack.c.b16 %v5486, %v5484
      %v7301 = vpack.c.b16 %v5487, %v5485
      %v7302 = vpack.c.b16 %v5490, %v5488
      %v7303 = vpack.c.b16 %v5491, %v5489
      %v7304 = vpack.c.b16 %v5494, %v5492
      %v7305 = vpack.c.b16 %v5495, %v5493
      %v7306 = vpack.c.b16 %v5498, %v5496
      %v7307 = vpack.c.b16 %v5499, %v5497
      %v7308 = vpack.c.b16 %v5502, %v5500
      %v7309 = vpack.c.b16 %v5503, %v5501
      %v7310 = vpack.c.b16 %v5506, %v5504
      %v7311 = vpack.c.b16 %v5507, %v5505
      %v7312 = vpack.c.b16 %v5510, %v5508
      %v7313 = vpack.c.b16 %v5511, %v5509
      %v7314 = vpack.c.b16 %v5514, %v5512
      %v7315 = vpack.c.b16 %v5515, %v5513
      %v7316 = vpack.c.b16 %v5518, %v5516
      %v7317 = vpack.c.b16 %v5519, %v5517
      %v7318 = vpack.c.b16 %v5522, %v5520
      %v7319 = vpack.c.b16 %v5523, %v5521
      %v7320 = vpack.c.b16 %v5526, %v5524
      %v7321 = vpack.c.b16 %v5527, %v5525
      %v7322 = vpack.c.b16 %v5530, %v5528
      %v7323 = vpack.c.b16 %v5531, %v5529
      %v7324 = vpack.c.b16 %v5534, %v5532
      %v7325 = vpack.c.b16 %v5535, %v5533
      %v7326 = vpack.c.b16 %v5538, %v5536
      %v7327 = vpack.c.b16 %v5539, %v5537
      %v7328 = vpack.c.b16 %v5542, %v5540
      %v7329 = vpack.c.b16 %v5543, %v5541
      %v7330 = vpack.c.b16 %v5546, %v5544
      %v7331 = vpack.c.b16 %v5547, %v5545
      %v7332 = vpack.c.b16 %v5550, %v5548
      %v7333 = vpack.c.b16 %v5551, %v5549
      %v7334 = vpack.c.b16 %v5554, %v5552
      %v7335 = vpack.c.b16 %v5555, %v5553
      %v7336 = vpack.c.b16 %v5558, %v5556
      %v7337 = vpack.c.b16 %v5559, %v5557
      %v7338 = vpack.c.b16 %v5562, %v5560
      %v7339 = vpack.c.b16 %v5563, %v5561
      %v7340 = vpack.c.b16 %v5566, %v5564
      %v7341 = vpack.c.b16 %v5567, %v5565
      %v7342 = vpack.c.b16 %v5570, %v5568
      %v7343 = vpack.c.b16 %v5571, %v5569
      %v7344 = vpack.c.b16 %v5574, %v5572
      %v7345 = vpack.c.b16 %v5575, %v5573
      %v7346 = vpack.c.b16 %v5578, %v5576
      %v7347 = vpack.c.b16 %v5579, %v5577
      %v7348 = vpack.c.b16 %v5582, %v5580
      %v7349 = vpack.c.b16 %v5583, %v5581
      %v7350 = vpack.c.b16 %v5586, %v5584
      %v7351 = vpack.c.b16 %v5587, %v5585
      %v7352 = vpack.c.b16 %v5590, %v5588
      %v7353 = vpack.c.b16 %v5591, %v5589
      %v7354 = vpack.c.b16 %v5594, %v5592
      %v7355 = vpack.c.b16 %v5595, %v5593
      %v7356 = vpack.c.b16 %v5598, %v5596
      %v7357 = vpack.c.b16 %v5599, %v5597
      %v7358 = vpack.c.b16 %v5602, %v5600
      %v7359 = vpack.c.b16 %v5603, %v5601
      %v7360 = vpack.c.b16 %v5606, %v5604
      %v7361 = vpack.c.b16 %v5607, %v5605
      %v7362 = vpack.c.b16 %v5610, %v5608
      %v7363 = vpack.c.b16 %v5611, %v5609
      %v7364 = vpack.c.b16 %v5614, %v5612
      %v7365 = vpack.c.b16 %v5615, %v5613
      %v7366 = vpack.c.b16 %v5618, %v5616
      %v7367 = vpack.c.b16 %v5619, %v5617
      %v7368 = vpack.c.b16 %v5622, %v5620
      %v7369 = vpack.c.b16 %v5623, %v5621
      %v7370 = vpack.c.b16 %v5626, %v5624
      %v7371 = vpack.c.b16 %v5627, %v5625
      %v7372 = vpack.c.b16 %v5630, %v5628
      %v7373 = vpack.c.b16 %v5631, %v5629
      %v7374 = vpack.c.b16 %v5634, %v5632
      %v7375 = vpack.c.b16 %v5635, %v5633
      %v7376 = vpack.c.b16 %v5638, %v5636
      %v7377 = vpack.c.b16 %v5639, %v5637
      %v7378 = vpack.c.b16 %v5642, %v5640
      %v7379 = vpack.c.b16 %v5643, %v5641
      %v7380 = vpack.c.b16 %v5646, %v5644
      %v7381 = vpack.c.b16 %v5647, %v5645
      %v7382 = vpack.c.b16 %v5650, %v5648
      %v7383 = vpack.c.b16 %v5651, %v5649
      %v7384 = vpack.c.b16 %v5654, %v5652
      %v7385 = vpack.c.b16 %v5655, %v5653
      %v7386 = vpack.c.b16 %v5658, %v5656
      %v7387 = vpack.c.b16 %v5659, %v5657
      %v7388 = vpack.c.b16 %v5662, %v5660
      %v7389 = vpack.c.b16 %v5663, %v5661
      %v7390 = vpack.c.b16 %v5666, %v5664
      %v7391 = vpack.c.b16 %v5667, %v5665
      %v7392 = vpack.c.b16 %v5670, %v5668
      %v7393 = vpack.c.b16 %v5671, %v5669
      %v7394 = vpack.c.b16 %v5674, %v5672
      %v7395 = vpack.c.b16 %v5675, %v5673
      %v7396 = vpack.c.b16 %v5678, %v5676
      %v7397 = vpack.c.b16 %v5679, %v5677
      %v7398 = vpack.c.b16 %v5682, %v5680
      %v7399 = vpack.c.b16 %v5683, %v5681
      %v7400 = vpack.c.b16 %v5686, %v5684
      %v7401 = vpack.c.b16 %v5687, %v5685
      %v7402 = vpack.c.b16 %v5690, %v5688
      %v7403 = vpack.c.b16 %v5691, %v5689
      %v7404 = vpack.c.b16 %v5694, %v5692
      %v7405 = vpack.c.b16 %v5695, %v5693
      %v7406 = vpack.c.b16 %v5698, %v5696
      %v7407 = vpack.c.b16 %v5699, %v5697
      %v7408 = vpack.c.b16 %v5702, %v5700
      %v7409 = vpack.c.b16 %v5703, %v5701
      %v7410 = vpack.c.b16 %v5706, %v5704
      %v7411 = vpack.c.b16 %v5707, %v5705
      %v7412 = vpack.c.b16 %v5710, %v5708
      %v7413 = vpack.c.b16 %v5711, %v5709
      %v7414 = vpack.c.b16 %v5714, %v5712
      %v7415 = vpack.c.b16 %v5715, %v5713
      %v7416 = vpack.c.b16 %v5718, %v5716
      %v7417 = vpack.c.b16 %v5719, %v5717
      %v7418 = vpack.c.b16 %v5722, %v5720
      %v7419 = vpack.c.b16 %v5723, %v5721
      %v7420 = vpack.c.b16 %v5726, %v5724
      %v7421 = vpack.c.b16 %v5727, %v5725
      %v7422 = vpack.c.b16 %v5730, %v5728
      %v7423 = vpack.c.b16 %v5731, %v5729
      %v7424 = vpack.c.b16 %v5734, %v5732
      %v7425 = vpack.c.b16 %v5735, %v5733
      %v7426 = vpack.c.b16 %v5738, %v5736
      %v7427 = vpack.c.b16 %v5739, %v5737
      %v7428 = vpack.c.b16 %v5742, %v5740
      %v7429 = vpack.c.b16 %v5743, %v5741
      %v7430 = vpack.c.b16 %v5746, %v5744
      %v7431 = vpack.c.b16 %v5747, %v5745
      %v7432 = vpack.c.b16 %v5750, %v5748
      %v7433 = vpack.c.b16 %v5751, %v5749
      %v7434 = vpack.c.b16 %v5754, %v5752
      %v7435 = vpack.c.b16 %v5755, %v5753
      %v7436 = vpack.c.b16 %v5758, %v5756
      %v7437 = vpack.c.b16 %v5759, %v5757
      %v7438 = vpack.c.b16 %v5762, %v5760
      %v7439 = vpack.c.b16 %v5763, %v5761
      %v7440 = vpack.c.b16 %v5766, %v5764
      %v7441 = vpack.c.b16 %v5767, %v5765
      %v7442 = vpack.c.b16 %v5770, %v5768
      %v7443 = vpack.c.b16 %v5771, %v5769
      %v7444 = vpack.c.b16 %v5774, %v5772
      %v7445 = vpack.c.b16 %v5775, %v5773
      %v7446 = vpack.c.b16 %v5778, %v5776
      %v7447 = vpack.c.b16 %v5779, %v5777
      %v7448 = vpack.c.b16 %v5782, %v5780
      %v7449 = vpack.c.b16 %v5783, %v5781
      %v7450 = vpack.c.b16 %v5786, %v5784
      %v7451 = vpack.c.b16 %v5787, %v5785
      %v7452 = vpack.c.b16 %v5790, %v5788
      %v7453 = vpack.c.b16 %v5791, %v5789
      %v7454 = vpack.c.b16 %v5794, %v5792
      %v7455 = vpack.c.b16 %v5795, %v5793
      %v7456 = vpack.c.b16 %v5798, %v5796
      %v7457 = vpack.c.b16 %v5799, %v5797
      %v7458 = vpack.c.b16 %v5802, %v5800
      %v7459 = vpack.c.b16 %v5803, %v5801
      %v7460 = vpack.c.b16 %v5806, %v5804
      %v7461 = vpack.c.b16 %v5807, %v5805
      %v7462 = vpack.c.b16 %v5810, %v5808
      %v7463 = vpack.c.b16 %v5811, %v5809
      %v7464 = vpack.c.b16 %v5814, %v5812
      %v7465 = vpack.c.b16 %v5815, %v5813
      %v7466 = vpack.c.b16 %v5818, %v5816
      %v7467 = vpack.c.b16 %v5819, %v5817
      %v7468 = vpack.c.b16 %v5822, %v5820
      %v7469 = vpack.c.b16 %v5823, %v5821
      %v7470 = vpack.c.b16 %v5826, %v5824
      %v7471 = vpack.c.b16 %v5827, %v5825
      %v7472 = vpack.c.b16 %v5830, %v5828
      %v7473 = vpack.c.b16 %v5831, %v5829
      %v7474 = vpack.c.b16 %v5834, %v5832
      %v7475 = vpack.c.b16 %v5835, %v5833
      %v7476 = vpack.c.b16 %v5838, %v5836
      %v7477 = vpack.c.b16 %v5839, %v5837
      %v7478 = vpack.c.b16 %v5842, %v5840
      %v7479 = vpack.c.b16 %v5843, %v5841
      %v7480 = vpack.c.b16 %v5846, %v5844
      %v7481 = vpack.c.b16 %v5847, %v5845
      %v7482 = vpack.c.b16 %v5850, %v5848
      %v7483 = vpack.c.b16 %v5851, %v5849
      %v7484 = vpack.c.b16 %v5854, %v5852
      %v7485 = vpack.c.b16 %v5855, %v5853
      %v7486 = vpack.c.b16 %v5858, %v5856
      %v7487 = vpack.c.b16 %v5859, %v5857
      %v7488 = vpack.c.b16 %v5862, %v5860
      %v7489 = vpack.c.b16 %v5863, %v5861
      %v7490 = vpack.c.b16 %v5866, %v5864
      %v7491 = vpack.c.b16 %v5867, %v5865
      %v7492 = vpack.c.b16 %v5870, %v5868
      %v7493 = vpack.c.b16 %v5871, %v5869
      %v7494 = vpack.c.b16 %v5874, %v5872
      %v7495 = vpack.c.b16 %v5875, %v5873
      %v7496 = vpack.c.b16 %v5878, %v5876
      %v7497 = vpack.c.b16 %v5879, %v5877
      %v7498 = vpack.c.b16 %v5882, %v5880
      %v7499 = vpack.c.b16 %v5883, %v5881
      %v7500 = vpack.c.b16 %v5886, %v5884
      %v7501 = vpack.c.b16 %v5887, %v5885
      %v7502 = vpack.c.b16 %v5890, %v5888
      %v7503 = vpack.c.b16 %v5891, %v5889
      %v7504 = vpack.c.b16 %v5894, %v5892
      %v7505 = vpack.c.b16 %v5895, %v5893
      %v7506 = vpack.c.b16 %v5898, %v5896
      %v7507 = vpack.c.b16 %v5899, %v5897
      %v7508 = vpack.c.b16 %v5902, %v5900
      %v7509 = vpack.c.b16 %v5903, %v5901
      %v7510 = vpack.c.b16 %v5906, %v5904
      %v7511 = vpack.c.b16 %v5907, %v5905
      %v7512 = vpack.c.b16 %v5910, %v5908
      %v7513 = vpack.c.b16 %v5911, %v5909
      %v7514 = vpack.c.b16 %v5914, %v5912
      %v7515 = vpack.c.b16 %v5915, %v5913
      %v7516 = vpack.c.b16 %v5918, %v5916
      %v7517 = vpack.c.b16 %v5919, %v5917
      %v7518 = vpack.c.b16 %v5922, %v5920
      %v7519 = vpack.c.b16 %v5923, %v5921
      %v7520 = vpack.c.b16 %v5926, %v5924
      %v7521 = vpack.c.b16 %v5927, %v5925
      %v7522 = vpack.c.b16 %v5930, %v5928
      %v7523 = vpack.c.b16 %v5931, %v5929
      %v7524 = vpack.c.b16 %v5934, %v5932
      %v7525 = vpack.c.b16 %v5935, %v5933
      %v7526 = vpack.c.b16 %v5938, %v5936
      %v7527 = vpack.c.b16 %v5939, %v5937
      %v7528 = vpack.c.b16 %v5942, %v5940
      %v7529 = vpack.c.b16 %v5943, %v5941
      %v7530 = vpack.c.b16 %v5946, %v5944
      %v7531 = vpack.c.b16 %v5947, %v5945
      %v7532 = vpack.c.b16 %v5950, %v5948
      %v7533 = vpack.c.b16 %v5951, %v5949
      %v7534 = vpack.c.b16 %v5954, %v5952
      %v7535 = vpack.c.b16 %v5955, %v5953
      %v7536 = vpack.c.b16 %v5958, %v5956
      %v7537 = vpack.c.b16 %v5959, %v5957
      %v7538 = vpack.c.b16 %v5962, %v5960
      %v7539 = vpack.c.b16 %v5963, %v5961
      %v7540 = vpack.c.b16 %v5966, %v5964
      %v7541 = vpack.c.b16 %v5967, %v5965
      %v7542 = vpack.c.b16 %v5970, %v5968
      %v7543 = vpack.c.b16 %v5971, %v5969
      %v7544 = vpack.c.b16 %v5974, %v5972
      %v7545 = vpack.c.b16 %v5975, %v5973
      %v7546 = vpack.c.b16 %v5978, %v5976
      %v7547 = vpack.c.b16 %v5979, %v5977
      %v7548 = vpack.c.b16 %v5982, %v5980
      %v7549 = vpack.c.b16 %v5983, %v5981
      %v7550 = vpack.c.b16 %v5986, %v5984
      %v7551 = vpack.c.b16 %v5987, %v5985
      %v7552 = vpack.c.b16 %v5990, %v5988
      %v7553 = vpack.c.b16 %v5991, %v5989
      %v7554 = vpack.c.b16 %v5994, %v5992
      %v7555 = vpack.c.b16 %v5995, %v5993
      %v7556 = vpack.c.b16 %v5998, %v5996
      %v7557 = vpack.c.b16 %v5999, %v5997
      %v7558 = vpack.c.b16 %v6002, %v6000
      %v7559 = vpack.c.b16 %v6003, %v6001
      %v7560 = vpack.c.b16 %v6006, %v6004
      %v7561 = vpack.c.b16 %v6007, %v6005
      %v7562 = vpack.c.b16 %v6010, %v6008
      %v7563 = vpack.c.b16 %v6011, %v6009
      %v7564 = vpack.c.b16 %v6014, %v6012
      %v7565 = vpack.c.b16 %v6015, %v6013
      %v7566 = vpack.c.b16 %v6018, %v6016
      %v7567 = vpack.c.b16 %v6019, %v6017
      %v7568 = vpack.c.b16 %v6022, %v6020
      %v7569 = vpack.c.b16 %v6023, %v6021
      %v7570 = vpack.c.b16 %v6026, %v6024
      %v7571 = vpack.c.b16 %v6027, %v6025
      %v7572 = vpack.c.b16 %v6030, %v6028
      %v7573 = vpack.c.b16 %v6031, %v6029
      %v7574 = vpack.c.b16 %v6034, %v6032
      %v7575 = vpack.c.b16 %v6035, %v6033
      %v7576 = vpack.c.b16 %v6038, %v6036
      %v7577 = vpack.c.b16 %v6039, %v6037
      %v7578 = vpack.c.b16 %v6042, %v6040
      %v7579 = vpack.c.b16 %v6043, %v6041
      %v7580 = vpack.c.b16 %v6046, %v6044
      %v7581 = vpack.c.b16 %v6047, %v6045
      %v7582 = vpack.c.b16 %v6050, %v6048
      %v7583 = vpack.c.b16 %v6051, %v6049
      %v7584 = vpack.c.b16 %v6054, %v6052
      %v7585 = vpack.c.b16 %v6055, %v6053
      %v7586 = vpack.c.b16 %v6058, %v6056
      %v7587 = vpack.c.b16 %v6059, %v6057
      %v7588 = vpack.c.b16 %v6062, %v6060
      %v7589 = vpack.c.b16 %v6063, %v6061
      %v7590 = vpack.c.b16 %v6066, %v6064
      %v7591 = vpack.c.b16 %v6067, %v6065
      %v7592 = vpack.c.b16 %v6070, %v6068
      %v7593 = vpack.c.b16 %v6071, %v6069
      %v7594 = vpack.c.b16 %v6074, %v6072
      %v7595 = vpack.c.b16 %v6075, %v6073
      %v7596 = vpack.c.b16 %v6078, %v6076
      %v7597 = vpack.c.b16 %v6079, %v6077
      %v7598 = vpack.c.b16 %v6082, %v6080
      %v7599 = vpack.c.b16 %v6083, %v6081
      %v7600 = vpack.c.b16 %v6086, %v6084
      %v7601 = vpack.c.b16 %v6087, %v6085
      %v7602 = vpack.c.b16 %v6090, %v6088
      %v7603 = vpack.c.b16 %v6091, %v6089
      %v7604 = vpack.c.b16 %v6094, %v6092
      %v7605 = vpack.c.b16 %v6095, %v6093
      %v7606 = vpack.c.b16 %v6098, %v6096
      %v7607 = vpack.c.b16 %v6099, %v6097
      %v7608 = vpack.c.b16 %v6102, %v6100
      %v7609 = vpack.c.b16 %v6103, %v6101
      %v7610 = vpack.c.b16 %v6106, %v6104
      %v7611 = vpack.c.b16 %v6107, %v6105
      %v7612 = vpack.c.b16 %v6110, %v6108
      %v7613 = vpack.c.b16 %v6111, %v6109
      %v7614 = vpack.c.b16 %v6114, %v6112
      %v7615 = vpack.c.b16 %v6115, %v6113
      %v7616 = vpack.c.b16 %v6118, %v6116
      %v7617 = vpack.c.b16 %v6119, %v6117
      %v7618 = vpack.c.b16 %v6122, %v6120
      %v7619 = vpack.c.b16 %v6123, %v6121
      %v7620 = vpack.c.b16 %v6126, %v6124
      %v7621 = vpack.c.b16 %v6127, %v6125
      %v7622 = vpack.c.b16 %v6130, %v6128
      %v7623 = vpack.c.b16 %v6131, %v6129
      %v7624 = vpack.c.b16 %v6134, %v6132
      %v7625 = vpack.c.b16 %v6135, %v6133
      %v7626 = vpack.c.b16 %v6138, %v6136
      %v7627 = vpack.c.b16 %v6139, %v6137
      %v7628 = vpack.c.b16 %v6142, %v6140
      %v7629 = vpack.c.b16 %v6143, %v6141
      %v7630 = vpack.c.b16 %v6146, %v6144
      %v7631 = vpack.c.b16 %v6147, %v6145
      %v7632 = vpack.c.b16 %v6150, %v6148
      %v7633 = vpack.c.b16 %v6151, %v6149
      %v7634 = vpack.c.b16 %v6154, %v6152
      %v7635 = vpack.c.b16 %v6155, %v6153
      %v7636 = vpack.c.b16 %v6158, %v6156
      %v7637 = vpack.c.b16 %v6159, %v6157
      %v7638 = vpack.c.b16 %v6162, %v6160
      %v7639 = vpack.c.b16 %v6163, %v6161
      %v7640 = vpack.c.b16 %v6166, %v6164
      %v7641 = vpack.c.b16 %v6167, %v6165
      %v7642 = vpack.c.b16 %v6170, %v6168
      %v7643 = vpack.c.b16 %v6171, %v6169
      %v7644 = vpack.c.b16 %v6174, %v6172
      %v7645 = vpack.c.b16 %v6175, %v6173
      %v7646 = vpack.c.b16 %v6178, %v6176
      %v7647 = vpack.c.b16 %v6179, %v6177
      %v7648 = vpack.c.b16 %v6182, %v6180
      %v7649 = vpack.c.b16 %v6183, %v6181
      %v7650 = vpack.c.b16 %v6186, %v6184
      %v7651 = vpack.c.b16 %v6187, %v6185
      %v7652 = vpack.c.b16 %v6190, %v6188
      %v7653 = vpack.c.b16 %v6191, %v6189
      %v7654 = vpack.c.b16 %v6194, %v6192
      %v7655 = vpack.c.b16 %v6195, %v6193
      %v7656 = vpack.c.b16 %v6198, %v6196
      %v7657 = vpack.c.b16 %v6199, %v6197
      %v7658 = vpack.c.b16 %v6202, %v6200
      %v7659 = vpack.c.b16 %v6203, %v6201
      %v7660 = vpack.c.b16 %v6206, %v6204
      %v7661 = vpack.c.b16 %v6207, %v6205
      %v7662 = vpack.c.b16 %v6210, %v6208
      %v7663 = vpack.c.b16 %v6211, %v6209
      %v7664 = vpack.c.b16 %v6214, %v6212
      %v7665 = vpack.c.b16 %v6215, %v6213
      %v7666 = vpack.c.b16 %v6218, %v6216
      %v7667 = vpack.c.b16 %v6219, %v6217
      %v7668 = vpack.c.b16 %v6222, %v6220
      %v7669 = vpack.c.b16 %v6223, %v6221
      %v7670 = vpack.c.b16 %v6226, %v6224
      %v7671 = vpack.c.b16 %v6227, %v6225
      %v7672 = vpack.c.b16 %v6230, %v6228
      %v7673 = vpack.c.b16 %v6231, %v6229
      %v7674 = vpack.c.b16 %v6234, %v6232
      %v7675 = vpack.c.b16 %v6235, %v6233
      %v7676 = vpack.c.b16 %v6238, %v6236
      %v7677 = vpack.c.b16 %v6239, %v6237
      %v7678 = vpack.c.b16 %v6242, %v6240
      %v7679 = vpack.c.b16 %v6243, %v6241
      %v7680 = vpack.c.b16 %v6246, %v6244
      %v7681 = vpack.c.b16 %v6247, %v6245
      %v7682 = vpack.c.b16 %v6250, %v6248
      %v7683 = vpack.c.b16 %v6251, %v6249
      %v7684 = vpack.c.b16 %v6254, %v6252
      %v7685 = vpack.c.b16 %v6255, %v6253
      %v7686 = vpack.c.b16 %v6258, %v6256
      %v7687 = vpack.c.b16 %v6259, %v6257
      %v7688 = vpack.c.b16 %v6262, %v6260
      %v7689 = vpack.c.b16 %v6263, %v6261
      %v7690 = vpack.c.b16 %v6266, %v6264
      %v7691 = vpack.c.b16 %v6267, %v6265
      %v7692 = vpack.c.b16 %v6270, %v6268
      %v7693 = vpack.c.b16 %v6271, %v6269
      %v7694 = vpack.c.b16 %v6274, %v6272
      %v7695 = vpack.c.b16 %v6275, %v6273
      %v7696 = vpack.c.b16 %v6278, %v6276
      %v7697 = vpack.c.b16 %v6279, %v6277
      %v7698 = vpack.c.b16 %v6282, %v6280
      %v7699 = vpack.c.b16 %v6283, %v6281
      %v7700 = vpack.c.b16 %v6286, %v6284
      %v7701 = vpack.c.b16 %v6287, %v6285
      %v7702 = vpack.c.b16 %v6290, %v6288
      %v7703 = vpack.c.b16 %v6291, %v6289
      %v7704 = vpack.c.b16 %v6294, %v6292
      %v7705 = vpack.c.b16 %v6295, %v6293
      %v7706 = vpack.c.b16 %v6298, %v6296
      %v7707 = vpack.c.b16 %v6299, %v6297
      %v7708 = vpack.c.b16 %v6302, %v6300
      %v7709 = vpack.c.b16 %v6303, %v6301
      %v7710 = vpack.c.b16 %v6306, %v6304
      %v7711 = vpack.c.b16 %v6307, %v6305
      %v7712 = vpack.c.b16 %v6310, %v6308
      %v7713 = vpack.c.b16 %v6311, %v6309
      %v7714 = vpack.c.b16 %v6314, %v6312
      %v7715 = vpack.c.b16 %v6315, %v6313
      %v7716 = vpack.c.b16 %v6318, %v6316
      %v7717 = vpack.c.b16 %v6319, %v6317
      %v7718 = vpack.c.b16 %v6322, %v6320
      %v7719 = vpack.c.b16 %v6323, %v6321
      %v7720 = vpack.c.b16 %v6326, %v6324
      %v7721 = vpack.c.b16 %v6327, %v6325
      %v7722 = vpack.c.b16 %v6330, %v6328
      %v7723 = vpack.c.b16 %v6331, %v6329
      %v7724 = vpack.c.b16 %v6334, %v6332
      %v7725 = vpack.c.b16 %v6335, %v6333
      %v7726 = vpack.c.b16 %v6338, %v6336
      %v7727 = vpack.c.b16 %v6339, %v6337
      %v7728 = vpack.c.b16 %v6342, %v6340
      %v7729 = vpack.c.b16 %v6343, %v6341
      %v7730 = vpack.c.b16 %v6346, %v6344
      %v7731 = vpack.c.b16 %v6347, %v6345
      %v7732 = vpack.c.b16 %v6350, %v6348
      %v7733 = vpack.c.b16 %v6351, %v6349
      %v7734 = vpack.c.b16 %v6354, %v6352
      %v7735 = vpack.c.b16 %v6355, %v6353
      %v7736 = vpack.c.b16 %v6358, %v6356
      %v7737 = vpack.c.b16 %v6359, %v6357
      %v7738 = vpack.c.b16 %v6362, %v6360
      %v7739 = vpack.c.b16 %v6363, %v6361
      %v7740 = vpack.c.b16 %v6366, %v6364
      %v7741 = vpack.c.b16 %v6367, %v6365
      %v7742 = vpack.c.b16 %v6370, %v6368
      %v7743 = vpack.c.b16 %v6371, %v6369
      %v7744 = vpack.c.b16 %v6374, %v6372
      %v7745 = vpack.c.b16 %v6375, %v6373
      %v7746 = vpack.c.b16 %v6378, %v6376
      %v7747 = vpack.c.b16 %v6379, %v6377
      %v7748 = vpack.c.b16 %v6382, %v6380
      %v7749 = vpack.c.b16 %v6383, %v6381
      %v7750 = vpack.c.b16 %v6386, %v6384
      %v7751 = vpack.c.b16 %v6387, %v6385
      %v7752 = vpack.c.b16 %v6390, %v6388
      %v7753 = vpack.c.b16 %v6391, %v6389
      %v7754 = vpack.c.b16 %v6394, %v6392
      %v7755 = vpack.c.b16 %v6395, %v6393
      %v7756 = vpack.c.b16 %v6398, %v6396
      %v7757 = vpack.c.b16 %v6399, %v6397
      %v7758 = vpack.c.b16 %v6402, %v6400
      %v7759 = vpack.c.b16 %v6403, %v6401
      %v7760 = vpack.c.b16 %v6406, %v6404
      %v7761 = vpack.c.b16 %v6407, %v6405
      %v7762 = vpack.c.b16 %v6410, %v6408
      %v7763 = vpack.c.b16 %v6411, %v6409
      %v7764 = vpack.c.b16 %v6414, %v6412
      %v7765 = vpack.c.b16 %v6415, %v6413
      %v7766 = vpack.c.b16 %v6418, %v6416
      %v7767 = vpack.c.b16 %v6419, %v6417
      %v7768 = vpack.c.b16 %v6422, %v6420
      %v7769 = vpack.c.b16 %v6423, %v6421
      %v7770 = vpack.c.b16 %v6426, %v6424
      %v7771 = vpack.c.b16 %v6427, %v6425
      %v7772 = vpack.c.b16 %v6430, %v6428
      %v7773 = vpack.c.b16 %v6431, %v6429
      %v7774 = vpack.c.b16 %v6434, %v6432
      %v7775 = vpack.c.b16 %v6435, %v6433
      %v7776 = vpack.c.b16 %v6438, %v6436
      %v7777 = vpack.c.b16 %v6439, %v6437
      %v7778 = vpack.c.b16 %v6442, %v6440
      %v7779 = vpack.c.b16 %v6443, %v6441
      %v7780 = vpack.c.b16 %v6446, %v6444
      %v7781 = vpack.c.b16 %v6447, %v6445
      %v7782 = vpack.c.b16 %v6450, %v6448
      %v7783 = vpack.c.b16 %v6451, %v6449
      %v7784 = vpack.c.b16 %v6454, %v6452
      %v7785 = vpack.c.b16 %v6455, %v6453
      %v7786 = vpack.c.b16 %v6458, %v6456
      %v7787 = vpack.c.b16 %v6459, %v6457
      %v7788 = vpack.c.b16 %v6462, %v6460
      %v7789 = vpack.c.b16 %v6463, %v6461
      %v7790 = vpack.c.b16 %v6466, %v6464
      %v7791 = vpack.c.b16 %v6467, %v6465
      %v7792 = vpack.c.b16 %v6470, %v6468
      %v7793 = vpack.c.b16 %v6471, %v6469
      %v7794 = vpack.c.b16 %v6474, %v6472
      %v7795 = vpack.c.b16 %v6475, %v6473
      %v7796 = vpack.c.b16 %v6478, %v6476
      %v7797 = vpack.c.b16 %v6479, %v6477
      %v7798 = vpack.c.b16 %v6482, %v6480
      %v7799 = vpack.c.b16 %v6483, %v6481
      %v7800 = vpack.c.b16 %v6486, %v6484
      %v7801 = vpack.c.b16 %v6487, %v6485
      %v7802 = vpack.c.b16 %v6490, %v6488
      %v7803 = vpack.c.b16 %v6491, %v6489
      %v7804 = vpack.c.b16 %v6494, %v6492
      %v7805 = vpack.c.b16 %v6495, %v6493
      %v7806 = vpack.c.b16 %v6498, %v6496
      %v7807 = vpack.c.b16 %v6499, %v6497
      %v7808 = vpack.c.b16 %v6502, %v6500
      %v7809 = vpack.c.b16 %v6503, %v6501
      %v7810 = vpack.c.b16 %v6506, %v6504
      %v7811 = vpack.c.b16 %v6507, %v6505
      %v7812 = vpack.c.b16 %v6510, %v6508
      %v7813 = vpack.c.b16 %v6511, %v6509
      %v7814 = vpack.c.b16 %v6514, %v6512
      %v7815 = vpack.c.b16 %v6515, %v6513
      %v7816 = vpack.c.b16 %v6518, %v6516
      %v7817 = vpack.c.b16 %v6519, %v6517
      %v7818 = vpack.c.b16 %v6522, %v6520
      %v7819 = vpack.c.b16 %v6523, %v6521
      %v7820 = vpack.c.b16 %v6526, %v6524
      %v7821 = vpack.c.b16 %v6527, %v6525
      %v7822 = vpack.c.b16 %v6530, %v6528
      %v7823 = vpack.c.b16 %v6531, %v6529
      %v7824 = vpack.c.b16 %v6534, %v6532
      %v7825 = vpack.c.b16 %v6535, %v6533
      %v7826 = vpack.c.b16 %v6538, %v6536
      %v7827 = vpack.c.b16 %v6539, %v6537
      %v7828 = vpack.c.b16 %v6542, %v6540
      %v7829 = vpack.c.b16 %v6543, %v6541
      %v7830 = vpack.c.b16 %v6546, %v6544
      %v7831 = vpack.c.b16 %v6547, %v6545
      %v7832 = vpack.c.b16 %v6550, %v6548
      %v7833 = vpack.c.b16 %v6551, %v6549
      %v7834 = vpack.c.b16 %v6554, %v6552
      %v7835 = vpack.c.b16 %v6555, %v6553
      %v7836 = vpack.c.b16 %v6558, %v6556
      %v7837 = vpack.c.b16 %v6559, %v6557
      %v7838 = vpack.c.b16 %v6562, %v6560
      %v7839 = vpack.c.b16 %v6563, %v6561
      %v7840 = vpack.c.b16 %v6566, %v6564
      %v7841 = vpack.c.b16 %v6567, %v6565
      %v7842 = vpack.c.b16 %v6570, %v6568
      %v7843 = vpack.c.b16 %v6571, %v6569
      %v7844 = vpack.c.b16 %v6574, %v6572
      %v7845 = vpack.c.b16 %v6575, %v6573
      %v7846 = vpack.c.b16 %v6578, %v6576
      %v7847 = vpack.c.b16 %v6579, %v6577
      %v7848 = vpack.c.b16 %v6582, %v6580
      %v7849 = vpack.c.b16 %v6583, %v6581
      %v7850 = vpack.c.b16 %v6586, %v6584
      %v7851 = vpack.c.b16 %v6587, %v6585
      %v7852 = vpack.c.b16 %v6590, %v6588
      %v7853 = vpack.c.b16 %v6591, %v6589
      %v7854 = vpack.c.b16 %v6594, %v6592
      %v7855 = vpack.c.b16 %v6595, %v6593
      %v7856 = vpack.c.b16 %v6598, %v6596
      %v7857 = vpack.c.b16 %v6599, %v6597
      %v7858 = vpack.c.b16 %v6602, %v6600
      %v7859 = vpack.c.b16 %v6603, %v6601
      %v7860 = vpack.c.b16 %v6606, %v6604
      %v7861 = vpack.c.b16 %v6607, %v6605
      %v7862 = vpack.c.b16 %v6610, %v6608
      %v7863 = vpack.c.b16 %v6611, %v6609
      %v7864 = vpack.c.b16 %v6614, %v6612
      %v7865 = vpack.c.b16 %v6615, %v6613
      %v7866 = vpack.c.b16 %v6618, %v6616
      %v7867 = vpack.c.b16 %v6619, %v6617
      %v7868 = vpack.c.b16 %v6622, %v6620
      %v7869 = vpack.c.b16 %v6623, %v6621
      %v7870 = vpack.c.b16 %v6626, %v6624
      %v7871 = vpack.c.b16 %v6627, %v6625
      %v7872 = vpack.c.b16 %v6630, %v6628
      %v7873 = vpack.c.b16 %v6631, %v6629
      %v7874 = vpack.c.b16 %v6634, %v6632
      %v7875 = vpack.c.b16 %v6635, %v6633
      %v7876 = vpack.c.b16 %v6638, %v6636
      %v7877 = vpack.c.b16 %v6639, %v6637
      %v7878 = vpack.c.b16 %v6642, %v6640
      %v7879 = vpack.c.b16 %v6643, %v6641
      %v7880 = vpack.c.b16 %v6646, %v6644
      %v7881 = vpack.c.b16 %v6647, %v6645
      %v7882 = vpack.c.b16 %v6650, %v6648
      %v7883 = vpack.c.b16 %v6651, %v6649
      %9116 = vmatprep.subr.bf16.mxu0 %v6667
      %9117 = vmatpush1.bf16.msra.mxu0 %v6666
      %9118 = vmatprep.subr.bf16.mxu0 %v6665
      %9119 = vmatpush1.bf16.msra.mxu0 %v6664
      %9120 = vmatprep.subr.bf16.mxu0 %v6663
      %9121 = vmatpush1.bf16.msra.mxu0 %v6662
      %9122 = vmatprep.subr.bf16.mxu0 %v6661
      %9123 = vmatpush1.bf16.msra.mxu0 %v6660
      %9124 = vmatprep.subr.bf16.mxu0 %v6659
      %9125 = vmatpush1.bf16.msra.mxu0 %v6658
      %9126 = vmatprep.subr.bf16.mxu0 %v6657
      %9127 = vmatpush1.bf16.msra.mxu0 %v6656
      %9128 = vmatprep.subr.bf16.mxu0 %v6655
      %9129 = vmatpush1.bf16.msra.mxu0 %v6654
      %9130 = vmatprep.subr.bf16.mxu0 %v6653
      %9131 = vmatpush1.bf16.msra.mxu0 %v6652
      %9132 = vmatprep.subr.bf16.mxu0 %v6683
      %9133 = vmatpush2.bf16.msra.mxu0 %v6682
      %9134 = vmatprep.subr.bf16.mxu0 %v6681
      %9135 = vmatpush2.bf16.msra.mxu0 %v6680
      %9136 = vmatprep.subr.bf16.mxu0 %v6679
      %9137 = vmatpush2.bf16.msra.mxu0 %v6678
      %9138 = vmatprep.subr.bf16.mxu0 %v6677
      %9139 = vmatpush2.bf16.msra.mxu0 %v6676
      %9140 = vmatprep.subr.bf16.mxu0 %v6675
      %9141 = vmatpush2.bf16.msra.mxu0 %v6674
      %9142 = vmatprep.subr.bf16.mxu0 %v6673
      %9143 = vmatpush2.bf16.msra.mxu0 %v6672
      %9144 = vmatprep.subr.bf16.mxu0 %v6671
      %9145 = vmatpush2.bf16.msra.mxu0 %v6670
      %9146 = vmatprep.subr.bf16.mxu0 %v6669
      %9147 = vmatpush2.bf16.msra.mxu0 %v6668
      %9148 = vmatprep.mubr.bf16.mxu0 %v1648
      %9149 = vmatmul.mubr.bf16.gmra.mxu0 %v1647
      %v9150 = vpop.f32.mrf.mxu0
      %v9151 = vadd.f32 0.0, %v9150
      %v9152 = vpop.f32.mrf.mxu0
      %v9153 = vadd.f32 0.0, %v9152
      %v9154 = vpop.f32.mrf.mxu0
      %v9155 = vpop.f32.mrf.mxu0
      %9156 = vdwg.mxu0
      %9157 = vmatprep.subr.bf16.mxu0 %v6699
      %9158 = vmatpush1.bf16.msra.mxu0 %v6698
      %9159 = vmatprep.subr.bf16.mxu0 %v6697
      %9160 = vmatpush1.bf16.msra.mxu0 %v6696
      %9161 = vmatprep.subr.bf16.mxu0 %v6695
      %9162 = vmatpush1.bf16.msra.mxu0 %v6694
      %9163 = vmatprep.subr.bf16.mxu0 %v6693
      %9164 = vmatpush1.bf16.msra.mxu0 %v6692
      %9165 = vmatprep.subr.bf16.mxu0 %v6691
      %9166 = vmatpush1.bf16.msra.mxu0 %v6690
      %9167 = vmatprep.subr.bf16.mxu0 %v6689
      %9168 = vmatpush1.bf16.msra.mxu0 %v6688
      %9169 = vmatprep.subr.bf16.mxu0 %v6687
      %9170 = vmatpush1.bf16.msra.mxu0 %v6686
      %9171 = vmatprep.subr.bf16.mxu0 %v6685
      %9172 = vmatpush1.bf16.msra.mxu0 %v6684
      %9173 = vmatprep.subr.bf16.mxu0 %v6715
      %9174 = vmatpush2.bf16.msra.mxu0 %v6714
      %9175 = vmatprep.subr.bf16.mxu0 %v6713
      %9176 = vmatpush2.bf16.msra.mxu0 %v6712
      %9177 = vmatprep.subr.bf16.mxu0 %v6711
      %9178 = vmatpush2.bf16.msra.mxu0 %v6710
      %9179 = vmatprep.subr.bf16.mxu0 %v6709
      %9180 = vmatpush2.bf16.msra.mxu0 %v6708
      %9181 = vmatprep.subr.bf16.mxu0 %v6707
      %9182 = vmatpush2.bf16.msra.mxu0 %v6706
      %9183 = vmatprep.subr.bf16.mxu0 %v6705
      %9184 = vmatpush2.bf16.msra.mxu0 %v6704
      %9185 = vmatprep.subr.bf16.mxu0 %v6703
      %9186 = vmatpush2.bf16.msra.mxu0 %v6702
      %9187 = vmatprep.subr.bf16.mxu0 %v6701
      %9188 = vmatpush2.bf16.msra.mxu0 %v6700
      %9189 = vmatprep.mubr.bf16.mxu0 %v1650
      %9190 = vmatmul.mubr.bf16.gmra.mxu0 %v1649
      %v9191 = vpop.f32.mrf.mxu0
      %v9192 = vadd.f32 %v9151, %v9191
      %v9193 = vpop.f32.mrf.mxu0
      %v9194 = vadd.f32 %v9153, %v9193
      %v9195 = vpop.f32.mrf.mxu0
      %v9196 = vpop.f32.mrf.mxu0
      %9197 = vdwg.mxu0
      %9198 = vmatprep.subr.bf16.mxu0 %v6731
      %9199 = vmatpush1.bf16.msra.mxu0 %v6730
      %9200 = vmatprep.subr.bf16.mxu0 %v6729
      %9201 = vmatpush1.bf16.msra.mxu0 %v6728
      %9202 = vmatprep.subr.bf16.mxu0 %v6727
      %9203 = vmatpush1.bf16.msra.mxu0 %v6726
      %9204 = vmatprep.subr.bf16.mxu0 %v6725
      %9205 = vmatpush1.bf16.msra.mxu0 %v6724
      %9206 = vmatprep.subr.bf16.mxu0 %v6723
      %9207 = vmatpush1.bf16.msra.mxu0 %v6722
      %9208 = vmatprep.subr.bf16.mxu0 %v6721
      %9209 = vmatpush1.bf16.msra.mxu0 %v6720
      %9210 = vmatprep.subr.bf16.mxu0 %v6719
      %9211 = vmatpush1.bf16.msra.mxu0 %v6718
      %9212 = vmatprep.subr.bf16.mxu0 %v6717
      %9213 = vmatpush1.bf16.msra.mxu0 %v6716
      %9214 = vmatprep.subr.bf16.mxu0 %v6747
      %9215 = vmatpush2.bf16.msra.mxu0 %v6746
      %9216 = vmatprep.subr.bf16.mxu0 %v6745
      %9217 = vmatpush2.bf16.msra.mxu0 %v6744
      %9218 = vmatprep.subr.bf16.mxu0 %v6743
      %9219 = vmatpush2.bf16.msra.mxu0 %v6742
      %9220 = vmatprep.subr.bf16.mxu0 %v6741
      %9221 = vmatpush2.bf16.msra.mxu0 %v6740
      %9222 = vmatprep.subr.bf16.mxu0 %v6739
      %9223 = vmatpush2.bf16.msra.mxu0 %v6738
      %9224 = vmatprep.subr.bf16.mxu0 %v6737
      %9225 = vmatpush2.bf16.msra.mxu0 %v6736
      %9226 = vmatprep.subr.bf16.mxu0 %v6735
      %9227 = vmatpush2.bf16.msra.mxu0 %v6734
      %9228 = vmatprep.subr.bf16.mxu0 %v6733
      %9229 = vmatpush2.bf16.msra.mxu0 %v6732
      %9230 = vmatprep.mubr.bf16.mxu0 %v1652
      %9231 = vmatmul.mubr.bf16.gmra.mxu0 %v1651
      %v9232 = vpop.f32.mrf.mxu0
      %v9233 = vadd.f32 %v9192, %v9232
      %v9234 = vpop.f32.mrf.mxu0
      %v9235 = vadd.f32 %v9194, %v9234
      %v9236 = vpop.f32.mrf.mxu0
      %v9237 = vpop.f32.mrf.mxu0
      %9238 = vdwg.mxu0
      %9239 = vmatprep.subr.bf16.mxu0 %v6763
      %9240 = vmatpush1.bf16.msra.mxu0 %v6762
      %9241 = vmatprep.subr.bf16.mxu0 %v6761
      %9242 = vmatpush1.bf16.msra.mxu0 %v6760
      %9243 = vmatprep.subr.bf16.mxu0 %v6759
      %9244 = vmatpush1.bf16.msra.mxu0 %v6758
      %9245 = vmatprep.subr.bf16.mxu0 %v6757
      %9246 = vmatpush1.bf16.msra.mxu0 %v6756
      %9247 = vmatprep.subr.bf16.mxu0 %v6755
      %9248 = vmatpush1.bf16.msra.mxu0 %v6754
      %9249 = vmatprep.subr.bf16.mxu0 %v6753
      %9250 = vmatpush1.bf16.msra.mxu0 %v6752
      %9251 = vmatprep.subr.bf16.mxu0 %v6751
      %9252 = vmatpush1.bf16.msra.mxu0 %v6750
      %9253 = vmatprep.subr.bf16.mxu0 %v6749
      %9254 = vmatpush1.bf16.msra.mxu0 %v6748
      %9255 = vmatprep.subr.bf16.mxu0 %v6779
      %9256 = vmatpush2.bf16.msra.mxu0 %v6778
      %9257 = vmatprep.subr.bf16.mxu0 %v6777
      %9258 = vmatpush2.bf16.msra.mxu0 %v6776
      %9259 = vmatprep.subr.bf16.mxu0 %v6775
      %9260 = vmatpush2.bf16.msra.mxu0 %v6774
      %9261 = vmatprep.subr.bf16.mxu0 %v6773
      %9262 = vmatpush2.bf16.msra.mxu0 %v6772
      %9263 = vmatprep.subr.bf16.mxu0 %v6771
      %9264 = vmatpush2.bf16.msra.mxu0 %v6770
      %9265 = vmatprep.subr.bf16.mxu0 %v6769
      %9266 = vmatpush2.bf16.msra.mxu0 %v6768
      %9267 = vmatprep.subr.bf16.mxu0 %v6767
      %9268 = vmatpush2.bf16.msra.mxu0 %v6766
      %9269 = vmatprep.subr.bf16.mxu0 %v6765
      %9270 = vmatpush2.bf16.msra.mxu0 %v6764
      %9271 = vmatprep.mubr.bf16.mxu0 %v1654
      %9272 = vmatmul.mubr.bf16.gmra.mxu0 %v1653
      %v9273 = vpop.f32.mrf.mxu0
      %v9274 = vadd.f32 %v9233, %v9273
      %v9275 = vpop.f32.mrf.mxu0
      %v9276 = vadd.f32 %v9235, %v9275
      %v9277 = vpop.f32.mrf.mxu0
      %v9278 = vpop.f32.mrf.mxu0
      %9279 = vdwg.mxu0
      %9280 = vmatprep.subr.bf16.mxu0 %v6795
      %9281 = vmatpush1.bf16.msra.mxu0 %v6794
      %9282 = vmatprep.subr.bf16.mxu0 %v6793
      %9283 = vmatpush1.bf16.msra.mxu0 %v6792
      %9284 = vmatprep.subr.bf16.mxu0 %v6791
      %9285 = vmatpush1.bf16.msra.mxu0 %v6790
      %9286 = vmatprep.subr.bf16.mxu0 %v6789
      %9287 = vmatpush1.bf16.msra.mxu0 %v6788
      %9288 = vmatprep.subr.bf16.mxu0 %v6787
      %9289 = vmatpush1.bf16.msra.mxu0 %v6786
      %9290 = vmatprep.subr.bf16.mxu0 %v6785
      %9291 = vmatpush1.bf16.msra.mxu0 %v6784
      %9292 = vmatprep.subr.bf16.mxu0 %v6783
      %9293 = vmatpush1.bf16.msra.mxu0 %v6782
      %9294 = vmatprep.subr.bf16.mxu0 %v6781
      %9295 = vmatpush1.bf16.msra.mxu0 %v6780
      %9296 = vmatprep.subr.bf16.mxu0 %v6811
      %9297 = vmatpush2.bf16.msra.mxu0 %v6810
      %9298 = vmatprep.subr.bf16.mxu0 %v6809
      %9299 = vmatpush2.bf16.msra.mxu0 %v6808
      %9300 = vmatprep.subr.bf16.mxu0 %v6807
      %9301 = vmatpush2.bf16.msra.mxu0 %v6806
      %9302 = vmatprep.subr.bf16.mxu0 %v6805
      %9303 = vmatpush2.bf16.msra.mxu0 %v6804
      %9304 = vmatprep.subr.bf16.mxu0 %v6803
      %9305 = vmatpush2.bf16.msra.mxu0 %v6802
      %9306 = vmatprep.subr.bf16.mxu0 %v6801
      %9307 = vmatpush2.bf16.msra.mxu0 %v6800
      %9308 = vmatprep.subr.bf16.mxu0 %v6799
      %9309 = vmatpush2.bf16.msra.mxu0 %v6798
      %9310 = vmatprep.subr.bf16.mxu0 %v6797
      %9311 = vmatpush2.bf16.msra.mxu0 %v6796
      %9312 = vmatprep.mubr.bf16.mxu0 %v1656
      %9313 = vmatmul.mubr.bf16.gmra.mxu0 %v1655
      %v9314 = vpop.f32.mrf.mxu0
      %v9315 = vadd.f32 %v9274, %v9314
      %v9316 = vpop.f32.mrf.mxu0
      %v9317 = vadd.f32 %v9276, %v9316
      %v9318 = vpop.f32.mrf.mxu0
      %v9319 = vpop.f32.mrf.mxu0
      %9320 = vdwg.mxu0
      %9321 = vmatprep.subr.bf16.mxu0 %v6827
      %9322 = vmatpush1.bf16.msra.mxu0 %v6826
      %9323 = vmatprep.subr.bf16.mxu0 %v6825
      %9324 = vmatpush1.bf16.msra.mxu0 %v6824
      %9325 = vmatprep.subr.bf16.mxu0 %v6823
      %9326 = vmatpush1.bf16.msra.mxu0 %v6822
      %9327 = vmatprep.subr.bf16.mxu0 %v6821
      %9328 = vmatpush1.bf16.msra.mxu0 %v6820
      %9329 = vmatprep.subr.bf16.mxu0 %v6819
      %9330 = vmatpush1.bf16.msra.mxu0 %v6818
      %9331 = vmatprep.subr.bf16.mxu0 %v6817
      %9332 = vmatpush1.bf16.msra.mxu0 %v6816
      %9333 = vmatprep.subr.bf16.mxu0 %v6815
      %9334 = vmatpush1.bf16.msra.mxu0 %v6814
      %9335 = vmatprep.subr.bf16.mxu0 %v6813
      %9336 = vmatpush1.bf16.msra.mxu0 %v6812
      %9337 = vmatprep.subr.bf16.mxu0 %v6843
      %9338 = vmatpush2.bf16.msra.mxu0 %v6842
      %9339 = vmatprep.subr.bf16.mxu0 %v6841
      %9340 = vmatpush2.bf16.msra.mxu0 %v6840
      %9341 = vmatprep.subr.bf16.mxu0 %v6839
      %9342 = vmatpush2.bf16.msra.mxu0 %v6838
      %9343 = vmatprep.subr.bf16.mxu0 %v6837
      %9344 = vmatpush2.bf16.msra.mxu0 %v6836
      %9345 = vmatprep.subr.bf16.mxu0 %v6835
      %9346 = vmatpush2.bf16.msra.mxu0 %v6834
      %9347 = vmatprep.subr.bf16.mxu0 %v6833
      %9348 = vmatpush2.bf16.msra.mxu0 %v6832
      %9349 = vmatprep.subr.bf16.mxu0 %v6831
      %9350 = vmatpush2.bf16.msra.mxu0 %v6830
      %9351 = vmatprep.subr.bf16.mxu0 %v6829
      %9352 = vmatpush2.bf16.msra.mxu0 %v6828
      %9353 = vmatprep.mubr.bf16.mxu0 %v1658
      %9354 = vmatmul.mubr.bf16.gmra.mxu0 %v1657
      %v9355 = vpop.f32.mrf.mxu0
      %v9356 = vadd.f32 %v9315, %v9355
      %v9357 = vpop.f32.mrf.mxu0
      %v9358 = vadd.f32 %v9317, %v9357
      %v9359 = vpop.f32.mrf.mxu0
      %v9360 = vpop.f32.mrf.mxu0
      %9361 = vdwg.mxu0
      %9362 = vmatprep.subr.bf16.mxu0 %v6859
      %9363 = vmatpush1.bf16.msra.mxu0 %v6858
      %9364 = vmatprep.subr.bf16.mxu0 %v6857
      %9365 = vmatpush1.bf16.msra.mxu0 %v6856
      %9366 = vmatprep.subr.bf16.mxu0 %v6855
      %9367 = vmatpush1.bf16.msra.mxu0 %v6854
      %9368 = vmatprep.subr.bf16.mxu0 %v6853
      %9369 = vmatpush1.bf16.msra.mxu0 %v6852
      %9370 = vmatprep.subr.bf16.mxu0 %v6851
      %9371 = vmatpush1.bf16.msra.mxu0 %v6850
      %9372 = vmatprep.subr.bf16.mxu0 %v6849
      %9373 = vmatpush1.bf16.msra.mxu0 %v6848
      %9374 = vmatprep.subr.bf16.mxu0 %v6847
      %9375 = vmatpush1.bf16.msra.mxu0 %v6846
      %9376 = vmatprep.subr.bf16.mxu0 %v6845
      %9377 = vmatpush1.bf16.msra.mxu0 %v6844
      %9378 = vmatprep.subr.bf16.mxu0 %v6875
      %9379 = vmatpush2.bf16.msra.mxu0 %v6874
      %9380 = vmatprep.subr.bf16.mxu0 %v6873
      %9381 = vmatpush2.bf16.msra.mxu0 %v6872
      %9382 = vmatprep.subr.bf16.mxu0 %v6871
      %9383 = vmatpush2.bf16.msra.mxu0 %v6870
      %9384 = vmatprep.subr.bf16.mxu0 %v6869
      %9385 = vmatpush2.bf16.msra.mxu0 %v6868
      %9386 = vmatprep.subr.bf16.mxu0 %v6867
      %9387 = vmatpush2.bf16.msra.mxu0 %v6866
      %9388 = vmatprep.subr.bf16.mxu0 %v6865
      %9389 = vmatpush2.bf16.msra.mxu0 %v6864
      %9390 = vmatprep.subr.bf16.mxu0 %v6863
      %9391 = vmatpush2.bf16.msra.mxu0 %v6862
      %9392 = vmatprep.subr.bf16.mxu0 %v6861
      %9393 = vmatpush2.bf16.msra.mxu0 %v6860
      %9394 = vmatprep.mubr.bf16.mxu0 %v1660
      %9395 = vmatmul.mubr.bf16.gmra.mxu0 %v1659
      %v9396 = vpop.f32.mrf.mxu0
      %v9397 = vadd.f32 %v9356, %v9396
      %v9398 = vpop.f32.mrf.mxu0
      %v9399 = vadd.f32 %v9358, %v9398
      %v9400 = vpop.f32.mrf.mxu0
      %v9401 = vpop.f32.mrf.mxu0
      %9402 = vdwg.mxu0
      %9403 = vmatprep.subr.bf16.mxu0 %v6891
      %9404 = vmatpush1.bf16.msra.mxu0 %v6890
      %9405 = vmatprep.subr.bf16.mxu0 %v6889
      %9406 = vmatpush1.bf16.msra.mxu0 %v6888
      %9407 = vmatprep.subr.bf16.mxu0 %v6887
      %9408 = vmatpush1.bf16.msra.mxu0 %v6886
      %9409 = vmatprep.subr.bf16.mxu0 %v6885
      %9410 = vmatpush1.bf16.msra.mxu0 %v6884
      %9411 = vmatprep.subr.bf16.mxu0 %v6883
      %9412 = vmatpush1.bf16.msra.mxu0 %v6882
      %9413 = vmatprep.subr.bf16.mxu0 %v6881
      %9414 = vmatpush1.bf16.msra.mxu0 %v6880
      %9415 = vmatprep.subr.bf16.mxu0 %v6879
      %9416 = vmatpush1.bf16.msra.mxu0 %v6878
      %9417 = vmatprep.subr.bf16.mxu0 %v6877
      %9418 = vmatpush1.bf16.msra.mxu0 %v6876
      %9419 = vmatprep.subr.bf16.mxu0 %v6907
      %9420 = vmatpush2.bf16.msra.mxu0 %v6906
      %9421 = vmatprep.subr.bf16.mxu0 %v6905
      %9422 = vmatpush2.bf16.msra.mxu0 %v6904
      %9423 = vmatprep.subr.bf16.mxu0 %v6903
      %9424 = vmatpush2.bf16.msra.mxu0 %v6902
      %9425 = vmatprep.subr.bf16.mxu0 %v6901
      %9426 = vmatpush2.bf16.msra.mxu0 %v6900
      %9427 = vmatprep.subr.bf16.mxu0 %v6899
      %9428 = vmatpush2.bf16.msra.mxu0 %v6898
      %9429 = vmatprep.subr.bf16.mxu0 %v6897
      %9430 = vmatpush2.bf16.msra.mxu0 %v6896
      %9431 = vmatprep.subr.bf16.mxu0 %v6895
      %9432 = vmatpush2.bf16.msra.mxu0 %v6894
      %9433 = vmatprep.subr.bf16.mxu0 %v6893
      %9434 = vmatpush2.bf16.msra.mxu0 %v6892
      %9435 = vmatprep.mubr.bf16.mxu0 %v1662
      %9436 = vmatmul.mubr.bf16.gmra.mxu0 %v1661
      %v9437 = vpop.f32.mrf.mxu0
      %v9438 = vadd.f32 %v9397, %v9437
      %v9439 = vpop.f32.mrf.mxu0
      %v9440 = vadd.f32 %v9399, %v9439
      %v9441 = vpop.f32.mrf.mxu0
      %v9442 = vpop.f32.mrf.mxu0
      %9443 = vdwg.mxu0
      %9444 = vmatprep.subr.bf16.mxu0 %v6923
      %9445 = vmatpush1.bf16.msra.mxu0 %v6922
      %9446 = vmatprep.subr.bf16.mxu0 %v6921
      %9447 = vmatpush1.bf16.msra.mxu0 %v6920
      %9448 = vmatprep.subr.bf16.mxu0 %v6919
      %9449 = vmatpush1.bf16.msra.mxu0 %v6918
      %9450 = vmatprep.subr.bf16.mxu0 %v6917
      %9451 = vmatpush1.bf16.msra.mxu0 %v6916
      %9452 = vmatprep.subr.bf16.mxu0 %v6915
      %9453 = vmatpush1.bf16.msra.mxu0 %v6914
      %9454 = vmatprep.subr.bf16.mxu0 %v6913
      %9455 = vmatpush1.bf16.msra.mxu0 %v6912
      %9456 = vmatprep.subr.bf16.mxu0 %v6911
      %9457 = vmatpush1.bf16.msra.mxu0 %v6910
      %9458 = vmatprep.subr.bf16.mxu0 %v6909
      %9459 = vmatpush1.bf16.msra.mxu0 %v6908
      %9460 = vmatprep.subr.bf16.mxu0 %v6939
      %9461 = vmatpush2.bf16.msra.mxu0 %v6938
      %9462 = vmatprep.subr.bf16.mxu0 %v6937
      %9463 = vmatpush2.bf16.msra.mxu0 %v6936
      %9464 = vmatprep.subr.bf16.mxu0 %v6935
      %9465 = vmatpush2.bf16.msra.mxu0 %v6934
      %9466 = vmatprep.subr.bf16.mxu0 %v6933
      %9467 = vmatpush2.bf16.msra.mxu0 %v6932
      %9468 = vmatprep.subr.bf16.mxu0 %v6931
      %9469 = vmatpush2.bf16.msra.mxu0 %v6930
      %9470 = vmatprep.subr.bf16.mxu0 %v6929
      %9471 = vmatpush2.bf16.msra.mxu0 %v6928
      %9472 = vmatprep.subr.bf16.mxu0 %v6927
      %9473 = vmatpush2.bf16.msra.mxu0 %v6926
      %9474 = vmatprep.subr.bf16.mxu0 %v6925
      %9475 = vmatpush2.bf16.msra.mxu0 %v6924
      %9476 = vmatprep.mubr.bf16.mxu0 %v1664
      %9477 = vmatmul.mubr.bf16.gmra.mxu0 %v1663
      %v9478 = vpop.f32.mrf.mxu0
      %v9479 = vadd.f32 %v9438, %v9478
      %v9480 = vpop.f32.mrf.mxu0
      %v9481 = vadd.f32 %v9440, %v9480
      %v9482 = vpop.f32.mrf.mxu0
      %v9483 = vpop.f32.mrf.mxu0
      %9484 = vdwg.mxu0
      %9485 = vmatprep.subr.bf16.mxu0 %v6955
      %9486 = vmatpush1.bf16.msra.mxu0 %v6954
      %9487 = vmatprep.subr.bf16.mxu0 %v6953
      %9488 = vmatpush1.bf16.msra.mxu0 %v6952
      %9489 = vmatprep.subr.bf16.mxu0 %v6951
      %9490 = vmatpush1.bf16.msra.mxu0 %v6950
      %9491 = vmatprep.subr.bf16.mxu0 %v6949
      %9492 = vmatpush1.bf16.msra.mxu0 %v6948
      %9493 = vmatprep.subr.bf16.mxu0 %v6947
      %9494 = vmatpush1.bf16.msra.mxu0 %v6946
      %9495 = vmatprep.subr.bf16.mxu0 %v6945
      %9496 = vmatpush1.bf16.msra.mxu0 %v6944
      %9497 = vmatprep.subr.bf16.mxu0 %v6943
      %9498 = vmatpush1.bf16.msra.mxu0 %v6942
      %9499 = vmatprep.subr.bf16.mxu0 %v6941
      %9500 = vmatpush1.bf16.msra.mxu0 %v6940
      %9501 = vmatprep.subr.bf16.mxu0 %v6971
      %9502 = vmatpush2.bf16.msra.mxu0 %v6970
      %9503 = vmatprep.subr.bf16.mxu0 %v6969
      %9504 = vmatpush2.bf16.msra.mxu0 %v6968
      %9505 = vmatprep.subr.bf16.mxu0 %v6967
      %9506 = vmatpush2.bf16.msra.mxu0 %v6966
      %9507 = vmatprep.subr.bf16.mxu0 %v6965
      %9508 = vmatpush2.bf16.msra.mxu0 %v6964
      %9509 = vmatprep.subr.bf16.mxu0 %v6963
      %9510 = vmatpush2.bf16.msra.mxu0 %v6962
      %9511 = vmatprep.subr.bf16.mxu0 %v6961
      %9512 = vmatpush2.bf16.msra.mxu0 %v6960
      %9513 = vmatprep.subr.bf16.mxu0 %v6959
      %9514 = vmatpush2.bf16.msra.mxu0 %v6958
      %9515 = vmatprep.subr.bf16.mxu0 %v6957
      %9516 = vmatpush2.bf16.msra.mxu0 %v6956
      %9517 = vmatprep.mubr.bf16.mxu0 %v1666
      %9518 = vmatmul.mubr.bf16.gmra.mxu0 %v1665
      %v9519 = vpop.f32.mrf.mxu0
      %v9520 = vadd.f32 %v9479, %v9519
      %v9521 = vpop.f32.mrf.mxu0
      %v9522 = vadd.f32 %v9481, %v9521
      %v9523 = vpop.f32.mrf.mxu0
      %v9524 = vpop.f32.mrf.mxu0
      %9525 = vdwg.mxu0
      %9526 = vmatprep.subr.bf16.mxu0 %v6987
      %9527 = vmatpush1.bf16.msra.mxu0 %v6986
      %9528 = vmatprep.subr.bf16.mxu0 %v6985
      %9529 = vmatpush1.bf16.msra.mxu0 %v6984
      %9530 = vmatprep.subr.bf16.mxu0 %v6983
      %9531 = vmatpush1.bf16.msra.mxu0 %v6982
      %9532 = vmatprep.subr.bf16.mxu0 %v6981
      %9533 = vmatpush1.bf16.msra.mxu0 %v6980
      %9534 = vmatprep.subr.bf16.mxu0 %v6979
      %9535 = vmatpush1.bf16.msra.mxu0 %v6978
      %9536 = vmatprep.subr.bf16.mxu0 %v6977
      %9537 = vmatpush1.bf16.msra.mxu0 %v6976
      %9538 = vmatprep.subr.bf16.mxu0 %v6975
      %9539 = vmatpush1.bf16.msra.mxu0 %v6974
      %9540 = vmatprep.subr.bf16.mxu0 %v6973
      %9541 = vmatpush1.bf16.msra.mxu0 %v6972
      %9542 = vmatprep.subr.bf16.mxu0 %v7003
      %9543 = vmatpush2.bf16.msra.mxu0 %v7002
      %9544 = vmatprep.subr.bf16.mxu0 %v7001
      %9545 = vmatpush2.bf16.msra.mxu0 %v7000
      %9546 = vmatprep.subr.bf16.mxu0 %v6999
      %9547 = vmatpush2.bf16.msra.mxu0 %v6998
      %9548 = vmatprep.subr.bf16.mxu0 %v6997
      %9549 = vmatpush2.bf16.msra.mxu0 %v6996
      %9550 = vmatprep.subr.bf16.mxu0 %v6995
      %9551 = vmatpush2.bf16.msra.mxu0 %v6994
      %9552 = vmatprep.subr.bf16.mxu0 %v6993
      %9553 = vmatpush2.bf16.msra.mxu0 %v6992
      %9554 = vmatprep.subr.bf16.mxu0 %v6991
      %9555 = vmatpush2.bf16.msra.mxu0 %v6990
      %9556 = vmatprep.subr.bf16.mxu0 %v6989
      %9557 = vmatpush2.bf16.msra.mxu0 %v6988
      %9558 = vmatprep.mubr.bf16.mxu0 %v1668
      %9559 = vmatmul.mubr.bf16.gmra.mxu0 %v1667
      %v9560 = vpop.f32.mrf.mxu0
      %v9561 = vadd.f32 %v9520, %v9560
      %v9562 = vpop.f32.mrf.mxu0
      %v9563 = vadd.f32 %v9522, %v9562
      %v9564 = vpop.f32.mrf.mxu0
      %v9565 = vpop.f32.mrf.mxu0
      %9566 = vdwg.mxu0
      %9567 = vmatprep.subr.bf16.mxu0 %v7019
      %9568 = vmatpush1.bf16.msra.mxu0 %v7018
      %9569 = vmatprep.subr.bf16.mxu0 %v7017
      %9570 = vmatpush1.bf16.msra.mxu0 %v7016
      %9571 = vmatprep.subr.bf16.mxu0 %v7015
      %9572 = vmatpush1.bf16.msra.mxu0 %v7014
      %9573 = vmatprep.subr.bf16.mxu0 %v7013
      %9574 = vmatpush1.bf16.msra.mxu0 %v7012
      %9575 = vmatprep.subr.bf16.mxu0 %v7011
      %9576 = vmatpush1.bf16.msra.mxu0 %v7010
      %9577 = vmatprep.subr.bf16.mxu0 %v7009
      %9578 = vmatpush1.bf16.msra.mxu0 %v7008
      %9579 = vmatprep.subr.bf16.mxu0 %v7007
      %9580 = vmatpush1.bf16.msra.mxu0 %v7006
      %9581 = vmatprep.subr.bf16.mxu0 %v7005
      %9582 = vmatpush1.bf16.msra.mxu0 %v7004
      %9583 = vmatprep.subr.bf16.mxu0 %v7035
      %9584 = vmatpush2.bf16.msra.mxu0 %v7034
      %9585 = vmatprep.subr.bf16.mxu0 %v7033
      %9586 = vmatpush2.bf16.msra.mxu0 %v7032
      %9587 = vmatprep.subr.bf16.mxu0 %v7031
      %9588 = vmatpush2.bf16.msra.mxu0 %v7030
      %9589 = vmatprep.subr.bf16.mxu0 %v7029
      %9590 = vmatpush2.bf16.msra.mxu0 %v7028
      %9591 = vmatprep.subr.bf16.mxu0 %v7027
      %9592 = vmatpush2.bf16.msra.mxu0 %v7026
      %9593 = vmatprep.subr.bf16.mxu0 %v7025
      %9594 = vmatpush2.bf16.msra.mxu0 %v7024
      %9595 = vmatprep.subr.bf16.mxu0 %v7023
      %9596 = vmatpush2.bf16.msra.mxu0 %v7022
      %9597 = vmatprep.subr.bf16.mxu0 %v7021
      %9598 = vmatpush2.bf16.msra.mxu0 %v7020
      %9599 = vmatprep.mubr.bf16.mxu0 %v1670
      %9600 = vmatmul.mubr.bf16.gmra.mxu0 %v1669
      %v9601 = vpop.f32.mrf.mxu0
      %v9602 = vadd.f32 %v9561, %v9601
      %v9603 = vpop.f32.mrf.mxu0
      %v9604 = vadd.f32 %v9563, %v9603
      %v9605 = vpop.f32.mrf.mxu0
      %v9606 = vpop.f32.mrf.mxu0
      %9607 = vdwg.mxu0
      %9608 = vmatprep.subr.bf16.mxu0 %v7051
      %9609 = vmatpush1.bf16.msra.mxu0 %v7050
      %9610 = vmatprep.subr.bf16.mxu0 %v7049
      %9611 = vmatpush1.bf16.msra.mxu0 %v7048
      %9612 = vmatprep.subr.bf16.mxu0 %v7047
      %9613 = vmatpush1.bf16.msra.mxu0 %v7046
      %9614 = vmatprep.subr.bf16.mxu0 %v7045
      %9615 = vmatpush1.bf16.msra.mxu0 %v7044
      %9616 = vmatprep.subr.bf16.mxu0 %v7043
      %9617 = vmatpush1.bf16.msra.mxu0 %v7042
      %9618 = vmatprep.subr.bf16.mxu0 %v7041
      %9619 = vmatpush1.bf16.msra.mxu0 %v7040
      %9620 = vmatprep.subr.bf16.mxu0 %v7039
      %9621 = vmatpush1.bf16.msra.mxu0 %v7038
      %9622 = vmatprep.subr.bf16.mxu0 %v7037
      %9623 = vmatpush1.bf16.msra.mxu0 %v7036
      %9624 = vmatprep.subr.bf16.mxu0 %v7067
      %9625 = vmatpush2.bf16.msra.mxu0 %v7066
      %9626 = vmatprep.subr.bf16.mxu0 %v7065
      %9627 = vmatpush2.bf16.msra.mxu0 %v7064
      %9628 = vmatprep.subr.bf16.mxu0 %v7063
      %9629 = vmatpush2.bf16.msra.mxu0 %v7062
      %9630 = vmatprep.subr.bf16.mxu0 %v7061
      %9631 = vmatpush2.bf16.msra.mxu0 %v7060
      %9632 = vmatprep.subr.bf16.mxu0 %v7059
      %9633 = vmatpush2.bf16.msra.mxu0 %v7058
      %9634 = vmatprep.subr.bf16.mxu0 %v7057
      %9635 = vmatpush2.bf16.msra.mxu0 %v7056
      %9636 = vmatprep.subr.bf16.mxu0 %v7055
      %9637 = vmatpush2.bf16.msra.mxu0 %v7054
      %9638 = vmatprep.subr.bf16.mxu0 %v7053
      %9639 = vmatpush2.bf16.msra.mxu0 %v7052
      %9640 = vmatprep.mubr.bf16.mxu0 %v1672
      %9641 = vmatmul.mubr.bf16.gmra.mxu0 %v1671
      %v9642 = vpop.f32.mrf.mxu0
      %v9643 = vadd.f32 %v9602, %v9642
      %v9644 = vpop.f32.mrf.mxu0
      %v9645 = vadd.f32 %v9604, %v9644
      %v9646 = vpop.f32.mrf.mxu0
      %v9647 = vpop.f32.mrf.mxu0
      %9648 = vdwg.mxu0
      %9649 = vmatprep.subr.bf16.mxu0 %v7083
      %9650 = vmatpush1.bf16.msra.mxu0 %v7082
      %9651 = vmatprep.subr.bf16.mxu0 %v7081
      %9652 = vmatpush1.bf16.msra.mxu0 %v7080
      %9653 = vmatprep.subr.bf16.mxu0 %v7079
      %9654 = vmatpush1.bf16.msra.mxu0 %v7078
      %9655 = vmatprep.subr.bf16.mxu0 %v7077
      %9656 = vmatpush1.bf16.msra.mxu0 %v7076
      %9657 = vmatprep.subr.bf16.mxu0 %v7075
      %9658 = vmatpush1.bf16.msra.mxu0 %v7074
      %9659 = vmatprep.subr.bf16.mxu0 %v7073
      %9660 = vmatpush1.bf16.msra.mxu0 %v7072
      %9661 = vmatprep.subr.bf16.mxu0 %v7071
      %9662 = vmatpush1.bf16.msra.mxu0 %v7070
      %9663 = vmatprep.subr.bf16.mxu0 %v7069
      %9664 = vmatpush1.bf16.msra.mxu0 %v7068
      %9665 = vmatprep.subr.bf16.mxu0 %v7099
      %9666 = vmatpush2.bf16.msra.mxu0 %v7098
      %9667 = vmatprep.subr.bf16.mxu0 %v7097
      %9668 = vmatpush2.bf16.msra.mxu0 %v7096
      %9669 = vmatprep.subr.bf16.mxu0 %v7095
      %9670 = vmatpush2.bf16.msra.mxu0 %v7094
      %9671 = vmatprep.subr.bf16.mxu0 %v7093
      %9672 = vmatpush2.bf16.msra.mxu0 %v7092
      %9673 = vmatprep.subr.bf16.mxu0 %v7091
      %9674 = vmatpush2.bf16.msra.mxu0 %v7090
      %9675 = vmatprep.subr.bf16.mxu0 %v7089
      %9676 = vmatpush2.bf16.msra.mxu0 %v7088
      %9677 = vmatprep.subr.bf16.mxu0 %v7087
      %9678 = vmatpush2.bf16.msra.mxu0 %v7086
      %9679 = vmatprep.subr.bf16.mxu0 %v7085
      %9680 = vmatpush2.bf16.msra.mxu0 %v7084
      %9681 = vmatprep.mubr.bf16.mxu0 %v1674
      %9682 = vmatmul.mubr.bf16.gmra.mxu0 %v1673
      %v9683 = vpop.f32.mrf.mxu0
      %v9684 = vadd.f32 %v9643, %v9683
      %v9685 = vpop.f32.mrf.mxu0
      %v9686 = vadd.f32 %v9645, %v9685
      %v9687 = vpop.f32.mrf.mxu0
      %v9688 = vpop.f32.mrf.mxu0
      %9689 = vdwg.mxu0
      %9690 = vmatprep.subr.bf16.mxu0 %v7115
      %9691 = vmatpush1.bf16.msra.mxu0 %v7114
      %9692 = vmatprep.subr.bf16.mxu0 %v7113
      %9693 = vmatpush1.bf16.msra.mxu0 %v7112
      %9694 = vmatprep.subr.bf16.mxu0 %v7111
      %9695 = vmatpush1.bf16.msra.mxu0 %v7110
      %9696 = vmatprep.subr.bf16.mxu0 %v7109
      %9697 = vmatpush1.bf16.msra.mxu0 %v7108
      %9698 = vmatprep.subr.bf16.mxu0 %v7107
      %9699 = vmatpush1.bf16.msra.mxu0 %v7106
      %9700 = vmatprep.subr.bf16.mxu0 %v7105
      %9701 = vmatpush1.bf16.msra.mxu0 %v7104
      %9702 = vmatprep.subr.bf16.mxu0 %v7103
      %9703 = vmatpush1.bf16.msra.mxu0 %v7102
      %9704 = vmatprep.subr.bf16.mxu0 %v7101
      %9705 = vmatpush1.bf16.msra.mxu0 %v7100
      %9706 = vmatprep.subr.bf16.mxu0 %v7131
      %9707 = vmatpush2.bf16.msra.mxu0 %v7130
      %9708 = vmatprep.subr.bf16.mxu0 %v7129
      %9709 = vmatpush2.bf16.msra.mxu0 %v7128
      %9710 = vmatprep.subr.bf16.mxu0 %v7127
      %9711 = vmatpush2.bf16.msra.mxu0 %v7126
      %9712 = vmatprep.subr.bf16.mxu0 %v7125
      %9713 = vmatpush2.bf16.msra.mxu0 %v7124
      %9714 = vmatprep.subr.bf16.mxu0 %v7123
      %9715 = vmatpush2.bf16.msra.mxu0 %v7122
      %9716 = vmatprep.subr.bf16.mxu0 %v7121
      %9717 = vmatpush2.bf16.msra.mxu0 %v7120
      %9718 = vmatprep.subr.bf16.mxu0 %v7119
      %9719 = vmatpush2.bf16.msra.mxu0 %v7118
      %9720 = vmatprep.subr.bf16.mxu0 %v7117
      %9721 = vmatpush2.bf16.msra.mxu0 %v7116
      %9722 = vmatprep.mubr.bf16.mxu0 %v1676
      %9723 = vmatmul.mubr.bf16.gmra.mxu0 %v1675
      %v9724 = vpop.f32.mrf.mxu0
      %v9725 = vadd.f32 %v9684, %v9724
      %v9726 = vpop.f32.mrf.mxu0
      %v9727 = vadd.f32 %v9686, %v9726
      %v9728 = vpop.f32.mrf.mxu0
      %v9729 = vpop.f32.mrf.mxu0
      %9730 = vdwg.mxu0
      %9731 = vmatprep.subr.bf16.mxu0 %v7147
      %9732 = vmatpush1.bf16.msra.mxu0 %v7146
      %9733 = vmatprep.subr.bf16.mxu0 %v7145
      %9734 = vmatpush1.bf16.msra.mxu0 %v7144
      %9735 = vmatprep.subr.bf16.mxu0 %v7143
      %9736 = vmatpush1.bf16.msra.mxu0 %v7142
      %9737 = vmatprep.subr.bf16.mxu0 %v7141
      %9738 = vmatpush1.bf16.msra.mxu0 %v7140
      %9739 = vmatprep.subr.bf16.mxu0 %v7139
      %9740 = vmatpush1.bf16.msra.mxu0 %v7138
      %9741 = vmatprep.subr.bf16.mxu0 %v7137
      %9742 = vmatpush1.bf16.msra.mxu0 %v7136
      %9743 = vmatprep.subr.bf16.mxu0 %v7135
      %9744 = vmatpush1.bf16.msra.mxu0 %v7134
      %9745 = vmatprep.subr.bf16.mxu0 %v7133
      %9746 = vmatpush1.bf16.msra.mxu0 %v7132
      %9747 = vmatprep.subr.bf16.mxu0 %v7163
      %9748 = vmatpush2.bf16.msra.mxu0 %v7162
      %9749 = vmatprep.subr.bf16.mxu0 %v7161
      %9750 = vmatpush2.bf16.msra.mxu0 %v7160
      %9751 = vmatprep.subr.bf16.mxu0 %v7159
      %9752 = vmatpush2.bf16.msra.mxu0 %v7158
      %9753 = vmatprep.subr.bf16.mxu0 %v7157
      %9754 = vmatpush2.bf16.msra.mxu0 %v7156
      %9755 = vmatprep.subr.bf16.mxu0 %v7155
      %9756 = vmatpush2.bf16.msra.mxu0 %v7154
      %9757 = vmatprep.subr.bf16.mxu0 %v7153
      %9758 = vmatpush2.bf16.msra.mxu0 %v7152
      %9759 = vmatprep.subr.bf16.mxu0 %v7151
      %9760 = vmatpush2.bf16.msra.mxu0 %v7150
      %9761 = vmatprep.subr.bf16.mxu0 %v7149
      %9762 = vmatpush2.bf16.msra.mxu0 %v7148
      %9763 = vmatprep.mubr.bf16.mxu0 %v1678
      %9764 = vmatmul.mubr.bf16.gmra.mxu0 %v1677
      %v9765 = vpop.f32.mrf.mxu0
      %v9766 = vadd.f32 %v9725, %v9765
      %v9767 = vpop.f32.mrf.mxu0
      %v9768 = vadd.f32 %v9727, %v9767
      %v9769 = vpop.f32.mrf.mxu0
      %v9770 = vpop.f32.mrf.mxu0
      %9771 = vdwg.mxu0
      %9772 = vmatprep.subr.bf16.mxu0 %v7179
      %9773 = vmatpush1.bf16.msra.mxu0 %v7178
      %9774 = vmatprep.subr.bf16.mxu0 %v7177
      %9775 = vmatpush1.bf16.msra.mxu0 %v7176
      %9776 = vmatprep.subr.bf16.mxu0 %v7175
      %9777 = vmatpush1.bf16.msra.mxu0 %v7174
      %9778 = vmatprep.subr.bf16.mxu0 %v7173
      %9779 = vmatpush1.bf16.msra.mxu0 %v7172
      %9780 = vmatprep.subr.bf16.mxu0 %v7171
      %9781 = vmatpush1.bf16.msra.mxu0 %v7170
      %9782 = vmatprep.subr.bf16.mxu0 %v7169
      %9783 = vmatpush1.bf16.msra.mxu0 %v7168
      %9784 = vmatprep.subr.bf16.mxu0 %v7167
      %9785 = vmatpush1.bf16.msra.mxu0 %v7166
      %9786 = vmatprep.subr.bf16.mxu0 %v7165
      %9787 = vmatpush1.bf16.msra.mxu0 %v7164
      %9788 = vmatprep.subr.bf16.mxu0 %v7195
      %9789 = vmatpush2.bf16.msra.mxu0 %v7194
      %9790 = vmatprep.subr.bf16.mxu0 %v7193
      %9791 = vmatpush2.bf16.msra.mxu0 %v7192
      %9792 = vmatprep.subr.bf16.mxu0 %v7191
      %9793 = vmatpush2.bf16.msra.mxu0 %v7190
      %9794 = vmatprep.subr.bf16.mxu0 %v7189
      %9795 = vmatpush2.bf16.msra.mxu0 %v7188
      %9796 = vmatprep.subr.bf16.mxu0 %v7187
      %9797 = vmatpush2.bf16.msra.mxu0 %v7186
      %9798 = vmatprep.subr.bf16.mxu0 %v7185
      %9799 = vmatpush2.bf16.msra.mxu0 %v7184
      %9800 = vmatprep.subr.bf16.mxu0 %v7183
      %9801 = vmatpush2.bf16.msra.mxu0 %v7182
      %9802 = vmatprep.subr.bf16.mxu0 %v7181
      %9803 = vmatpush2.bf16.msra.mxu0 %v7180
      %9804 = vmatprep.mubr.bf16.mxu0 %v1680
      %9805 = vmatmul.mubr.bf16.gmra.mxu0 %v1679
      %v9806 = vpop.f32.mrf.mxu0
      %v9807 = vadd.f32 %v9766, %v9806
      %v9808 = vpop.f32.mrf.mxu0
      %v9809 = vadd.f32 %v9768, %v9808
      %v9810 = vpop.f32.mrf.mxu0
      %v9811 = vpop.f32.mrf.mxu0
      %9812 = vdwg.mxu0
      %9813 = vmatprep.subr.bf16.mxu0 %v7211
      %9814 = vmatpush1.bf16.msra.mxu0 %v7210
      %9815 = vmatprep.subr.bf16.mxu0 %v7209
      %9816 = vmatpush1.bf16.msra.mxu0 %v7208
      %9817 = vmatprep.subr.bf16.mxu0 %v7207
      %9818 = vmatpush1.bf16.msra.mxu0 %v7206
      %9819 = vmatprep.subr.bf16.mxu0 %v7205
      %9820 = vmatpush1.bf16.msra.mxu0 %v7204
      %9821 = vmatprep.subr.bf16.mxu0 %v7203
      %9822 = vmatpush1.bf16.msra.mxu0 %v7202
      %9823 = vmatprep.subr.bf16.mxu0 %v7201
      %9824 = vmatpush1.bf16.msra.mxu0 %v7200
      %9825 = vmatprep.subr.bf16.mxu0 %v7199
      %9826 = vmatpush1.bf16.msra.mxu0 %v7198
      %9827 = vmatprep.subr.bf16.mxu0 %v7197
      %9828 = vmatpush1.bf16.msra.mxu0 %v7196
      %9829 = vmatprep.subr.bf16.mxu0 %v7227
      %9830 = vmatpush2.bf16.msra.mxu0 %v7226
      %9831 = vmatprep.subr.bf16.mxu0 %v7225
      %9832 = vmatpush2.bf16.msra.mxu0 %v7224
      %9833 = vmatprep.subr.bf16.mxu0 %v7223
      %9834 = vmatpush2.bf16.msra.mxu0 %v7222
      %9835 = vmatprep.subr.bf16.mxu0 %v7221
      %9836 = vmatpush2.bf16.msra.mxu0 %v7220
      %9837 = vmatprep.subr.bf16.mxu0 %v7219
      %9838 = vmatpush2.bf16.msra.mxu0 %v7218
      %9839 = vmatprep.subr.bf16.mxu0 %v7217
      %9840 = vmatpush2.bf16.msra.mxu0 %v7216
      %9841 = vmatprep.subr.bf16.mxu0 %v7215
      %9842 = vmatpush2.bf16.msra.mxu0 %v7214
      %9843 = vmatprep.subr.bf16.mxu0 %v7213
      %9844 = vmatpush2.bf16.msra.mxu0 %v7212
      %9845 = vmatprep.mubr.bf16.mxu0 %v1682
      %9846 = vmatmul.mubr.bf16.gmra.mxu0 %v1681
      %v9847 = vpop.f32.mrf.mxu0
      %v9848 = vadd.f32 %v9807, %v9847
      %v9849 = vpop.f32.mrf.mxu0
      %v9850 = vadd.f32 %v9809, %v9849
      %v9851 = vpop.f32.mrf.mxu0
      %v9852 = vpop.f32.mrf.mxu0
      %9853 = vdwg.mxu0
      %9854 = vmatprep.subr.bf16.mxu0 %v7243
      %9855 = vmatpush1.bf16.msra.mxu0 %v7242
      %9856 = vmatprep.subr.bf16.mxu0 %v7241
      %9857 = vmatpush1.bf16.msra.mxu0 %v7240
      %9858 = vmatprep.subr.bf16.mxu0 %v7239
      %9859 = vmatpush1.bf16.msra.mxu0 %v7238
      %9860 = vmatprep.subr.bf16.mxu0 %v7237
      %9861 = vmatpush1.bf16.msra.mxu0 %v7236
      %9862 = vmatprep.subr.bf16.mxu0 %v7235
      %9863 = vmatpush1.bf16.msra.mxu0 %v7234
      %9864 = vmatprep.subr.bf16.mxu0 %v7233
      %9865 = vmatpush1.bf16.msra.mxu0 %v7232
      %9866 = vmatprep.subr.bf16.mxu0 %v7231
      %9867 = vmatpush1.bf16.msra.mxu0 %v7230
      %9868 = vmatprep.subr.bf16.mxu0 %v7229
      %9869 = vmatpush1.bf16.msra.mxu0 %v7228
      %9870 = vmatprep.subr.bf16.mxu0 %v7259
      %9871 = vmatpush2.bf16.msra.mxu0 %v7258
      %9872 = vmatprep.subr.bf16.mxu0 %v7257
      %9873 = vmatpush2.bf16.msra.mxu0 %v7256
      %9874 = vmatprep.subr.bf16.mxu0 %v7255
      %9875 = vmatpush2.bf16.msra.mxu0 %v7254
      %9876 = vmatprep.subr.bf16.mxu0 %v7253
      %9877 = vmatpush2.bf16.msra.mxu0 %v7252
      %9878 = vmatprep.subr.bf16.mxu0 %v7251
      %9879 = vmatpush2.bf16.msra.mxu0 %v7250
      %9880 = vmatprep.subr.bf16.mxu0 %v7249
      %9881 = vmatpush2.bf16.msra.mxu0 %v7248
      %9882 = vmatprep.subr.bf16.mxu0 %v7247
      %9883 = vmatpush2.bf16.msra.mxu0 %v7246
      %9884 = vmatprep.subr.bf16.mxu0 %v7245
      %9885 = vmatpush2.bf16.msra.mxu0 %v7244
      %9886 = vmatprep.mubr.bf16.mxu0 %v1684
      %9887 = vmatmul.mubr.bf16.gmra.mxu0 %v1683
      %v9888 = vpop.f32.mrf.mxu0
      %v9889 = vadd.f32 %v9848, %v9888
      %v9890 = vpop.f32.mrf.mxu0
      %v9891 = vadd.f32 %v9850, %v9890
      %v9892 = vpop.f32.mrf.mxu0
      %v9893 = vpop.f32.mrf.mxu0
      %9894 = vdwg.mxu0
      %9895 = vmatprep.subr.bf16.mxu0 %v7275
      %9896 = vmatpush1.bf16.msra.mxu0 %v7274
      %9897 = vmatprep.subr.bf16.mxu0 %v7273
      %9898 = vmatpush1.bf16.msra.mxu0 %v7272
      %9899 = vmatprep.subr.bf16.mxu0 %v7271
      %9900 = vmatpush1.bf16.msra.mxu0 %v7270
      %9901 = vmatprep.subr.bf16.mxu0 %v7269
      %9902 = vmatpush1.bf16.msra.mxu0 %v7268
      %9903 = vmatprep.subr.bf16.mxu0 %v7267
      %9904 = vmatpush1.bf16.msra.mxu0 %v7266
      %9905 = vmatprep.subr.bf16.mxu0 %v7265
      %9906 = vmatpush1.bf16.msra.mxu0 %v7264
      %9907 = vmatprep.subr.bf16.mxu0 %v7263
      %9908 = vmatpush1.bf16.msra.mxu0 %v7262
      %9909 = vmatprep.subr.bf16.mxu0 %v7261
      %9910 = vmatpush1.bf16.msra.mxu0 %v7260
      %9911 = vmatprep.subr.bf16.mxu0 %v7291
      %9912 = vmatpush2.bf16.msra.mxu0 %v7290
      %9913 = vmatprep.subr.bf16.mxu0 %v7289
      %9914 = vmatpush2.bf16.msra.mxu0 %v7288
      %9915 = vmatprep.subr.bf16.mxu0 %v7287
      %9916 = vmatpush2.bf16.msra.mxu0 %v7286
      %9917 = vmatprep.subr.bf16.mxu0 %v7285
      %9918 = vmatpush2.bf16.msra.mxu0 %v7284
      %9919 = vmatprep.subr.bf16.mxu0 %v7283
      %9920 = vmatpush2.bf16.msra.mxu0 %v7282
      %9921 = vmatprep.subr.bf16.mxu0 %v7281
      %9922 = vmatpush2.bf16.msra.mxu0 %v7280
      %9923 = vmatprep.subr.bf16.mxu0 %v7279
      %9924 = vmatpush2.bf16.msra.mxu0 %v7278
      %9925 = vmatprep.subr.bf16.mxu0 %v7277
      %9926 = vmatpush2.bf16.msra.mxu0 %v7276
      %9927 = vmatprep.mubr.bf16.mxu0 %v1686
      %9928 = vmatmul.mubr.bf16.gmra.mxu0 %v1685
      %v9929 = vpop.f32.mrf.mxu0
      %v9930 = vadd.f32 %v9889, %v9929
      %v9931 = vpop.f32.mrf.mxu0
      %v9932 = vadd.f32 %v9891, %v9931
      %v9933 = vpop.f32.mrf.mxu0
      %v9934 = vpop.f32.mrf.mxu0
      %9935 = vdwg.mxu0
      %9936 = vmatprep.subr.bf16.mxu0 %v7307
      %9937 = vmatpush1.bf16.msra.mxu0 %v7306
      %9938 = vmatprep.subr.bf16.mxu0 %v7305
      %9939 = vmatpush1.bf16.msra.mxu0 %v7304
      %9940 = vmatprep.subr.bf16.mxu0 %v7303
      %9941 = vmatpush1.bf16.msra.mxu0 %v7302
      %9942 = vmatprep.subr.bf16.mxu0 %v7301
      %9943 = vmatpush1.bf16.msra.mxu0 %v7300
      %9944 = vmatprep.subr.bf16.mxu0 %v7299
      %9945 = vmatpush1.bf16.msra.mxu0 %v7298
      %9946 = vmatprep.subr.bf16.mxu0 %v7297
      %9947 = vmatpush1.bf16.msra.mxu0 %v7296
      %9948 = vmatprep.subr.bf16.mxu0 %v7295
      %9949 = vmatpush1.bf16.msra.mxu0 %v7294
      %9950 = vmatprep.subr.bf16.mxu0 %v7293
      %9951 = vmatpush1.bf16.msra.mxu0 %v7292
      %9952 = vmatprep.subr.bf16.mxu0 %v7323
      %9953 = vmatpush2.bf16.msra.mxu0 %v7322
      %9954 = vmatprep.subr.bf16.mxu0 %v7321
      %9955 = vmatpush2.bf16.msra.mxu0 %v7320
      %9956 = vmatprep.subr.bf16.mxu0 %v7319
      %9957 = vmatpush2.bf16.msra.mxu0 %v7318
      %9958 = vmatprep.subr.bf16.mxu0 %v7317
      %9959 = vmatpush2.bf16.msra.mxu0 %v7316
      %9960 = vmatprep.subr.bf16.mxu0 %v7315
      %9961 = vmatpush2.bf16.msra.mxu0 %v7314
      %9962 = vmatprep.subr.bf16.mxu0 %v7313
      %9963 = vmatpush2.bf16.msra.mxu0 %v7312
      %9964 = vmatprep.subr.bf16.mxu0 %v7311
      %9965 = vmatpush2.bf16.msra.mxu0 %v7310
      %9966 = vmatprep.subr.bf16.mxu0 %v7309
      %9967 = vmatpush2.bf16.msra.mxu0 %v7308
      %9968 = vmatprep.mubr.bf16.mxu0 %v1688
      %9969 = vmatmul.mubr.bf16.gmra.mxu0 %v1687
      %v9970 = vpop.f32.mrf.mxu0
      %v9971 = vadd.f32 %v9930, %v9970
      %v9972 = vpop.f32.mrf.mxu0
      %v9973 = vadd.f32 %v9932, %v9972
      %v9974 = vpop.f32.mrf.mxu0
      %v9975 = vpop.f32.mrf.mxu0
      %9976 = vdwg.mxu0
      %9977 = vmatprep.subr.bf16.mxu0 %v7339
      %9978 = vmatpush1.bf16.msra.mxu0 %v7338
      %9979 = vmatprep.subr.bf16.mxu0 %v7337
      %9980 = vmatpush1.bf16.msra.mxu0 %v7336
      %9981 = vmatprep.subr.bf16.mxu0 %v7335
      %9982 = vmatpush1.bf16.msra.mxu0 %v7334
      %9983 = vmatprep.subr.bf16.mxu0 %v7333
      %9984 = vmatpush1.bf16.msra.mxu0 %v7332
      %9985 = vmatprep.subr.bf16.mxu0 %v7331
      %9986 = vmatpush1.bf16.msra.mxu0 %v7330
      %9987 = vmatprep.subr.bf16.mxu0 %v7329
      %9988 = vmatpush1.bf16.msra.mxu0 %v7328
      %9989 = vmatprep.subr.bf16.mxu0 %v7327
      %9990 = vmatpush1.bf16.msra.mxu0 %v7326
      %9991 = vmatprep.subr.bf16.mxu0 %v7325
      %9992 = vmatpush1.bf16.msra.mxu0 %v7324
      %9993 = vmatprep.subr.bf16.mxu0 %v7355
      %9994 = vmatpush2.bf16.msra.mxu0 %v7354
      %9995 = vmatprep.subr.bf16.mxu0 %v7353
      %9996 = vmatpush2.bf16.msra.mxu0 %v7352
      %9997 = vmatprep.subr.bf16.mxu0 %v7351
      %9998 = vmatpush2.bf16.msra.mxu0 %v7350
      %9999 = vmatprep.subr.bf16.mxu0 %v7349
      %10000 = vmatpush2.bf16.msra.mxu0 %v7348
      %10001 = vmatprep.subr.bf16.mxu0 %v7347
      %10002 = vmatpush2.bf16.msra.mxu0 %v7346
      %10003 = vmatprep.subr.bf16.mxu0 %v7345
      %10004 = vmatpush2.bf16.msra.mxu0 %v7344
      %10005 = vmatprep.subr.bf16.mxu0 %v7343
      %10006 = vmatpush2.bf16.msra.mxu0 %v7342
      %10007 = vmatprep.subr.bf16.mxu0 %v7341
      %10008 = vmatpush2.bf16.msra.mxu0 %v7340
      %10009 = vmatprep.mubr.bf16.mxu0 %v1690
      %10010 = vmatmul.mubr.bf16.gmra.mxu0 %v1689
      %v10011 = vpop.f32.mrf.mxu0
      %v10012 = vadd.f32 %v9971, %v10011
      %v10013 = vpop.f32.mrf.mxu0
      %v10014 = vadd.f32 %v9973, %v10013
      %v10015 = vpop.f32.mrf.mxu0
      %v10016 = vpop.f32.mrf.mxu0
      %10017 = vdwg.mxu0
      %10018 = vmatprep.subr.bf16.mxu0 %v7371
      %10019 = vmatpush1.bf16.msra.mxu0 %v7370
      %10020 = vmatprep.subr.bf16.mxu0 %v7369
      %10021 = vmatpush1.bf16.msra.mxu0 %v7368
      %10022 = vmatprep.subr.bf16.mxu0 %v7367
      %10023 = vmatpush1.bf16.msra.mxu0 %v7366
      %10024 = vmatprep.subr.bf16.mxu0 %v7365
      %10025 = vmatpush1.bf16.msra.mxu0 %v7364
      %10026 = vmatprep.subr.bf16.mxu0 %v7363
      %10027 = vmatpush1.bf16.msra.mxu0 %v7362
      %10028 = vmatprep.subr.bf16.mxu0 %v7361
      %10029 = vmatpush1.bf16.msra.mxu0 %v7360
      %10030 = vmatprep.subr.bf16.mxu0 %v7359
      %10031 = vmatpush1.bf16.msra.mxu0 %v7358
      %10032 = vmatprep.subr.bf16.mxu0 %v7357
      %10033 = vmatpush1.bf16.msra.mxu0 %v7356
      %10034 = vmatprep.subr.bf16.mxu0 %v7387
      %10035 = vmatpush2.bf16.msra.mxu0 %v7386
      %10036 = vmatprep.subr.bf16.mxu0 %v7385
      %10037 = vmatpush2.bf16.msra.mxu0 %v7384
      %10038 = vmatprep.subr.bf16.mxu0 %v7383
      %10039 = vmatpush2.bf16.msra.mxu0 %v7382
      %10040 = vmatprep.subr.bf16.mxu0 %v7381
      %10041 = vmatpush2.bf16.msra.mxu0 %v7380
      %10042 = vmatprep.subr.bf16.mxu0 %v7379
      %10043 = vmatpush2.bf16.msra.mxu0 %v7378
      %10044 = vmatprep.subr.bf16.mxu0 %v7377
      %10045 = vmatpush2.bf16.msra.mxu0 %v7376
      %10046 = vmatprep.subr.bf16.mxu0 %v7375
      %10047 = vmatpush2.bf16.msra.mxu0 %v7374
      %10048 = vmatprep.subr.bf16.mxu0 %v7373
      %10049 = vmatpush2.bf16.msra.mxu0 %v7372
      %10050 = vmatprep.mubr.bf16.mxu0 %v1692
      %10051 = vmatmul.mubr.bf16.gmra.mxu0 %v1691
      %v10052 = vpop.f32.mrf.mxu0
      %v10053 = vadd.f32 %v10012, %v10052
      %v10054 = vpop.f32.mrf.mxu0
      %v10055 = vadd.f32 %v10014, %v10054
      %v10056 = vpop.f32.mrf.mxu0
      %v10057 = vpop.f32.mrf.mxu0
      %10058 = vdwg.mxu0
      %10059 = vmatprep.subr.bf16.mxu0 %v7403
      %10060 = vmatpush1.bf16.msra.mxu0 %v7402
      %10061 = vmatprep.subr.bf16.mxu0 %v7401
      %10062 = vmatpush1.bf16.msra.mxu0 %v7400
      %10063 = vmatprep.subr.bf16.mxu0 %v7399
      %10064 = vmatpush1.bf16.msra.mxu0 %v7398
      %10065 = vmatprep.subr.bf16.mxu0 %v7397
      %10066 = vmatpush1.bf16.msra.mxu0 %v7396
      %10067 = vmatprep.subr.bf16.mxu0 %v7395
      %10068 = vmatpush1.bf16.msra.mxu0 %v7394
      %10069 = vmatprep.subr.bf16.mxu0 %v7393
      %10070 = vmatpush1.bf16.msra.mxu0 %v7392
      %10071 = vmatprep.subr.bf16.mxu0 %v7391
      %10072 = vmatpush1.bf16.msra.mxu0 %v7390
      %10073 = vmatprep.subr.bf16.mxu0 %v7389
      %10074 = vmatpush1.bf16.msra.mxu0 %v7388
      %10075 = vmatprep.subr.bf16.mxu0 %v7419
      %10076 = vmatpush2.bf16.msra.mxu0 %v7418
      %10077 = vmatprep.subr.bf16.mxu0 %v7417
      %10078 = vmatpush2.bf16.msra.mxu0 %v7416
      %10079 = vmatprep.subr.bf16.mxu0 %v7415
      %10080 = vmatpush2.bf16.msra.mxu0 %v7414
      %10081 = vmatprep.subr.bf16.mxu0 %v7413
      %10082 = vmatpush2.bf16.msra.mxu0 %v7412
      %10083 = vmatprep.subr.bf16.mxu0 %v7411
      %10084 = vmatpush2.bf16.msra.mxu0 %v7410
      %10085 = vmatprep.subr.bf16.mxu0 %v7409
      %10086 = vmatpush2.bf16.msra.mxu0 %v7408
      %10087 = vmatprep.subr.bf16.mxu0 %v7407
      %10088 = vmatpush2.bf16.msra.mxu0 %v7406
      %10089 = vmatprep.subr.bf16.mxu0 %v7405
      %10090 = vmatpush2.bf16.msra.mxu0 %v7404
      %10091 = vmatprep.mubr.bf16.mxu0 %v1694
      %10092 = vmatmul.mubr.bf16.gmra.mxu0 %v1693
      %v10093 = vpop.f32.mrf.mxu0
      %v10094 = vadd.f32 %v10053, %v10093
      %v10095 = vpop.f32.mrf.mxu0
      %v10096 = vadd.f32 %v10055, %v10095
      %v10097 = vpop.f32.mrf.mxu0
      %v10098 = vpop.f32.mrf.mxu0
      %10099 = vdwg.mxu0
      %10100 = vmatprep.subr.bf16.mxu0 %v7435
      %10101 = vmatpush1.bf16.msra.mxu0 %v7434
      %10102 = vmatprep.subr.bf16.mxu0 %v7433
      %10103 = vmatpush1.bf16.msra.mxu0 %v7432
      %10104 = vmatprep.subr.bf16.mxu0 %v7431
      %10105 = vmatpush1.bf16.msra.mxu0 %v7430
      %10106 = vmatprep.subr.bf16.mxu0 %v7429
      %10107 = vmatpush1.bf16.msra.mxu0 %v7428
      %10108 = vmatprep.subr.bf16.mxu0 %v7427
      %10109 = vmatpush1.bf16.msra.mxu0 %v7426
      %10110 = vmatprep.subr.bf16.mxu0 %v7425
      %10111 = vmatpush1.bf16.msra.mxu0 %v7424
      %10112 = vmatprep.subr.bf16.mxu0 %v7423
      %10113 = vmatpush1.bf16.msra.mxu0 %v7422
      %10114 = vmatprep.subr.bf16.mxu0 %v7421
      %10115 = vmatpush1.bf16.msra.mxu0 %v7420
      %10116 = vmatprep.subr.bf16.mxu0 %v7451
      %10117 = vmatpush2.bf16.msra.mxu0 %v7450
      %10118 = vmatprep.subr.bf16.mxu0 %v7449
      %10119 = vmatpush2.bf16.msra.mxu0 %v7448
      %10120 = vmatprep.subr.bf16.mxu0 %v7447
      %10121 = vmatpush2.bf16.msra.mxu0 %v7446
      %10122 = vmatprep.subr.bf16.mxu0 %v7445
      %10123 = vmatpush2.bf16.msra.mxu0 %v7444
      %10124 = vmatprep.subr.bf16.mxu0 %v7443
      %10125 = vmatpush2.bf16.msra.mxu0 %v7442
      %10126 = vmatprep.subr.bf16.mxu0 %v7441
      %10127 = vmatpush2.bf16.msra.mxu0 %v7440
      %10128 = vmatprep.subr.bf16.mxu0 %v7439
      %10129 = vmatpush2.bf16.msra.mxu0 %v7438
      %10130 = vmatprep.subr.bf16.mxu0 %v7437
      %10131 = vmatpush2.bf16.msra.mxu0 %v7436
      %10132 = vmatprep.mubr.bf16.mxu0 %v1696
      %10133 = vmatmul.mubr.bf16.gmra.mxu0 %v1695
      %v10134 = vpop.f32.mrf.mxu0
      %v10135 = vadd.f32 %v10094, %v10134
      %v10136 = vpop.f32.mrf.mxu0
      %v10137 = vadd.f32 %v10096, %v10136
      %v10138 = vpop.f32.mrf.mxu0
      %v10139 = vpop.f32.mrf.mxu0
      %10140 = vdwg.mxu0
      %10141 = vmatprep.subr.bf16.mxu0 %v7467
      %10142 = vmatpush1.bf16.msra.mxu0 %v7466
      %10143 = vmatprep.subr.bf16.mxu0 %v7465
      %10144 = vmatpush1.bf16.msra.mxu0 %v7464
      %10145 = vmatprep.subr.bf16.mxu0 %v7463
      %10146 = vmatpush1.bf16.msra.mxu0 %v7462
      %10147 = vmatprep.subr.bf16.mxu0 %v7461
      %10148 = vmatpush1.bf16.msra.mxu0 %v7460
      %10149 = vmatprep.subr.bf16.mxu0 %v7459
      %10150 = vmatpush1.bf16.msra.mxu0 %v7458
      %10151 = vmatprep.subr.bf16.mxu0 %v7457
      %10152 = vmatpush1.bf16.msra.mxu0 %v7456
      %10153 = vmatprep.subr.bf16.mxu0 %v7455
      %10154 = vmatpush1.bf16.msra.mxu0 %v7454
      %10155 = vmatprep.subr.bf16.mxu0 %v7453
      %10156 = vmatpush1.bf16.msra.mxu0 %v7452
      %10157 = vmatprep.subr.bf16.mxu0 %v7483
      %10158 = vmatpush2.bf16.msra.mxu0 %v7482
      %10159 = vmatprep.subr.bf16.mxu0 %v7481
      %10160 = vmatpush2.bf16.msra.mxu0 %v7480
      %10161 = vmatprep.subr.bf16.mxu0 %v7479
      %10162 = vmatpush2.bf16.msra.mxu0 %v7478
      %10163 = vmatprep.subr.bf16.mxu0 %v7477
      %10164 = vmatpush2.bf16.msra.mxu0 %v7476
      %10165 = vmatprep.subr.bf16.mxu0 %v7475
      %10166 = vmatpush2.bf16.msra.mxu0 %v7474
      %10167 = vmatprep.subr.bf16.mxu0 %v7473
      %10168 = vmatpush2.bf16.msra.mxu0 %v7472
      %10169 = vmatprep.subr.bf16.mxu0 %v7471
      %10170 = vmatpush2.bf16.msra.mxu0 %v7470
      %10171 = vmatprep.subr.bf16.mxu0 %v7469
      %10172 = vmatpush2.bf16.msra.mxu0 %v7468
      %10173 = vmatprep.mubr.bf16.mxu0 %v1698
      %10174 = vmatmul.mubr.bf16.gmra.mxu0 %v1697
      %v10175 = vpop.f32.mrf.mxu0
      %v10176 = vadd.f32 %v10135, %v10175
      %v10177 = vpop.f32.mrf.mxu0
      %v10178 = vadd.f32 %v10137, %v10177
      %v10179 = vpop.f32.mrf.mxu0
      %v10180 = vpop.f32.mrf.mxu0
      %10181 = vdwg.mxu0
      %10182 = vmatprep.subr.bf16.mxu0 %v7499
      %10183 = vmatpush1.bf16.msra.mxu0 %v7498
      %10184 = vmatprep.subr.bf16.mxu0 %v7497
      %10185 = vmatpush1.bf16.msra.mxu0 %v7496
      %10186 = vmatprep.subr.bf16.mxu0 %v7495
      %10187 = vmatpush1.bf16.msra.mxu0 %v7494
      %10188 = vmatprep.subr.bf16.mxu0 %v7493
      %10189 = vmatpush1.bf16.msra.mxu0 %v7492
      %10190 = vmatprep.subr.bf16.mxu0 %v7491
      %10191 = vmatpush1.bf16.msra.mxu0 %v7490
      %10192 = vmatprep.subr.bf16.mxu0 %v7489
      %10193 = vmatpush1.bf16.msra.mxu0 %v7488
      %10194 = vmatprep.subr.bf16.mxu0 %v7487
      %10195 = vmatpush1.bf16.msra.mxu0 %v7486
      %10196 = vmatprep.subr.bf16.mxu0 %v7485
      %10197 = vmatpush1.bf16.msra.mxu0 %v7484
      %10198 = vmatprep.subr.bf16.mxu0 %v7515
      %10199 = vmatpush2.bf16.msra.mxu0 %v7514
      %10200 = vmatprep.subr.bf16.mxu0 %v7513
      %10201 = vmatpush2.bf16.msra.mxu0 %v7512
      %10202 = vmatprep.subr.bf16.mxu0 %v7511
      %10203 = vmatpush2.bf16.msra.mxu0 %v7510
      %10204 = vmatprep.subr.bf16.mxu0 %v7509
      %10205 = vmatpush2.bf16.msra.mxu0 %v7508
      %10206 = vmatprep.subr.bf16.mxu0 %v7507
      %10207 = vmatpush2.bf16.msra.mxu0 %v7506
      %10208 = vmatprep.subr.bf16.mxu0 %v7505
      %10209 = vmatpush2.bf16.msra.mxu0 %v7504
      %10210 = vmatprep.subr.bf16.mxu0 %v7503
      %10211 = vmatpush2.bf16.msra.mxu0 %v7502
      %10212 = vmatprep.subr.bf16.mxu0 %v7501
      %10213 = vmatpush2.bf16.msra.mxu0 %v7500
      %10214 = vmatprep.mubr.bf16.mxu0 %v1700
      %10215 = vmatmul.mubr.bf16.gmra.mxu0 %v1699
      %v10216 = vpop.f32.mrf.mxu0
      %v10217 = vadd.f32 %v10176, %v10216
      %v10218 = vpop.f32.mrf.mxu0
      %v10219 = vadd.f32 %v10178, %v10218
      %v10220 = vpop.f32.mrf.mxu0
      %v10221 = vpop.f32.mrf.mxu0
      %10222 = vdwg.mxu0
      %10223 = vmatprep.subr.bf16.mxu0 %v7531
      %10224 = vmatpush1.bf16.msra.mxu0 %v7530
      %10225 = vmatprep.subr.bf16.mxu0 %v7529
      %10226 = vmatpush1.bf16.msra.mxu0 %v7528
      %10227 = vmatprep.subr.bf16.mxu0 %v7527
      %10228 = vmatpush1.bf16.msra.mxu0 %v7526
      %10229 = vmatprep.subr.bf16.mxu0 %v7525
      %10230 = vmatpush1.bf16.msra.mxu0 %v7524
      %10231 = vmatprep.subr.bf16.mxu0 %v7523
      %10232 = vmatpush1.bf16.msra.mxu0 %v7522
      %10233 = vmatprep.subr.bf16.mxu0 %v7521
      %10234 = vmatpush1.bf16.msra.mxu0 %v7520
      %10235 = vmatprep.subr.bf16.mxu0 %v7519
      %10236 = vmatpush1.bf16.msra.mxu0 %v7518
      %10237 = vmatprep.subr.bf16.mxu0 %v7517
      %10238 = vmatpush1.bf16.msra.mxu0 %v7516
      %10239 = vmatprep.subr.bf16.mxu0 %v7547
      %10240 = vmatpush2.bf16.msra.mxu0 %v7546
      %10241 = vmatprep.subr.bf16.mxu0 %v7545
      %10242 = vmatpush2.bf16.msra.mxu0 %v7544
      %10243 = vmatprep.subr.bf16.mxu0 %v7543
      %10244 = vmatpush2.bf16.msra.mxu0 %v7542
      %10245 = vmatprep.subr.bf16.mxu0 %v7541
      %10246 = vmatpush2.bf16.msra.mxu0 %v7540
      %10247 = vmatprep.subr.bf16.mxu0 %v7539
      %10248 = vmatpush2.bf16.msra.mxu0 %v7538
      %10249 = vmatprep.subr.bf16.mxu0 %v7537
      %10250 = vmatpush2.bf16.msra.mxu0 %v7536
      %10251 = vmatprep.subr.bf16.mxu0 %v7535
      %10252 = vmatpush2.bf16.msra.mxu0 %v7534
      %10253 = vmatprep.subr.bf16.mxu0 %v7533
      %10254 = vmatpush2.bf16.msra.mxu0 %v7532
      %10255 = vmatprep.mubr.bf16.mxu0 %v1702
      %10256 = vmatmul.mubr.bf16.gmra.mxu0 %v1701
      %v10257 = vpop.f32.mrf.mxu0
      %v10258 = vadd.f32 %v10217, %v10257
      %v10259 = vpop.f32.mrf.mxu0
      %v10260 = vadd.f32 %v10219, %v10259
      %v10261 = vpop.f32.mrf.mxu0
      %v10262 = vpop.f32.mrf.mxu0
      %10263 = vdwg.mxu0
      %10264 = vmatprep.subr.bf16.mxu0 %v7563
      %10265 = vmatpush1.bf16.msra.mxu0 %v7562
      %10266 = vmatprep.subr.bf16.mxu0 %v7561
      %10267 = vmatpush1.bf16.msra.mxu0 %v7560
      %10268 = vmatprep.subr.bf16.mxu0 %v7559
      %10269 = vmatpush1.bf16.msra.mxu0 %v7558
      %10270 = vmatprep.subr.bf16.mxu0 %v7557
      %10271 = vmatpush1.bf16.msra.mxu0 %v7556
      %10272 = vmatprep.subr.bf16.mxu0 %v7555
      %10273 = vmatpush1.bf16.msra.mxu0 %v7554
      %10274 = vmatprep.subr.bf16.mxu0 %v7553
      %10275 = vmatpush1.bf16.msra.mxu0 %v7552
      %10276 = vmatprep.subr.bf16.mxu0 %v7551
      %10277 = vmatpush1.bf16.msra.mxu0 %v7550
      %10278 = vmatprep.subr.bf16.mxu0 %v7549
      %10279 = vmatpush1.bf16.msra.mxu0 %v7548
      %10280 = vmatprep.subr.bf16.mxu0 %v7579
      %10281 = vmatpush2.bf16.msra.mxu0 %v7578
      %10282 = vmatprep.subr.bf16.mxu0 %v7577
      %10283 = vmatpush2.bf16.msra.mxu0 %v7576
      %10284 = vmatprep.subr.bf16.mxu0 %v7575
      %10285 = vmatpush2.bf16.msra.mxu0 %v7574
      %10286 = vmatprep.subr.bf16.mxu0 %v7573
      %10287 = vmatpush2.bf16.msra.mxu0 %v7572
      %10288 = vmatprep.subr.bf16.mxu0 %v7571
      %10289 = vmatpush2.bf16.msra.mxu0 %v7570
      %10290 = vmatprep.subr.bf16.mxu0 %v7569
      %10291 = vmatpush2.bf16.msra.mxu0 %v7568
      %10292 = vmatprep.subr.bf16.mxu0 %v7567
      %10293 = vmatpush2.bf16.msra.mxu0 %v7566
      %10294 = vmatprep.subr.bf16.mxu0 %v7565
      %10295 = vmatpush2.bf16.msra.mxu0 %v7564
      %10296 = vmatprep.mubr.bf16.mxu0 %v1704
      %10297 = vmatmul.mubr.bf16.gmra.mxu0 %v1703
      %v10298 = vpop.f32.mrf.mxu0
      %v10299 = vadd.f32 %v10258, %v10298
      %v10300 = vpop.f32.mrf.mxu0
      %v10301 = vadd.f32 %v10260, %v10300
      %v10302 = vpop.f32.mrf.mxu0
      %v10303 = vpop.f32.mrf.mxu0
      %10304 = vdwg.mxu0
      %10305 = vmatprep.subr.bf16.mxu0 %v7595
      %10306 = vmatpush1.bf16.msra.mxu0 %v7594
      %10307 = vmatprep.subr.bf16.mxu0 %v7593
      %10308 = vmatpush1.bf16.msra.mxu0 %v7592
      %10309 = vmatprep.subr.bf16.mxu0 %v7591
      %10310 = vmatpush1.bf16.msra.mxu0 %v7590
      %10311 = vmatprep.subr.bf16.mxu0 %v7589
      %10312 = vmatpush1.bf16.msra.mxu0 %v7588
      %10313 = vmatprep.subr.bf16.mxu0 %v7587
      %10314 = vmatpush1.bf16.msra.mxu0 %v7586
      %10315 = vmatprep.subr.bf16.mxu0 %v7585
      %10316 = vmatpush1.bf16.msra.mxu0 %v7584
      %10317 = vmatprep.subr.bf16.mxu0 %v7583
      %10318 = vmatpush1.bf16.msra.mxu0 %v7582
      %10319 = vmatprep.subr.bf16.mxu0 %v7581
      %10320 = vmatpush1.bf16.msra.mxu0 %v7580
      %10321 = vmatprep.subr.bf16.mxu0 %v7611
      %10322 = vmatpush2.bf16.msra.mxu0 %v7610
      %10323 = vmatprep.subr.bf16.mxu0 %v7609
      %10324 = vmatpush2.bf16.msra.mxu0 %v7608
      %10325 = vmatprep.subr.bf16.mxu0 %v7607
      %10326 = vmatpush2.bf16.msra.mxu0 %v7606
      %10327 = vmatprep.subr.bf16.mxu0 %v7605
      %10328 = vmatpush2.bf16.msra.mxu0 %v7604
      %10329 = vmatprep.subr.bf16.mxu0 %v7603
      %10330 = vmatpush2.bf16.msra.mxu0 %v7602
      %10331 = vmatprep.subr.bf16.mxu0 %v7601
      %10332 = vmatpush2.bf16.msra.mxu0 %v7600
      %10333 = vmatprep.subr.bf16.mxu0 %v7599
      %10334 = vmatpush2.bf16.msra.mxu0 %v7598
      %10335 = vmatprep.subr.bf16.mxu0 %v7597
      %10336 = vmatpush2.bf16.msra.mxu0 %v7596
      %10337 = vmatprep.mubr.bf16.mxu0 %v1706
      %10338 = vmatmul.mubr.bf16.gmra.mxu0 %v1705
      %v10339 = vpop.f32.mrf.mxu0
      %v10340 = vadd.f32 %v10299, %v10339
      %v10341 = vpop.f32.mrf.mxu0
      %v10342 = vadd.f32 %v10301, %v10341
      %v10343 = vpop.f32.mrf.mxu0
      %v10344 = vpop.f32.mrf.mxu0
      %10345 = vdwg.mxu0
      %10346 = vmatprep.subr.bf16.mxu0 %v7627
      %10347 = vmatpush1.bf16.msra.mxu0 %v7626
      %10348 = vmatprep.subr.bf16.mxu0 %v7625
      %10349 = vmatpush1.bf16.msra.mxu0 %v7624
      %10350 = vmatprep.subr.bf16.mxu0 %v7623
      %10351 = vmatpush1.bf16.msra.mxu0 %v7622
      %10352 = vmatprep.subr.bf16.mxu0 %v7621
      %10353 = vmatpush1.bf16.msra.mxu0 %v7620
      %10354 = vmatprep.subr.bf16.mxu0 %v7619
      %10355 = vmatpush1.bf16.msra.mxu0 %v7618
      %10356 = vmatprep.subr.bf16.mxu0 %v7617
      %10357 = vmatpush1.bf16.msra.mxu0 %v7616
      %10358 = vmatprep.subr.bf16.mxu0 %v7615
      %10359 = vmatpush1.bf16.msra.mxu0 %v7614
      %10360 = vmatprep.subr.bf16.mxu0 %v7613
      %10361 = vmatpush1.bf16.msra.mxu0 %v7612
      %10362 = vmatprep.subr.bf16.mxu0 %v7643
      %10363 = vmatpush2.bf16.msra.mxu0 %v7642
      %10364 = vmatprep.subr.bf16.mxu0 %v7641
      %10365 = vmatpush2.bf16.msra.mxu0 %v7640
      %10366 = vmatprep.subr.bf16.mxu0 %v7639
      %10367 = vmatpush2.bf16.msra.mxu0 %v7638
      %10368 = vmatprep.subr.bf16.mxu0 %v7637
      %10369 = vmatpush2.bf16.msra.mxu0 %v7636
      %10370 = vmatprep.subr.bf16.mxu0 %v7635
      %10371 = vmatpush2.bf16.msra.mxu0 %v7634
      %10372 = vmatprep.subr.bf16.mxu0 %v7633
      %10373 = vmatpush2.bf16.msra.mxu0 %v7632
      %10374 = vmatprep.subr.bf16.mxu0 %v7631
      %10375 = vmatpush2.bf16.msra.mxu0 %v7630
      %10376 = vmatprep.subr.bf16.mxu0 %v7629
      %10377 = vmatpush2.bf16.msra.mxu0 %v7628
      %10378 = vmatprep.mubr.bf16.mxu0 %v1708
      %10379 = vmatmul.mubr.bf16.gmra.mxu0 %v1707
      %v10380 = vpop.f32.mrf.mxu0
      %v10381 = vadd.f32 %v10340, %v10380
      %v10382 = vpop.f32.mrf.mxu0
      %v10383 = vadd.f32 %v10342, %v10382
      %v10384 = vpop.f32.mrf.mxu0
      %v10385 = vpop.f32.mrf.mxu0
      %10386 = vdwg.mxu0
      %10387 = vmatprep.subr.bf16.mxu0 %v7659
      %10388 = vmatpush1.bf16.msra.mxu0 %v7658
      %10389 = vmatprep.subr.bf16.mxu0 %v7657
      %10390 = vmatpush1.bf16.msra.mxu0 %v7656
      %10391 = vmatprep.subr.bf16.mxu0 %v7655
      %10392 = vmatpush1.bf16.msra.mxu0 %v7654
      %10393 = vmatprep.subr.bf16.mxu0 %v7653
      %10394 = vmatpush1.bf16.msra.mxu0 %v7652
      %10395 = vmatprep.subr.bf16.mxu0 %v7651
      %10396 = vmatpush1.bf16.msra.mxu0 %v7650
      %10397 = vmatprep.subr.bf16.mxu0 %v7649
      %10398 = vmatpush1.bf16.msra.mxu0 %v7648
      %10399 = vmatprep.subr.bf16.mxu0 %v7647
      %10400 = vmatpush1.bf16.msra.mxu0 %v7646
      %10401 = vmatprep.subr.bf16.mxu0 %v7645
      %10402 = vmatpush1.bf16.msra.mxu0 %v7644
      %10403 = vmatprep.subr.bf16.mxu0 %v7675
      %10404 = vmatpush2.bf16.msra.mxu0 %v7674
      %10405 = vmatprep.subr.bf16.mxu0 %v7673
      %10406 = vmatpush2.bf16.msra.mxu0 %v7672
      %10407 = vmatprep.subr.bf16.mxu0 %v7671
      %10408 = vmatpush2.bf16.msra.mxu0 %v7670
      %10409 = vmatprep.subr.bf16.mxu0 %v7669
      %10410 = vmatpush2.bf16.msra.mxu0 %v7668
      %10411 = vmatprep.subr.bf16.mxu0 %v7667
      %10412 = vmatpush2.bf16.msra.mxu0 %v7666
      %10413 = vmatprep.subr.bf16.mxu0 %v7665
      %10414 = vmatpush2.bf16.msra.mxu0 %v7664
      %10415 = vmatprep.subr.bf16.mxu0 %v7663
      %10416 = vmatpush2.bf16.msra.mxu0 %v7662
      %10417 = vmatprep.subr.bf16.mxu0 %v7661
      %10418 = vmatpush2.bf16.msra.mxu0 %v7660
      %10419 = vmatprep.mubr.bf16.mxu0 %v1710
      %10420 = vmatmul.mubr.bf16.gmra.mxu0 %v1709
      %v10421 = vpop.f32.mrf.mxu0
      %v10422 = vadd.f32 %v10381, %v10421
      %v10423 = vpop.f32.mrf.mxu0
      %v10424 = vadd.f32 %v10383, %v10423
      %v10425 = vpop.f32.mrf.mxu0
      %v10426 = vpop.f32.mrf.mxu0
      %10427 = vdwg.mxu0
      %10428 = vmatprep.subr.bf16.mxu0 %v7691
      %10429 = vmatpush1.bf16.msra.mxu0 %v7690
      %10430 = vmatprep.subr.bf16.mxu0 %v7689
      %10431 = vmatpush1.bf16.msra.mxu0 %v7688
      %10432 = vmatprep.subr.bf16.mxu0 %v7687
      %10433 = vmatpush1.bf16.msra.mxu0 %v7686
      %10434 = vmatprep.subr.bf16.mxu0 %v7685
      %10435 = vmatpush1.bf16.msra.mxu0 %v7684
      %10436 = vmatprep.subr.bf16.mxu0 %v7683
      %10437 = vmatpush1.bf16.msra.mxu0 %v7682
      %10438 = vmatprep.subr.bf16.mxu0 %v7681
      %10439 = vmatpush1.bf16.msra.mxu0 %v7680
      %10440 = vmatprep.subr.bf16.mxu0 %v7679
      %10441 = vmatpush1.bf16.msra.mxu0 %v7678
      %10442 = vmatprep.subr.bf16.mxu0 %v7677
      %10443 = vmatpush1.bf16.msra.mxu0 %v7676
      %10444 = vmatprep.subr.bf16.mxu0 %v7707
      %10445 = vmatpush2.bf16.msra.mxu0 %v7706
      %10446 = vmatprep.subr.bf16.mxu0 %v7705
      %10447 = vmatpush2.bf16.msra.mxu0 %v7704
      %10448 = vmatprep.subr.bf16.mxu0 %v7703
      %10449 = vmatpush2.bf16.msra.mxu0 %v7702
      %10450 = vmatprep.subr.bf16.mxu0 %v7701
      %10451 = vmatpush2.bf16.msra.mxu0 %v7700
      %10452 = vmatprep.subr.bf16.mxu0 %v7699
      %10453 = vmatpush2.bf16.msra.mxu0 %v7698
      %10454 = vmatprep.subr.bf16.mxu0 %v7697
      %10455 = vmatpush2.bf16.msra.mxu0 %v7696
      %10456 = vmatprep.subr.bf16.mxu0 %v7695
      %10457 = vmatpush2.bf16.msra.mxu0 %v7694
      %10458 = vmatprep.subr.bf16.mxu0 %v7693
      %10459 = vmatpush2.bf16.msra.mxu0 %v7692
      %10460 = vmatprep.mubr.bf16.mxu0 %v1712
      %10461 = vmatmul.mubr.bf16.gmra.mxu0 %v1711
      %v10462 = vpop.f32.mrf.mxu0
      %v10463 = vadd.f32 %v10422, %v10462
      %v10464 = vpop.f32.mrf.mxu0
      %v10465 = vadd.f32 %v10424, %v10464
      %v10466 = vpop.f32.mrf.mxu0
      %v10467 = vpop.f32.mrf.mxu0
      %10468 = vdwg.mxu0
      %10469 = vmatprep.subr.bf16.mxu0 %v7723
      %10470 = vmatpush1.bf16.msra.mxu0 %v7722
      %10471 = vmatprep.subr.bf16.mxu0 %v7721
      %10472 = vmatpush1.bf16.msra.mxu0 %v7720
      %10473 = vmatprep.subr.bf16.mxu0 %v7719
      %10474 = vmatpush1.bf16.msra.mxu0 %v7718
      %10475 = vmatprep.subr.bf16.mxu0 %v7717
      %10476 = vmatpush1.bf16.msra.mxu0 %v7716
      %10477 = vmatprep.subr.bf16.mxu0 %v7715
      %10478 = vmatpush1.bf16.msra.mxu0 %v7714
      %10479 = vmatprep.subr.bf16.mxu0 %v7713
      %10480 = vmatpush1.bf16.msra.mxu0 %v7712
      %10481 = vmatprep.subr.bf16.mxu0 %v7711
      %10482 = vmatpush1.bf16.msra.mxu0 %v7710
      %10483 = vmatprep.subr.bf16.mxu0 %v7709
      %10484 = vmatpush1.bf16.msra.mxu0 %v7708
      %10485 = vmatprep.subr.bf16.mxu0 %v7739
      %10486 = vmatpush2.bf16.msra.mxu0 %v7738
      %10487 = vmatprep.subr.bf16.mxu0 %v7737
      %10488 = vmatpush2.bf16.msra.mxu0 %v7736
      %10489 = vmatprep.subr.bf16.mxu0 %v7735
      %10490 = vmatpush2.bf16.msra.mxu0 %v7734
      %10491 = vmatprep.subr.bf16.mxu0 %v7733
      %10492 = vmatpush2.bf16.msra.mxu0 %v7732
      %10493 = vmatprep.subr.bf16.mxu0 %v7731
      %10494 = vmatpush2.bf16.msra.mxu0 %v7730
      %10495 = vmatprep.subr.bf16.mxu0 %v7729
      %10496 = vmatpush2.bf16.msra.mxu0 %v7728
      %10497 = vmatprep.subr.bf16.mxu0 %v7727
      %10498 = vmatpush2.bf16.msra.mxu0 %v7726
      %10499 = vmatprep.subr.bf16.mxu0 %v7725
      %10500 = vmatpush2.bf16.msra.mxu0 %v7724
      %10501 = vmatprep.mubr.bf16.mxu0 %v1714
      %10502 = vmatmul.mubr.bf16.gmra.mxu0 %v1713
      %v10503 = vpop.f32.mrf.mxu0
      %v10504 = vadd.f32 %v10463, %v10503
      %v10505 = vpop.f32.mrf.mxu0
      %v10506 = vadd.f32 %v10465, %v10505
      %v10507 = vpop.f32.mrf.mxu0
      %v10508 = vpop.f32.mrf.mxu0
      %10509 = vdwg.mxu0
      %10510 = vmatprep.subr.bf16.mxu0 %v7755
      %10511 = vmatpush1.bf16.msra.mxu0 %v7754
      %10512 = vmatprep.subr.bf16.mxu0 %v7753
      %10513 = vmatpush1.bf16.msra.mxu0 %v7752
      %10514 = vmatprep.subr.bf16.mxu0 %v7751
      %10515 = vmatpush1.bf16.msra.mxu0 %v7750
      %10516 = vmatprep.subr.bf16.mxu0 %v7749
      %10517 = vmatpush1.bf16.msra.mxu0 %v7748
      %10518 = vmatprep.subr.bf16.mxu0 %v7747
      %10519 = vmatpush1.bf16.msra.mxu0 %v7746
      %10520 = vmatprep.subr.bf16.mxu0 %v7745
      %10521 = vmatpush1.bf16.msra.mxu0 %v7744
      %10522 = vmatprep.subr.bf16.mxu0 %v7743
      %10523 = vmatpush1.bf16.msra.mxu0 %v7742
      %10524 = vmatprep.subr.bf16.mxu0 %v7741
      %10525 = vmatpush1.bf16.msra.mxu0 %v7740
      %10526 = vmatprep.subr.bf16.mxu0 %v7771
      %10527 = vmatpush2.bf16.msra.mxu0 %v7770
      %10528 = vmatprep.subr.bf16.mxu0 %v7769
      %10529 = vmatpush2.bf16.msra.mxu0 %v7768
      %10530 = vmatprep.subr.bf16.mxu0 %v7767
      %10531 = vmatpush2.bf16.msra.mxu0 %v7766
      %10532 = vmatprep.subr.bf16.mxu0 %v7765
      %10533 = vmatpush2.bf16.msra.mxu0 %v7764
      %10534 = vmatprep.subr.bf16.mxu0 %v7763
      %10535 = vmatpush2.bf16.msra.mxu0 %v7762
      %10536 = vmatprep.subr.bf16.mxu0 %v7761
      %10537 = vmatpush2.bf16.msra.mxu0 %v7760
      %10538 = vmatprep.subr.bf16.mxu0 %v7759
      %10539 = vmatpush2.bf16.msra.mxu0 %v7758
      %10540 = vmatprep.subr.bf16.mxu0 %v7757
      %10541 = vmatpush2.bf16.msra.mxu0 %v7756
      %10542 = vmatprep.mubr.bf16.mxu0 %v1716
      %10543 = vmatmul.mubr.bf16.gmra.mxu0 %v1715
      %v10544 = vpop.f32.mrf.mxu0
      %v10545 = vadd.f32 %v10504, %v10544
      %v10546 = vpop.f32.mrf.mxu0
      %v10547 = vadd.f32 %v10506, %v10546
      %v10548 = vpop.f32.mrf.mxu0
      %v10549 = vpop.f32.mrf.mxu0
      %10550 = vdwg.mxu0
      %10551 = vmatprep.subr.bf16.mxu0 %v7787
      %10552 = vmatpush1.bf16.msra.mxu0 %v7786
      %10553 = vmatprep.subr.bf16.mxu0 %v7785
      %10554 = vmatpush1.bf16.msra.mxu0 %v7784
      %10555 = vmatprep.subr.bf16.mxu0 %v7783
      %10556 = vmatpush1.bf16.msra.mxu0 %v7782
      %10557 = vmatprep.subr.bf16.mxu0 %v7781
      %10558 = vmatpush1.bf16.msra.mxu0 %v7780
      %10559 = vmatprep.subr.bf16.mxu0 %v7779
      %10560 = vmatpush1.bf16.msra.mxu0 %v7778
      %10561 = vmatprep.subr.bf16.mxu0 %v7777
      %10562 = vmatpush1.bf16.msra.mxu0 %v7776
      %10563 = vmatprep.subr.bf16.mxu0 %v7775
      %10564 = vmatpush1.bf16.msra.mxu0 %v7774
      %10565 = vmatprep.subr.bf16.mxu0 %v7773
      %10566 = vmatpush1.bf16.msra.mxu0 %v7772
      %10567 = vmatprep.subr.bf16.mxu0 %v7803
      %10568 = vmatpush2.bf16.msra.mxu0 %v7802
      %10569 = vmatprep.subr.bf16.mxu0 %v7801
      %10570 = vmatpush2.bf16.msra.mxu0 %v7800
      %10571 = vmatprep.subr.bf16.mxu0 %v7799
      %10572 = vmatpush2.bf16.msra.mxu0 %v7798
      %10573 = vmatprep.subr.bf16.mxu0 %v7797
      %10574 = vmatpush2.bf16.msra.mxu0 %v7796
      %10575 = vmatprep.subr.bf16.mxu0 %v7795
      %10576 = vmatpush2.bf16.msra.mxu0 %v7794
      %10577 = vmatprep.subr.bf16.mxu0 %v7793
      %10578 = vmatpush2.bf16.msra.mxu0 %v7792
      %10579 = vmatprep.subr.bf16.mxu0 %v7791
      %10580 = vmatpush2.bf16.msra.mxu0 %v7790
      %10581 = vmatprep.subr.bf16.mxu0 %v7789
      %10582 = vmatpush2.bf16.msra.mxu0 %v7788
      %10583 = vmatprep.mubr.bf16.mxu0 %v1718
      %10584 = vmatmul.mubr.bf16.gmra.mxu0 %v1717
      %v10585 = vpop.f32.mrf.mxu0
      %v10586 = vadd.f32 %v10545, %v10585
      %v10587 = vpop.f32.mrf.mxu0
      %v10588 = vadd.f32 %v10547, %v10587
      %v10589 = vpop.f32.mrf.mxu0
      %v10590 = vpop.f32.mrf.mxu0
      %10591 = vdwg.mxu0
      %10592 = vmatprep.subr.bf16.mxu0 %v7819
      %10593 = vmatpush1.bf16.msra.mxu0 %v7818
      %10594 = vmatprep.subr.bf16.mxu0 %v7817
      %10595 = vmatpush1.bf16.msra.mxu0 %v7816
      %10596 = vmatprep.subr.bf16.mxu0 %v7815
      %10597 = vmatpush1.bf16.msra.mxu0 %v7814
      %10598 = vmatprep.subr.bf16.mxu0 %v7813
      %10599 = vmatpush1.bf16.msra.mxu0 %v7812
      %10600 = vmatprep.subr.bf16.mxu0 %v7811
      %10601 = vmatpush1.bf16.msra.mxu0 %v7810
      %10602 = vmatprep.subr.bf16.mxu0 %v7809
      %10603 = vmatpush1.bf16.msra.mxu0 %v7808
      %10604 = vmatprep.subr.bf16.mxu0 %v7807
      %10605 = vmatpush1.bf16.msra.mxu0 %v7806
      %10606 = vmatprep.subr.bf16.mxu0 %v7805
      %10607 = vmatpush1.bf16.msra.mxu0 %v7804
      %10608 = vmatprep.subr.bf16.mxu0 %v7835
      %10609 = vmatpush2.bf16.msra.mxu0 %v7834
      %10610 = vmatprep.subr.bf16.mxu0 %v7833
      %10611 = vmatpush2.bf16.msra.mxu0 %v7832
      %10612 = vmatprep.subr.bf16.mxu0 %v7831
      %10613 = vmatpush2.bf16.msra.mxu0 %v7830
      %10614 = vmatprep.subr.bf16.mxu0 %v7829
      %10615 = vmatpush2.bf16.msra.mxu0 %v7828
      %10616 = vmatprep.subr.bf16.mxu0 %v7827
      %10617 = vmatpush2.bf16.msra.mxu0 %v7826
      %10618 = vmatprep.subr.bf16.mxu0 %v7825
      %10619 = vmatpush2.bf16.msra.mxu0 %v7824
      %10620 = vmatprep.subr.bf16.mxu0 %v7823
      %10621 = vmatpush2.bf16.msra.mxu0 %v7822
      %10622 = vmatprep.subr.bf16.mxu0 %v7821
      %10623 = vmatpush2.bf16.msra.mxu0 %v7820
      %10624 = vmatprep.mubr.bf16.mxu0 %v1720
      %10625 = vmatmul.mubr.bf16.gmra.mxu0 %v1719
      %v10626 = vpop.f32.mrf.mxu0
      %v10627 = vadd.f32 %v10586, %v10626
      %v10628 = vpop.f32.mrf.mxu0
      %v10629 = vadd.f32 %v10588, %v10628
      %v10630 = vpop.f32.mrf.mxu0
      %v10631 = vpop.f32.mrf.mxu0
      %10632 = vdwg.mxu0
      %10633 = vmatprep.subr.bf16.mxu0 %v7851
      %10634 = vmatpush1.bf16.msra.mxu0 %v7850
      %10635 = vmatprep.subr.bf16.mxu0 %v7849
      %10636 = vmatpush1.bf16.msra.mxu0 %v7848
      %10637 = vmatprep.subr.bf16.mxu0 %v7847
      %10638 = vmatpush1.bf16.msra.mxu0 %v7846
      %10639 = vmatprep.subr.bf16.mxu0 %v7845
      %10640 = vmatpush1.bf16.msra.mxu0 %v7844
      %10641 = vmatprep.subr.bf16.mxu0 %v7843
      %10642 = vmatpush1.bf16.msra.mxu0 %v7842
      %10643 = vmatprep.subr.bf16.mxu0 %v7841
      %10644 = vmatpush1.bf16.msra.mxu0 %v7840
      %10645 = vmatprep.subr.bf16.mxu0 %v7839
      %10646 = vmatpush1.bf16.msra.mxu0 %v7838
      %10647 = vmatprep.subr.bf16.mxu0 %v7837
      %10648 = vmatpush1.bf16.msra.mxu0 %v7836
      %10649 = vmatprep.subr.bf16.mxu0 %v7867
      %10650 = vmatpush2.bf16.msra.mxu0 %v7866
      %10651 = vmatprep.subr.bf16.mxu0 %v7865
      %10652 = vmatpush2.bf16.msra.mxu0 %v7864
      %10653 = vmatprep.subr.bf16.mxu0 %v7863
      %10654 = vmatpush2.bf16.msra.mxu0 %v7862
      %10655 = vmatprep.subr.bf16.mxu0 %v7861
      %10656 = vmatpush2.bf16.msra.mxu0 %v7860
      %10657 = vmatprep.subr.bf16.mxu0 %v7859
      %10658 = vmatpush2.bf16.msra.mxu0 %v7858
      %10659 = vmatprep.subr.bf16.mxu0 %v7857
      %10660 = vmatpush2.bf16.msra.mxu0 %v7856
      %10661 = vmatprep.subr.bf16.mxu0 %v7855
      %10662 = vmatpush2.bf16.msra.mxu0 %v7854
      %10663 = vmatprep.subr.bf16.mxu0 %v7853
      %10664 = vmatpush2.bf16.msra.mxu0 %v7852
      %10665 = vmatprep.mubr.bf16.mxu0 %v1722
      %10666 = vmatmul.mubr.bf16.gmra.mxu0 %v1721
      %v10667 = vpop.f32.mrf.mxu0
      %v10668 = vadd.f32 %v10627, %v10667
      %v10669 = vpop.f32.mrf.mxu0
      %v10670 = vadd.f32 %v10629, %v10669
      %v10671 = vpop.f32.mrf.mxu0
      %v10672 = vpop.f32.mrf.mxu0
      %10673 = vdwg.mxu0
      %10674 = vmatprep.subr.bf16.mxu0 %v7883
      %10675 = vmatpush1.bf16.msra.mxu0 %v7882
      %10676 = vmatprep.subr.bf16.mxu0 %v7881
      %10677 = vmatpush1.bf16.msra.mxu0 %v7880
      %10678 = vmatprep.subr.bf16.mxu0 %v7879
      %10679 = vmatpush1.bf16.msra.mxu0 %v7878
      %10680 = vmatprep.subr.bf16.mxu0 %v7877
      %10681 = vmatpush1.bf16.msra.mxu0 %v7876
      %10682 = vmatprep.subr.bf16.mxu0 %v7875
      %10683 = vmatpush1.bf16.msra.mxu0 %v7874
      %10684 = vmatprep.subr.bf16.mxu0 %v7873
      %10685 = vmatpush1.bf16.msra.mxu0 %v7872
      %10686 = vmatprep.subr.bf16.mxu0 %v7871
      %10687 = vmatpush1.bf16.msra.mxu0 %v7870
      %10688 = vmatprep.subr.bf16.mxu0 %v7869
      %10689 = vmatpush1.bf16.msra.mxu0 %v7868
      %10690 = vmatprep.subr.bf16.mxu0 0
      %10691 = vmatpush2.bf16.msra.mxu0 0
      %10692 = vmatprep.subr.bf16.mxu0 0
      %10693 = vmatpush2.bf16.msra.mxu0 0
      %10694 = vmatprep.subr.bf16.mxu0 0
      %10695 = vmatpush2.bf16.msra.mxu0 0
      %10696 = vmatprep.subr.bf16.mxu0 0
      %10697 = vmatpush2.bf16.msra.mxu0 0
      %10698 = vmatprep.subr.bf16.mxu0 0
      %10699 = vmatpush2.bf16.msra.mxu0 0
      %10700 = vmatprep.subr.bf16.mxu0 0
      %10701 = vmatpush2.bf16.msra.mxu0 0
      %10702 = vmatprep.subr.bf16.mxu0 0
      %10703 = vmatpush2.bf16.msra.mxu0 0
      %10704 = vmatprep.subr.bf16.mxu0 0
      %10705 = vmatpush2.bf16.msra.mxu0 0
      %10706 = vmatprep.mubr.bf16.mxu0 0
      %10707 = vmatmul.mubr.bf16.gmra.mxu0 %v1723
      %v10708 = vpop.f32.mrf.mxu0
      %v10709 = vadd.f32 %v10668, %v10708
      %v10710 = vpop.f32.mrf.mxu0
      %v10711 = vadd.f32 %v10670, %v10710
      %v10712 = vpop.f32.mrf.mxu0
      %v10713 = vpop.f32.mrf.mxu0
      %10714 = vdwg.mxu0
      %10715 = vmatprep.subr.bf16.mxu0 %v6667
      %10716 = vmatpush1.bf16.msra.mxu0 %v6666
      %10717 = vmatprep.subr.bf16.mxu0 %v6665
      %10718 = vmatpush1.bf16.msra.mxu0 %v6664
      %10719 = vmatprep.subr.bf16.mxu0 %v6663
      %10720 = vmatpush1.bf16.msra.mxu0 %v6662
      %10721 = vmatprep.subr.bf16.mxu0 %v6661
      %10722 = vmatpush1.bf16.msra.mxu0 %v6660
      %10723 = vmatprep.subr.bf16.mxu0 %v6659
      %10724 = vmatpush1.bf16.msra.mxu0 %v6658
      %10725 = vmatprep.subr.bf16.mxu0 %v6657
      %10726 = vmatpush1.bf16.msra.mxu0 %v6656
      %10727 = vmatprep.subr.bf16.mxu0 %v6655
      %10728 = vmatpush1.bf16.msra.mxu0 %v6654
      %10729 = vmatprep.subr.bf16.mxu0 %v6653
      %10730 = vmatpush1.bf16.msra.mxu0 %v6652
      %10731 = vmatprep.subr.bf16.mxu0 %v6683
      %10732 = vmatpush2.bf16.msra.mxu0 %v6682
      %10733 = vmatprep.subr.bf16.mxu0 %v6681
      %10734 = vmatpush2.bf16.msra.mxu0 %v6680
      %10735 = vmatprep.subr.bf16.mxu0 %v6679
      %10736 = vmatpush2.bf16.msra.mxu0 %v6678
      %10737 = vmatprep.subr.bf16.mxu0 %v6677
      %10738 = vmatpush2.bf16.msra.mxu0 %v6676
      %10739 = vmatprep.subr.bf16.mxu0 %v6675
      %10740 = vmatpush2.bf16.msra.mxu0 %v6674
      %10741 = vmatprep.subr.bf16.mxu0 %v6673
      %10742 = vmatpush2.bf16.msra.mxu0 %v6672
      %10743 = vmatprep.subr.bf16.mxu0 %v6671
      %10744 = vmatpush2.bf16.msra.mxu0 %v6670
      %10745 = vmatprep.subr.bf16.mxu0 %v6669
      %10746 = vmatpush2.bf16.msra.mxu0 %v6668
      %10747 = vmatprep.mubr.bf16.mxu0 %v620
      %10748 = vmatmul.mubr.bf16.gmra.mxu0 %v619
      %v10749 = vpop.f32.mrf.mxu0
      %v10750 = vadd.f32 %v10709, %v10749
      %v10751 = vpop.f32.mrf.mxu0
      %v10752 = vadd.f32 %v10711, %v10751
      %v10753 = vpop.f32.mrf.mxu0
      %v10754 = vpop.f32.mrf.mxu0
      %10755 = vdwg.mxu0
      %10756 = vmatprep.subr.bf16.mxu0 %v6699
      %10757 = vmatpush1.bf16.msra.mxu0 %v6698
      %10758 = vmatprep.subr.bf16.mxu0 %v6697
      %10759 = vmatpush1.bf16.msra.mxu0 %v6696
      %10760 = vmatprep.subr.bf16.mxu0 %v6695
      %10761 = vmatpush1.bf16.msra.mxu0 %v6694
      %10762 = vmatprep.subr.bf16.mxu0 %v6693
      %10763 = vmatpush1.bf16.msra.mxu0 %v6692
      %10764 = vmatprep.subr.bf16.mxu0 %v6691
      %10765 = vmatpush1.bf16.msra.mxu0 %v6690
      %10766 = vmatprep.subr.bf16.mxu0 %v6689
      %10767 = vmatpush1.bf16.msra.mxu0 %v6688
      %10768 = vmatprep.subr.bf16.mxu0 %v6687
      %10769 = vmatpush1.bf16.msra.mxu0 %v6686
      %10770 = vmatprep.subr.bf16.mxu0 %v6685
      %10771 = vmatpush1.bf16.msra.mxu0 %v6684
      %10772 = vmatprep.subr.bf16.mxu0 %v6715
      %10773 = vmatpush2.bf16.msra.mxu0 %v6714
      %10774 = vmatprep.subr.bf16.mxu0 %v6713
      %10775 = vmatpush2.bf16.msra.mxu0 %v6712
      %10776 = vmatprep.subr.bf16.mxu0 %v6711
      %10777 = vmatpush2.bf16.msra.mxu0 %v6710
      %10778 = vmatprep.subr.bf16.mxu0 %v6709
      %10779 = vmatpush2.bf16.msra.mxu0 %v6708
      %10780 = vmatprep.subr.bf16.mxu0 %v6707
      %10781 = vmatpush2.bf16.msra.mxu0 %v6706
      %10782 = vmatprep.subr.bf16.mxu0 %v6705
      %10783 = vmatpush2.bf16.msra.mxu0 %v6704
      %10784 = vmatprep.subr.bf16.mxu0 %v6703
      %10785 = vmatpush2.bf16.msra.mxu0 %v6702
      %10786 = vmatprep.subr.bf16.mxu0 %v6701
      %10787 = vmatpush2.bf16.msra.mxu0 %v6700
      %10788 = vmatprep.mubr.bf16.mxu0 %v622
      %10789 = vmatmul.mubr.bf16.gmra.mxu0 %v621
      %v10790 = vpop.f32.mrf.mxu0
      %v10791 = vadd.f32 %v10750, %v10790
      %v10792 = vpop.f32.mrf.mxu0
      %v10793 = vadd.f32 %v10752, %v10792
      %v10794 = vpop.f32.mrf.mxu0
      %v10795 = vpop.f32.mrf.mxu0
      %10796 = vdwg.mxu0
      %10797 = vmatprep.subr.bf16.mxu0 %v6731
      %10798 = vmatpush1.bf16.msra.mxu0 %v6730
      %10799 = vmatprep.subr.bf16.mxu0 %v6729
      %10800 = vmatpush1.bf16.msra.mxu0 %v6728
      %10801 = vmatprep.subr.bf16.mxu0 %v6727
      %10802 = vmatpush1.bf16.msra.mxu0 %v6726
      %10803 = vmatprep.subr.bf16.mxu0 %v6725
      %10804 = vmatpush1.bf16.msra.mxu0 %v6724
      %10805 = vmatprep.subr.bf16.mxu0 %v6723
      %10806 = vmatpush1.bf16.msra.mxu0 %v6722
      %10807 = vmatprep.subr.bf16.mxu0 %v6721
      %10808 = vmatpush1.bf16.msra.mxu0 %v6720
      %10809 = vmatprep.subr.bf16.mxu0 %v6719
      %10810 = vmatpush1.bf16.msra.mxu0 %v6718
      %10811 = vmatprep.subr.bf16.mxu0 %v6717
      %10812 = vmatpush1.bf16.msra.mxu0 %v6716
      %10813 = vmatprep.subr.bf16.mxu0 %v6747
      %10814 = vmatpush2.bf16.msra.mxu0 %v6746
      %10815 = vmatprep.subr.bf16.mxu0 %v6745
      %10816 = vmatpush2.bf16.msra.mxu0 %v6744
      %10817 = vmatprep.subr.bf16.mxu0 %v6743
      %10818 = vmatpush2.bf16.msra.mxu0 %v6742
      %10819 = vmatprep.subr.bf16.mxu0 %v6741
      %10820 = vmatpush2.bf16.msra.mxu0 %v6740
      %10821 = vmatprep.subr.bf16.mxu0 %v6739
      %10822 = vmatpush2.bf16.msra.mxu0 %v6738
      %10823 = vmatprep.subr.bf16.mxu0 %v6737
      %10824 = vmatpush2.bf16.msra.mxu0 %v6736
      %10825 = vmatprep.subr.bf16.mxu0 %v6735
      %10826 = vmatpush2.bf16.msra.mxu0 %v6734
      %10827 = vmatprep.subr.bf16.mxu0 %v6733
      %10828 = vmatpush2.bf16.msra.mxu0 %v6732
      %10829 = vmatprep.mubr.bf16.mxu0 %v624
      %10830 = vmatmul.mubr.bf16.gmra.mxu0 %v623
      %v10831 = vpop.f32.mrf.mxu0
      %v10832 = vadd.f32 %v10791, %v10831
      %v10833 = vpop.f32.mrf.mxu0
      %v10834 = vadd.f32 %v10793, %v10833
      %v10835 = vpop.f32.mrf.mxu0
      %v10836 = vpop.f32.mrf.mxu0
      %10837 = vdwg.mxu0
      %10838 = vmatprep.subr.bf16.mxu0 %v6763
      %10839 = vmatpush1.bf16.msra.mxu0 %v6762
      %10840 = vmatprep.subr.bf16.mxu0 %v6761
      %10841 = vmatpush1.bf16.msra.mxu0 %v6760
      %10842 = vmatprep.subr.bf16.mxu0 %v6759
      %10843 = vmatpush1.bf16.msra.mxu0 %v6758
      %10844 = vmatprep.subr.bf16.mxu0 %v6757
      %10845 = vmatpush1.bf16.msra.mxu0 %v6756
      %10846 = vmatprep.subr.bf16.mxu0 %v6755
      %10847 = vmatpush1.bf16.msra.mxu0 %v6754
      %10848 = vmatprep.subr.bf16.mxu0 %v6753
      %10849 = vmatpush1.bf16.msra.mxu0 %v6752
      %10850 = vmatprep.subr.bf16.mxu0 %v6751
      %10851 = vmatpush1.bf16.msra.mxu0 %v6750
      %10852 = vmatprep.subr.bf16.mxu0 %v6749
      %10853 = vmatpush1.bf16.msra.mxu0 %v6748
      %10854 = vmatprep.subr.bf16.mxu0 %v6779
      %10855 = vmatpush2.bf16.msra.mxu0 %v6778
      %10856 = vmatprep.subr.bf16.mxu0 %v6777
      %10857 = vmatpush2.bf16.msra.mxu0 %v6776
      %10858 = vmatprep.subr.bf16.mxu0 %v6775
      %10859 = vmatpush2.bf16.msra.mxu0 %v6774
      %10860 = vmatprep.subr.bf16.mxu0 %v6773
      %10861 = vmatpush2.bf16.msra.mxu0 %v6772
      %10862 = vmatprep.subr.bf16.mxu0 %v6771
      %10863 = vmatpush2.bf16.msra.mxu0 %v6770
      %10864 = vmatprep.subr.bf16.mxu0 %v6769
      %10865 = vmatpush2.bf16.msra.mxu0 %v6768
      %10866 = vmatprep.subr.bf16.mxu0 %v6767
      %10867 = vmatpush2.bf16.msra.mxu0 %v6766
      %10868 = vmatprep.subr.bf16.mxu0 %v6765
      %10869 = vmatpush2.bf16.msra.mxu0 %v6764
      %10870 = vmatprep.mubr.bf16.mxu0 %v626
      %10871 = vmatmul.mubr.bf16.gmra.mxu0 %v625
      %v10872 = vpop.f32.mrf.mxu0
      %v10873 = vadd.f32 %v10832, %v10872
      %v10874 = vpop.f32.mrf.mxu0
      %v10875 = vadd.f32 %v10834, %v10874
      %v10876 = vpop.f32.mrf.mxu0
      %v10877 = vpop.f32.mrf.mxu0
      %10878 = vdwg.mxu0
      %10879 = vmatprep.subr.bf16.mxu0 %v6795
      %10880 = vmatpush1.bf16.msra.mxu0 %v6794
      %10881 = vmatprep.subr.bf16.mxu0 %v6793
      %10882 = vmatpush1.bf16.msra.mxu0 %v6792
      %10883 = vmatprep.subr.bf16.mxu0 %v6791
      %10884 = vmatpush1.bf16.msra.mxu0 %v6790
      %10885 = vmatprep.subr.bf16.mxu0 %v6789
      %10886 = vmatpush1.bf16.msra.mxu0 %v6788
      %10887 = vmatprep.subr.bf16.mxu0 %v6787
      %10888 = vmatpush1.bf16.msra.mxu0 %v6786
      %10889 = vmatprep.subr.bf16.mxu0 %v6785
      %10890 = vmatpush1.bf16.msra.mxu0 %v6784
      %10891 = vmatprep.subr.bf16.mxu0 %v6783
      %10892 = vmatpush1.bf16.msra.mxu0 %v6782
      %10893 = vmatprep.subr.bf16.mxu0 %v6781
      %10894 = vmatpush1.bf16.msra.mxu0 %v6780
      %10895 = vmatprep.subr.bf16.mxu0 %v6811
      %10896 = vmatpush2.bf16.msra.mxu0 %v6810
      %10897 = vmatprep.subr.bf16.mxu0 %v6809
      %10898 = vmatpush2.bf16.msra.mxu0 %v6808
      %10899 = vmatprep.subr.bf16.mxu0 %v6807
      %10900 = vmatpush2.bf16.msra.mxu0 %v6806
      %10901 = vmatprep.subr.bf16.mxu0 %v6805
      %10902 = vmatpush2.bf16.msra.mxu0 %v6804
      %10903 = vmatprep.subr.bf16.mxu0 %v6803
      %10904 = vmatpush2.bf16.msra.mxu0 %v6802
      %10905 = vmatprep.subr.bf16.mxu0 %v6801
      %10906 = vmatpush2.bf16.msra.mxu0 %v6800
      %10907 = vmatprep.subr.bf16.mxu0 %v6799
      %10908 = vmatpush2.bf16.msra.mxu0 %v6798
      %10909 = vmatprep.subr.bf16.mxu0 %v6797
      %10910 = vmatpush2.bf16.msra.mxu0 %v6796
      %10911 = vmatprep.mubr.bf16.mxu0 %v628
      %10912 = vmatmul.mubr.bf16.gmra.mxu0 %v627
      %v10913 = vpop.f32.mrf.mxu0
      %v10914 = vadd.f32 %v10873, %v10913
      %v10915 = vpop.f32.mrf.mxu0
      %v10916 = vadd.f32 %v10875, %v10915
      %v10917 = vpop.f32.mrf.mxu0
      %v10918 = vpop.f32.mrf.mxu0
      %10919 = vdwg.mxu0
      %10920 = vmatprep.subr.bf16.mxu0 %v6827
      %10921 = vmatpush1.bf16.msra.mxu0 %v6826
      %10922 = vmatprep.subr.bf16.mxu0 %v6825
      %10923 = vmatpush1.bf16.msra.mxu0 %v6824
      %10924 = vmatprep.subr.bf16.mxu0 %v6823
      %10925 = vmatpush1.bf16.msra.mxu0 %v6822
      %10926 = vmatprep.subr.bf16.mxu0 %v6821
      %10927 = vmatpush1.bf16.msra.mxu0 %v6820
      %10928 = vmatprep.subr.bf16.mxu0 %v6819
      %10929 = vmatpush1.bf16.msra.mxu0 %v6818
      %10930 = vmatprep.subr.bf16.mxu0 %v6817
      %10931 = vmatpush1.bf16.msra.mxu0 %v6816
      %10932 = vmatprep.subr.bf16.mxu0 %v6815
      %10933 = vmatpush1.bf16.msra.mxu0 %v6814
      %10934 = vmatprep.subr.bf16.mxu0 %v6813
      %10935 = vmatpush1.bf16.msra.mxu0 %v6812
      %10936 = vmatprep.subr.bf16.mxu0 %v6843
      %10937 = vmatpush2.bf16.msra.mxu0 %v6842
      %10938 = vmatprep.subr.bf16.mxu0 %v6841
      %10939 = vmatpush2.bf16.msra.mxu0 %v6840
      %10940 = vmatprep.subr.bf16.mxu0 %v6839
      %10941 = vmatpush2.bf16.msra.mxu0 %v6838
      %10942 = vmatprep.subr.bf16.mxu0 %v6837
      %10943 = vmatpush2.bf16.msra.mxu0 %v6836
      %10944 = vmatprep.subr.bf16.mxu0 %v6835
      %10945 = vmatpush2.bf16.msra.mxu0 %v6834
      %10946 = vmatprep.subr.bf16.mxu0 %v6833
      %10947 = vmatpush2.bf16.msra.mxu0 %v6832
      %10948 = vmatprep.subr.bf16.mxu0 %v6831
      %10949 = vmatpush2.bf16.msra.mxu0 %v6830
      %10950 = vmatprep.subr.bf16.mxu0 %v6829
      %10951 = vmatpush2.bf16.msra.mxu0 %v6828
      %10952 = vmatprep.mubr.bf16.mxu0 %v630
      %10953 = vmatmul.mubr.bf16.gmra.mxu0 %v629
      %v10954 = vpop.f32.mrf.mxu0
      %v10955 = vadd.f32 %v10914, %v10954
      %v10956 = vpop.f32.mrf.mxu0
      %v10957 = vadd.f32 %v10916, %v10956
      %v10958 = vpop.f32.mrf.mxu0
      %v10959 = vpop.f32.mrf.mxu0
      %10960 = vdwg.mxu0
      %10961 = vmatprep.subr.bf16.mxu0 %v6859
      %10962 = vmatpush1.bf16.msra.mxu0 %v6858
      %10963 = vmatprep.subr.bf16.mxu0 %v6857
      %10964 = vmatpush1.bf16.msra.mxu0 %v6856
      %10965 = vmatprep.subr.bf16.mxu0 %v6855
      %10966 = vmatpush1.bf16.msra.mxu0 %v6854
      %10967 = vmatprep.subr.bf16.mxu0 %v6853
      %10968 = vmatpush1.bf16.msra.mxu0 %v6852
      %10969 = vmatprep.subr.bf16.mxu0 %v6851
      %10970 = vmatpush1.bf16.msra.mxu0 %v6850
      %10971 = vmatprep.subr.bf16.mxu0 %v6849
      %10972 = vmatpush1.bf16.msra.mxu0 %v6848
      %10973 = vmatprep.subr.bf16.mxu0 %v6847
      %10974 = vmatpush1.bf16.msra.mxu0 %v6846
      %10975 = vmatprep.subr.bf16.mxu0 %v6845
      %10976 = vmatpush1.bf16.msra.mxu0 %v6844
      %10977 = vmatprep.subr.bf16.mxu0 %v6875
      %10978 = vmatpush2.bf16.msra.mxu0 %v6874
      %10979 = vmatprep.subr.bf16.mxu0 %v6873
      %10980 = vmatpush2.bf16.msra.mxu0 %v6872
      %10981 = vmatprep.subr.bf16.mxu0 %v6871
      %10982 = vmatpush2.bf16.msra.mxu0 %v6870
      %10983 = vmatprep.subr.bf16.mxu0 %v6869
      %10984 = vmatpush2.bf16.msra.mxu0 %v6868
      %10985 = vmatprep.subr.bf16.mxu0 %v6867
      %10986 = vmatpush2.bf16.msra.mxu0 %v6866
      %10987 = vmatprep.subr.bf16.mxu0 %v6865
      %10988 = vmatpush2.bf16.msra.mxu0 %v6864
      %10989 = vmatprep.subr.bf16.mxu0 %v6863
      %10990 = vmatpush2.bf16.msra.mxu0 %v6862
      %10991 = vmatprep.subr.bf16.mxu0 %v6861
      %10992 = vmatpush2.bf16.msra.mxu0 %v6860
      %10993 = vmatprep.mubr.bf16.mxu0 %v632
      %10994 = vmatmul.mubr.bf16.gmra.mxu0 %v631
      %v10995 = vpop.f32.mrf.mxu0
      %v10996 = vadd.f32 %v10955, %v10995
      %v10997 = vpop.f32.mrf.mxu0
      %v10998 = vadd.f32 %v10957, %v10997
      %v10999 = vpop.f32.mrf.mxu0
      %v11000 = vpop.f32.mrf.mxu0
      %11001 = vdwg.mxu0
      %11002 = vmatprep.subr.bf16.mxu0 %v6891
      %11003 = vmatpush1.bf16.msra.mxu0 %v6890
      %11004 = vmatprep.subr.bf16.mxu0 %v6889
      %11005 = vmatpush1.bf16.msra.mxu0 %v6888
      %11006 = vmatprep.subr.bf16.mxu0 %v6887
      %11007 = vmatpush1.bf16.msra.mxu0 %v6886
      %11008 = vmatprep.subr.bf16.mxu0 %v6885
      %11009 = vmatpush1.bf16.msra.mxu0 %v6884
      %11010 = vmatprep.subr.bf16.mxu0 %v6883
      %11011 = vmatpush1.bf16.msra.mxu0 %v6882
      %11012 = vmatprep.subr.bf16.mxu0 %v6881
      %11013 = vmatpush1.bf16.msra.mxu0 %v6880
      %11014 = vmatprep.subr.bf16.mxu0 %v6879
      %11015 = vmatpush1.bf16.msra.mxu0 %v6878
      %11016 = vmatprep.subr.bf16.mxu0 %v6877
      %11017 = vmatpush1.bf16.msra.mxu0 %v6876
      %11018 = vmatprep.subr.bf16.mxu0 %v6907
      %11019 = vmatpush2.bf16.msra.mxu0 %v6906
      %11020 = vmatprep.subr.bf16.mxu0 %v6905
      %11021 = vmatpush2.bf16.msra.mxu0 %v6904
      %11022 = vmatprep.subr.bf16.mxu0 %v6903
      %11023 = vmatpush2.bf16.msra.mxu0 %v6902
      %11024 = vmatprep.subr.bf16.mxu0 %v6901
      %11025 = vmatpush2.bf16.msra.mxu0 %v6900
      %11026 = vmatprep.subr.bf16.mxu0 %v6899
      %11027 = vmatpush2.bf16.msra.mxu0 %v6898
      %11028 = vmatprep.subr.bf16.mxu0 %v6897
      %11029 = vmatpush2.bf16.msra.mxu0 %v6896
      %11030 = vmatprep.subr.bf16.mxu0 %v6895
      %11031 = vmatpush2.bf16.msra.mxu0 %v6894
      %11032 = vmatprep.subr.bf16.mxu0 %v6893
      %11033 = vmatpush2.bf16.msra.mxu0 %v6892
      %11034 = vmatprep.mubr.bf16.mxu0 %v634
      %11035 = vmatmul.mubr.bf16.gmra.mxu0 %v633
      %v11036 = vpop.f32.mrf.mxu0
      %v11037 = vadd.f32 %v10996, %v11036
      %v11038 = vpop.f32.mrf.mxu0
      %v11039 = vadd.f32 %v10998, %v11038
      %v11040 = vpop.f32.mrf.mxu0
      %v11041 = vpop.f32.mrf.mxu0
      %11042 = vdwg.mxu0
      %11043 = vmatprep.subr.bf16.mxu0 %v6923
      %11044 = vmatpush1.bf16.msra.mxu0 %v6922
      %11045 = vmatprep.subr.bf16.mxu0 %v6921
      %11046 = vmatpush1.bf16.msra.mxu0 %v6920
      %11047 = vmatprep.subr.bf16.mxu0 %v6919
      %11048 = vmatpush1.bf16.msra.mxu0 %v6918
      %11049 = vmatprep.subr.bf16.mxu0 %v6917
      %11050 = vmatpush1.bf16.msra.mxu0 %v6916
      %11051 = vmatprep.subr.bf16.mxu0 %v6915
      %11052 = vmatpush1.bf16.msra.mxu0 %v6914
      %11053 = vmatprep.subr.bf16.mxu0 %v6913
      %11054 = vmatpush1.bf16.msra.mxu0 %v6912
      %11055 = vmatprep.subr.bf16.mxu0 %v6911
      %11056 = vmatpush1.bf16.msra.mxu0 %v6910
      %11057 = vmatprep.subr.bf16.mxu0 %v6909
      %11058 = vmatpush1.bf16.msra.mxu0 %v6908
      %11059 = vmatprep.subr.bf16.mxu0 %v6939
      %11060 = vmatpush2.bf16.msra.mxu0 %v6938
      %11061 = vmatprep.subr.bf16.mxu0 %v6937
      %11062 = vmatpush2.bf16.msra.mxu0 %v6936
      %11063 = vmatprep.subr.bf16.mxu0 %v6935
      %11064 = vmatpush2.bf16.msra.mxu0 %v6934
      %11065 = vmatprep.subr.bf16.mxu0 %v6933
      %11066 = vmatpush2.bf16.msra.mxu0 %v6932
      %11067 = vmatprep.subr.bf16.mxu0 %v6931
      %11068 = vmatpush2.bf16.msra.mxu0 %v6930
      %11069 = vmatprep.subr.bf16.mxu0 %v6929
      %11070 = vmatpush2.bf16.msra.mxu0 %v6928
      %11071 = vmatprep.subr.bf16.mxu0 %v6927
      %11072 = vmatpush2.bf16.msra.mxu0 %v6926
      %11073 = vmatprep.subr.bf16.mxu0 %v6925
      %11074 = vmatpush2.bf16.msra.mxu0 %v6924
      %11075 = vmatprep.mubr.bf16.mxu0 %v636
      %11076 = vmatmul.mubr.bf16.gmra.mxu0 %v635
      %v11077 = vpop.f32.mrf.mxu0
      %v11078 = vadd.f32 %v11037, %v11077
      %v11079 = vpop.f32.mrf.mxu0
      %v11080 = vadd.f32 %v11039, %v11079
      %v11081 = vpop.f32.mrf.mxu0
      %v11082 = vpop.f32.mrf.mxu0
      %11083 = vdwg.mxu0
      %11084 = vmatprep.subr.bf16.mxu0 %v6955
      %11085 = vmatpush1.bf16.msra.mxu0 %v6954
      %11086 = vmatprep.subr.bf16.mxu0 %v6953
      %11087 = vmatpush1.bf16.msra.mxu0 %v6952
      %11088 = vmatprep.subr.bf16.mxu0 %v6951
      %11089 = vmatpush1.bf16.msra.mxu0 %v6950
      %11090 = vmatprep.subr.bf16.mxu0 %v6949
      %11091 = vmatpush1.bf16.msra.mxu0 %v6948
      %11092 = vmatprep.subr.bf16.mxu0 %v6947
      %11093 = vmatpush1.bf16.msra.mxu0 %v6946
      %11094 = vmatprep.subr.bf16.mxu0 %v6945
      %11095 = vmatpush1.bf16.msra.mxu0 %v6944
      %11096 = vmatprep.subr.bf16.mxu0 %v6943
      %11097 = vmatpush1.bf16.msra.mxu0 %v6942
      %11098 = vmatprep.subr.bf16.mxu0 %v6941
      %11099 = vmatpush1.bf16.msra.mxu0 %v6940
      %11100 = vmatprep.subr.bf16.mxu0 %v6971
      %11101 = vmatpush2.bf16.msra.mxu0 %v6970
      %11102 = vmatprep.subr.bf16.mxu0 %v6969
      %11103 = vmatpush2.bf16.msra.mxu0 %v6968
      %11104 = vmatprep.subr.bf16.mxu0 %v6967
      %11105 = vmatpush2.bf16.msra.mxu0 %v6966
      %11106 = vmatprep.subr.bf16.mxu0 %v6965
      %11107 = vmatpush2.bf16.msra.mxu0 %v6964
      %11108 = vmatprep.subr.bf16.mxu0 %v6963
      %11109 = vmatpush2.bf16.msra.mxu0 %v6962
      %11110 = vmatprep.subr.bf16.mxu0 %v6961
      %11111 = vmatpush2.bf16.msra.mxu0 %v6960
      %11112 = vmatprep.subr.bf16.mxu0 %v6959
      %11113 = vmatpush2.bf16.msra.mxu0 %v6958
      %11114 = vmatprep.subr.bf16.mxu0 %v6957
      %11115 = vmatpush2.bf16.msra.mxu0 %v6956
      %11116 = vmatprep.mubr.bf16.mxu0 %v638
      %11117 = vmatmul.mubr.bf16.gmra.mxu0 %v637
      %v11118 = vpop.f32.mrf.mxu0
      %v11119 = vadd.f32 %v11078, %v11118
      %v11120 = vpop.f32.mrf.mxu0
      %v11121 = vadd.f32 %v11080, %v11120
      %v11122 = vpop.f32.mrf.mxu0
      %v11123 = vpop.f32.mrf.mxu0
      %11124 = vdwg.mxu0
      %11125 = vmatprep.subr.bf16.mxu0 %v6987
      %11126 = vmatpush1.bf16.msra.mxu0 %v6986
      %11127 = vmatprep.subr.bf16.mxu0 %v6985
      %11128 = vmatpush1.bf16.msra.mxu0 %v6984
      %11129 = vmatprep.subr.bf16.mxu0 %v6983
      %11130 = vmatpush1.bf16.msra.mxu0 %v6982
      %11131 = vmatprep.subr.bf16.mxu0 %v6981
      %11132 = vmatpush1.bf16.msra.mxu0 %v6980
      %11133 = vmatprep.subr.bf16.mxu0 %v6979
      %11134 = vmatpush1.bf16.msra.mxu0 %v6978
      %11135 = vmatprep.subr.bf16.mxu0 %v6977
      %11136 = vmatpush1.bf16.msra.mxu0 %v6976
      %11137 = vmatprep.subr.bf16.mxu0 %v6975
      %11138 = vmatpush1.bf16.msra.mxu0 %v6974
      %11139 = vmatprep.subr.bf16.mxu0 %v6973
      %11140 = vmatpush1.bf16.msra.mxu0 %v6972
      %11141 = vmatprep.subr.bf16.mxu0 %v7003
      %11142 = vmatpush2.bf16.msra.mxu0 %v7002
      %11143 = vmatprep.subr.bf16.mxu0 %v7001
      %11144 = vmatpush2.bf16.msra.mxu0 %v7000
      %11145 = vmatprep.subr.bf16.mxu0 %v6999
      %11146 = vmatpush2.bf16.msra.mxu0 %v6998
      %11147 = vmatprep.subr.bf16.mxu0 %v6997
      %11148 = vmatpush2.bf16.msra.mxu0 %v6996
      %11149 = vmatprep.subr.bf16.mxu0 %v6995
      %11150 = vmatpush2.bf16.msra.mxu0 %v6994
      %11151 = vmatprep.subr.bf16.mxu0 %v6993
      %11152 = vmatpush2.bf16.msra.mxu0 %v6992
      %11153 = vmatprep.subr.bf16.mxu0 %v6991
      %11154 = vmatpush2.bf16.msra.mxu0 %v6990
      %11155 = vmatprep.subr.bf16.mxu0 %v6989
      %11156 = vmatpush2.bf16.msra.mxu0 %v6988
      %11157 = vmatprep.mubr.bf16.mxu0 %v640
      %11158 = vmatmul.mubr.bf16.gmra.mxu0 %v639
      %v11159 = vpop.f32.mrf.mxu0
      %v11160 = vadd.f32 %v11119, %v11159
      %v11161 = vpop.f32.mrf.mxu0
      %v11162 = vadd.f32 %v11121, %v11161
      %v11163 = vpop.f32.mrf.mxu0
      %v11164 = vpop.f32.mrf.mxu0
      %11165 = vdwg.mxu0
      %11166 = vmatprep.subr.bf16.mxu0 %v7019
      %11167 = vmatpush1.bf16.msra.mxu0 %v7018
      %11168 = vmatprep.subr.bf16.mxu0 %v7017
      %11169 = vmatpush1.bf16.msra.mxu0 %v7016
      %11170 = vmatprep.subr.bf16.mxu0 %v7015
      %11171 = vmatpush1.bf16.msra.mxu0 %v7014
      %11172 = vmatprep.subr.bf16.mxu0 %v7013
      %11173 = vmatpush1.bf16.msra.mxu0 %v7012
      %11174 = vmatprep.subr.bf16.mxu0 %v7011
      %11175 = vmatpush1.bf16.msra.mxu0 %v7010
      %11176 = vmatprep.subr.bf16.mxu0 %v7009
      %11177 = vmatpush1.bf16.msra.mxu0 %v7008
      %11178 = vmatprep.subr.bf16.mxu0 %v7007
      %11179 = vmatpush1.bf16.msra.mxu0 %v7006
      %11180 = vmatprep.subr.bf16.mxu0 %v7005
      %11181 = vmatpush1.bf16.msra.mxu0 %v7004
      %11182 = vmatprep.subr.bf16.mxu0 %v7035
      %11183 = vmatpush2.bf16.msra.mxu0 %v7034
      %11184 = vmatprep.subr.bf16.mxu0 %v7033
      %11185 = vmatpush2.bf16.msra.mxu0 %v7032
      %11186 = vmatprep.subr.bf16.mxu0 %v7031
      %11187 = vmatpush2.bf16.msra.mxu0 %v7030
      %11188 = vmatprep.subr.bf16.mxu0 %v7029
      %11189 = vmatpush2.bf16.msra.mxu0 %v7028
      %11190 = vmatprep.subr.bf16.mxu0 %v7027
      %11191 = vmatpush2.bf16.msra.mxu0 %v7026
      %11192 = vmatprep.subr.bf16.mxu0 %v7025
      %11193 = vmatpush2.bf16.msra.mxu0 %v7024
      %11194 = vmatprep.subr.bf16.mxu0 %v7023
      %11195 = vmatpush2.bf16.msra.mxu0 %v7022
      %11196 = vmatprep.subr.bf16.mxu0 %v7021
      %11197 = vmatpush2.bf16.msra.mxu0 %v7020
      %11198 = vmatprep.mubr.bf16.mxu0 %v642
      %11199 = vmatmul.mubr.bf16.gmra.mxu0 %v641
      %v11200 = vpop.f32.mrf.mxu0
      %v11201 = vadd.f32 %v11160, %v11200
      %v11202 = vpop.f32.mrf.mxu0
      %v11203 = vadd.f32 %v11162, %v11202
      %v11204 = vpop.f32.mrf.mxu0
      %v11205 = vpop.f32.mrf.mxu0
      %11206 = vdwg.mxu0
      %11207 = vmatprep.subr.bf16.mxu0 %v7051
      %11208 = vmatpush1.bf16.msra.mxu0 %v7050
      %11209 = vmatprep.subr.bf16.mxu0 %v7049
      %11210 = vmatpush1.bf16.msra.mxu0 %v7048
      %11211 = vmatprep.subr.bf16.mxu0 %v7047
      %11212 = vmatpush1.bf16.msra.mxu0 %v7046
      %11213 = vmatprep.subr.bf16.mxu0 %v7045
      %11214 = vmatpush1.bf16.msra.mxu0 %v7044
      %11215 = vmatprep.subr.bf16.mxu0 %v7043
      %11216 = vmatpush1.bf16.msra.mxu0 %v7042
      %11217 = vmatprep.subr.bf16.mxu0 %v7041
      %11218 = vmatpush1.bf16.msra.mxu0 %v7040
      %11219 = vmatprep.subr.bf16.mxu0 %v7039
      %11220 = vmatpush1.bf16.msra.mxu0 %v7038
      %11221 = vmatprep.subr.bf16.mxu0 %v7037
      %11222 = vmatpush1.bf16.msra.mxu0 %v7036
      %11223 = vmatprep.subr.bf16.mxu0 %v7067
      %11224 = vmatpush2.bf16.msra.mxu0 %v7066
      %11225 = vmatprep.subr.bf16.mxu0 %v7065
      %11226 = vmatpush2.bf16.msra.mxu0 %v7064
      %11227 = vmatprep.subr.bf16.mxu0 %v7063
      %11228 = vmatpush2.bf16.msra.mxu0 %v7062
      %11229 = vmatprep.subr.bf16.mxu0 %v7061
      %11230 = vmatpush2.bf16.msra.mxu0 %v7060
      %11231 = vmatprep.subr.bf16.mxu0 %v7059
      %11232 = vmatpush2.bf16.msra.mxu0 %v7058
      %11233 = vmatprep.subr.bf16.mxu0 %v7057
      %11234 = vmatpush2.bf16.msra.mxu0 %v7056
      %11235 = vmatprep.subr.bf16.mxu0 %v7055
      %11236 = vmatpush2.bf16.msra.mxu0 %v7054
      %11237 = vmatprep.subr.bf16.mxu0 %v7053
      %11238 = vmatpush2.bf16.msra.mxu0 %v7052
      %11239 = vmatprep.mubr.bf16.mxu0 %v644
      %11240 = vmatmul.mubr.bf16.gmra.mxu0 %v643
      %v11241 = vpop.f32.mrf.mxu0
      %v11242 = vadd.f32 %v11201, %v11241
      %v11243 = vpop.f32.mrf.mxu0
      %v11244 = vadd.f32 %v11203, %v11243
      %v11245 = vpop.f32.mrf.mxu0
      %v11246 = vpop.f32.mrf.mxu0
      %11247 = vdwg.mxu0
      %11248 = vmatprep.subr.bf16.mxu0 %v7083
      %11249 = vmatpush1.bf16.msra.mxu0 %v7082
      %11250 = vmatprep.subr.bf16.mxu0 %v7081
      %11251 = vmatpush1.bf16.msra.mxu0 %v7080
      %11252 = vmatprep.subr.bf16.mxu0 %v7079
      %11253 = vmatpush1.bf16.msra.mxu0 %v7078
      %11254 = vmatprep.subr.bf16.mxu0 %v7077
      %11255 = vmatpush1.bf16.msra.mxu0 %v7076
      %11256 = vmatprep.subr.bf16.mxu0 %v7075
      %11257 = vmatpush1.bf16.msra.mxu0 %v7074
      %11258 = vmatprep.subr.bf16.mxu0 %v7073
      %11259 = vmatpush1.bf16.msra.mxu0 %v7072
      %11260 = vmatprep.subr.bf16.mxu0 %v7071
      %11261 = vmatpush1.bf16.msra.mxu0 %v7070
      %11262 = vmatprep.subr.bf16.mxu0 %v7069
      %11263 = vmatpush1.bf16.msra.mxu0 %v7068
      %11264 = vmatprep.subr.bf16.mxu0 %v7099
      %11265 = vmatpush2.bf16.msra.mxu0 %v7098
      %11266 = vmatprep.subr.bf16.mxu0 %v7097
      %11267 = vmatpush2.bf16.msra.mxu0 %v7096
      %11268 = vmatprep.subr.bf16.mxu0 %v7095
      %11269 = vmatpush2.bf16.msra.mxu0 %v7094
      %11270 = vmatprep.subr.bf16.mxu0 %v7093
      %11271 = vmatpush2.bf16.msra.mxu0 %v7092
      %11272 = vmatprep.subr.bf16.mxu0 %v7091
      %11273 = vmatpush2.bf16.msra.mxu0 %v7090
      %11274 = vmatprep.subr.bf16.mxu0 %v7089
      %11275 = vmatpush2.bf16.msra.mxu0 %v7088
      %11276 = vmatprep.subr.bf16.mxu0 %v7087
      %11277 = vmatpush2.bf16.msra.mxu0 %v7086
      %11278 = vmatprep.subr.bf16.mxu0 %v7085
      %11279 = vmatpush2.bf16.msra.mxu0 %v7084
      %11280 = vmatprep.mubr.bf16.mxu0 %v646
      %11281 = vmatmul.mubr.bf16.gmra.mxu0 %v645
      %v11282 = vpop.f32.mrf.mxu0
      %v11283 = vadd.f32 %v11242, %v11282
      %v11284 = vpop.f32.mrf.mxu0
      %v11285 = vadd.f32 %v11244, %v11284
      %v11286 = vpop.f32.mrf.mxu0
      %v11287 = vpop.f32.mrf.mxu0
      %11288 = vdwg.mxu0
      %11289 = vmatprep.subr.bf16.mxu0 %v7115
      %11290 = vmatpush1.bf16.msra.mxu0 %v7114
      %11291 = vmatprep.subr.bf16.mxu0 %v7113
      %11292 = vmatpush1.bf16.msra.mxu0 %v7112
      %11293 = vmatprep.subr.bf16.mxu0 %v7111
      %11294 = vmatpush1.bf16.msra.mxu0 %v7110
      %11295 = vmatprep.subr.bf16.mxu0 %v7109
      %11296 = vmatpush1.bf16.msra.mxu0 %v7108
      %11297 = vmatprep.subr.bf16.mxu0 %v7107
      %11298 = vmatpush1.bf16.msra.mxu0 %v7106
      %11299 = vmatprep.subr.bf16.mxu0 %v7105
      %11300 = vmatpush1.bf16.msra.mxu0 %v7104
      %11301 = vmatprep.subr.bf16.mxu0 %v7103
      %11302 = vmatpush1.bf16.msra.mxu0 %v7102
      %11303 = vmatprep.subr.bf16.mxu0 %v7101
      %11304 = vmatpush1.bf16.msra.mxu0 %v7100
      %11305 = vmatprep.subr.bf16.mxu0 %v7131
      %11306 = vmatpush2.bf16.msra.mxu0 %v7130
      %11307 = vmatprep.subr.bf16.mxu0 %v7129
      %11308 = vmatpush2.bf16.msra.mxu0 %v7128
      %11309 = vmatprep.subr.bf16.mxu0 %v7127
      %11310 = vmatpush2.bf16.msra.mxu0 %v7126
      %11311 = vmatprep.subr.bf16.mxu0 %v7125
      %11312 = vmatpush2.bf16.msra.mxu0 %v7124
      %11313 = vmatprep.subr.bf16.mxu0 %v7123
      %11314 = vmatpush2.bf16.msra.mxu0 %v7122
      %11315 = vmatprep.subr.bf16.mxu0 %v7121
      %11316 = vmatpush2.bf16.msra.mxu0 %v7120
      %11317 = vmatprep.subr.bf16.mxu0 %v7119
      %11318 = vmatpush2.bf16.msra.mxu0 %v7118
      %11319 = vmatprep.subr.bf16.mxu0 %v7117
      %11320 = vmatpush2.bf16.msra.mxu0 %v7116
      %11321 = vmatprep.mubr.bf16.mxu0 %v648
      %11322 = vmatmul.mubr.bf16.gmra.mxu0 %v647
      %v11323 = vpop.f32.mrf.mxu0
      %v11324 = vadd.f32 %v11283, %v11323
      %v11325 = vpop.f32.mrf.mxu0
      %v11326 = vadd.f32 %v11285, %v11325
      %v11327 = vpop.f32.mrf.mxu0
      %v11328 = vpop.f32.mrf.mxu0
      %11329 = vdwg.mxu0
      %11330 = vmatprep.subr.bf16.mxu0 %v7147
      %11331 = vmatpush1.bf16.msra.mxu0 %v7146
      %11332 = vmatprep.subr.bf16.mxu0 %v7145
      %11333 = vmatpush1.bf16.msra.mxu0 %v7144
      %11334 = vmatprep.subr.bf16.mxu0 %v7143
      %11335 = vmatpush1.bf16.msra.mxu0 %v7142
      %11336 = vmatprep.subr.bf16.mxu0 %v7141
      %11337 = vmatpush1.bf16.msra.mxu0 %v7140
      %11338 = vmatprep.subr.bf16.mxu0 %v7139
      %11339 = vmatpush1.bf16.msra.mxu0 %v7138
      %11340 = vmatprep.subr.bf16.mxu0 %v7137
      %11341 = vmatpush1.bf16.msra.mxu0 %v7136
      %11342 = vmatprep.subr.bf16.mxu0 %v7135
      %11343 = vmatpush1.bf16.msra.mxu0 %v7134
      %11344 = vmatprep.subr.bf16.mxu0 %v7133
      %11345 = vmatpush1.bf16.msra.mxu0 %v7132
      %11346 = vmatprep.subr.bf16.mxu0 %v7163
      %11347 = vmatpush2.bf16.msra.mxu0 %v7162
      %11348 = vmatprep.subr.bf16.mxu0 %v7161
      %11349 = vmatpush2.bf16.msra.mxu0 %v7160
      %11350 = vmatprep.subr.bf16.mxu0 %v7159
      %11351 = vmatpush2.bf16.msra.mxu0 %v7158
      %11352 = vmatprep.subr.bf16.mxu0 %v7157
      %11353 = vmatpush2.bf16.msra.mxu0 %v7156
      %11354 = vmatprep.subr.bf16.mxu0 %v7155
      %11355 = vmatpush2.bf16.msra.mxu0 %v7154
      %11356 = vmatprep.subr.bf16.mxu0 %v7153
      %11357 = vmatpush2.bf16.msra.mxu0 %v7152
      %11358 = vmatprep.subr.bf16.mxu0 %v7151
      %11359 = vmatpush2.bf16.msra.mxu0 %v7150
      %11360 = vmatprep.subr.bf16.mxu0 %v7149
      %11361 = vmatpush2.bf16.msra.mxu0 %v7148
      %11362 = vmatprep.mubr.bf16.mxu0 %v650
      %11363 = vmatmul.mubr.bf16.gmra.mxu0 %v649
      %v11364 = vpop.f32.mrf.mxu0
      %v11365 = vadd.f32 %v11324, %v11364
      %v11366 = vpop.f32.mrf.mxu0
      %v11367 = vadd.f32 %v11326, %v11366
      %v11368 = vpop.f32.mrf.mxu0
      %v11369 = vpop.f32.mrf.mxu0
      %11370 = vdwg.mxu0
      %11371 = vmatprep.subr.bf16.mxu0 %v7179
      %11372 = vmatpush1.bf16.msra.mxu0 %v7178
      %11373 = vmatprep.subr.bf16.mxu0 %v7177
      %11374 = vmatpush1.bf16.msra.mxu0 %v7176
      %11375 = vmatprep.subr.bf16.mxu0 %v7175
      %11376 = vmatpush1.bf16.msra.mxu0 %v7174
      %11377 = vmatprep.subr.bf16.mxu0 %v7173
      %11378 = vmatpush1.bf16.msra.mxu0 %v7172
      %11379 = vmatprep.subr.bf16.mxu0 %v7171
      %11380 = vmatpush1.bf16.msra.mxu0 %v7170
      %11381 = vmatprep.subr.bf16.mxu0 %v7169
      %11382 = vmatpush1.bf16.msra.mxu0 %v7168
      %11383 = vmatprep.subr.bf16.mxu0 %v7167
      %11384 = vmatpush1.bf16.msra.mxu0 %v7166
      %11385 = vmatprep.subr.bf16.mxu0 %v7165
      %11386 = vmatpush1.bf16.msra.mxu0 %v7164
      %11387 = vmatprep.subr.bf16.mxu0 %v7195
      %11388 = vmatpush2.bf16.msra.mxu0 %v7194
      %11389 = vmatprep.subr.bf16.mxu0 %v7193
      %11390 = vmatpush2.bf16.msra.mxu0 %v7192
      %11391 = vmatprep.subr.bf16.mxu0 %v7191
      %11392 = vmatpush2.bf16.msra.mxu0 %v7190
      %11393 = vmatprep.subr.bf16.mxu0 %v7189
      %11394 = vmatpush2.bf16.msra.mxu0 %v7188
      %11395 = vmatprep.subr.bf16.mxu0 %v7187
      %11396 = vmatpush2.bf16.msra.mxu0 %v7186
      %11397 = vmatprep.subr.bf16.mxu0 %v7185
      %11398 = vmatpush2.bf16.msra.mxu0 %v7184
      %11399 = vmatprep.subr.bf16.mxu0 %v7183
      %11400 = vmatpush2.bf16.msra.mxu0 %v7182
      %11401 = vmatprep.subr.bf16.mxu0 %v7181
      %11402 = vmatpush2.bf16.msra.mxu0 %v7180
      %11403 = vmatprep.mubr.bf16.mxu0 %v652
      %11404 = vmatmul.mubr.bf16.gmra.mxu0 %v651
      %v11405 = vpop.f32.mrf.mxu0
      %v11406 = vadd.f32 %v11365, %v11405
      %v11407 = vpop.f32.mrf.mxu0
      %v11408 = vadd.f32 %v11367, %v11407
      %v11409 = vpop.f32.mrf.mxu0
      %v11410 = vpop.f32.mrf.mxu0
      %11411 = vdwg.mxu0
      %11412 = vmatprep.subr.bf16.mxu0 %v7211
      %11413 = vmatpush1.bf16.msra.mxu0 %v7210
      %11414 = vmatprep.subr.bf16.mxu0 %v7209
      %11415 = vmatpush1.bf16.msra.mxu0 %v7208
      %11416 = vmatprep.subr.bf16.mxu0 %v7207
      %11417 = vmatpush1.bf16.msra.mxu0 %v7206
      %11418 = vmatprep.subr.bf16.mxu0 %v7205
      %11419 = vmatpush1.bf16.msra.mxu0 %v7204
      %11420 = vmatprep.subr.bf16.mxu0 %v7203
      %11421 = vmatpush1.bf16.msra.mxu0 %v7202
      %11422 = vmatprep.subr.bf16.mxu0 %v7201
      %11423 = vmatpush1.bf16.msra.mxu0 %v7200
      %11424 = vmatprep.subr.bf16.mxu0 %v7199
      %11425 = vmatpush1.bf16.msra.mxu0 %v7198
      %11426 = vmatprep.subr.bf16.mxu0 %v7197
      %11427 = vmatpush1.bf16.msra.mxu0 %v7196
      %11428 = vmatprep.subr.bf16.mxu0 %v7227
      %11429 = vmatpush2.bf16.msra.mxu0 %v7226
      %11430 = vmatprep.subr.bf16.mxu0 %v7225
      %11431 = vmatpush2.bf16.msra.mxu0 %v7224
      %11432 = vmatprep.subr.bf16.mxu0 %v7223
      %11433 = vmatpush2.bf16.msra.mxu0 %v7222
      %11434 = vmatprep.subr.bf16.mxu0 %v7221
      %11435 = vmatpush2.bf16.msra.mxu0 %v7220
      %11436 = vmatprep.subr.bf16.mxu0 %v7219
      %11437 = vmatpush2.bf16.msra.mxu0 %v7218
      %11438 = vmatprep.subr.bf16.mxu0 %v7217
      %11439 = vmatpush2.bf16.msra.mxu0 %v7216
      %11440 = vmatprep.subr.bf16.mxu0 %v7215
      %11441 = vmatpush2.bf16.msra.mxu0 %v7214
      %11442 = vmatprep.subr.bf16.mxu0 %v7213
      %11443 = vmatpush2.bf16.msra.mxu0 %v7212
      %11444 = vmatprep.mubr.bf16.mxu0 %v654
      %11445 = vmatmul.mubr.bf16.gmra.mxu0 %v653
      %v11446 = vpop.f32.mrf.mxu0
      %v11447 = vadd.f32 %v11406, %v11446
      %v11448 = vpop.f32.mrf.mxu0
      %v11449 = vadd.f32 %v11408, %v11448
      %v11450 = vpop.f32.mrf.mxu0
      %v11451 = vpop.f32.mrf.mxu0
      %11452 = vdwg.mxu0
      %11453 = vmatprep.subr.bf16.mxu0 %v7243
      %11454 = vmatpush1.bf16.msra.mxu0 %v7242
      %11455 = vmatprep.subr.bf16.mxu0 %v7241
      %11456 = vmatpush1.bf16.msra.mxu0 %v7240
      %11457 = vmatprep.subr.bf16.mxu0 %v7239
      %11458 = vmatpush1.bf16.msra.mxu0 %v7238
      %11459 = vmatprep.subr.bf16.mxu0 %v7237
      %11460 = vmatpush1.bf16.msra.mxu0 %v7236
      %11461 = vmatprep.subr.bf16.mxu0 %v7235
      %11462 = vmatpush1.bf16.msra.mxu0 %v7234
      %11463 = vmatprep.subr.bf16.mxu0 %v7233
      %11464 = vmatpush1.bf16.msra.mxu0 %v7232
      %11465 = vmatprep.subr.bf16.mxu0 %v7231
      %11466 = vmatpush1.bf16.msra.mxu0 %v7230
      %11467 = vmatprep.subr.bf16.mxu0 %v7229
      %11468 = vmatpush1.bf16.msra.mxu0 %v7228
      %11469 = vmatprep.subr.bf16.mxu0 %v7259
      %11470 = vmatpush2.bf16.msra.mxu0 %v7258
      %11471 = vmatprep.subr.bf16.mxu0 %v7257
      %11472 = vmatpush2.bf16.msra.mxu0 %v7256
      %11473 = vmatprep.subr.bf16.mxu0 %v7255
      %11474 = vmatpush2.bf16.msra.mxu0 %v7254
      %11475 = vmatprep.subr.bf16.mxu0 %v7253
      %11476 = vmatpush2.bf16.msra.mxu0 %v7252
      %11477 = vmatprep.subr.bf16.mxu0 %v7251
      %11478 = vmatpush2.bf16.msra.mxu0 %v7250
      %11479 = vmatprep.subr.bf16.mxu0 %v7249
      %11480 = vmatpush2.bf16.msra.mxu0 %v7248
      %11481 = vmatprep.subr.bf16.mxu0 %v7247
      %11482 = vmatpush2.bf16.msra.mxu0 %v7246
      %11483 = vmatprep.subr.bf16.mxu0 %v7245
      %11484 = vmatpush2.bf16.msra.mxu0 %v7244
      %11485 = vmatprep.mubr.bf16.mxu0 %v656
      %11486 = vmatmul.mubr.bf16.gmra.mxu0 %v655
      %v11487 = vpop.f32.mrf.mxu0
      %v11488 = vadd.f32 %v11447, %v11487
      %v11489 = vpop.f32.mrf.mxu0
      %v11490 = vadd.f32 %v11449, %v11489
      %v11491 = vpop.f32.mrf.mxu0
      %v11492 = vpop.f32.mrf.mxu0
      %11493 = vdwg.mxu0
      %11494 = vmatprep.subr.bf16.mxu0 %v7275
      %11495 = vmatpush1.bf16.msra.mxu0 %v7274
      %11496 = vmatprep.subr.bf16.mxu0 %v7273
      %11497 = vmatpush1.bf16.msra.mxu0 %v7272
      %11498 = vmatprep.subr.bf16.mxu0 %v7271
      %11499 = vmatpush1.bf16.msra.mxu0 %v7270
      %11500 = vmatprep.subr.bf16.mxu0 %v7269
      %11501 = vmatpush1.bf16.msra.mxu0 %v7268
      %11502 = vmatprep.subr.bf16.mxu0 %v7267
      %11503 = vmatpush1.bf16.msra.mxu0 %v7266
      %11504 = vmatprep.subr.bf16.mxu0 %v7265
      %11505 = vmatpush1.bf16.msra.mxu0 %v7264
      %11506 = vmatprep.subr.bf16.mxu0 %v7263
      %11507 = vmatpush1.bf16.msra.mxu0 %v7262
      %11508 = vmatprep.subr.bf16.mxu0 %v7261
      %11509 = vmatpush1.bf16.msra.mxu0 %v7260
      %11510 = vmatprep.subr.bf16.mxu0 %v7291
      %11511 = vmatpush2.bf16.msra.mxu0 %v7290
      %11512 = vmatprep.subr.bf16.mxu0 %v7289
      %11513 = vmatpush2.bf16.msra.mxu0 %v7288
      %11514 = vmatprep.subr.bf16.mxu0 %v7287
      %11515 = vmatpush2.bf16.msra.mxu0 %v7286
      %11516 = vmatprep.subr.bf16.mxu0 %v7285
      %11517 = vmatpush2.bf16.msra.mxu0 %v7284
      %11518 = vmatprep.subr.bf16.mxu0 %v7283
      %11519 = vmatpush2.bf16.msra.mxu0 %v7282
      %11520 = vmatprep.subr.bf16.mxu0 %v7281
      %11521 = vmatpush2.bf16.msra.mxu0 %v7280
      %11522 = vmatprep.subr.bf16.mxu0 %v7279
      %11523 = vmatpush2.bf16.msra.mxu0 %v7278
      %11524 = vmatprep.subr.bf16.mxu0 %v7277
      %11525 = vmatpush2.bf16.msra.mxu0 %v7276
      %11526 = vmatprep.mubr.bf16.mxu0 %v658
      %11527 = vmatmul.mubr.bf16.gmra.mxu0 %v657
      %v11528 = vpop.f32.mrf.mxu0
      %v11529 = vadd.f32 %v11488, %v11528
      %v11530 = vpop.f32.mrf.mxu0
      %v11531 = vadd.f32 %v11490, %v11530
      %v11532 = vpop.f32.mrf.mxu0
      %v11533 = vpop.f32.mrf.mxu0
      %11534 = vdwg.mxu0
      %11535 = vmatprep.subr.bf16.mxu0 %v7307
      %11536 = vmatpush1.bf16.msra.mxu0 %v7306
      %11537 = vmatprep.subr.bf16.mxu0 %v7305
      %11538 = vmatpush1.bf16.msra.mxu0 %v7304
      %11539 = vmatprep.subr.bf16.mxu0 %v7303
      %11540 = vmatpush1.bf16.msra.mxu0 %v7302
      %11541 = vmatprep.subr.bf16.mxu0 %v7301
      %11542 = vmatpush1.bf16.msra.mxu0 %v7300
      %11543 = vmatprep.subr.bf16.mxu0 %v7299
      %11544 = vmatpush1.bf16.msra.mxu0 %v7298
      %11545 = vmatprep.subr.bf16.mxu0 %v7297
      %11546 = vmatpush1.bf16.msra.mxu0 %v7296
      %11547 = vmatprep.subr.bf16.mxu0 %v7295
      %11548 = vmatpush1.bf16.msra.mxu0 %v7294
      %11549 = vmatprep.subr.bf16.mxu0 %v7293
      %11550 = vmatpush1.bf16.msra.mxu0 %v7292
      %11551 = vmatprep.subr.bf16.mxu0 %v7323
      %11552 = vmatpush2.bf16.msra.mxu0 %v7322
      %11553 = vmatprep.subr.bf16.mxu0 %v7321
      %11554 = vmatpush2.bf16.msra.mxu0 %v7320
      %11555 = vmatprep.subr.bf16.mxu0 %v7319
      %11556 = vmatpush2.bf16.msra.mxu0 %v7318
      %11557 = vmatprep.subr.bf16.mxu0 %v7317
      %11558 = vmatpush2.bf16.msra.mxu0 %v7316
      %11559 = vmatprep.subr.bf16.mxu0 %v7315
      %11560 = vmatpush2.bf16.msra.mxu0 %v7314
      %11561 = vmatprep.subr.bf16.mxu0 %v7313
      %11562 = vmatpush2.bf16.msra.mxu0 %v7312
      %11563 = vmatprep.subr.bf16.mxu0 %v7311
      %11564 = vmatpush2.bf16.msra.mxu0 %v7310
      %11565 = vmatprep.subr.bf16.mxu0 %v7309
      %11566 = vmatpush2.bf16.msra.mxu0 %v7308
      %11567 = vmatprep.mubr.bf16.mxu0 %v660
      %11568 = vmatmul.mubr.bf16.gmra.mxu0 %v659
      %v11569 = vpop.f32.mrf.mxu0
      %v11570 = vadd.f32 %v11529, %v11569
      %v11571 = vpop.f32.mrf.mxu0
      %v11572 = vadd.f32 %v11531, %v11571
      %v11573 = vpop.f32.mrf.mxu0
      %v11574 = vpop.f32.mrf.mxu0
      %11575 = vdwg.mxu0
      %11576 = vmatprep.subr.bf16.mxu0 %v7339
      %11577 = vmatpush1.bf16.msra.mxu0 %v7338
      %11578 = vmatprep.subr.bf16.mxu0 %v7337
      %11579 = vmatpush1.bf16.msra.mxu0 %v7336
      %11580 = vmatprep.subr.bf16.mxu0 %v7335
      %11581 = vmatpush1.bf16.msra.mxu0 %v7334
      %11582 = vmatprep.subr.bf16.mxu0 %v7333
      %11583 = vmatpush1.bf16.msra.mxu0 %v7332
      %11584 = vmatprep.subr.bf16.mxu0 %v7331
      %11585 = vmatpush1.bf16.msra.mxu0 %v7330
      %11586 = vmatprep.subr.bf16.mxu0 %v7329
      %11587 = vmatpush1.bf16.msra.mxu0 %v7328
      %11588 = vmatprep.subr.bf16.mxu0 %v7327
      %11589 = vmatpush1.bf16.msra.mxu0 %v7326
      %11590 = vmatprep.subr.bf16.mxu0 %v7325
      %11591 = vmatpush1.bf16.msra.mxu0 %v7324
      %11592 = vmatprep.subr.bf16.mxu0 %v7355
      %11593 = vmatpush2.bf16.msra.mxu0 %v7354
      %11594 = vmatprep.subr.bf16.mxu0 %v7353
      %11595 = vmatpush2.bf16.msra.mxu0 %v7352
      %11596 = vmatprep.subr.bf16.mxu0 %v7351
      %11597 = vmatpush2.bf16.msra.mxu0 %v7350
      %11598 = vmatprep.subr.bf16.mxu0 %v7349
      %11599 = vmatpush2.bf16.msra.mxu0 %v7348
      %11600 = vmatprep.subr.bf16.mxu0 %v7347
      %11601 = vmatpush2.bf16.msra.mxu0 %v7346
      %11602 = vmatprep.subr.bf16.mxu0 %v7345
      %11603 = vmatpush2.bf16.msra.mxu0 %v7344
      %11604 = vmatprep.subr.bf16.mxu0 %v7343
      %11605 = vmatpush2.bf16.msra.mxu0 %v7342
      %11606 = vmatprep.subr.bf16.mxu0 %v7341
      %11607 = vmatpush2.bf16.msra.mxu0 %v7340
      %11608 = vmatprep.mubr.bf16.mxu0 %v662
      %11609 = vmatmul.mubr.bf16.gmra.mxu0 %v661
      %v11610 = vpop.f32.mrf.mxu0
      %v11611 = vadd.f32 %v11570, %v11610
      %v11612 = vpop.f32.mrf.mxu0
      %v11613 = vadd.f32 %v11572, %v11612
      %v11614 = vpop.f32.mrf.mxu0
      %v11615 = vpop.f32.mrf.mxu0
      %11616 = vdwg.mxu0
      %11617 = vmatprep.subr.bf16.mxu0 %v7371
      %11618 = vmatpush1.bf16.msra.mxu0 %v7370
      %11619 = vmatprep.subr.bf16.mxu0 %v7369
      %11620 = vmatpush1.bf16.msra.mxu0 %v7368
      %11621 = vmatprep.subr.bf16.mxu0 %v7367
      %11622 = vmatpush1.bf16.msra.mxu0 %v7366
      %11623 = vmatprep.subr.bf16.mxu0 %v7365
      %11624 = vmatpush1.bf16.msra.mxu0 %v7364
      %11625 = vmatprep.subr.bf16.mxu0 %v7363
      %11626 = vmatpush1.bf16.msra.mxu0 %v7362
      %11627 = vmatprep.subr.bf16.mxu0 %v7361
      %11628 = vmatpush1.bf16.msra.mxu0 %v7360
      %11629 = vmatprep.subr.bf16.mxu0 %v7359
      %11630 = vmatpush1.bf16.msra.mxu0 %v7358
      %11631 = vmatprep.subr.bf16.mxu0 %v7357
      %11632 = vmatpush1.bf16.msra.mxu0 %v7356
      %11633 = vmatprep.subr.bf16.mxu0 %v7387
      %11634 = vmatpush2.bf16.msra.mxu0 %v7386
      %11635 = vmatprep.subr.bf16.mxu0 %v7385
      %11636 = vmatpush2.bf16.msra.mxu0 %v7384
      %11637 = vmatprep.subr.bf16.mxu0 %v7383
      %11638 = vmatpush2.bf16.msra.mxu0 %v7382
      %11639 = vmatprep.subr.bf16.mxu0 %v7381
      %11640 = vmatpush2.bf16.msra.mxu0 %v7380
      %11641 = vmatprep.subr.bf16.mxu0 %v7379
      %11642 = vmatpush2.bf16.msra.mxu0 %v7378
      %11643 = vmatprep.subr.bf16.mxu0 %v7377
      %11644 = vmatpush2.bf16.msra.mxu0 %v7376
      %11645 = vmatprep.subr.bf16.mxu0 %v7375
      %11646 = vmatpush2.bf16.msra.mxu0 %v7374
      %11647 = vmatprep.subr.bf16.mxu0 %v7373
      %11648 = vmatpush2.bf16.msra.mxu0 %v7372
      %11649 = vmatprep.mubr.bf16.mxu0 %v664
      %11650 = vmatmul.mubr.bf16.gmra.mxu0 %v663
      %v11651 = vpop.f32.mrf.mxu0
      %v11652 = vadd.f32 %v11611, %v11651
      %v11653 = vpop.f32.mrf.mxu0
      %v11654 = vadd.f32 %v11613, %v11653
      %v11655 = vpop.f32.mrf.mxu0
      %v11656 = vpop.f32.mrf.mxu0
      %11657 = vdwg.mxu0
      %11658 = vmatprep.subr.bf16.mxu0 %v7403
      %11659 = vmatpush1.bf16.msra.mxu0 %v7402
      %11660 = vmatprep.subr.bf16.mxu0 %v7401
      %11661 = vmatpush1.bf16.msra.mxu0 %v7400
      %11662 = vmatprep.subr.bf16.mxu0 %v7399
      %11663 = vmatpush1.bf16.msra.mxu0 %v7398
      %11664 = vmatprep.subr.bf16.mxu0 %v7397
      %11665 = vmatpush1.bf16.msra.mxu0 %v7396
      %11666 = vmatprep.subr.bf16.mxu0 %v7395
      %11667 = vmatpush1.bf16.msra.mxu0 %v7394
      %11668 = vmatprep.subr.bf16.mxu0 %v7393
      %11669 = vmatpush1.bf16.msra.mxu0 %v7392
      %11670 = vmatprep.subr.bf16.mxu0 %v7391
      %11671 = vmatpush1.bf16.msra.mxu0 %v7390
      %11672 = vmatprep.subr.bf16.mxu0 %v7389
      %11673 = vmatpush1.bf16.msra.mxu0 %v7388
      %11674 = vmatprep.subr.bf16.mxu0 %v7419
      %11675 = vmatpush2.bf16.msra.mxu0 %v7418
      %11676 = vmatprep.subr.bf16.mxu0 %v7417
      %11677 = vmatpush2.bf16.msra.mxu0 %v7416
      %11678 = vmatprep.subr.bf16.mxu0 %v7415
      %11679 = vmatpush2.bf16.msra.mxu0 %v7414
      %11680 = vmatprep.subr.bf16.mxu0 %v7413
      %11681 = vmatpush2.bf16.msra.mxu0 %v7412
      %11682 = vmatprep.subr.bf16.mxu0 %v7411
      %11683 = vmatpush2.bf16.msra.mxu0 %v7410
      %11684 = vmatprep.subr.bf16.mxu0 %v7409
      %11685 = vmatpush2.bf16.msra.mxu0 %v7408
      %11686 = vmatprep.subr.bf16.mxu0 %v7407
      %11687 = vmatpush2.bf16.msra.mxu0 %v7406
      %11688 = vmatprep.subr.bf16.mxu0 %v7405
      %11689 = vmatpush2.bf16.msra.mxu0 %v7404
      %11690 = vmatprep.mubr.bf16.mxu0 %v666
      %11691 = vmatmul.mubr.bf16.gmra.mxu0 %v665
      %v11692 = vpop.f32.mrf.mxu0
      %v11693 = vadd.f32 %v11652, %v11692
      %v11694 = vpop.f32.mrf.mxu0
      %v11695 = vadd.f32 %v11654, %v11694
      %v11696 = vpop.f32.mrf.mxu0
      %v11697 = vpop.f32.mrf.mxu0
      %11698 = vdwg.mxu0
      %11699 = vmatprep.subr.bf16.mxu0 %v7435
      %11700 = vmatpush1.bf16.msra.mxu0 %v7434
      %11701 = vmatprep.subr.bf16.mxu0 %v7433
      %11702 = vmatpush1.bf16.msra.mxu0 %v7432
      %11703 = vmatprep.subr.bf16.mxu0 %v7431
      %11704 = vmatpush1.bf16.msra.mxu0 %v7430
      %11705 = vmatprep.subr.bf16.mxu0 %v7429
      %11706 = vmatpush1.bf16.msra.mxu0 %v7428
      %11707 = vmatprep.subr.bf16.mxu0 %v7427
      %11708 = vmatpush1.bf16.msra.mxu0 %v7426
      %11709 = vmatprep.subr.bf16.mxu0 %v7425
      %11710 = vmatpush1.bf16.msra.mxu0 %v7424
      %11711 = vmatprep.subr.bf16.mxu0 %v7423
      %11712 = vmatpush1.bf16.msra.mxu0 %v7422
      %11713 = vmatprep.subr.bf16.mxu0 %v7421
      %11714 = vmatpush1.bf16.msra.mxu0 %v7420
      %11715 = vmatprep.subr.bf16.mxu0 %v7451
      %11716 = vmatpush2.bf16.msra.mxu0 %v7450
      %11717 = vmatprep.subr.bf16.mxu0 %v7449
      %11718 = vmatpush2.bf16.msra.mxu0 %v7448
      %11719 = vmatprep.subr.bf16.mxu0 %v7447
      %11720 = vmatpush2.bf16.msra.mxu0 %v7446
      %11721 = vmatprep.subr.bf16.mxu0 %v7445
      %11722 = vmatpush2.bf16.msra.mxu0 %v7444
      %11723 = vmatprep.subr.bf16.mxu0 %v7443
      %11724 = vmatpush2.bf16.msra.mxu0 %v7442
      %11725 = vmatprep.subr.bf16.mxu0 %v7441
      %11726 = vmatpush2.bf16.msra.mxu0 %v7440
      %11727 = vmatprep.subr.bf16.mxu0 %v7439
      %11728 = vmatpush2.bf16.msra.mxu0 %v7438
      %11729 = vmatprep.subr.bf16.mxu0 %v7437
      %11730 = vmatpush2.bf16.msra.mxu0 %v7436
      %11731 = vmatprep.mubr.bf16.mxu0 %v668
      %11732 = vmatmul.mubr.bf16.gmra.mxu0 %v667
      %v11733 = vpop.f32.mrf.mxu0
      %v11734 = vadd.f32 %v11693, %v11733
      %v11735 = vpop.f32.mrf.mxu0
      %v11736 = vadd.f32 %v11695, %v11735
      %v11737 = vpop.f32.mrf.mxu0
      %v11738 = vpop.f32.mrf.mxu0
      %11739 = vdwg.mxu0
      %11740 = vmatprep.subr.bf16.mxu0 %v7467
      %11741 = vmatpush1.bf16.msra.mxu0 %v7466
      %11742 = vmatprep.subr.bf16.mxu0 %v7465
      %11743 = vmatpush1.bf16.msra.mxu0 %v7464
      %11744 = vmatprep.subr.bf16.mxu0 %v7463
      %11745 = vmatpush1.bf16.msra.mxu0 %v7462
      %11746 = vmatprep.subr.bf16.mxu0 %v7461
      %11747 = vmatpush1.bf16.msra.mxu0 %v7460
      %11748 = vmatprep.subr.bf16.mxu0 %v7459
      %11749 = vmatpush1.bf16.msra.mxu0 %v7458
      %11750 = vmatprep.subr.bf16.mxu0 %v7457
      %11751 = vmatpush1.bf16.msra.mxu0 %v7456
      %11752 = vmatprep.subr.bf16.mxu0 %v7455
      %11753 = vmatpush1.bf16.msra.mxu0 %v7454
      %11754 = vmatprep.subr.bf16.mxu0 %v7453
      %11755 = vmatpush1.bf16.msra.mxu0 %v7452
      %11756 = vmatprep.subr.bf16.mxu0 %v7483
      %11757 = vmatpush2.bf16.msra.mxu0 %v7482
      %11758 = vmatprep.subr.bf16.mxu0 %v7481
      %11759 = vmatpush2.bf16.msra.mxu0 %v7480
      %11760 = vmatprep.subr.bf16.mxu0 %v7479
      %11761 = vmatpush2.bf16.msra.mxu0 %v7478
      %11762 = vmatprep.subr.bf16.mxu0 %v7477
      %11763 = vmatpush2.bf16.msra.mxu0 %v7476
      %11764 = vmatprep.subr.bf16.mxu0 %v7475
      %11765 = vmatpush2.bf16.msra.mxu0 %v7474
      %11766 = vmatprep.subr.bf16.mxu0 %v7473
      %11767 = vmatpush2.bf16.msra.mxu0 %v7472
      %11768 = vmatprep.subr.bf16.mxu0 %v7471
      %11769 = vmatpush2.bf16.msra.mxu0 %v7470
      %11770 = vmatprep.subr.bf16.mxu0 %v7469
      %11771 = vmatpush2.bf16.msra.mxu0 %v7468
      %11772 = vmatprep.mubr.bf16.mxu0 %v670
      %11773 = vmatmul.mubr.bf16.gmra.mxu0 %v669
      %v11774 = vpop.f32.mrf.mxu0
      %v11775 = vadd.f32 %v11734, %v11774
      %v11776 = vpop.f32.mrf.mxu0
      %v11777 = vadd.f32 %v11736, %v11776
      %v11778 = vpop.f32.mrf.mxu0
      %v11779 = vpop.f32.mrf.mxu0
      %11780 = vdwg.mxu0
      %11781 = vmatprep.subr.bf16.mxu0 %v7499
      %11782 = vmatpush1.bf16.msra.mxu0 %v7498
      %11783 = vmatprep.subr.bf16.mxu0 %v7497
      %11784 = vmatpush1.bf16.msra.mxu0 %v7496
      %11785 = vmatprep.subr.bf16.mxu0 %v7495
      %11786 = vmatpush1.bf16.msra.mxu0 %v7494
      %11787 = vmatprep.subr.bf16.mxu0 %v7493
      %11788 = vmatpush1.bf16.msra.mxu0 %v7492
      %11789 = vmatprep.subr.bf16.mxu0 %v7491
      %11790 = vmatpush1.bf16.msra.mxu0 %v7490
      %11791 = vmatprep.subr.bf16.mxu0 %v7489
      %11792 = vmatpush1.bf16.msra.mxu0 %v7488
      %11793 = vmatprep.subr.bf16.mxu0 %v7487
      %11794 = vmatpush1.bf16.msra.mxu0 %v7486
      %11795 = vmatprep.subr.bf16.mxu0 %v7485
      %11796 = vmatpush1.bf16.msra.mxu0 %v7484
      %11797 = vmatprep.subr.bf16.mxu0 %v7515
      %11798 = vmatpush2.bf16.msra.mxu0 %v7514
      %11799 = vmatprep.subr.bf16.mxu0 %v7513
      %11800 = vmatpush2.bf16.msra.mxu0 %v7512
      %11801 = vmatprep.subr.bf16.mxu0 %v7511
      %11802 = vmatpush2.bf16.msra.mxu0 %v7510
      %11803 = vmatprep.subr.bf16.mxu0 %v7509
      %11804 = vmatpush2.bf16.msra.mxu0 %v7508
      %11805 = vmatprep.subr.bf16.mxu0 %v7507
      %11806 = vmatpush2.bf16.msra.mxu0 %v7506
      %11807 = vmatprep.subr.bf16.mxu0 %v7505
      %11808 = vmatpush2.bf16.msra.mxu0 %v7504
      %11809 = vmatprep.subr.bf16.mxu0 %v7503
      %11810 = vmatpush2.bf16.msra.mxu0 %v7502
      %11811 = vmatprep.subr.bf16.mxu0 %v7501
      %11812 = vmatpush2.bf16.msra.mxu0 %v7500
      %11813 = vmatprep.mubr.bf16.mxu0 %v672
      %11814 = vmatmul.mubr.bf16.gmra.mxu0 %v671
      %v11815 = vpop.f32.mrf.mxu0
      %v11816 = vadd.f32 %v11775, %v11815
      %v11817 = vpop.f32.mrf.mxu0
      %v11818 = vadd.f32 %v11777, %v11817
      %v11819 = vpop.f32.mrf.mxu0
      %v11820 = vpop.f32.mrf.mxu0
      %11821 = vdwg.mxu0
      %11822 = vmatprep.subr.bf16.mxu0 %v7531
      %11823 = vmatpush1.bf16.msra.mxu0 %v7530
      %11824 = vmatprep.subr.bf16.mxu0 %v7529
      %11825 = vmatpush1.bf16.msra.mxu0 %v7528
      %11826 = vmatprep.subr.bf16.mxu0 %v7527
      %11827 = vmatpush1.bf16.msra.mxu0 %v7526
      %11828 = vmatprep.subr.bf16.mxu0 %v7525
      %11829 = vmatpush1.bf16.msra.mxu0 %v7524
      %11830 = vmatprep.subr.bf16.mxu0 %v7523
      %11831 = vmatpush1.bf16.msra.mxu0 %v7522
      %11832 = vmatprep.subr.bf16.mxu0 %v7521
      %11833 = vmatpush1.bf16.msra.mxu0 %v7520
      %11834 = vmatprep.subr.bf16.mxu0 %v7519
      %11835 = vmatpush1.bf16.msra.mxu0 %v7518
      %11836 = vmatprep.subr.bf16.mxu0 %v7517
      %11837 = vmatpush1.bf16.msra.mxu0 %v7516
      %11838 = vmatprep.subr.bf16.mxu0 %v7547
      %11839 = vmatpush2.bf16.msra.mxu0 %v7546
      %11840 = vmatprep.subr.bf16.mxu0 %v7545
      %11841 = vmatpush2.bf16.msra.mxu0 %v7544
      %11842 = vmatprep.subr.bf16.mxu0 %v7543
      %11843 = vmatpush2.bf16.msra.mxu0 %v7542
      %11844 = vmatprep.subr.bf16.mxu0 %v7541
      %11845 = vmatpush2.bf16.msra.mxu0 %v7540
      %11846 = vmatprep.subr.bf16.mxu0 %v7539
      %11847 = vmatpush2.bf16.msra.mxu0 %v7538
      %11848 = vmatprep.subr.bf16.mxu0 %v7537
      %11849 = vmatpush2.bf16.msra.mxu0 %v7536
      %11850 = vmatprep.subr.bf16.mxu0 %v7535
      %11851 = vmatpush2.bf16.msra.mxu0 %v7534
      %11852 = vmatprep.subr.bf16.mxu0 %v7533
      %11853 = vmatpush2.bf16.msra.mxu0 %v7532
      %11854 = vmatprep.mubr.bf16.mxu0 %v674
      %11855 = vmatmul.mubr.bf16.gmra.mxu0 %v673
      %v11856 = vpop.f32.mrf.mxu0
      %v11857 = vadd.f32 %v11816, %v11856
      %v11858 = vpop.f32.mrf.mxu0
      %v11859 = vadd.f32 %v11818, %v11858
      %v11860 = vpop.f32.mrf.mxu0
      %v11861 = vpop.f32.mrf.mxu0
      %11862 = vdwg.mxu0
      %11863 = vmatprep.subr.bf16.mxu0 %v7563
      %11864 = vmatpush1.bf16.msra.mxu0 %v7562
      %11865 = vmatprep.subr.bf16.mxu0 %v7561
      %11866 = vmatpush1.bf16.msra.mxu0 %v7560
      %11867 = vmatprep.subr.bf16.mxu0 %v7559
      %11868 = vmatpush1.bf16.msra.mxu0 %v7558
      %11869 = vmatprep.subr.bf16.mxu0 %v7557
      %11870 = vmatpush1.bf16.msra.mxu0 %v7556
      %11871 = vmatprep.subr.bf16.mxu0 %v7555
      %11872 = vmatpush1.bf16.msra.mxu0 %v7554
      %11873 = vmatprep.subr.bf16.mxu0 %v7553
      %11874 = vmatpush1.bf16.msra.mxu0 %v7552
      %11875 = vmatprep.subr.bf16.mxu0 %v7551
      %11876 = vmatpush1.bf16.msra.mxu0 %v7550
      %11877 = vmatprep.subr.bf16.mxu0 %v7549
      %11878 = vmatpush1.bf16.msra.mxu0 %v7548
      %11879 = vmatprep.subr.bf16.mxu0 %v7579
      %11880 = vmatpush2.bf16.msra.mxu0 %v7578
      %11881 = vmatprep.subr.bf16.mxu0 %v7577
      %11882 = vmatpush2.bf16.msra.mxu0 %v7576
      %11883 = vmatprep.subr.bf16.mxu0 %v7575
      %11884 = vmatpush2.bf16.msra.mxu0 %v7574
      %11885 = vmatprep.subr.bf16.mxu0 %v7573
      %11886 = vmatpush2.bf16.msra.mxu0 %v7572
      %11887 = vmatprep.subr.bf16.mxu0 %v7571
      %11888 = vmatpush2.bf16.msra.mxu0 %v7570
      %11889 = vmatprep.subr.bf16.mxu0 %v7569
      %11890 = vmatpush2.bf16.msra.mxu0 %v7568
      %11891 = vmatprep.subr.bf16.mxu0 %v7567
      %11892 = vmatpush2.bf16.msra.mxu0 %v7566
      %11893 = vmatprep.subr.bf16.mxu0 %v7565
      %11894 = vmatpush2.bf16.msra.mxu0 %v7564
      %11895 = vmatprep.mubr.bf16.mxu0 %v676
      %11896 = vmatmul.mubr.bf16.gmra.mxu0 %v675
      %v11897 = vpop.f32.mrf.mxu0
      %v11898 = vadd.f32 %v11857, %v11897
      %v11899 = vpop.f32.mrf.mxu0
      %v11900 = vadd.f32 %v11859, %v11899
      %v11901 = vpop.f32.mrf.mxu0
      %v11902 = vpop.f32.mrf.mxu0
      %11903 = vdwg.mxu0
      %11904 = vmatprep.subr.bf16.mxu0 %v7595
      %11905 = vmatpush1.bf16.msra.mxu0 %v7594
      %11906 = vmatprep.subr.bf16.mxu0 %v7593
      %11907 = vmatpush1.bf16.msra.mxu0 %v7592
      %11908 = vmatprep.subr.bf16.mxu0 %v7591
      %11909 = vmatpush1.bf16.msra.mxu0 %v7590
      %11910 = vmatprep.subr.bf16.mxu0 %v7589
      %11911 = vmatpush1.bf16.msra.mxu0 %v7588
      %11912 = vmatprep.subr.bf16.mxu0 %v7587
      %11913 = vmatpush1.bf16.msra.mxu0 %v7586
      %11914 = vmatprep.subr.bf16.mxu0 %v7585
      %11915 = vmatpush1.bf16.msra.mxu0 %v7584
      %11916 = vmatprep.subr.bf16.mxu0 %v7583
      %11917 = vmatpush1.bf16.msra.mxu0 %v7582
      %11918 = vmatprep.subr.bf16.mxu0 %v7581
      %11919 = vmatpush1.bf16.msra.mxu0 %v7580
      %11920 = vmatprep.subr.bf16.mxu0 %v7611
      %11921 = vmatpush2.bf16.msra.mxu0 %v7610
      %11922 = vmatprep.subr.bf16.mxu0 %v7609
      %11923 = vmatpush2.bf16.msra.mxu0 %v7608
      %11924 = vmatprep.subr.bf16.mxu0 %v7607
      %11925 = vmatpush2.bf16.msra.mxu0 %v7606
      %11926 = vmatprep.subr.bf16.mxu0 %v7605
      %11927 = vmatpush2.bf16.msra.mxu0 %v7604
      %11928 = vmatprep.subr.bf16.mxu0 %v7603
      %11929 = vmatpush2.bf16.msra.mxu0 %v7602
      %11930 = vmatprep.subr.bf16.mxu0 %v7601
      %11931 = vmatpush2.bf16.msra.mxu0 %v7600
      %11932 = vmatprep.subr.bf16.mxu0 %v7599
      %11933 = vmatpush2.bf16.msra.mxu0 %v7598
      %11934 = vmatprep.subr.bf16.mxu0 %v7597
      %11935 = vmatpush2.bf16.msra.mxu0 %v7596
      %11936 = vmatprep.mubr.bf16.mxu0 %v678
      %11937 = vmatmul.mubr.bf16.gmra.mxu0 %v677
      %v11938 = vpop.f32.mrf.mxu0
      %v11939 = vadd.f32 %v11898, %v11938
      %v11940 = vpop.f32.mrf.mxu0
      %v11941 = vadd.f32 %v11900, %v11940
      %v11942 = vpop.f32.mrf.mxu0
      %v11943 = vpop.f32.mrf.mxu0
      %11944 = vdwg.mxu0
      %11945 = vmatprep.subr.bf16.mxu0 %v7627
      %11946 = vmatpush1.bf16.msra.mxu0 %v7626
      %11947 = vmatprep.subr.bf16.mxu0 %v7625
      %11948 = vmatpush1.bf16.msra.mxu0 %v7624
      %11949 = vmatprep.subr.bf16.mxu0 %v7623
      %11950 = vmatpush1.bf16.msra.mxu0 %v7622
      %11951 = vmatprep.subr.bf16.mxu0 %v7621
      %11952 = vmatpush1.bf16.msra.mxu0 %v7620
      %11953 = vmatprep.subr.bf16.mxu0 %v7619
      %11954 = vmatpush1.bf16.msra.mxu0 %v7618
      %11955 = vmatprep.subr.bf16.mxu0 %v7617
      %11956 = vmatpush1.bf16.msra.mxu0 %v7616
      %11957 = vmatprep.subr.bf16.mxu0 %v7615
      %11958 = vmatpush1.bf16.msra.mxu0 %v7614
      %11959 = vmatprep.subr.bf16.mxu0 %v7613
      %11960 = vmatpush1.bf16.msra.mxu0 %v7612
      %11961 = vmatprep.subr.bf16.mxu0 %v7643
      %11962 = vmatpush2.bf16.msra.mxu0 %v7642
      %11963 = vmatprep.subr.bf16.mxu0 %v7641
      %11964 = vmatpush2.bf16.msra.mxu0 %v7640
      %11965 = vmatprep.subr.bf16.mxu0 %v7639
      %11966 = vmatpush2.bf16.msra.mxu0 %v7638
      %11967 = vmatprep.subr.bf16.mxu0 %v7637
      %11968 = vmatpush2.bf16.msra.mxu0 %v7636
      %11969 = vmatprep.subr.bf16.mxu0 %v7635
      %11970 = vmatpush2.bf16.msra.mxu0 %v7634
      %11971 = vmatprep.subr.bf16.mxu0 %v7633
      %11972 = vmatpush2.bf16.msra.mxu0 %v7632
      %11973 = vmatprep.subr.bf16.mxu0 %v7631
      %11974 = vmatpush2.bf16.msra.mxu0 %v7630
      %11975 = vmatprep.subr.bf16.mxu0 %v7629
      %11976 = vmatpush2.bf16.msra.mxu0 %v7628
      %11977 = vmatprep.mubr.bf16.mxu0 %v680
      %11978 = vmatmul.mubr.bf16.gmra.mxu0 %v679
      %v11979 = vpop.f32.mrf.mxu0
      %v11980 = vadd.f32 %v11939, %v11979
      %v11981 = vpop.f32.mrf.mxu0
      %v11982 = vadd.f32 %v11941, %v11981
      %v11983 = vpop.f32.mrf.mxu0
      %v11984 = vpop.f32.mrf.mxu0
      %11985 = vdwg.mxu0
      %11986 = vmatprep.subr.bf16.mxu0 %v7659
      %11987 = vmatpush1.bf16.msra.mxu0 %v7658
      %11988 = vmatprep.subr.bf16.mxu0 %v7657
      %11989 = vmatpush1.bf16.msra.mxu0 %v7656
      %11990 = vmatprep.subr.bf16.mxu0 %v7655
      %11991 = vmatpush1.bf16.msra.mxu0 %v7654
      %11992 = vmatprep.subr.bf16.mxu0 %v7653
      %11993 = vmatpush1.bf16.msra.mxu0 %v7652
      %11994 = vmatprep.subr.bf16.mxu0 %v7651
      %11995 = vmatpush1.bf16.msra.mxu0 %v7650
      %11996 = vmatprep.subr.bf16.mxu0 %v7649
      %11997 = vmatpush1.bf16.msra.mxu0 %v7648
      %11998 = vmatprep.subr.bf16.mxu0 %v7647
      %11999 = vmatpush1.bf16.msra.mxu0 %v7646
      %12000 = vmatprep.subr.bf16.mxu0 %v7645
      %12001 = vmatpush1.bf16.msra.mxu0 %v7644
      %12002 = vmatprep.subr.bf16.mxu0 %v7675
      %12003 = vmatpush2.bf16.msra.mxu0 %v7674
      %12004 = vmatprep.subr.bf16.mxu0 %v7673
      %12005 = vmatpush2.bf16.msra.mxu0 %v7672
      %12006 = vmatprep.subr.bf16.mxu0 %v7671
      %12007 = vmatpush2.bf16.msra.mxu0 %v7670
      %12008 = vmatprep.subr.bf16.mxu0 %v7669
      %12009 = vmatpush2.bf16.msra.mxu0 %v7668
      %12010 = vmatprep.subr.bf16.mxu0 %v7667
      %12011 = vmatpush2.bf16.msra.mxu0 %v7666
      %12012 = vmatprep.subr.bf16.mxu0 %v7665
      %12013 = vmatpush2.bf16.msra.mxu0 %v7664
      %12014 = vmatprep.subr.bf16.mxu0 %v7663
      %12015 = vmatpush2.bf16.msra.mxu0 %v7662
      %12016 = vmatprep.subr.bf16.mxu0 %v7661
      %12017 = vmatpush2.bf16.msra.mxu0 %v7660
      %12018 = vmatprep.mubr.bf16.mxu0 %v682
      %12019 = vmatmul.mubr.bf16.gmra.mxu0 %v681
      %v12020 = vpop.f32.mrf.mxu0
      %v12021 = vadd.f32 %v11980, %v12020
      %v12022 = vpop.f32.mrf.mxu0
      %v12023 = vadd.f32 %v11982, %v12022
      %v12024 = vpop.f32.mrf.mxu0
      %v12025 = vpop.f32.mrf.mxu0
      %12026 = vdwg.mxu0
      %12027 = vmatprep.subr.bf16.mxu0 %v7691
      %12028 = vmatpush1.bf16.msra.mxu0 %v7690
      %12029 = vmatprep.subr.bf16.mxu0 %v7689
      %12030 = vmatpush1.bf16.msra.mxu0 %v7688
      %12031 = vmatprep.subr.bf16.mxu0 %v7687
      %12032 = vmatpush1.bf16.msra.mxu0 %v7686
      %12033 = vmatprep.subr.bf16.mxu0 %v7685
      %12034 = vmatpush1.bf16.msra.mxu0 %v7684
      %12035 = vmatprep.subr.bf16.mxu0 %v7683
      %12036 = vmatpush1.bf16.msra.mxu0 %v7682
      %12037 = vmatprep.subr.bf16.mxu0 %v7681
      %12038 = vmatpush1.bf16.msra.mxu0 %v7680
      %12039 = vmatprep.subr.bf16.mxu0 %v7679
      %12040 = vmatpush1.bf16.msra.mxu0 %v7678
      %12041 = vmatprep.subr.bf16.mxu0 %v7677
      %12042 = vmatpush1.bf16.msra.mxu0 %v7676
      %12043 = vmatprep.subr.bf16.mxu0 %v7707
      %12044 = vmatpush2.bf16.msra.mxu0 %v7706
      %12045 = vmatprep.subr.bf16.mxu0 %v7705
      %12046 = vmatpush2.bf16.msra.mxu0 %v7704
      %12047 = vmatprep.subr.bf16.mxu0 %v7703
      %12048 = vmatpush2.bf16.msra.mxu0 %v7702
      %12049 = vmatprep.subr.bf16.mxu0 %v7701
      %12050 = vmatpush2.bf16.msra.mxu0 %v7700
      %12051 = vmatprep.subr.bf16.mxu0 %v7699
      %12052 = vmatpush2.bf16.msra.mxu0 %v7698
      %12053 = vmatprep.subr.bf16.mxu0 %v7697
      %12054 = vmatpush2.bf16.msra.mxu0 %v7696
      %12055 = vmatprep.subr.bf16.mxu0 %v7695
      %12056 = vmatpush2.bf16.msra.mxu0 %v7694
      %12057 = vmatprep.subr.bf16.mxu0 %v7693
      %12058 = vmatpush2.bf16.msra.mxu0 %v7692
      %12059 = vmatprep.mubr.bf16.mxu0 %v684
      %12060 = vmatmul.mubr.bf16.gmra.mxu0 %v683
      %v12061 = vpop.f32.mrf.mxu0
      %v12062 = vadd.f32 %v12021, %v12061
      %v12063 = vpop.f32.mrf.mxu0
      %v12064 = vadd.f32 %v12023, %v12063
      %v12065 = vpop.f32.mrf.mxu0
      %v12066 = vpop.f32.mrf.mxu0
      %12067 = vdwg.mxu0
      %12068 = vmatprep.subr.bf16.mxu0 %v7723
      %12069 = vmatpush1.bf16.msra.mxu0 %v7722
      %12070 = vmatprep.subr.bf16.mxu0 %v7721
      %12071 = vmatpush1.bf16.msra.mxu0 %v7720
      %12072 = vmatprep.subr.bf16.mxu0 %v7719
      %12073 = vmatpush1.bf16.msra.mxu0 %v7718
      %12074 = vmatprep.subr.bf16.mxu0 %v7717
      %12075 = vmatpush1.bf16.msra.mxu0 %v7716
      %12076 = vmatprep.subr.bf16.mxu0 %v7715
      %12077 = vmatpush1.bf16.msra.mxu0 %v7714
      %12078 = vmatprep.subr.bf16.mxu0 %v7713
      %12079 = vmatpush1.bf16.msra.mxu0 %v7712
      %12080 = vmatprep.subr.bf16.mxu0 %v7711
      %12081 = vmatpush1.bf16.msra.mxu0 %v7710
      %12082 = vmatprep.subr.bf16.mxu0 %v7709
      %12083 = vmatpush1.bf16.msra.mxu0 %v7708
      %12084 = vmatprep.subr.bf16.mxu0 %v7739
      %12085 = vmatpush2.bf16.msra.mxu0 %v7738
      %12086 = vmatprep.subr.bf16.mxu0 %v7737
      %12087 = vmatpush2.bf16.msra.mxu0 %v7736
      %12088 = vmatprep.subr.bf16.mxu0 %v7735
      %12089 = vmatpush2.bf16.msra.mxu0 %v7734
      %12090 = vmatprep.subr.bf16.mxu0 %v7733
      %12091 = vmatpush2.bf16.msra.mxu0 %v7732
      %12092 = vmatprep.subr.bf16.mxu0 %v7731
      %12093 = vmatpush2.bf16.msra.mxu0 %v7730
      %12094 = vmatprep.subr.bf16.mxu0 %v7729
      %12095 = vmatpush2.bf16.msra.mxu0 %v7728
      %12096 = vmatprep.subr.bf16.mxu0 %v7727
      %12097 = vmatpush2.bf16.msra.mxu0 %v7726
      %12098 = vmatprep.subr.bf16.mxu0 %v7725
      %12099 = vmatpush2.bf16.msra.mxu0 %v7724
      %12100 = vmatprep.mubr.bf16.mxu0 %v686
      %12101 = vmatmul.mubr.bf16.gmra.mxu0 %v685
      %v12102 = vpop.f32.mrf.mxu0
      %v12103 = vadd.f32 %v12062, %v12102
      %v12104 = vpop.f32.mrf.mxu0
      %v12105 = vadd.f32 %v12064, %v12104
      %v12106 = vpop.f32.mrf.mxu0
      %v12107 = vpop.f32.mrf.mxu0
      %12108 = vdwg.mxu0
      %12109 = vmatprep.subr.bf16.mxu0 %v7755
      %12110 = vmatpush1.bf16.msra.mxu0 %v7754
      %12111 = vmatprep.subr.bf16.mxu0 %v7753
      %12112 = vmatpush1.bf16.msra.mxu0 %v7752
      %12113 = vmatprep.subr.bf16.mxu0 %v7751
      %12114 = vmatpush1.bf16.msra.mxu0 %v7750
      %12115 = vmatprep.subr.bf16.mxu0 %v7749
      %12116 = vmatpush1.bf16.msra.mxu0 %v7748
      %12117 = vmatprep.subr.bf16.mxu0 %v7747
      %12118 = vmatpush1.bf16.msra.mxu0 %v7746
      %12119 = vmatprep.subr.bf16.mxu0 %v7745
      %12120 = vmatpush1.bf16.msra.mxu0 %v7744
      %12121 = vmatprep.subr.bf16.mxu0 %v7743
      %12122 = vmatpush1.bf16.msra.mxu0 %v7742
      %12123 = vmatprep.subr.bf16.mxu0 %v7741
      %12124 = vmatpush1.bf16.msra.mxu0 %v7740
      %12125 = vmatprep.subr.bf16.mxu0 %v7771
      %12126 = vmatpush2.bf16.msra.mxu0 %v7770
      %12127 = vmatprep.subr.bf16.mxu0 %v7769
      %12128 = vmatpush2.bf16.msra.mxu0 %v7768
      %12129 = vmatprep.subr.bf16.mxu0 %v7767
      %12130 = vmatpush2.bf16.msra.mxu0 %v7766
      %12131 = vmatprep.subr.bf16.mxu0 %v7765
      %12132 = vmatpush2.bf16.msra.mxu0 %v7764
      %12133 = vmatprep.subr.bf16.mxu0 %v7763
      %12134 = vmatpush2.bf16.msra.mxu0 %v7762
      %12135 = vmatprep.subr.bf16.mxu0 %v7761
      %12136 = vmatpush2.bf16.msra.mxu0 %v7760
      %12137 = vmatprep.subr.bf16.mxu0 %v7759
      %12138 = vmatpush2.bf16.msra.mxu0 %v7758
      %12139 = vmatprep.subr.bf16.mxu0 %v7757
      %12140 = vmatpush2.bf16.msra.mxu0 %v7756
      %12141 = vmatprep.mubr.bf16.mxu0 %v688
      %12142 = vmatmul.mubr.bf16.gmra.mxu0 %v687
      %v12143 = vpop.f32.mrf.mxu0
      %v12144 = vadd.f32 %v12103, %v12143
      %v12145 = vpop.f32.mrf.mxu0
      %v12146 = vadd.f32 %v12105, %v12145
      %v12147 = vpop.f32.mrf.mxu0
      %v12148 = vpop.f32.mrf.mxu0
      %12149 = vdwg.mxu0
      %12150 = vmatprep.subr.bf16.mxu0 %v7787
      %12151 = vmatpush1.bf16.msra.mxu0 %v7786
      %12152 = vmatprep.subr.bf16.mxu0 %v7785
      %12153 = vmatpush1.bf16.msra.mxu0 %v7784
      %12154 = vmatprep.subr.bf16.mxu0 %v7783
      %12155 = vmatpush1.bf16.msra.mxu0 %v7782
      %12156 = vmatprep.subr.bf16.mxu0 %v7781
      %12157 = vmatpush1.bf16.msra.mxu0 %v7780
      %12158 = vmatprep.subr.bf16.mxu0 %v7779
      %12159 = vmatpush1.bf16.msra.mxu0 %v7778
      %12160 = vmatprep.subr.bf16.mxu0 %v7777
      %12161 = vmatpush1.bf16.msra.mxu0 %v7776
      %12162 = vmatprep.subr.bf16.mxu0 %v7775
      %12163 = vmatpush1.bf16.msra.mxu0 %v7774
      %12164 = vmatprep.subr.bf16.mxu0 %v7773
      %12165 = vmatpush1.bf16.msra.mxu0 %v7772
      %12166 = vmatprep.subr.bf16.mxu0 %v7803
      %12167 = vmatpush2.bf16.msra.mxu0 %v7802
      %12168 = vmatprep.subr.bf16.mxu0 %v7801
      %12169 = vmatpush2.bf16.msra.mxu0 %v7800
      %12170 = vmatprep.subr.bf16.mxu0 %v7799
      %12171 = vmatpush2.bf16.msra.mxu0 %v7798
      %12172 = vmatprep.subr.bf16.mxu0 %v7797
      %12173 = vmatpush2.bf16.msra.mxu0 %v7796
      %12174 = vmatprep.subr.bf16.mxu0 %v7795
      %12175 = vmatpush2.bf16.msra.mxu0 %v7794
      %12176 = vmatprep.subr.bf16.mxu0 %v7793
      %12177 = vmatpush2.bf16.msra.mxu0 %v7792
      %12178 = vmatprep.subr.bf16.mxu0 %v7791
      %12179 = vmatpush2.bf16.msra.mxu0 %v7790
      %12180 = vmatprep.subr.bf16.mxu0 %v7789
      %12181 = vmatpush2.bf16.msra.mxu0 %v7788
      %12182 = vmatprep.mubr.bf16.mxu0 %v690
      %12183 = vmatmul.mubr.bf16.gmra.mxu0 %v689
      %v12184 = vpop.f32.mrf.mxu0
      %v12185 = vadd.f32 %v12144, %v12184
      %v12186 = vpop.f32.mrf.mxu0
      %v12187 = vadd.f32 %v12146, %v12186
      %v12188 = vpop.f32.mrf.mxu0
      %v12189 = vpop.f32.mrf.mxu0
      %12190 = vdwg.mxu0
      %12191 = vmatprep.subr.bf16.mxu0 %v7819
      %12192 = vmatpush1.bf16.msra.mxu0 %v7818
      %12193 = vmatprep.subr.bf16.mxu0 %v7817
      %12194 = vmatpush1.bf16.msra.mxu0 %v7816
      %12195 = vmatprep.subr.bf16.mxu0 %v7815
      %12196 = vmatpush1.bf16.msra.mxu0 %v7814
      %12197 = vmatprep.subr.bf16.mxu0 %v7813
      %12198 = vmatpush1.bf16.msra.mxu0 %v7812
      %12199 = vmatprep.subr.bf16.mxu0 %v7811
      %12200 = vmatpush1.bf16.msra.mxu0 %v7810
      %12201 = vmatprep.subr.bf16.mxu0 %v7809
      %12202 = vmatpush1.bf16.msra.mxu0 %v7808
      %12203 = vmatprep.subr.bf16.mxu0 %v7807
      %12204 = vmatpush1.bf16.msra.mxu0 %v7806
      %12205 = vmatprep.subr.bf16.mxu0 %v7805
      %12206 = vmatpush1.bf16.msra.mxu0 %v7804
      %12207 = vmatprep.subr.bf16.mxu0 %v7835
      %12208 = vmatpush2.bf16.msra.mxu0 %v7834
      %12209 = vmatprep.subr.bf16.mxu0 %v7833
      %12210 = vmatpush2.bf16.msra.mxu0 %v7832
      %12211 = vmatprep.subr.bf16.mxu0 %v7831
      %12212 = vmatpush2.bf16.msra.mxu0 %v7830
      %12213 = vmatprep.subr.bf16.mxu0 %v7829
      %12214 = vmatpush2.bf16.msra.mxu0 %v7828
      %12215 = vmatprep.subr.bf16.mxu0 %v7827
      %12216 = vmatpush2.bf16.msra.mxu0 %v7826
      %12217 = vmatprep.subr.bf16.mxu0 %v7825
      %12218 = vmatpush2.bf16.msra.mxu0 %v7824
      %12219 = vmatprep.subr.bf16.mxu0 %v7823
      %12220 = vmatpush2.bf16.msra.mxu0 %v7822
      %12221 = vmatprep.subr.bf16.mxu0 %v7821
      %12222 = vmatpush2.bf16.msra.mxu0 %v7820
      %12223 = vmatprep.mubr.bf16.mxu0 %v692
      %12224 = vmatmul.mubr.bf16.gmra.mxu0 %v691
      %v12225 = vpop.f32.mrf.mxu0
      %v12226 = vadd.f32 %v12185, %v12225
      %v12227 = vpop.f32.mrf.mxu0
      %v12228 = vadd.f32 %v12187, %v12227
      %v12229 = vpop.f32.mrf.mxu0
      %v12230 = vpop.f32.mrf.mxu0
      %12231 = vdwg.mxu0
      %12232 = vmatprep.subr.bf16.mxu0 %v7851
      %12233 = vmatpush1.bf16.msra.mxu0 %v7850
      %12234 = vmatprep.subr.bf16.mxu0 %v7849
      %12235 = vmatpush1.bf16.msra.mxu0 %v7848
      %12236 = vmatprep.subr.bf16.mxu0 %v7847
      %12237 = vmatpush1.bf16.msra.mxu0 %v7846
      %12238 = vmatprep.subr.bf16.mxu0 %v7845
      %12239 = vmatpush1.bf16.msra.mxu0 %v7844
      %12240 = vmatprep.subr.bf16.mxu0 %v7843
      %12241 = vmatpush1.bf16.msra.mxu0 %v7842
      %12242 = vmatprep.subr.bf16.mxu0 %v7841
      %12243 = vmatpush1.bf16.msra.mxu0 %v7840
      %12244 = vmatprep.subr.bf16.mxu0 %v7839
      %12245 = vmatpush1.bf16.msra.mxu0 %v7838
      %12246 = vmatprep.subr.bf16.mxu0 %v7837
      %12247 = vmatpush1.bf16.msra.mxu0 %v7836
      %12248 = vmatprep.subr.bf16.mxu0 %v7867
      %12249 = vmatpush2.bf16.msra.mxu0 %v7866
      %12250 = vmatprep.subr.bf16.mxu0 %v7865
      %12251 = vmatpush2.bf16.msra.mxu0 %v7864
      %12252 = vmatprep.subr.bf16.mxu0 %v7863
      %12253 = vmatpush2.bf16.msra.mxu0 %v7862
      %12254 = vmatprep.subr.bf16.mxu0 %v7861
      %12255 = vmatpush2.bf16.msra.mxu0 %v7860
      %12256 = vmatprep.subr.bf16.mxu0 %v7859
      %12257 = vmatpush2.bf16.msra.mxu0 %v7858
      %12258 = vmatprep.subr.bf16.mxu0 %v7857
      %12259 = vmatpush2.bf16.msra.mxu0 %v7856
      %12260 = vmatprep.subr.bf16.mxu0 %v7855
      %12261 = vmatpush2.bf16.msra.mxu0 %v7854
      %12262 = vmatprep.subr.bf16.mxu0 %v7853
      %12263 = vmatpush2.bf16.msra.mxu0 %v7852
      %12264 = vmatprep.mubr.bf16.mxu0 %v694
      %12265 = vmatmul.mubr.bf16.gmra.mxu0 %v693
      %v12266 = vpop.f32.mrf.mxu0
      %v12267 = vadd.f32 %v12226, %v12266
      %v12268 = vpop.f32.mrf.mxu0
      %v12269 = vadd.f32 %v12228, %v12268
      %v12270 = vpop.f32.mrf.mxu0
      %v12271 = vpop.f32.mrf.mxu0
      %12272 = vdwg.mxu0
      %12273 = vmatprep.subr.bf16.mxu0 %v7883
      %12274 = vmatpush1.bf16.msra.mxu0 %v7882
      %12275 = vmatprep.subr.bf16.mxu0 %v7881
      %12276 = vmatpush1.bf16.msra.mxu0 %v7880
      %12277 = vmatprep.subr.bf16.mxu0 %v7879
      %12278 = vmatpush1.bf16.msra.mxu0 %v7878
      %12279 = vmatprep.subr.bf16.mxu0 %v7877
      %12280 = vmatpush1.bf16.msra.mxu0 %v7876
      %12281 = vmatprep.subr.bf16.mxu0 %v7875
      %12282 = vmatpush1.bf16.msra.mxu0 %v7874
      %12283 = vmatprep.subr.bf16.mxu0 %v7873
      %12284 = vmatpush1.bf16.msra.mxu0 %v7872
      %12285 = vmatprep.subr.bf16.mxu0 %v7871
      %12286 = vmatpush1.bf16.msra.mxu0 %v7870
      %12287 = vmatprep.subr.bf16.mxu0 %v7869
      %12288 = vmatpush1.bf16.msra.mxu0 %v7868
      %12289 = vmatprep.subr.bf16.mxu0 0
      %12290 = vmatpush2.bf16.msra.mxu0 0
      %12291 = vmatprep.subr.bf16.mxu0 0
      %12292 = vmatpush2.bf16.msra.mxu0 0
      %12293 = vmatprep.subr.bf16.mxu0 0
      %12294 = vmatpush2.bf16.msra.mxu0 0
      %12295 = vmatprep.subr.bf16.mxu0 0
      %12296 = vmatpush2.bf16.msra.mxu0 0
      %12297 = vmatprep.subr.bf16.mxu0 0
      %12298 = vmatpush2.bf16.msra.mxu0 0
      %12299 = vmatprep.subr.bf16.mxu0 0
      %12300 = vmatpush2.bf16.msra.mxu0 0
      %12301 = vmatprep.subr.bf16.mxu0 0
      %12302 = vmatpush2.bf16.msra.mxu0 0
      %12303 = vmatprep.subr.bf16.mxu0 0
      %12304 = vmatpush2.bf16.msra.mxu0 0
      %12305 = vmatprep.mubr.bf16.mxu0 0
      %12306 = vmatmul.mubr.bf16.gmra.mxu0 %v695
      %v12307 = vpop.f32.mrf.mxu0
      %v12308 = vadd.f32 %v12267, %v12307
      %v12309 = vpop.f32.mrf.mxu0
      %v12310 = vadd.f32 %v12269, %v12309
      %v12311 = vpop.f32.mrf.mxu0
      %v12312 = vpop.f32.mrf.mxu0
      %12313 = vdwg.mxu0
      %v12316 = vcombine.low %v12308, %v12310
      %v12318 = vunpack.c.l.s4 1983009808
      %v12319 = vunpack.c.0.s8 %v12318
      %v12320 = vlaneseq
      %v12321 = vshrl.u32 %v12320, 7
      %v12322 = vsub.s32 %v12319, %v12321
      %v12323 = vrot.slane %v12316, %v12322
      %vm12325 = vcmask 1041408
      %vm12326 = vcmask 551938
      %vm12327 = vmor %vm12326, %vm12325
      %12328 = vst.msk [vmem:[%s170] sm:$0xf] %vm12327, %v12323
      %p12329 = scmp.lt.s32.totalorder %s13, 1
      %s12330 = scalar_select %p12329, %s13, 1
      %s12331 = smul.addr %s12330, 2
      %s12332 = smul.addr %s12331, 2
      %s12333 = scalar_lea.vmem %s2, %s12332
      // Predicated region
      $region29: #{ms_block14_forward.3} parent=27 // pred_check
        %p12334 = pneg %p83
      $region30: #{ms_block14_forward.3} parent=27 // pred_check_branch
        %12336 = sbr.rel (%p12334) target = $region32
      $region31: #{ms_block14_forward.3} parent=27 // pred_region
        _
      $region32: #{ms_block14_forward.3} parent=27 // pred_fallthru
        _
    $region28: #{ms_block14_forward.3} parent=5 // pred_fallthru
      _
    %p12337 = scmp.le.s32.totalorder 2, %s8
    // Predicated region
    $region33: #{ms_block14_forward.3} parent=5 // pred_check
      %p12338 = pneg %p12337
    $region34: #{ms_block14_forward.3} parent=5 // pred_check_branch
      %12340 = sbr.rel (%p12338) target = $region36
    $region35: #{ms_block14_forward.3} parent=5 // pred_region
      %s12341 = ssub.s32 %s8, 2
      // Predicated region
      $region37: #{ms_block14_forward.3} parent=35 // pred_check
        %p12342 = pneg %p89
      $region38: #{ms_block14_forward.3} parent=35 // pred_check_branch
        %12344 = sbr.rel (%p12342) target = $region40
      $region39: #{ms_block14_forward.3} parent=35 // pred_region
        %p12345 = scmp.lt.s32.totalorder %s14, 1
        %s12346 = scalar_select %p12345, %s14, 1
        %s12347 = smul.addr %s12346, 2
        %s12348 = smul.addr %s12347, 2
        %s12349 = scalar_lea.vmem %s2, %s12348
      $region40: #{ms_block14_forward.3} parent=35 // pred_fallthru
        _
    $region36: #{ms_block14_forward.3} parent=5 // pred_fallthru
      _
  $region6: #{ms_block14_forward.3} parent=0 // loop_footer
    %s12 = sadd.s32 1, %s8
  $region7: #{ms_block14_forward.3} parent=0 // loop_footer_branch
    %7 = sbr.rel target = $region3
  $region8: #{ms_block14_forward.3} parent=0 // loop_exit
    _

</llo_original>
